<compile_context>
chip_gen: v5e
topology: v5e:2x2
jax: 0.10.0
libtpu: 0.0.40
codegen_flags: <defaults>
</compile_context>

<pallas_src>
import functools

import jax
import jax.numpy as jnp
from jax.experimental import pallas as pl
from jax.experimental.pallas import tpu as pltpu

_LN_EPS = 1e-5
_INV_SQRT2 = 0.7071067811865476


def _layer_norm(h, gamma, beta, true_dim):
    """LayerNorm over the last axis; statistics masked to the first true_dim cols."""
    d = h.shape[-1]
    if true_dim == d:
        mu = jnp.mean(h, axis=-1, keepdims=True)
        diff = h - mu
        var = jnp.mean(diff * diff, axis=-1, keepdims=True)
    else:
        mask = jax.lax.broadcasted_iota(jnp.int32, (1, d), 1) < true_dim
        inv_n = 1.0 / float(true_dim)
        mu = jnp.sum(jnp.where(mask, h, 0.0), axis=-1, keepdims=True) * inv_n
        diff = jnp.where(mask, h - mu, 0.0)
        var = jnp.sum(diff * diff, axis=-1, keepdims=True) * inv_n
    # Padded gamma/beta are zero, so padded columns come out as exactly 0.
    return (h - mu) * jax.lax.rsqrt(var + _LN_EPS) * gamma + beta


def _layer1_kernel(kmap_ref, cnt_ref, a_ref, z1_ref, b1_ref, g1_ref, bt1_ref,
                   w2_ref, b2_ref, z2_ref, acc_ref, *, tile, hidden_true):
    """acc = sum over nonzero k-blocks of A[i,k] @ (X W1)[k];
    finalize: +b1 -> GELU -> LN1 -> (dropout=identity) -> @W2 + b2 -> Z2."""
    i = pl.program_id(0)
    k = pl.program_id(1)

    @pl.when(k == 0)
    def _init():
        acc_ref[...] = jnp.zeros_like(acc_ref)

    # Skip structurally empty A blocks (MXU + DMA skipped: the A index map repeats
    # the previous block index for these steps, so no new tile is fetched either).
    @pl.when(k < cnt_ref[i])
    def _accumulate():
        kb = kmap_ref[i, k]
        off = pl.multiple_of(kb * tile, tile)
        z1_blk = z1_ref[pl.ds(off, tile), :]          # slice the VMEM-resident X@W1
        acc_ref[...] += jnp.dot(a_ref[...], z1_blk,
                                preferred_element_type=jnp.float32)

    @pl.when(k == pl.num_programs(1) - 1)
    def _finalize():
        h = acc_ref[...] + b1_ref[...]
        # Exact (erf) GELU, matching torch.nn.functional.gelu default, in f32.
        h = 0.5 * h * (1.0 + jax.lax.erf(h * _INV_SQRT2))
        h = _layer_norm(h, g1_ref[...], bt1_ref[...], hidden_true)
        # Dropout(p=0.1) is identity in eval mode.
        # TODO(synk): training-mode dropout (pltpu.prng_seed + prng_random_bits) not implemented.
        z2_ref[...] = (jnp.dot(h.astype(jnp.bfloat16), w2_ref[...],
                               preferred_element_type=jnp.float32)
                       + b2_ref[...]).astype(z2_ref.dtype)


def _layer2_kernel(kmap_ref, cnt_ref, a_ref, z2_ref, g2_ref, bt2_ref, o_ref,
                   *, tile, dout_true):
    """o = sum over nonzero k-blocks of A[i,k] @ Z2[k]; finalize: LayerNorm2 in place.
    The f32 output block is the accumulator (constant block index along k)."""
    i = pl.program_id(0)
    k = pl.program_id(1)

    @pl.when(k == 0)
    def _init():
        o_ref[...] = jnp.zeros_like(o_ref)

    @pl.when(k < cnt_ref[i])
    def _accumulate():
        kb = kmap_ref[i, k]
        off = pl.multiple_of(kb * tile, tile)
        z_blk = z2_ref[pl.ds(off, tile), :]           # slice the VMEM-resident Z2
        o_ref[...] += jnp.dot(a_ref[...], z_blk,
                              preferred_element_type=jnp.float32)

    @pl.when(k == pl.num_programs(1) - 1)
    def _finalize():
        o_ref[...] = _layer_norm(o_ref[...], g2_ref[...], bt2_ref[...], dout_true)


def _round_up(x, m):
    return (x + m - 1) // m * m


def _build_gcn_adjacency(edge_index, num_nodes, padded_nodes):
    """Dense GCN-normalized adjacency (bf16), PyG gcn_norm / add_remaining_self_loops
    semantics. Degrees are computed in O(E); normalized values are scattered directly
    into the padded bf16 buffer (no dense f32 intermediate). Also returns the
    (row, col) lists used for block-sparsity metadata."""
    src = edge_index[0]
    dst = edge_index[1]
    ew = jnp.ones(src.shape, jnp.float32)

    # add_remaining_self_loops: only nodes WITHOUT an existing self loop get one.
    is_loop = (src == dst).astype(jnp.float32)
    has_loop = jnp.zeros((num_nodes,), jnp.float32).at[dst].max(is_loop)
    loop_w = 1.0 - has_loop                       # 1 where a loop is added, else 0

    # Degrees on the target index (PyG gcn_norm), including self loops.
    deg = jnp.zeros((num_nodes,), jnp.float32).at[dst].add(ew) + loop_w
    d_inv_sqrt = jnp.where(deg > 0.0, jax.lax.rsqrt(deg), 0.0)

    loop_idx = jnp.arange(num_nodes, dtype=src.dtype)
    rows = jnp.concatenate([dst, loop_idx])       # out[dst] += w * x[src]
    cols = jnp.concatenate([src, loop_idx])
    vals = jnp.concatenate([d_inv_sqrt[dst] * d_inv_sqrt[src],
                            d_inv_sqrt * d_inv_sqrt * loop_w])

    a_hat = jnp.zeros((padded_nodes, padded_nodes), jnp.bfloat16)
    a_hat = a_hat.at[rows, cols].add(vals.astype(jnp.bfloat16))
    # TODO(synk): on v7x an fp8 (e4m3) A_hat would halve the dominant HBM stream.
    return a_hat, rows, cols


def _block_sparsity_metadata(rows, cols, n_blocks, tile):
    """Per row block: number of nonzero column blocks and a compacted column-block
    list, padded by repeating the last valid entry so skipped grid steps re-use the
    previously fetched A tile (no DMA)."""
    blk_r = (rows // tile).astype(jnp.int32)
    blk_c = (cols // tile).astype(jnp.int32)
    nnz = jnp.zeros((n_blocks, n_blocks), jnp.int32).at[blk_r, blk_c].add(1)
    mask = nnz > 0
    cnt = jnp.sum(mask, axis=1).astype(jnp.int32)
    col_ids = jnp.arange(n_blocks, dtype=jnp.int32)
    keys = jnp.where(mask, col_ids[None, :], n_blocks)   # sentinel = n_blocks
    kmap = jnp.sort(keys, axis=1)
    last = kmap[jnp.arange(n_blocks), jnp.maximum(cnt - 1, 0)]
    last = jnp.where(cnt > 0, last, 0)
    kmap = jnp.where(kmap >= n_blocks, last[:, None], kmap).astype(jnp.int32)
    return kmap, cnt


def _vmem_limit_bytes():
    # v5e/v6e have 128 MiB physical VMEM, v7x has 64 MiB; take ~75% with a cap.
    try:
        cap = int(pltpu.get_tpu_info().vmem_capacity_bytes)
    except Exception:
        cap = 64 * 1024 * 1024
    return max(32 * 1024 * 1024, min(cap * 3 // 4, 96 * 1024 * 1024))


@jax.jit
def graph_sage_forward(x, edge_index, params):
    n, din = x.shape
    hidden = params["w1"].shape[1]
    dout = params["w2"].shape[1]
    hidden_pad = _round_up(hidden, 128)
    dout_pad = _round_up(dout, 128)

    # Node axis: lane-dense multiple of 128; decoupled 512-wide tiles for big graphs.
    n_pad = _round_up(max(n, 128), 128)
    if n_pad <= 512:
        tile = n_pad
    else:
        tile = 512
        n_pad = _round_up(n_pad, tile)
    nb = n_pad // tile
    grid = (nb, nb)

    a_hat, rows, cols = _build_gcn_adjacency(edge_index, n, n_pad)
    kmap, cnt = _block_sparsity_metadata(rows, cols, nb, tile)

    # GCNConv1 reassociated: A @ (X W1) + b1. hidden <= input for this module, so
    # contracting the N^2 aggregation over `hidden` is the cheap association.
    # (For input_dim < hidden_dim, applying W1 after aggregation would be cheaper;
    #  this form is always correct.)
    xw1 = jnp.dot(x.astype(jnp.bfloat16), params["w1"].astype(jnp.bfloat16),
                  preferred_element_type=jnp.float32)
    z1 = jnp.zeros((n_pad, hidden_pad), jnp.bfloat16).at[:n, :hidden].set(
        xw1.astype(jnp.bfloat16))

    def pad_vec(v, d_pad, d_true):
        return jnp.zeros((1, d_pad), jnp.float32).at[:, :d_true].set(
            v.reshape(1, -1).astype(jnp.float32))

    b1 = pad_vec(params["b1"], hidden_pad, hidden)
    g1 = pad_vec(params["gamma1"], hidden_pad, hidden)
    bt1 = pad_vec(params["beta1"], hidden_pad, hidden)
    w2 = jnp.zeros((hidden_pad, dout_pad), jnp.bfloat16).at[:hidden, :dout].set(
        params["w2"].astype(jnp.bfloat16))
    b2 = pad_vec(params["b2"], dout_pad, dout)
    g2 = pad_vec(params["gamma2"], dout_pad, dout)
    bt2 = pad_vec(params["beta2"], dout_pad, dout)

    compiler_params = pltpu.CompilerParams(
        # TODO(synk): on v7x, pltpu.CORE_PARALLEL on dim 0 would shard the row tiles
        # across the chip's 2 TensorCores; kept portable here.
        dimension_semantics=("parallel", "arbitrary"),
        vmem_limit_bytes=_vmem_limit_bytes(),
    )

    def bcast(f):
        return pl.BlockSpec((1, f), lambda i, k, km, ct: (0, 0))

    # Data-dependent A tiles: column block comes from the compacted nonzero list.
    a_spec = pl.BlockSpec((tile, tile), lambda i, k, km, ct: (i, km[i, k]))

    # ---- Layer 1: Z2 = (LN1(GELU(A @ (X W1) + b1))) @ W2 + b2 ----
    cost1 = pl.CostEstimate(
        flops=2 * n_pad * n_pad * hidden_pad + 2 * n_pad * hidden_pad * dout_pad,
        transcendentals=n_pad * hidden_pad,
        bytes_accessed=2 * n_pad * n_pad                 # A (dense upper bound)
        + 2 * n_pad * hidden_pad                         # X@W1, fetched once
        + 2 * hidden_pad * dout_pad + 4 * (3 * hidden_pad + dout_pad)
        + 2 * n_pad * dout_pad,
    )
    z2 = pl.pallas_call(
        functools.partial(_layer1_kernel, tile=tile, hidden_true=hidden),
        out_shape=jax.ShapeDtypeStruct((n_pad, dout_pad), jnp.bfloat16),
        grid_spec=pltpu.PrefetchScalarGridSpec(
            num_scalar_prefetch=2,
            grid=grid,
            in_specs=[
                a_spec,                                                        # A_hat
                # Full-array, constant-index block: fetched once, VMEM-resident.
                pl.BlockSpec((n_pad, hidden_pad), lambda i, k, km, ct: (0, 0)),  # X@W1
                bcast(hidden_pad),                                             # b1
                bcast(hidden_pad),                                             # gamma1
                bcast(hidden_pad),                                             # beta1
                pl.BlockSpec((hidden_pad, dout_pad), lambda i, k, km, ct: (0, 0)),  # W2
                bcast(dout_pad),                                               # b2
            ],
            out_specs=pl.BlockSpec((tile, dout_pad), lambda i, k, km, ct: (i, 0)),
            scratch_shapes=[pltpu.VMEM((tile, hidden_pad), jnp.float32)],
        ),
        compiler_params=compiler_params,
        cost_estimate=cost1,
    )(kmap, cnt, a_hat, z1, b1, g1, bt1, w2, b2)

    # ---- Layer 2: out = LN2(A @ Z2) ----
    cost2 = pl.CostEstimate(
        flops=2 * n_pad * n_pad * dout_pad,
        transcendentals=n_pad,
        bytes_accessed=2 * n_pad * n_pad + 2 * n_pad * dout_pad
        + 8 * dout_pad + 4 * n_pad * dout_pad,
    )
    out_pad = pl.pallas_call(
        functools.partial(_layer2_kernel, tile=tile, dout_true=dout),
        out_shape=jax.ShapeDtypeStruct((n_pad, dout_pad), jnp.float32),
        grid_spec=pltpu.PrefetchScalarGridSpec(
            num_scalar_prefetch=2,
            grid=grid,
            in_specs=[
                a_spec,                                                        # A_hat
                pl.BlockSpec((n_pad, dout_pad), lambda i, k, km, ct: (0, 0)),  # Z2 (resident)
                bcast(dout_pad),                                               # gamma2
                bcast(dout_pad),                                               # beta2
            ],
            out_specs=pl.BlockSpec((tile, dout_pad), lambda i, k, km, ct: (i, 0)),
        ),
        compiler_params=compiler_params,
        cost_estimate=cost2,
    )(kmap, cnt, a_hat, z2, g2, bt2)

    return out_pad[:n, :dout]


def init_params(key, input_dim, hidden_dim, output_dim):
    k1, k2 = jax.random.split(key, 2)
    lim1 = (6.0 / (input_dim + hidden_dim)) ** 0.5
    lim2 = (6.0 / (hidden_dim + output_dim)) ** 0.5
    return {
        "w1": jax.random.uniform(k1, (input_dim, hidden_dim), jnp.float32, -lim1, lim1),
        "b1": jnp.zeros((hidden_dim,), jnp.float32),
        "gamma1": jnp.ones((hidden_dim,), jnp.float32),
        "beta1": jnp.zeros((hidden_dim,), jnp.float32),
        "w2": jax.random.uniform(k2, (hidden_dim, output_dim), jnp.float32, -lim2, lim2),
        "b2": jnp.zeros((output_dim,), jnp.float32),
        "gamma2": jnp.ones((output_dim,), jnp.float32),
        "beta2": jnp.zeros((output_dim,), jnp.float32),
    }


if __name__ == "__main__":
    # Small node/edge counts; feature dims match the module defaults
    # (input 768, hidden 512, output 342 -> exercises the lane-padding + masked LN path).
    N, E = 64, 256
    INPUT_DIM, HIDDEN_DIM, OUTPUT_DIM = 768, 512, 342

    key = jax.random.PRNGKey(0)
    kx, ke, kp = jax.random.split(key, 3)

    x = jax.random.normal(kx, (N, INPUT_DIM), jnp.float32)
    edge_index = jax.random.randint(ke, (2, E), 0, N, jnp.int32)
    params = init_params(kp, INPUT_DIM, HIDDEN_DIM, OUTPUT_DIM)

    out = graph_sage_forward(x, edge_index, params)
    out = jax.block_until_ready(out)

    assert out.shape == (N, OUTPUT_DIM)
    assert bool(jnp.all(jnp.isfinite(out)))
    print("KERNEL_OK")
</pallas_src>

<mosaic_0001>
module attributes {stable_mosaic.version = 11 : i64} {
  func.func @_layer2_kernel(%arg0: i32, %arg1: i32, %arg2: memref<1x1xi32, #tpu.memory_space<smem>>, %arg3: memref<1xi32, #tpu.memory_space<smem>>, %arg4: memref<128x128xbf16, #tpu.memory_space<vmem>>, %arg5: memref<128x384xbf16, #tpu.memory_space<vmem>>, %arg6: memref<1x384xf32, #tpu.memory_space<vmem>>, %arg7: memref<1x384xf32, #tpu.memory_space<vmem>>, %arg8: memref<128x384xf32, #tpu.memory_space<vmem>>) attributes {dimension_semantics = [#tpu.dimension_semantics<parallel>, #tpu.dimension_semantics<arbitrary>], iteration_bounds = array<i64: 1, 1>, scalar_prefetch = 2 : i64, scratch_operands = 0 : i64, tpu.core_type = #tpu.core_type<tc>, window_params = [{transform_indices = @transform_0, window_bounds = array<i64: 128, 128>}, {pipeline_mode = #tpu.pipeline_mode<synchronous>, transform_indices = @transform_1, window_bounds = array<i64: 128, 384>}, {pipeline_mode = #tpu.pipeline_mode<synchronous>, transform_indices = @transform_2, window_bounds = array<i64: 1, 384>}, {pipeline_mode = #tpu.pipeline_mode<synchronous>, transform_indices = @transform_3, window_bounds = array<i64: 1, 384>}, {transform_indices = @transform_4, window_bounds = array<i64: 128, 384>}]} {
    %c0_i32 = arith.constant 0 : i32
    %0 = arith.cmpi eq, %arg1, %c0_i32 : i32
    %1 = arith.extui %0 : i1 to i32
    %c0_i32_0 = arith.constant 0 : i32
    %2 = arith.cmpi ne, %1, %c0_i32_0 : i32
    scf.if %2 {
      %cst = arith.constant 0.000000e+00 : f32
      %11 = vector.broadcast %cst : f32 to vector<128x384xf32>
      %c0 = arith.constant 0 : index
      %c0_4 = arith.constant 0 : index
      %12 = vector.load %arg8[%c0, %c0_4] : memref<128x384xf32, #tpu.memory_space<vmem>>, vector<128x384xf32>
      tpu.vector_store %arg8[%c0, %c0_4], %11 {strides = array<i32>} : memref<128x384xf32, #tpu.memory_space<vmem>>, vector<128x384xf32>,
    } else {
    }
    %3 = arith.index_cast %arg0 : i32 to index
    %4 = memref.load %arg3[%3] : memref<1xi32, #tpu.memory_space<smem>>
    %5 = arith.cmpi slt, %arg1, %4 : i32
    %6 = arith.extui %5 : i1 to i32
    %c0_i32_1 = arith.constant 0 : i32
    %7 = arith.cmpi ne, %6, %c0_i32_1 : i32
    scf.if %7 {
      %11 = arith.index_cast %arg0 : i32 to index
      %12 = arith.index_cast %arg1 : i32 to index
      %13 = memref.load %arg2[%11, %12] : memref<1x1xi32, #tpu.memory_space<smem>>
      %c128_i32 = arith.constant 128 : i32
      %14 = arith.muli %13, %c128_i32 : i32
      %15 = tpu.assume_multiple %14, 128 : i32
      %16 = arith.index_cast %15 : i32 to index
      %c0 = arith.constant 0 : index
      %17 = vector.load %arg5[%16, %c0] : memref<128x384xbf16, #tpu.memory_space<vmem>>, vector<128x384xbf16>
      %c0_4 = arith.constant 0 : index
      %c0_5 = arith.constant 0 : index
      %18 = vector.load %arg8[%c0_4, %c0_5] : memref<128x384xf32, #tpu.memory_space<vmem>>, vector<128x384xf32>
      %c0_6 = arith.constant 0 : index
      %c0_7 = arith.constant 0 : index
      %19 = vector.load %arg4[%c0_6, %c0_7] : memref<128x128xbf16, #tpu.memory_space<vmem>>, vector<128x128xbf16>
      %cst = arith.constant dense<0.000000e+00> : vector<128x384xf32>
      %20 = tpu.matmul %19, %17, %cst {dimension_numbers = #tpu.dot_dimension_numbers<[1], [0], [0], [1], [0, 0, 1, 1], [], []>} : vector<128x128xbf16>, vector<128x384xbf16>, vector<128x384xf32> -> vector<128x384xf32>
      %21 = arith.addf %18, %20 : vector<128x384xf32>
      %c0_8 = arith.constant 0 : index
      %c0_9 = arith.constant 0 : index
      %22 = vector.load %arg8[%c0_8, %c0_9] : memref<128x384xf32, #tpu.memory_space<vmem>>, vector<128x384xf32>
      tpu.vector_store %arg8[%c0_8, %c0_9], %21 {strides = array<i32>} : memref<128x384xf32, #tpu.memory_space<vmem>>, vector<128x384xf32>,
    } else {
    }
    %c0_i32_2 = arith.constant 0 : i32
    %8 = arith.cmpi eq, %arg1, %c0_i32_2 : i32
    %9 = arith.extui %8 : i1 to i32
    %c0_i32_3 = arith.constant 0 : i32
    %10 = arith.cmpi ne, %9, %c0_i32_3 : i32
    scf.if %10 {
      %c0 = arith.constant 0 : index
      %c0_4 = arith.constant 0 : index
      %11 = vector.load %arg8[%c0, %c0_4] : memref<128x384xf32, #tpu.memory_space<vmem>>, vector<128x384xf32>
      %c0_5 = arith.constant 0 : index
      %c0_6 = arith.constant 0 : index
      %12 = vector.load %arg6[%c0_5, %c0_6] : memref<1x384xf32, #tpu.memory_space<vmem>>, vector<1x384xf32>
      %c0_7 = arith.constant 0 : index
      %c0_8 = arith.constant 0 : index
      %13 = vector.load %arg7[%c0_7, %c0_8] : memref<1x384xf32, #tpu.memory_space<vmem>>, vector<1x384xf32>
      %14 = tpu.iota {dimensions = array<i32: 1>} : vector<1x384xi32>
      %c342_i32 = arith.constant 342 : i32
      %15 = vector.broadcast %c342_i32 : i32 to vector<1x384xi32>
      %16 = arith.cmpi slt, %14, %15 : vector<1x384xi32>
      %cst = arith.constant 0.000000e+00 : f32
      %17 = vector.shape_cast %16 : vector<1x384xi1> to vector<1x384xi1>
      %18 = vector.broadcast %17 : vector<1x384xi1> to vector<128x384xi1>
      %19 = vector.broadcast %cst : f32 to vector<128x384xf32>
      %20 = arith.select %18, %11, %19 : vector<128x384xi1>, vector<128x384xf32>
      %cst_9 = arith.constant dense<0.000000e+00> : vector<128xf32>
      %21 = vector.multi_reduction <add>, %20, %cst_9 [1] : vector<128x384xf32> to vector<128xf32>
      %22 = vector.shape_cast %21 : vector<128xf32> to vector<128x1xf32>
      %cst_10 = arith.constant 0.00292397663 : f32
      %23 = vector.broadcast %cst_10 : f32 to vector<128x1xf32>
      %24 = arith.mulf %22, %23 : vector<128x1xf32>
      %25 = vector.broadcast %24 : vector<128x1xf32> to vector<128x384xf32>
      %26 = arith.subf %11, %25 : vector<128x384xf32>
      %cst_11 = arith.constant 0.000000e+00 : f32
      %27 = vector.shape_cast %16 : vector<1x384xi1> to vector<1x384xi1>
      %28 = vector.broadcast %27 : vector<1x384xi1> to vector<128x384xi1>
      %29 = vector.broadcast %cst_11 : f32 to vector<128x384xf32>
      %30 = arith.select %28, %26, %29 : vector<128x384xi1>, vector<128x384xf32>
      %31 = arith.mulf %30, %30 : vector<128x384xf32>
      %cst_12 = arith.constant dense<0.000000e+00> : vector<128xf32>
      %32 = vector.multi_reduction <add>, %31, %cst_12 [1] : vector<128x384xf32> to vector<128xf32>
      %33 = vector.shape_cast %32 : vector<128xf32> to vector<128x1xf32>
      %cst_13 = arith.constant 0.00292397663 : f32
      %34 = vector.broadcast %cst_13 : f32 to vector<128x1xf32>
      %35 = arith.mulf %33, %34 : vector<128x1xf32>
      %36 = vector.broadcast %24 : vector<128x1xf32> to vector<128x384xf32>
      %37 = arith.subf %11, %36 : vector<128x384xf32>
      %cst_14 = arith.constant 9.99999974E-6 : f32
      %38 = vector.broadcast %cst_14 : f32 to vector<128x1xf32>
      %39 = arith.addf %35, %38 : vector<128x1xf32>
      %40 = math.rsqrt %39 : vector<128x1xf32>
      %41 = vector.broadcast %40 : vector<128x1xf32> to vector<128x384xf32>
      %42 = arith.mulf %37, %41 : vector<128x384xf32>
      %43 = vector.broadcast %12 : vector<1x384xf32> to vector<128x384xf32>
      %44 = arith.mulf %42, %43 : vector<128x384xf32>
      %45 = vector.broadcast %13 : vector<1x384xf32> to vector<128x384xf32>
      %46 = arith.addf %44, %45 : vector<128x384xf32>
      %c0_15 = arith.constant 0 : index
      %c0_16 = arith.constant 0 : index
      %47 = vector.load %arg8[%c0_15, %c0_16] : memref<128x384xf32, #tpu.memory_space<vmem>>, vector<128x384xf32>
      tpu.vector_store %arg8[%c0_15, %c0_16], %46 {strides = array<i32>} : memref<128x384xf32, #tpu.memory_space<vmem>>, vector<128x384xf32>,
    } else {
    }
    return
  }
  func.func @transform_0(%arg0: i32, %arg1: i32, %arg2: memref<1x1xi32, #tpu.memory_space<smem>>, %arg3: memref<1xi32, #tpu.memory_space<smem>>) -> (i32, i32) {
    %0 = arith.index_cast %arg0 : i32 to index
    %1 = arith.index_cast %arg1 : i32 to index
    %2 = memref.load %arg2[%0, %1] : memref<1x1xi32, #tpu.memory_space<smem>>
    %c0_i32 = arith.constant 0 : i32
    return %arg0, %2 : i32, i32
  }
  func.func @transform_1(%arg0: i32, %arg1: i32, %arg2: memref<1x1xi32, #tpu.memory_space<smem>>, %arg3: memref<1xi32, #tpu.memory_space<smem>>) -> (i32, i32) {
    %c0_i32 = arith.constant 0 : i32
    %c0_i32_0 = arith.constant 0 : i32
    %c0_i32_1 = arith.constant 0 : i32
    return %c0_i32, %c0_i32_0 : i32, i32
  }
  func.func @transform_2(%arg0: i32, %arg1: i32, %arg2: memref<1x1xi32, #tpu.memory_space<smem>>, %arg3: memref<1xi32, #tpu.memory_space<smem>>) -> (i32, i32) {
    %c0_i32 = arith.constant 0 : i32
    %c0_i32_0 = arith.constant 0 : i32
    %c0_i32_1 = arith.constant 0 : i32
    return %c0_i32, %c0_i32_0 : i32, i32
  }
  func.func @transform_3(%arg0: i32, %arg1: i32, %arg2: memref<1x1xi32, #tpu.memory_space<smem>>, %arg3: memref<1xi32, #tpu.memory_space<smem>>) -> (i32, i32) {
    %c0_i32 = arith.constant 0 : i32
    %c0_i32_0 = arith.constant 0 : i32
    %c0_i32_1 = arith.constant 0 : i32
    return %c0_i32, %c0_i32_0 : i32, i32
  }
  func.func @transform_4(%arg0: i32, %arg1: i32, %arg2: memref<1x1xi32, #tpu.memory_space<smem>>, %arg3: memref<1xi32, #tpu.memory_space<smem>>) -> (i32, i32) {
    %c0_i32 = arith.constant 0 : i32
    %c0_i32_0 = arith.constant 0 : i32
    return %arg0, %c0_i32 : i32, i32
  }
}

module attributes {stable_mosaic.version = 11 : i64} {
  func.func @_layer1_kernel(%arg0: i32, %arg1: i32, %arg2: memref<1x1xi32, #tpu.memory_space<smem>>, %arg3: memref<1xi32, #tpu.memory_space<smem>>, %arg4: memref<128x128xbf16, #tpu.memory_space<vmem>>, %arg5: memref<128x512xbf16, #tpu.memory_space<vmem>>, %arg6: memref<1x512xf32, #tpu.memory_space<vmem>>, %arg7: memref<1x512xf32, #tpu.memory_space<vmem>>, %arg8: memref<1x512xf32, #tpu.memory_space<vmem>>, %arg9: memref<512x384xbf16, #tpu.memory_space<vmem>>, %arg10: memref<1x384xf32, #tpu.memory_space<vmem>>, %arg11: memref<128x384xbf16, #tpu.memory_space<vmem>>, %arg12: memref<128x512xf32, #tpu.memory_space<vmem>>) attributes {dimension_semantics = [#tpu.dimension_semantics<parallel>, #tpu.dimension_semantics<arbitrary>], iteration_bounds = array<i64: 1, 1>, scalar_prefetch = 2 : i64, scratch_operands = 1 : i64, tpu.core_type = #tpu.core_type<tc>, window_params = [{transform_indices = @transform_0, window_bounds = array<i64: 128, 128>}, {pipeline_mode = #tpu.pipeline_mode<synchronous>, transform_indices = @transform_1, window_bounds = array<i64: 128, 512>}, {pipeline_mode = #tpu.pipeline_mode<synchronous>, transform_indices = @transform_2, window_bounds = array<i64: 1, 512>}, {pipeline_mode = #tpu.pipeline_mode<synchronous>, transform_indices = @transform_3, window_bounds = array<i64: 1, 512>}, {pipeline_mode = #tpu.pipeline_mode<synchronous>, transform_indices = @transform_4, window_bounds = array<i64: 1, 512>}, {pipeline_mode = #tpu.pipeline_mode<synchronous>, transform_indices = @transform_5, window_bounds = array<i64: 512, 384>}, {pipeline_mode = #tpu.pipeline_mode<synchronous>, transform_indices = @transform_6, window_bounds = array<i64: 1, 384>}, {transform_indices = @transform_7, window_bounds = array<i64: 128, 384>}]} {
    %c0_i32 = arith.constant 0 : i32
    %0 = arith.cmpi eq, %arg1, %c0_i32 : i32
    %1 = arith.extui %0 : i1 to i32
    %c0_i32_0 = arith.constant 0 : i32
    %2 = arith.cmpi ne, %1, %c0_i32_0 : i32
    scf.if %2 {
      %cst = arith.constant 0.000000e+00 : f32
      %11 = vector.broadcast %cst : f32 to vector<128x512xf32>
      %c0 = arith.constant 0 : index
      %c0_4 = arith.constant 0 : index
      %12 = vector.load %arg12[%c0, %c0_4] : memref<128x512xf32, #tpu.memory_space<vmem>>, vector<128x512xf32>
      tpu.vector_store %arg12[%c0, %c0_4], %11 {strides = array<i32>} : memref<128x512xf32, #tpu.memory_space<vmem>>, vector<128x512xf32>,
    } else {
    }
    %3 = arith.index_cast %arg0 : i32 to index
    %4 = memref.load %arg3[%3] : memref<1xi32, #tpu.memory_space<smem>>
    %5 = arith.cmpi slt, %arg1, %4 : i32
    %6 = arith.extui %5 : i1 to i32
    %c0_i32_1 = arith.constant 0 : i32
    %7 = arith.cmpi ne, %6, %c0_i32_1 : i32
    scf.if %7 {
      %11 = arith.index_cast %arg0 : i32 to index
      %12 = arith.index_cast %arg1 : i32 to index
      %13 = memref.load %arg2[%11, %12] : memref<1x1xi32, #tpu.memory_space<smem>>
      %c128_i32 = arith.constant 128 : i32
      %14 = arith.muli %13, %c128_i32 : i32
      %15 = tpu.assume_multiple %14, 128 : i32
      %16 = arith.index_cast %15 : i32 to index
      %c0 = arith.constant 0 : index
      %17 = vector.load %arg5[%16, %c0] : memref<128x512xbf16, #tpu.memory_space<vmem>>, vector<128x512xbf16>
      %c0_4 = arith.constant 0 : index
      %c0_5 = arith.constant 0 : index
      %18 = vector.load %arg12[%c0_4, %c0_5] : memref<128x512xf32, #tpu.memory_space<vmem>>, vector<128x512xf32>
      %c0_6 = arith.constant 0 : index
      %c0_7 = arith.constant 0 : index
      %19 = vector.load %arg4[%c0_6, %c0_7] : memref<128x128xbf16, #tpu.memory_space<vmem>>, vector<128x128xbf16>
      %cst = arith.constant dense<0.000000e+00> : vector<128x512xf32>
      %20 = tpu.matmul %19, %17, %cst {dimension_numbers = #tpu.dot_dimension_numbers<[1], [0], [0], [1], [0, 0, 1, 1], [], []>} : vector<128x128xbf16>, vector<128x512xbf16>, vector<128x512xf32> -> vector<128x512xf32>
      %21 = arith.addf %18, %20 : vector<128x512xf32>
      %c0_8 = arith.constant 0 : index
      %c0_9 = arith.constant 0 : index
      %22 = vector.load %arg12[%c0_8, %c0_9] : memref<128x512xf32, #tpu.memory_space<vmem>>, vector<128x512xf32>
      tpu.vector_store %arg12[%c0_8, %c0_9], %21 {strides = array<i32>} : memref<128x512xf32, #tpu.memory_space<vmem>>, vector<128x512xf32>,
    } else {
    }
    %c0_i32_2 = arith.constant 0 : i32
    %8 = arith.cmpi eq, %arg1, %c0_i32_2 : i32
    %9 = arith.extui %8 : i1 to i32
    %c0_i32_3 = arith.constant 0 : i32
    %10 = arith.cmpi ne, %9, %c0_i32_3 : i32
    scf.if %10 {
      %c0 = arith.constant 0 : index
      %c0_4 = arith.constant 0 : index
      %11 = vector.load %arg12[%c0, %c0_4] : memref<128x512xf32, #tpu.memory_space<vmem>>, vector<128x512xf32>
      %c0_5 = arith.constant 0 : index
      %c0_6 = arith.constant 0 : index
      %12 = vector.load %arg6[%c0_5, %c0_6] : memref<1x512xf32, #tpu.memory_space<vmem>>, vector<1x512xf32>
      %13 = vector.broadcast %12 : vector<1x512xf32> to vector<128x512xf32>
      %14 = arith.addf %11, %13 : vector<128x512xf32>
      %cst = arith.constant 5.000000e-01 : f32
      %15 = vector.broadcast %cst : f32 to vector<128x512xf32>
      %16 = arith.mulf %15, %14 : vector<128x512xf32>
      %cst_7 = arith.constant 0.707106769 : f32
      %17 = vector.broadcast %cst_7 : f32 to vector<128x512xf32>
      %18 = arith.mulf %14, %17 : vector<128x512xf32>
      %19 = math.erf %18 : vector<128x512xf32>
      %cst_8 = arith.constant 1.000000e+00 : f32
      %20 = vector.broadcast %cst_8 : f32 to vector<128x512xf32>
      %21 = arith.addf %20, %19 : vector<128x512xf32>
      %22 = arith.mulf %16, %21 : vector<128x512xf32>
      %c0_9 = arith.constant 0 : index
      %c0_10 = arith.constant 0 : index
      %23 = vector.load %arg7[%c0_9, %c0_10] : memref<1x512xf32, #tpu.memory_space<vmem>>, vector<1x512xf32>
      %c0_11 = arith.constant 0 : index
      %c0_12 = arith.constant 0 : index
      %24 = vector.load %arg8[%c0_11, %c0_12] : memref<1x512xf32, #tpu.memory_space<vmem>>, vector<1x512xf32>
      %cst_13 = arith.constant dense<0.000000e+00> : vector<128xf32>
      %25 = vector.multi_reduction <add>, %22, %cst_13 [1] : vector<128x512xf32> to vector<128xf32>
      %26 = vector.shape_cast %25 : vector<128xf32> to vector<128x1xf32>
      %cst_14 = arith.constant 5.120000e+02 : f32
      %27 = vector.broadcast %cst_14 : f32 to vector<128x1xf32>
      %28 = arith.divf %26, %27 : vector<128x1xf32>
      %29 = vector.broadcast %28 : vector<128x1xf32> to vector<128x512xf32>
      %30 = arith.subf %22, %29 : vector<128x512xf32>
      %31 = arith.mulf %30, %30 : vector<128x512xf32>
      %cst_15 = arith.constant dense<0.000000e+00> : vector<128xf32>
      %32 = vector.multi_reduction <add>, %31, %cst_15 [1] : vector<128x512xf32> to vector<128xf32>
      %33 = vector.shape_cast %32 : vector<128xf32> to vector<128x1xf32>
      %cst_16 = arith.constant 5.120000e+02 : f32
      %34 = vector.broadcast %cst_16 : f32 to vector<128x1xf32>
      %35 = arith.divf %33, %34 : vector<128x1xf32>
      %36 = vector.broadcast %28 : vector<128x1xf32> to vector<128x512xf32>
      %37 = arith.subf %22, %36 : vector<128x512xf32>
      %cst_17 = arith.constant 9.99999974E-6 : f32
      %38 = vector.broadcast %cst_17 : f32 to vector<128x1xf32>
      %39 = arith.addf %35, %38 : vector<128x1xf32>
      %40 = math.rsqrt %39 : vector<128x1xf32>
      %41 = vector.broadcast %40 : vector<128x1xf32> to vector<128x512xf32>
      %42 = arith.mulf %37, %41 : vector<128x512xf32>
      %43 = vector.broadcast %23 : vector<1x512xf32> to vector<128x512xf32>
      %44 = arith.mulf %42, %43 : vector<128x512xf32>
      %45 = vector.broadcast %24 : vector<1x512xf32> to vector<128x512xf32>
      %46 = arith.addf %44, %45 : vector<128x512xf32>
      %47 = arith.truncf %46 : vector<128x512xf32> to vector<128x512xbf16>
      %c0_18 = arith.constant 0 : index
      %c0_19 = arith.constant 0 : index
      %48 = vector.load %arg9[%c0_18, %c0_19] : memref<512x384xbf16, #tpu.memory_space<vmem>>, vector<512x384xbf16>
      %cst_20 = arith.constant dense<0.000000e+00> : vector<128x384xf32>
      %49 = tpu.matmul %47, %48, %cst_20 {dimension_numbers = #tpu.dot_dimension_numbers<[1], [0], [0], [1], [0, 0, 1, 1], [], []>} : vector<128x512xbf16>, vector<512x384xbf16>, vector<128x384xf32> -> vector<128x384xf32>
      %c0_21 = arith.constant 0 : index
      %c0_22 = arith.constant 0 : index
      %50 = vector.load %arg10[%c0_21, %c0_22] : memref<1x384xf32, #tpu.memory_space<vmem>>, vector<1x384xf32>
      %51 = vector.broadcast %50 : vector<1x384xf32> to vector<128x384xf32>
      %52 = arith.addf %49, %51 : vector<128x384xf32>
      %53 = arith.truncf %52 : vector<128x384xf32> to vector<128x384xbf16>
      %c0_23 = arith.constant 0 : index
      %c0_24 = arith.constant 0 : index
      %54 = vector.load %arg11[%c0_23, %c0_24] : memref<128x384xbf16, #tpu.memory_space<vmem>>, vector<128x384xbf16>
      tpu.vector_store %arg11[%c0_23, %c0_24], %53 {strides = array<i32>} : memref<128x384xbf16, #tpu.memory_space<vmem>>, vector<128x384xbf16>,
    } else {
    }
    return
  }
  func.func @transform_0(%arg0: i32, %arg1: i32, %arg2: memref<1x1xi32, #tpu.memory_space<smem>>, %arg3: memref<1xi32, #tpu.memory_space<smem>>) -> (i32, i32) {
    %0 = arith.index_cast %arg0 : i32 to index
    %1 = arith.index_cast %arg1 : i32 to index
    %2 = memref.load %arg2[%0, %1] : memref<1x1xi32, #tpu.memory_space<smem>>
    %c0_i32 = arith.constant 0 : i32
    return %arg0, %2 : i32, i32
  }
  func.func @transform_1(%arg0: i32, %arg1: i32, %arg2: memref<1x1xi32, #tpu.memory_space<smem>>, %arg3: memref<1xi32, #tpu.memory_space<smem>>) -> (i32, i32) {
    %c0_i32 = arith.constant 0 : i32
    %c0_i32_0 = arith.constant 0 : i32
    %c0_i32_1 = arith.constant 0 : i32
    return %c0_i32, %c0_i32_0 : i32, i32
  }
  func.func @transform_2(%arg0: i32, %arg1: i32, %arg2: memref<1x1xi32, #tpu.memory_space<smem>>, %arg3: memref<1xi32, #tpu.memory_space<smem>>) -> (i32, i32) {
    %c0_i32 = arith.constant 0 : i32
    %c0_i32_0 = arith.constant 0 : i32
    %c0_i32_1 = arith.constant 0 : i32
    return %c0_i32, %c0_i32_0 : i32, i32
  }
  func.func @transform_3(%arg0: i32, %arg1: i32, %arg2: memref<1x1xi32, #tpu.memory_space<smem>>, %arg3: memref<1xi32, #tpu.memory_space<smem>>) -> (i32, i32) {
    %c0_i32 = arith.constant 0 : i32
    %c0_i32_0 = arith.constant 0 : i32
    %c0_i32_1 = arith.constant 0 : i32
    return %c0_i32, %c0_i32_0 : i32, i32
  }
  func.func @transform_4(%arg0: i32, %arg1: i32, %arg2: memref<1x1xi32, #tpu.memory_space<smem>>, %arg3: memref<1xi32, #tpu.memory_space<smem>>) -> (i32, i32) {
    %c0_i32 = arith.constant 0 : i32
    %c0_i32_0 = arith.constant 0 : i32
    %c0_i32_1 = arith.constant 0 : i32
    return %c0_i32, %c0_i32_0 : i32, i32
  }
  func.func @transform_5(%arg0: i32, %arg1: i32, %arg2: memref<1x1xi32, #tpu.memory_space<smem>>, %arg3: memref<1xi32, #tpu.memory_space<smem>>) -> (i32, i32) {
    %c0_i32 = arith.constant 0 : i32
    %c0_i32_0 = arith.constant 0 : i32
    %c0_i32_1 = arith.constant 0 : i32
    return %c0_i32, %c0_i32_0 : i32, i32
  }
  func.func @transform_6(%arg0: i32, %arg1: i32, %arg2: memref<1x1xi32, #tpu.memory_space<smem>>, %arg3: memref<1xi32, #tpu.memory_space<smem>>) -> (i32, i32) {
    %c0_i32 = arith.constant 0 : i32
    %c0_i32_0 = arith.constant 0 : i32
    %c0_i32_1 = arith.constant 0 : i32
    return %c0_i32, %c0_i32_0 : i32, i32
  }
  func.func @transform_7(%arg0: i32, %arg1: i32, %arg2: memref<1x1xi32, #tpu.memory_space<smem>>, %arg3: memref<1xi32, #tpu.memory_space<smem>>) -> (i32, i32) {
    %c0_i32 = arith.constant 0 : i32
    %c0_i32_0 = arith.constant 0 : i32
    return %arg0, %c0_i32 : i32, i32
  }
}

</mosaic_0001>

<llo_original>
// kernel: graph_sage_forward.3
$region0: #{graph_sage_forward.3}
  #allocation0 [shape = 'u32[]', space=smem, size = 0x4, offset = 0x4, fixed_abs, tag = 'smem constant byte address 0x4 - core index']
  #allocation1 [shape = 'u32[72,128]{1,0:T(1,128)}', space=vmem, size = 0x9000, scoped, tag = 'internal scratch']
  #allocation2 [shape = 's32[1]{0}', space=sflag, size = 0x4, scoped, tag = 'scoped memory for graph_sage_forward.3']
  #allocation3 [shape = 's32[1,1]{1,0:T(1,128)S(6)}', space=smem, size = 0x200, scoped, tag = 'prefetched SMEM operand 0']
  #allocation4 [shape = 's32[1]{0:T(128)S(6)}', space=smem, size = 0x200, scoped, tag = 'prefetched SMEM operand 1']
  %s0 = inlined_call_operand.<no memory space> [shape: s32[1,1], index: 0, kind: input, shape index: {}]
  %s1 = inlined_call_operand.<no memory space> [shape: s32[1], index: 1, kind: input, shape index: {}]
  %s2 = inlined_call_operand.vmem [shape: bf16[128,128], index: 2, kind: input, shape index: {}]
  %s3 = inlined_call_operand.vmem [shape: bf16[128,384], index: 3, kind: input, shape index: {}]
  %s4 = inlined_call_operand.vmem [shape: f32[1,384], index: 4, kind: input, shape index: {}]
  %s5 = inlined_call_operand.vmem [shape: f32[1,384], index: 5, kind: input, shape index: {}]
  %s6 = inlined_call_operand.vmem [shape: f32[128,384], index: 6, kind: output, shape index: {}]
  %s7 = sld [smem:[#allocation0]]
  $region38: #{graph_sage_forward.3} parent=0
    _
  %s9 = ssub.s32 1, %s7
  %s10 = scalar_select 0, %s9, %s7
  %11 = sst [smem:[#allocation3]] %s0
  %12 = sst [smem:[#allocation4]] %s1
  // Predicated region
  $region2: #{graph_sage_forward.3} parent=0 // pred_check
    _
  $region3: #{graph_sage_forward.3} parent=0 // pred_check_branch
    %14 = sbr.rel (0) target = $region5
  $region4: #{graph_sage_forward.3} parent=0 // pred_region
    %s15 = sadd.s32 0, 0
    %s16 = smul.u32 %s15, 128
    %s17 = sadd.s32 %s16, 0
    %s18 = sld [smem:[#allocation3 + %s17]]
    %p19 = scmp.lt.s32.totalorder %s18, 0
    %s20 = scalar_select %p19, %s18, 0
    %s21 = smul.addr %s20, 4
    %s22 = scalar_lea.vmem %s2, %s21
    %s23 = sadd.s32 0, 0
    %s24 = smul.u32 %s23, 128
    %s25 = sadd.s32 %s24, 0
    %s26 = sld [smem:[#allocation3 + %s25]]
  $region5: #{graph_sage_forward.3} parent=0 // pred_fallthru
    _
  // Predicated region
  $region6: #{graph_sage_forward.3} parent=0 // pred_check
    _
  $region7: #{graph_sage_forward.3} parent=0 // pred_check_branch
    %28 = sbr.rel (0) target = $region9
  $region8: #{graph_sage_forward.3} parent=0 // pred_region
    _
  $region9: #{graph_sage_forward.3} parent=0 // pred_fallthru
    _
  // Predicated region
  $region10: #{graph_sage_forward.3} parent=0 // pred_check
    _
  $region11: #{graph_sage_forward.3} parent=0 // pred_check_branch
    %30 = sbr.rel (0) target = $region13
  $region12: #{graph_sage_forward.3} parent=0 // pred_region
    _
  $region13: #{graph_sage_forward.3} parent=0 // pred_fallthru
    _
  // Predicated region
  $region14: #{graph_sage_forward.3} parent=0 // pred_check
    _
  $region15: #{graph_sage_forward.3} parent=0 // pred_check_branch
    %32 = sbr.rel (0) target = $region17
  $region16: #{graph_sage_forward.3} parent=0 // pred_region
    _
  $region17: #{graph_sage_forward.3} parent=0 // pred_fallthru
    _
  %s33 = sadd.s32 0, 0
  %s34 = smul.u32 %s33, 128
  %s35 = sadd.s32 %s34, 0
  %s36 = sld [smem:[#allocation3 + %s35]]
  %p37 = scmp.lt.s32.totalorder %s36, 0
  %s38 = scalar_select %p37, %s36, 0
  %s39 = smul.addr %s38, 4
  %s40 = scalar_lea.vmem %s2, %s39
  %s41 = sadd.s32 0, 0
  %s42 = smul.u32 %s41, 128
  %s43 = sadd.s32 %s42, 0
  %s44 = sld [smem:[#allocation3 + %s43]]
  %p45 = scmp.lt.s32.totalorder %s44, 0
  %s46 = scalar_select %p45, %s44, 0
  %s47 = smul.addr %s46, 4
  %s48 = scalar_lea.vmem %s2, %s47
  %s49 = sadd.s32 0, 0
  %s50 = smul.u32 %s49, 128
  %s51 = sadd.s32 %s50, 0
  %s52 = sld [smem:[#allocation3 + %s51]]
  %p53 = scmp.eq.s32.totalorder 0, 0
  // Predicated region
  $region18: #{graph_sage_forward.3} parent=0 // pred_check
    %p54 = pneg %p53
  $region19: #{graph_sage_forward.3} parent=0 // pred_check_branch
    %56 = sbr.rel (%p54) target = $region21
  $region20: #{graph_sage_forward.3} parent=0 // pred_region
    %57 = vst [vmem:[%s6] sm:$0xff] 0.0
    %58 = vst [vmem:[%s6 + $0x8] sm:$0xff] 0.0
    %59 = vst [vmem:[%s6 + $0x10] sm:$0xff] 0.0
    %60 = vst [vmem:[%s6 + $0x18] sm:$0xff] 0.0
    %61 = vst [vmem:[%s6 + $0x20] sm:$0xff] 0.0
    %62 = vst [vmem:[%s6 + $0x28] sm:$0xff] 0.0
    %63 = vst [vmem:[%s6 + $0x30] sm:$0xff] 0.0
    %64 = vst [vmem:[%s6 + $0x38] sm:$0xff] 0.0
    %65 = vst [vmem:[%s6 + $0x40] sm:$0xff] 0.0
    %66 = vst [vmem:[%s6 + $0x48] sm:$0xff] 0.0
    %67 = vst [vmem:[%s6 + $0x50] sm:$0xff] 0.0
    %68 = vst [vmem:[%s6 + $0x58] sm:$0xff] 0.0
    %69 = vst [vmem:[%s6 + $0x60] sm:$0xff] 0.0
    %70 = vst [vmem:[%s6 + $0x68] sm:$0xff] 0.0
    %71 = vst [vmem:[%s6 + $0x70] sm:$0xff] 0.0
    %72 = vst [vmem:[%s6 + $0x78] sm:$0xff] 0.0
    %73 = vst [vmem:[%s6 + $0x80] sm:$0xff] 0.0
    %74 = vst [vmem:[%s6 + $0x88] sm:$0xff] 0.0
    %75 = vst [vmem:[%s6 + $0x90] sm:$0xff] 0.0
    %76 = vst [vmem:[%s6 + $0x98] sm:$0xff] 0.0
    %77 = vst [vmem:[%s6 + $0xa0] sm:$0xff] 0.0
    %78 = vst [vmem:[%s6 + $0xa8] sm:$0xff] 0.0
    %79 = vst [vmem:[%s6 + $0xb0] sm:$0xff] 0.0
    %80 = vst [vmem:[%s6 + $0xb8] sm:$0xff] 0.0
    %81 = vst [vmem:[%s6 + $0xc0] sm:$0xff] 0.0
    %82 = vst [vmem:[%s6 + $0xc8] sm:$0xff] 0.0
    %83 = vst [vmem:[%s6 + $0xd0] sm:$0xff] 0.0
    %84 = vst [vmem:[%s6 + $0xd8] sm:$0xff] 0.0
    %85 = vst [vmem:[%s6 + $0xe0] sm:$0xff] 0.0
    %86 = vst [vmem:[%s6 + $0xe8] sm:$0xff] 0.0
    %87 = vst [vmem:[%s6 + $0xf0] sm:$0xff] 0.0
    %88 = vst [vmem:[%s6 + $0xf8] sm:$0xff] 0.0
    %89 = vst [vmem:[%s6 + $0x100] sm:$0xff] 0.0
    %90 = vst [vmem:[%s6 + $0x108] sm:$0xff] 0.0
    %91 = vst [vmem:[%s6 + $0x110] sm:$0xff] 0.0
    %92 = vst [vmem:[%s6 + $0x118] sm:$0xff] 0.0
    %93 = vst [vmem:[%s6 + $0x120] sm:$0xff] 0.0
    %94 = vst [vmem:[%s6 + $0x128] sm:$0xff] 0.0
    %95 = vst [vmem:[%s6 + $0x130] sm:$0xff] 0.0
    %96 = vst [vmem:[%s6 + $0x138] sm:$0xff] 0.0
    %97 = vst [vmem:[%s6 + $0x140] sm:$0xff] 0.0
    %98 = vst [vmem:[%s6 + $0x148] sm:$0xff] 0.0
    %99 = vst [vmem:[%s6 + $0x150] sm:$0xff] 0.0
    %100 = vst [vmem:[%s6 + $0x158] sm:$0xff] 0.0
    %101 = vst [vmem:[%s6 + $0x160] sm:$0xff] 0.0
    %102 = vst [vmem:[%s6 + $0x168] sm:$0xff] 0.0
    %103 = vst [vmem:[%s6 + $0x170] sm:$0xff] 0.0
    %104 = vst [vmem:[%s6 + $0x178] sm:$0xff] 0.0
  $region21: #{graph_sage_forward.3} parent=0 // pred_fallthru
    _
  %s105 = sld [smem:[#allocation4]]
  %p106 = scmp.lt.s32.totalorder 0, %s105
  // Predicated region
  $region22: #{graph_sage_forward.3} parent=0 // pred_check
    %p107 = pneg %p106
  $region23: #{graph_sage_forward.3} parent=0 // pred_check_branch
    %109 = sbr.rel (%p107) target = $region25
  $region24: #{graph_sage_forward.3} parent=0 // pred_region
    %s110 = sadd.s32 0, 0
    %s111 = smul.u32 %s110, 128
    %s112 = sadd.s32 %s111, 0
    %s113 = sld [smem:[#allocation3 + %s112]]
    %s114 = smul.u32 %s113, 128
    %s115 = sshra.s32 %s114, 3
    %s116 = sand.u32 %s114, 7
    %s117 = smul.u32 %s115, 3
    %s118 = smul.addr %s117, 4
    %s119 = scalar_lea.vmem %s3, %s118
    %v120 = vld [vmem:[%s119] sm:$0xff]
    %v121 = vld [vmem:[%s119 + $0x8] sm:$0xf]
    %v122 = vld [vmem:[%s119 + $0xc] sm:$0xff]
    %v123 = vld [vmem:[%s119 + $0x14] sm:$0xf]
    %v124 = vld [vmem:[%s119 + $0x18] sm:$0xff]
    %v125 = vld [vmem:[%s119 + $0x20] sm:$0xf]
    %v126 = vld [vmem:[%s119 + $0x24] sm:$0xff]
    %v127 = vld [vmem:[%s119 + $0x2c] sm:$0xf]
    %v128 = vld [vmem:[%s119 + $0x30] sm:$0xff]
    %v129 = vld [vmem:[%s119 + $0x38] sm:$0xf]
    %v130 = vld [vmem:[%s119 + $0x3c] sm:$0xff]
    %v131 = vld [vmem:[%s119 + $0x44] sm:$0xf]
    %v132 = vld [vmem:[%s119 + $0x48] sm:$0xff]
    %v133 = vld [vmem:[%s119 + $0x50] sm:$0xf]
    %v134 = vld [vmem:[%s119 + $0x54] sm:$0xff]
    %v135 = vld [vmem:[%s119 + $0x5c] sm:$0xf]
    %v136 = vld [vmem:[%s119 + $0x60] sm:$0xff]
    %v137 = vld [vmem:[%s119 + $0x68] sm:$0xf]
    %v138 = vld [vmem:[%s119 + $0x6c] sm:$0xff]
    %v139 = vld [vmem:[%s119 + $0x74] sm:$0xf]
    %v140 = vld [vmem:[%s119 + $0x78] sm:$0xff]
    %v141 = vld [vmem:[%s119 + $0x80] sm:$0xf]
    %v142 = vld [vmem:[%s119 + $0x84] sm:$0xff]
    %v143 = vld [vmem:[%s119 + $0x8c] sm:$0xf]
    %v144 = vld [vmem:[%s119 + $0x90] sm:$0xff]
    %v145 = vld [vmem:[%s119 + $0x98] sm:$0xf]
    %v146 = vld [vmem:[%s119 + $0x9c] sm:$0xff]
    %v147 = vld [vmem:[%s119 + $0xa4] sm:$0xf]
    %v148 = vld [vmem:[%s119 + $0xa8] sm:$0xff]
    %v149 = vld [vmem:[%s119 + $0xb0] sm:$0xf]
    %v150 = vld [vmem:[%s119 + $0xb4] sm:$0xff]
    %v151 = vld [vmem:[%s119 + $0xbc] sm:$0xf]
    %v152 = vld [vmem:[%s6] sm:$0xff]
    %v153 = vld [vmem:[%s6 + $0x8] sm:$0xff]
    %v154 = vld [vmem:[%s6 + $0x10] sm:$0xff]
    %v155 = vld [vmem:[%s6 + $0x18] sm:$0xff]
    %v156 = vld [vmem:[%s6 + $0x20] sm:$0xff]
    %v157 = vld [vmem:[%s6 + $0x28] sm:$0xff]
    %v158 = vld [vmem:[%s6 + $0x30] sm:$0xff]
    %v159 = vld [vmem:[%s6 + $0x38] sm:$0xff]
    %v160 = vld [vmem:[%s6 + $0x40] sm:$0xff]
    %v161 = vld [vmem:[%s6 + $0x48] sm:$0xff]
    %v162 = vld [vmem:[%s6 + $0x50] sm:$0xff]
    %v163 = vld [vmem:[%s6 + $0x58] sm:$0xff]
    %v164 = vld [vmem:[%s6 + $0x60] sm:$0xff]
    %v165 = vld [vmem:[%s6 + $0x68] sm:$0xff]
    %v166 = vld [vmem:[%s6 + $0x70] sm:$0xff]
    %v167 = vld [vmem:[%s6 + $0x78] sm:$0xff]
    %v168 = vld [vmem:[%s6 + $0x80] sm:$0xff]
    %v169 = vld [vmem:[%s6 + $0x88] sm:$0xff]
    %v170 = vld [vmem:[%s6 + $0x90] sm:$0xff]
    %v171 = vld [vmem:[%s6 + $0x98] sm:$0xff]
    %v172 = vld [vmem:[%s6 + $0xa0] sm:$0xff]
    %v173 = vld [vmem:[%s6 + $0xa8] sm:$0xff]
    %v174 = vld [vmem:[%s6 + $0xb0] sm:$0xff]
    %v175 = vld [vmem:[%s6 + $0xb8] sm:$0xff]
    %v176 = vld [vmem:[%s6 + $0xc0] sm:$0xff]
    %v177 = vld [vmem:[%s6 + $0xc8] sm:$0xff]
    %v178 = vld [vmem:[%s6 + $0xd0] sm:$0xff]
    %v179 = vld [vmem:[%s6 + $0xd8] sm:$0xff]
    %v180 = vld [vmem:[%s6 + $0xe0] sm:$0xff]
    %v181 = vld [vmem:[%s6 + $0xe8] sm:$0xff]
    %v182 = vld [vmem:[%s6 + $0xf0] sm:$0xff]
    %v183 = vld [vmem:[%s6 + $0xf8] sm:$0xff]
    %v184 = vld [vmem:[%s6 + $0x100] sm:$0xff]
    %v185 = vld [vmem:[%s6 + $0x108] sm:$0xff]
    %v186 = vld [vmem:[%s6 + $0x110] sm:$0xff]
    %v187 = vld [vmem:[%s6 + $0x118] sm:$0xff]
    %v188 = vld [vmem:[%s6 + $0x120] sm:$0xff]
    %v189 = vld [vmem:[%s6 + $0x128] sm:$0xff]
    %v190 = vld [vmem:[%s6 + $0x130] sm:$0xff]
    %v191 = vld [vmem:[%s6 + $0x138] sm:$0xff]
    %v192 = vld [vmem:[%s6 + $0x140] sm:$0xff]
    %v193 = vld [vmem:[%s6 + $0x148] sm:$0xff]
    %v194 = vld [vmem:[%s6 + $0x150] sm:$0xff]
    %v195 = vld [vmem:[%s6 + $0x158] sm:$0xff]
    %v196 = vld [vmem:[%s6 + $0x160] sm:$0xff]
    %v197 = vld [vmem:[%s6 + $0x168] sm:$0xff]
    %v198 = vld [vmem:[%s6 + $0x170] sm:$0xff]
    %v199 = vld [vmem:[%s6 + $0x178] sm:$0xff]
    %v200 = vld [vmem:[%s48] sm:$0xf]
    %v201 = vld [vmem:[%s48 + $0x4] sm:$0xf]
    %v202 = vld [vmem:[%s48 + $0x8] sm:$0xf]
    %v203 = vld [vmem:[%s48 + $0xc] sm:$0xf]
    %v204 = vld [vmem:[%s48 + $0x10] sm:$0xf]
    %v205 = vld [vmem:[%s48 + $0x14] sm:$0xf]
    %v206 = vld [vmem:[%s48 + $0x18] sm:$0xf]
    %v207 = vld [vmem:[%s48 + $0x1c] sm:$0xf]
    %v208 = vld [vmem:[%s48 + $0x20] sm:$0xf]
    %v209 = vld [vmem:[%s48 + $0x24] sm:$0xf]
    %v210 = vld [vmem:[%s48 + $0x28] sm:$0xf]
    %v211 = vld [vmem:[%s48 + $0x2c] sm:$0xf]
    %v212 = vld [vmem:[%s48 + $0x30] sm:$0xf]
    %v213 = vld [vmem:[%s48 + $0x34] sm:$0xf]
    %v214 = vld [vmem:[%s48 + $0x38] sm:$0xf]
    %v215 = vld [vmem:[%s48 + $0x3c] sm:$0xf]
    %v232 = vunpack.c.l.b16 %v200
    %v233 = vunpack.c.l.b16 %v201
    %v234 = vunpack.c.l.b16 %v202
    %v235 = vunpack.c.l.b16 %v203
    %v236 = vunpack.c.l.b16 %v204
    %v237 = vunpack.c.l.b16 %v205
    %v238 = vunpack.c.l.b16 %v206
    %v239 = vunpack.c.l.b16 %v207
    %v240 = vunpack.c.l.b16 %v208
    %v241 = vunpack.c.l.b16 %v209
    %v242 = vunpack.c.l.b16 %v210
    %v243 = vunpack.c.l.b16 %v211
    %v244 = vunpack.c.l.b16 %v212
    %v245 = vunpack.c.l.b16 %v213
    %v246 = vunpack.c.l.b16 %v214
    %v247 = vunpack.c.l.b16 %v215
    %v248 = vpack.c.b16 %v233, %v232
    %v249 = vpack.c.b16 %v235, %v234
    %v250 = vpack.c.b16 %v237, %v236
    %v251 = vpack.c.b16 %v239, %v238
    %v252 = vpack.c.b16 %v241, %v240
    %v253 = vpack.c.b16 %v243, %v242
    %v254 = vpack.c.b16 %v245, %v244
    %v255 = vpack.c.b16 %v247, %v246
    %v296 = vunpack.c.l.b16 %v120
    %v297 = vunpack.c.h.b16 %v120
    %v298 = vunpack.c.l.b16 %v121
    %v299 = vunpack.c.l.b16 %v122
    %v300 = vunpack.c.h.b16 %v122
    %v301 = vunpack.c.l.b16 %v123
    %v302 = vunpack.c.l.b16 %v124
    %v303 = vunpack.c.h.b16 %v124
    %v304 = vunpack.c.l.b16 %v125
    %v305 = vunpack.c.l.b16 %v126
    %v306 = vunpack.c.h.b16 %v126
    %v307 = vunpack.c.l.b16 %v127
    %v308 = vunpack.c.l.b16 %v128
    %v309 = vunpack.c.h.b16 %v128
    %v310 = vunpack.c.l.b16 %v129
    %v311 = vunpack.c.l.b16 %v130
    %v312 = vunpack.c.h.b16 %v130
    %v313 = vunpack.c.l.b16 %v131
    %v314 = vunpack.c.l.b16 %v132
    %v315 = vunpack.c.h.b16 %v132
    %v316 = vunpack.c.l.b16 %v133
    %v317 = vunpack.c.l.b16 %v134
    %v318 = vunpack.c.h.b16 %v134
    %v319 = vunpack.c.l.b16 %v135
    %v320 = vunpack.c.l.b16 %v136
    %v321 = vunpack.c.h.b16 %v136
    %v322 = vunpack.c.l.b16 %v137
    %v323 = vunpack.c.l.b16 %v138
    %v324 = vunpack.c.h.b16 %v138
    %v325 = vunpack.c.l.b16 %v139
    %v326 = vunpack.c.l.b16 %v140
    %v327 = vunpack.c.h.b16 %v140
    %v328 = vunpack.c.l.b16 %v141
    %v329 = vunpack.c.l.b16 %v142
    %v330 = vunpack.c.h.b16 %v142
    %v331 = vunpack.c.l.b16 %v143
    %v332 = vunpack.c.l.b16 %v144
    %v333 = vunpack.c.h.b16 %v144
    %v334 = vunpack.c.l.b16 %v145
    %v335 = vunpack.c.l.b16 %v146
    %v336 = vunpack.c.h.b16 %v146
    %v337 = vunpack.c.l.b16 %v147
    %v338 = vunpack.c.l.b16 %v148
    %v339 = vunpack.c.h.b16 %v148
    %v340 = vunpack.c.l.b16 %v149
    %v341 = vunpack.c.l.b16 %v150
    %v342 = vunpack.c.h.b16 %v150
    %v343 = vunpack.c.l.b16 %v151
    %v344 = vpack.c.b16 %v299, %v296
    %v345 = vpack.c.b16 %v300, %v297
    %v346 = vpack.c.b16 %v301, %v298
    %v347 = vpack.c.b16 %v305, %v302
    %v348 = vpack.c.b16 %v306, %v303
    %v349 = vpack.c.b16 %v307, %v304
    %v350 = vpack.c.b16 %v311, %v308
    %v351 = vpack.c.b16 %v312, %v309
    %v352 = vpack.c.b16 %v313, %v310
    %v353 = vpack.c.b16 %v317, %v314
    %v354 = vpack.c.b16 %v318, %v315
    %v355 = vpack.c.b16 %v319, %v316
    %v356 = vpack.c.b16 %v323, %v320
    %v357 = vpack.c.b16 %v324, %v321
    %v358 = vpack.c.b16 %v325, %v322
    %v359 = vpack.c.b16 %v329, %v326
    %v360 = vpack.c.b16 %v330, %v327
    %v361 = vpack.c.b16 %v331, %v328
    %v362 = vpack.c.b16 %v335, %v332
    %v363 = vpack.c.b16 %v336, %v333
    %v364 = vpack.c.b16 %v337, %v334
    %v365 = vpack.c.b16 %v341, %v338
    %v366 = vpack.c.b16 %v342, %v339
    %v367 = vpack.c.b16 %v343, %v340
    %392 = vmatpush.bf16.msra.mxu0 %v365
    %393 = vmatpush.bf16.msra.mxu0 %v362
    %394 = vmatpush.bf16.msra.mxu0 %v359
    %395 = vmatpush.bf16.msra.mxu0 %v356
    %396 = vmatpush.bf16.msra.mxu0 %v353
    %397 = vmatpush.bf16.msra.mxu0 %v350
    %398 = vmatpush.bf16.msra.mxu0 %v347
    %399 = vmatpush.bf16.msra.mxu0 %v344
    %400 = vmatmul.bf16.gmra.mxu0 %v248
    %v401 = vpop.f32.mrf.mxu0
    %v402 = vadd.f32 0.0, %v401
    %v403 = vpop.f32.mrf.mxu0
    %v404 = vadd.f32 0.0, %v403
    %405 = vmatmul.bf16.gmra.mxu0 %v249
    %v406 = vpop.f32.mrf.mxu0
    %v407 = vadd.f32 0.0, %v406
    %v408 = vpop.f32.mrf.mxu0
    %v409 = vadd.f32 0.0, %v408
    %410 = vmatmul.bf16.gmra.mxu0 %v250
    %v411 = vpop.f32.mrf.mxu0
    %v412 = vadd.f32 0.0, %v411
    %v413 = vpop.f32.mrf.mxu0
    %v414 = vadd.f32 0.0, %v413
    %415 = vmatmul.bf16.gmra.mxu0 %v251
    %v416 = vpop.f32.mrf.mxu0
    %v417 = vadd.f32 0.0, %v416
    %v418 = vpop.f32.mrf.mxu0
    %v419 = vadd.f32 0.0, %v418
    %420 = vmatmul.bf16.gmra.mxu0 %v252
    %v421 = vpop.f32.mrf.mxu0
    %v422 = vadd.f32 0.0, %v421
    %v423 = vpop.f32.mrf.mxu0
    %v424 = vadd.f32 0.0, %v423
    %425 = vmatmul.bf16.gmra.mxu0 %v253
    %v426 = vpop.f32.mrf.mxu0
    %v427 = vadd.f32 0.0, %v426
    %v428 = vpop.f32.mrf.mxu0
    %v429 = vadd.f32 0.0, %v428
    %430 = vmatmul.bf16.gmra.mxu0 %v254
    %v431 = vpop.f32.mrf.mxu0
    %v432 = vadd.f32 0.0, %v431
    %v433 = vpop.f32.mrf.mxu0
    %v434 = vadd.f32 0.0, %v433
    %435 = vmatmul.bf16.gmra.mxu0 %v255
    %v436 = vpop.f32.mrf.mxu0
    %v437 = vadd.f32 0.0, %v436
    %v438 = vpop.f32.mrf.mxu0
    %v439 = vadd.f32 0.0, %v438
    %440 = vdwg.mxu0
    %441 = vmatpush.bf16.msra.mxu0 %v366
    %442 = vmatpush.bf16.msra.mxu0 %v363
    %443 = vmatpush.bf16.msra.mxu0 %v360
    %444 = vmatpush.bf16.msra.mxu0 %v357
    %445 = vmatpush.bf16.msra.mxu0 %v354
    %446 = vmatpush.bf16.msra.mxu0 %v351
    %447 = vmatpush.bf16.msra.mxu0 %v348
    %448 = vmatpush.bf16.msra.mxu0 %v345
    %449 = vmatmul.bf16.gmra.mxu0 %v248
    %v450 = vpop.f32.mrf.mxu0
    %v451 = vadd.f32 0.0, %v450
    %v452 = vpop.f32.mrf.mxu0
    %v453 = vadd.f32 0.0, %v452
    %454 = vmatmul.bf16.gmra.mxu0 %v249
    %v455 = vpop.f32.mrf.mxu0
    %v456 = vadd.f32 0.0, %v455
    %v457 = vpop.f32.mrf.mxu0
    %v458 = vadd.f32 0.0, %v457
    %459 = vmatmul.bf16.gmra.mxu0 %v250
    %v460 = vpop.f32.mrf.mxu0
    %v461 = vadd.f32 0.0, %v460
    %v462 = vpop.f32.mrf.mxu0
    %v463 = vadd.f32 0.0, %v462
    %464 = vmatmul.bf16.gmra.mxu0 %v251
    %v465 = vpop.f32.mrf.mxu0
    %v466 = vadd.f32 0.0, %v465
    %v467 = vpop.f32.mrf.mxu0
    %v468 = vadd.f32 0.0, %v467
    %469 = vmatmul.bf16.gmra.mxu0 %v252
    %v470 = vpop.f32.mrf.mxu0
    %v471 = vadd.f32 0.0, %v470
    %v472 = vpop.f32.mrf.mxu0
    %v473 = vadd.f32 0.0, %v472
    %474 = vmatmul.bf16.gmra.mxu0 %v253
    %v475 = vpop.f32.mrf.mxu0
    %v476 = vadd.f32 0.0, %v475
    %v477 = vpop.f32.mrf.mxu0
    %v478 = vadd.f32 0.0, %v477
    %479 = vmatmul.bf16.gmra.mxu0 %v254
    %v480 = vpop.f32.mrf.mxu0
    %v481 = vadd.f32 0.0, %v480
    %v482 = vpop.f32.mrf.mxu0
    %v483 = vadd.f32 0.0, %v482
    %484 = vmatmul.bf16.gmra.mxu0 %v255
    %v485 = vpop.f32.mrf.mxu0
    %v486 = vadd.f32 0.0, %v485
    %v487 = vpop.f32.mrf.mxu0
    %v488 = vadd.f32 0.0, %v487
    %489 = vdwg.mxu0
    %490 = vmatpush.bf16.msra.mxu0 %v367
    %491 = vmatpush.bf16.msra.mxu0 %v364
    %492 = vmatpush.bf16.msra.mxu0 %v361
    %493 = vmatpush.bf16.msra.mxu0 %v358
    %494 = vmatpush.bf16.msra.mxu0 %v355
    %495 = vmatpush.bf16.msra.mxu0 %v352
    %496 = vmatpush.bf16.msra.mxu0 %v349
    %497 = vmatpush.bf16.msra.mxu0 %v346
    %498 = vmatmul.bf16.gmra.mxu0 %v248
    %v499 = vpop.f32.mrf.mxu0
    %v500 = vadd.f32 0.0, %v499
    %v501 = vpop.f32.mrf.mxu0
    %v502 = vadd.f32 0.0, %v501
    %503 = vmatmul.bf16.gmra.mxu0 %v249
    %v504 = vpop.f32.mrf.mxu0
    %v505 = vadd.f32 0.0, %v504
    %v506 = vpop.f32.mrf.mxu0
    %v507 = vadd.f32 0.0, %v506
    %508 = vmatmul.bf16.gmra.mxu0 %v250
    %v509 = vpop.f32.mrf.mxu0
    %v510 = vadd.f32 0.0, %v509
    %v511 = vpop.f32.mrf.mxu0
    %v512 = vadd.f32 0.0, %v511
    %513 = vmatmul.bf16.gmra.mxu0 %v251
    %v514 = vpop.f32.mrf.mxu0
    %v515 = vadd.f32 0.0, %v514
    %v516 = vpop.f32.mrf.mxu0
    %v517 = vadd.f32 0.0, %v516
    %518 = vmatmul.bf16.gmra.mxu0 %v252
    %v519 = vpop.f32.mrf.mxu0
    %v520 = vadd.f32 0.0, %v519
    %v521 = vpop.f32.mrf.mxu0
    %v522 = vadd.f32 0.0, %v521
    %523 = vmatmul.bf16.gmra.mxu0 %v253
    %v524 = vpop.f32.mrf.mxu0
    %v525 = vadd.f32 0.0, %v524
    %v526 = vpop.f32.mrf.mxu0
    %v527 = vadd.f32 0.0, %v526
    %528 = vmatmul.bf16.gmra.mxu0 %v254
    %v529 = vpop.f32.mrf.mxu0
    %v530 = vadd.f32 0.0, %v529
    %v531 = vpop.f32.mrf.mxu0
    %v532 = vadd.f32 0.0, %v531
    %533 = vmatmul.bf16.gmra.mxu0 %v255
    %v534 = vpop.f32.mrf.mxu0
    %v535 = vadd.f32 0.0, %v534
    %v536 = vpop.f32.mrf.mxu0
    %v537 = vadd.f32 0.0, %v536
    %538 = vdwg.mxu0
    %v539 = vadd.f32 %v152, %v402
    %v540 = vadd.f32 %v153, %v451
    %v541 = vadd.f32 %v154, %v500
    %v542 = vadd.f32 %v155, %v404
    %v543 = vadd.f32 %v156, %v453
    %v544 = vadd.f32 %v157, %v502
    %v545 = vadd.f32 %v158, %v407
    %v546 = vadd.f32 %v159, %v456
    %v547 = vadd.f32 %v160, %v505
    %v548 = vadd.f32 %v161, %v409
    %v549 = vadd.f32 %v162, %v458
    %v550 = vadd.f32 %v163, %v507
    %v551 = vadd.f32 %v164, %v412
    %v552 = vadd.f32 %v165, %v461
    %v553 = vadd.f32 %v166, %v510
    %v554 = vadd.f32 %v167, %v414
    %v555 = vadd.f32 %v168, %v463
    %v556 = vadd.f32 %v169, %v512
    %v557 = vadd.f32 %v170, %v417
    %v558 = vadd.f32 %v171, %v466
    %v559 = vadd.f32 %v172, %v515
    %v560 = vadd.f32 %v173, %v419
    %v561 = vadd.f32 %v174, %v468
    %v562 = vadd.f32 %v175, %v517
    %v563 = vadd.f32 %v176, %v422
    %v564 = vadd.f32 %v177, %v471
    %v565 = vadd.f32 %v178, %v520
    %v566 = vadd.f32 %v179, %v424
    %v567 = vadd.f32 %v180, %v473
    %v568 = vadd.f32 %v181, %v522
    %v569 = vadd.f32 %v182, %v427
    %v570 = vadd.f32 %v183, %v476
    %v571 = vadd.f32 %v184, %v525
    %v572 = vadd.f32 %v185, %v429
    %v573 = vadd.f32 %v186, %v478
    %v574 = vadd.f32 %v187, %v527
    %v575 = vadd.f32 %v188, %v432
    %v576 = vadd.f32 %v189, %v481
    %v577 = vadd.f32 %v190, %v530
    %v578 = vadd.f32 %v191, %v434
    %v579 = vadd.f32 %v192, %v483
    %v580 = vadd.f32 %v193, %v532
    %v581 = vadd.f32 %v194, %v437
    %v582 = vadd.f32 %v195, %v486
    %v583 = vadd.f32 %v196, %v535
    %v584 = vadd.f32 %v197, %v439
    %v585 = vadd.f32 %v198, %v488
    %v586 = vadd.f32 %v199, %v537
    %587 = vst [vmem:[%s6] sm:$0xff] %v539
    %588 = vst [vmem:[%s6 + $0x8] sm:$0xff] %v540
    %589 = vst [vmem:[%s6 + $0x10] sm:$0xff] %v541
    %590 = vst [vmem:[%s6 + $0x18] sm:$0xff] %v542
    %591 = vst [vmem:[%s6 + $0x20] sm:$0xff] %v543
    %592 = vst [vmem:[%s6 + $0x28] sm:$0xff] %v544
    %593 = vst [vmem:[%s6 + $0x30] sm:$0xff] %v545
    %594 = vst [vmem:[%s6 + $0x38] sm:$0xff] %v546
    %595 = vst [vmem:[%s6 + $0x40] sm:$0xff] %v547
    %596 = vst [vmem:[%s6 + $0x48] sm:$0xff] %v548
    %597 = vst [vmem:[%s6 + $0x50] sm:$0xff] %v549
    %598 = vst [vmem:[%s6 + $0x58] sm:$0xff] %v550
    %599 = vst [vmem:[%s6 + $0x60] sm:$0xff] %v551
    %600 = vst [vmem:[%s6 + $0x68] sm:$0xff] %v552
    %601 = vst [vmem:[%s6 + $0x70] sm:$0xff] %v553
    %602 = vst [vmem:[%s6 + $0x78] sm:$0xff] %v554
    %603 = vst [vmem:[%s6 + $0x80] sm:$0xff] %v555
    %604 = vst [vmem:[%s6 + $0x88] sm:$0xff] %v556
    %605 = vst [vmem:[%s6 + $0x90] sm:$0xff] %v557
    %606 = vst [vmem:[%s6 + $0x98] sm:$0xff] %v558
    %607 = vst [vmem:[%s6 + $0xa0] sm:$0xff] %v559
    %608 = vst [vmem:[%s6 + $0xa8] sm:$0xff] %v560
    %609 = vst [vmem:[%s6 + $0xb0] sm:$0xff] %v561
    %610 = vst [vmem:[%s6 + $0xb8] sm:$0xff] %v562
    %611 = vst [vmem:[%s6 + $0xc0] sm:$0xff] %v563
    %612 = vst [vmem:[%s6 + $0xc8] sm:$0xff] %v564
    %613 = vst [vmem:[%s6 + $0xd0] sm:$0xff] %v565
    %614 = vst [vmem:[%s6 + $0xd8] sm:$0xff] %v566
    %615 = vst [vmem:[%s6 + $0xe0] sm:$0xff] %v567
    %616 = vst [vmem:[%s6 + $0xe8] sm:$0xff] %v568
    %617 = vst [vmem:[%s6 + $0xf0] sm:$0xff] %v569
    %618 = vst [vmem:[%s6 + $0xf8] sm:$0xff] %v570
    %619 = vst [vmem:[%s6 + $0x100] sm:$0xff] %v571
    %620 = vst [vmem:[%s6 + $0x108] sm:$0xff] %v572
    %621 = vst [vmem:[%s6 + $0x110] sm:$0xff] %v573
    %622 = vst [vmem:[%s6 + $0x118] sm:$0xff] %v574
    %623 = vst [vmem:[%s6 + $0x120] sm:$0xff] %v575
    %624 = vst [vmem:[%s6 + $0x128] sm:$0xff] %v576
    %625 = vst [vmem:[%s6 + $0x130] sm:$0xff] %v577
    %626 = vst [vmem:[%s6 + $0x138] sm:$0xff] %v578
    %627 = vst [vmem:[%s6 + $0x140] sm:$0xff] %v579
    %628 = vst [vmem:[%s6 + $0x148] sm:$0xff] %v580
    %629 = vst [vmem:[%s6 + $0x150] sm:$0xff] %v581
    %630 = vst [vmem:[%s6 + $0x158] sm:$0xff] %v582
    %631 = vst [vmem:[%s6 + $0x160] sm:$0xff] %v583
    %632 = vst [vmem:[%s6 + $0x168] sm:$0xff] %v584
    %633 = vst [vmem:[%s6 + $0x170] sm:$0xff] %v585
    %634 = vst [vmem:[%s6 + $0x178] sm:$0xff] %v586
  $region25: #{graph_sage_forward.3} parent=0 // pred_fallthru
    _
  // Predicated region
  $region26: #{graph_sage_forward.3} parent=0 // pred_check
    %p635 = pneg %p53
  $region27: #{graph_sage_forward.3} parent=0 // pred_check_branch
    %637 = sbr.rel (%p635) target = $region29
  $region28: #{graph_sage_forward.3} parent=0 // pred_region
    %v638 = vld [vmem:[%s6] sm:$0xff]
    %v639 = vld [vmem:[%s6 + $0x8] sm:$0xff]
    %v640 = vld [vmem:[%s6 + $0x10] sm:$0xff]
    %v641 = vld [vmem:[%s6 + $0x18] sm:$0xff]
    %v642 = vld [vmem:[%s6 + $0x20] sm:$0xff]
    %v643 = vld [vmem:[%s6 + $0x28] sm:$0xff]
    %v644 = vld [vmem:[%s6 + $0x30] sm:$0xff]
    %v645 = vld [vmem:[%s6 + $0x38] sm:$0xff]
    %v646 = vld [vmem:[%s6 + $0x40] sm:$0xff]
    %v647 = vld [vmem:[%s6 + $0x48] sm:$0xff]
    %v648 = vld [vmem:[%s6 + $0x50] sm:$0xff]
    %v649 = vld [vmem:[%s6 + $0x58] sm:$0xff]
    %v650 = vld [vmem:[%s6 + $0x60] sm:$0xff]
    %v651 = vld [vmem:[%s6 + $0x68] sm:$0xff]
    %v652 = vld [vmem:[%s6 + $0x70] sm:$0xff]
    %v653 = vld [vmem:[%s6 + $0x78] sm:$0xff]
    %v654 = vld [vmem:[%s6 + $0x80] sm:$0xff]
    %v655 = vld [vmem:[%s6 + $0x88] sm:$0xff]
    %v656 = vld [vmem:[%s6 + $0x90] sm:$0xff]
    %v657 = vld [vmem:[%s6 + $0x98] sm:$0xff]
    %v658 = vld [vmem:[%s6 + $0xa0] sm:$0xff]
    %v659 = vld [vmem:[%s6 + $0xa8] sm:$0xff]
    %v660 = vld [vmem:[%s6 + $0xb0] sm:$0xff]
    %v661 = vld [vmem:[%s6 + $0xb8] sm:$0xff]
    %v662 = vld [vmem:[%s6 + $0xc0] sm:$0xff]
    %v663 = vld [vmem:[%s6 + $0xc8] sm:$0xff]
    %v664 = vld [vmem:[%s6 + $0xd0] sm:$0xff]
    %v665 = vld [vmem:[%s6 + $0xd8] sm:$0xff]
    %v666 = vld [vmem:[%s6 + $0xe0] sm:$0xff]
    %v667 = vld [vmem:[%s6 + $0xe8] sm:$0xff]
    %v668 = vld [vmem:[%s6 + $0xf0] sm:$0xff]
    %v669 = vld [vmem:[%s6 + $0xf8] sm:$0xff]
    %v670 = vld [vmem:[%s6 + $0x100] sm:$0xff]
    %v671 = vld [vmem:[%s6 + $0x108] sm:$0xff]
    %v672 = vld [vmem:[%s6 + $0x110] sm:$0xff]
    %v673 = vld [vmem:[%s6 + $0x118] sm:$0xff]
    %v674 = vld [vmem:[%s6 + $0x120] sm:$0xff]
    %v675 = vld [vmem:[%s6 + $0x128] sm:$0xff]
    %v676 = vld [vmem:[%s6 + $0x130] sm:$0xff]
    %v677 = vld [vmem:[%s6 + $0x138] sm:$0xff]
    %v678 = vld [vmem:[%s6 + $0x140] sm:$0xff]
    %v679 = vld [vmem:[%s6 + $0x148] sm:$0xff]
    %v680 = vld [vmem:[%s6 + $0x150] sm:$0xff]
    %v681 = vld [vmem:[%s6 + $0x158] sm:$0xff]
    %v682 = vld [vmem:[%s6 + $0x160] sm:$0xff]
    %v683 = vld [vmem:[%s6 + $0x168] sm:$0xff]
    %v684 = vld [vmem:[%s6 + $0x170] sm:$0xff]
    %v685 = vld [vmem:[%s6 + $0x178] sm:$0xff]
    %v686 = vld [vmem:[%s4] sm:$0x7]
    %v687 = vld [vmem:[%s5] sm:$0x7]
    %v688 = vlaneseq
    %v689 = vand.u32 %v688, 127
    %v690 = vadd.s32 %v689, 128
    %v691 = vadd.s32 %v689, 256
    %vm692 = vcmp.lt.s32.totalorder %v689, 342
    %vm693 = vcmp.lt.s32.totalorder %v690, 342
    %vm694 = vcmp.lt.s32.totalorder %v691, 342
    %v695 = vsel %vm692, 1, 0
    %v696 = vsel %vm693, 1, 0
    %v697 = vsel %vm694, 1, 0
    %vm698 = vcmp.eq.s32.totalorder %v695, 1
    %vm699 = vcmp.eq.s32.totalorder %v696, 1
    %vm700 = vcmp.eq.s32.totalorder %v697, 1
    %v701 = vsel %vm698, %v638, 0.0
    %v702 = vsel %vm699, %v639, 0.0
    %v703 = vsel %vm700, %v640, 0.0
    %v704 = vsel %vm698, %v641, 0.0
    %v705 = vsel %vm699, %v642, 0.0
    %v706 = vsel %vm700, %v643, 0.0
    %v707 = vsel %vm698, %v644, 0.0
    %v708 = vsel %vm699, %v645, 0.0
    %v709 = vsel %vm700, %v646, 0.0
    %v710 = vsel %vm698, %v647, 0.0
    %v711 = vsel %vm699, %v648, 0.0
    %v712 = vsel %vm700, %v649, 0.0
    %v713 = vsel %vm698, %v650, 0.0
    %v714 = vsel %vm699, %v651, 0.0
    %v715 = vsel %vm700, %v652, 0.0
    %v716 = vsel %vm698, %v653, 0.0
    %v717 = vsel %vm699, %v654, 0.0
    %v718 = vsel %vm700, %v655, 0.0
    %v719 = vsel %vm698, %v656, 0.0
    %v720 = vsel %vm699, %v657, 0.0
    %v721 = vsel %vm700, %v658, 0.0
    %v722 = vsel %vm698, %v659, 0.0
    %v723 = vsel %vm699, %v660, 0.0
    %v724 = vsel %vm700, %v661, 0.0
    %v725 = vsel %vm698, %v662, 0.0
    %v726 = vsel %vm699, %v663, 0.0
    %v727 = vsel %vm700, %v664, 0.0
    %v728 = vsel %vm698, %v665, 0.0
    %v729 = vsel %vm699, %v666, 0.0
    %v730 = vsel %vm700, %v667, 0.0
    %v731 = vsel %vm698, %v668, 0.0
    %v732 = vsel %vm699, %v669, 0.0
    %v733 = vsel %vm700, %v670, 0.0
    %v734 = vsel %vm698, %v671, 0.0
    %v735 = vsel %vm699, %v672, 0.0
    %v736 = vsel %vm700, %v673, 0.0
    %v737 = vsel %vm698, %v674, 0.0
    %v738 = vsel %vm699, %v675, 0.0
    %v739 = vsel %vm700, %v676, 0.0
    %v740 = vsel %vm698, %v677, 0.0
    %v741 = vsel %vm699, %v678, 0.0
    %v742 = vsel %vm700, %v679, 0.0
    %v743 = vsel %vm698, %v680, 0.0
    %v744 = vsel %vm699, %v681, 0.0
    %v745 = vsel %vm700, %v682, 0.0
    %v746 = vsel %vm698, %v683, 0.0
    %v747 = vsel %vm699, %v684, 0.0
    %v748 = vsel %vm700, %v685, 0.0
    %v749 = vadd.f32 %v701, %v702
    %v750 = vadd.f32 %v749, %v703
    %751 = vadd.xlane.f32.xlu0 %v750
    %v752 = vpop.xlane.xlu0 %751
    %v753 = vadd.f32 %v704, %v705
    %v754 = vadd.f32 %v753, %v706
    %755 = vadd.xlane.f32.xlu0 %v754
    %v756 = vpop.xlane.xlu0 %755
    %v757 = vadd.f32 %v707, %v708
    %v758 = vadd.f32 %v757, %v709
    %759 = vadd.xlane.f32.xlu0 %v758
    %v760 = vpop.xlane.xlu0 %759
    %v761 = vadd.f32 %v710, %v711
    %v762 = vadd.f32 %v761, %v712
    %763 = vadd.xlane.f32.xlu0 %v762
    %v764 = vpop.xlane.xlu0 %763
    %v765 = vadd.f32 %v713, %v714
    %v766 = vadd.f32 %v765, %v715
    %767 = vadd.xlane.f32.xlu0 %v766
    %v768 = vpop.xlane.xlu0 %767
    %v769 = vadd.f32 %v716, %v717
    %v770 = vadd.f32 %v769, %v718
    %771 = vadd.xlane.f32.xlu0 %v770
    %v772 = vpop.xlane.xlu0 %771
    %v773 = vadd.f32 %v719, %v720
    %v774 = vadd.f32 %v773, %v721
    %775 = vadd.xlane.f32.xlu0 %v774
    %v776 = vpop.xlane.xlu0 %775
    %v777 = vadd.f32 %v722, %v723
    %v778 = vadd.f32 %v777, %v724
    %779 = vadd.xlane.f32.xlu0 %v778
    %v780 = vpop.xlane.xlu0 %779
    %v781 = vadd.f32 %v725, %v726
    %v782 = vadd.f32 %v781, %v727
    %783 = vadd.xlane.f32.xlu0 %v782
    %v784 = vpop.xlane.xlu0 %783
    %v785 = vadd.f32 %v728, %v729
    %v786 = vadd.f32 %v785, %v730
    %787 = vadd.xlane.f32.xlu0 %v786
    %v788 = vpop.xlane.xlu0 %787
    %v789 = vadd.f32 %v731, %v732
    %v790 = vadd.f32 %v789, %v733
    %791 = vadd.xlane.f32.xlu0 %v790
    %v792 = vpop.xlane.xlu0 %791
    %v793 = vadd.f32 %v734, %v735
    %v794 = vadd.f32 %v793, %v736
    %795 = vadd.xlane.f32.xlu0 %v794
    %v796 = vpop.xlane.xlu0 %795
    %v797 = vadd.f32 %v737, %v738
    %v798 = vadd.f32 %v797, %v739
    %799 = vadd.xlane.f32.xlu0 %v798
    %v800 = vpop.xlane.xlu0 %799
    %v801 = vadd.f32 %v740, %v741
    %v802 = vadd.f32 %v801, %v742
    %803 = vadd.xlane.f32.xlu0 %v802
    %v804 = vpop.xlane.xlu0 %803
    %v805 = vadd.f32 %v743, %v744
    %v806 = vadd.f32 %v805, %v745
    %807 = vadd.xlane.f32.xlu0 %v806
    %v808 = vpop.xlane.xlu0 %807
    %v809 = vadd.f32 %v746, %v747
    %v810 = vadd.f32 %v809, %v748
    %811 = vadd.xlane.f32.xlu0 %v810
    %v812 = vpop.xlane.xlu0 %811
    %v813 = vmul.f32 %v752, 0.0029239766
    %v814 = vmul.f32 %v756, 0.0029239766
    %v815 = vmul.f32 %v760, 0.0029239766
    %v816 = vmul.f32 %v764, 0.0029239766
    %v817 = vmul.f32 %v768, 0.0029239766
    %v818 = vmul.f32 %v772, 0.0029239766
    %v819 = vmul.f32 %v776, 0.0029239766
    %v820 = vmul.f32 %v780, 0.0029239766
    %v821 = vmul.f32 %v784, 0.0029239766
    %v822 = vmul.f32 %v788, 0.0029239766
    %v823 = vmul.f32 %v792, 0.0029239766
    %v824 = vmul.f32 %v796, 0.0029239766
    %v825 = vmul.f32 %v800, 0.0029239766
    %v826 = vmul.f32 %v804, 0.0029239766
    %v827 = vmul.f32 %v808, 0.0029239766
    %v828 = vmul.f32 %v812, 0.0029239766
    %v829 = vsub.f32 %v638, %v813
    %v830 = vsub.f32 %v639, %v813
    %v831 = vsub.f32 %v640, %v813
    %v832 = vsub.f32 %v641, %v814
    %v833 = vsub.f32 %v642, %v814
    %v834 = vsub.f32 %v643, %v814
    %v835 = vsub.f32 %v644, %v815
    %v836 = vsub.f32 %v645, %v815
    %v837 = vsub.f32 %v646, %v815
    %v838 = vsub.f32 %v647, %v816
    %v839 = vsub.f32 %v648, %v816
    %v840 = vsub.f32 %v649, %v816
    %v841 = vsub.f32 %v650, %v817
    %v842 = vsub.f32 %v651, %v817
    %v843 = vsub.f32 %v652, %v817
    %v844 = vsub.f32 %v653, %v818
    %v845 = vsub.f32 %v654, %v818
    %v846 = vsub.f32 %v655, %v818
    %v847 = vsub.f32 %v656, %v819
    %v848 = vsub.f32 %v657, %v819
    %v849 = vsub.f32 %v658, %v819
    %v850 = vsub.f32 %v659, %v820
    %v851 = vsub.f32 %v660, %v820
    %v852 = vsub.f32 %v661, %v820
    %v853 = vsub.f32 %v662, %v821
    %v854 = vsub.f32 %v663, %v821
    %v855 = vsub.f32 %v664, %v821
    %v856 = vsub.f32 %v665, %v822
    %v857 = vsub.f32 %v666, %v822
    %v858 = vsub.f32 %v667, %v822
    %v859 = vsub.f32 %v668, %v823
    %v860 = vsub.f32 %v669, %v823
    %v861 = vsub.f32 %v670, %v823
    %v862 = vsub.f32 %v671, %v824
    %v863 = vsub.f32 %v672, %v824
    %v864 = vsub.f32 %v673, %v824
    %v865 = vsub.f32 %v674, %v825
    %v866 = vsub.f32 %v675, %v825
    %v867 = vsub.f32 %v676, %v825
    %v868 = vsub.f32 %v677, %v826
    %v869 = vsub.f32 %v678, %v826
    %v870 = vsub.f32 %v679, %v826
    %v871 = vsub.f32 %v680, %v827
    %v872 = vsub.f32 %v681, %v827
    %v873 = vsub.f32 %v682, %v827
    %v874 = vsub.f32 %v683, %v828
    %v875 = vsub.f32 %v684, %v828
    %v876 = vsub.f32 %v685, %v828
    %v877 = vsel %vm698, %v829, 0.0
    %v878 = vsel %vm699, %v830, 0.0
    %v879 = vsel %vm700, %v831, 0.0
    %v880 = vsel %vm698, %v832, 0.0
    %v881 = vsel %vm699, %v833, 0.0
    %v882 = vsel %vm700, %v834, 0.0
    %v883 = vsel %vm698, %v835, 0.0
    %v884 = vsel %vm699, %v836, 0.0
    %v885 = vsel %vm700, %v837, 0.0
    %v886 = vsel %vm698, %v838, 0.0
    %v887 = vsel %vm699, %v839, 0.0
    %v888 = vsel %vm700, %v840, 0.0
    %v889 = vsel %vm698, %v841, 0.0
    %v890 = vsel %vm699, %v842, 0.0
    %v891 = vsel %vm700, %v843, 0.0
    %v892 = vsel %vm698, %v844, 0.0
    %v893 = vsel %vm699, %v845, 0.0
    %v894 = vsel %vm700, %v846, 0.0
    %v895 = vsel %vm698, %v847, 0.0
    %v896 = vsel %vm699, %v848, 0.0
    %v897 = vsel %vm700, %v849, 0.0
    %v898 = vsel %vm698, %v850, 0.0
    %v899 = vsel %vm699, %v851, 0.0
    %v900 = vsel %vm700, %v852, 0.0
    %v901 = vsel %vm698, %v853, 0.0
    %v902 = vsel %vm699, %v854, 0.0
    %v903 = vsel %vm700, %v855, 0.0
    %v904 = vsel %vm698, %v856, 0.0
    %v905 = vsel %vm699, %v857, 0.0
    %v906 = vsel %vm700, %v858, 0.0
    %v907 = vsel %vm698, %v859, 0.0
    %v908 = vsel %vm699, %v860, 0.0
    %v909 = vsel %vm700, %v861, 0.0
    %v910 = vsel %vm698, %v862, 0.0
    %v911 = vsel %vm699, %v863, 0.0
    %v912 = vsel %vm700, %v864, 0.0
    %v913 = vsel %vm698, %v865, 0.0
    %v914 = vsel %vm699, %v866, 0.0
    %v915 = vsel %vm700, %v867, 0.0
    %v916 = vsel %vm698, %v868, 0.0
    %v917 = vsel %vm699, %v869, 0.0
    %v918 = vsel %vm700, %v870, 0.0
    %v919 = vsel %vm698, %v871, 0.0
    %v920 = vsel %vm699, %v872, 0.0
    %v921 = vsel %vm700, %v873, 0.0
    %v922 = vsel %vm698, %v874, 0.0
    %v923 = vsel %vm699, %v875, 0.0
    %v924 = vsel %vm700, %v876, 0.0
    %v925 = vmul.f32 %v877, %v877
    %v926 = vmul.f32 %v878, %v878
    %v927 = vmul.f32 %v879, %v879
    %v928 = vmul.f32 %v880, %v880
    %v929 = vmul.f32 %v881, %v881
    %v930 = vmul.f32 %v882, %v882
    %v931 = vmul.f32 %v883, %v883
    %v932 = vmul.f32 %v884, %v884
    %v933 = vmul.f32 %v885, %v885
    %v934 = vmul.f32 %v886, %v886
    %v935 = vmul.f32 %v887, %v887
    %v936 = vmul.f32 %v888, %v888
    %v937 = vmul.f32 %v889, %v889
    %v938 = vmul.f32 %v890, %v890
    %v939 = vmul.f32 %v891, %v891
    %v940 = vmul.f32 %v892, %v892
    %v941 = vmul.f32 %v893, %v893
    %v942 = vmul.f32 %v894, %v894
    %v943 = vmul.f32 %v895, %v895
    %v944 = vmul.f32 %v896, %v896
    %v945 = vmul.f32 %v897, %v897
    %v946 = vmul.f32 %v898, %v898
    %v947 = vmul.f32 %v899, %v899
    %v948 = vmul.f32 %v900, %v900
    %v949 = vmul.f32 %v901, %v901
    %v950 = vmul.f32 %v902, %v902
    %v951 = vmul.f32 %v903, %v903
    %v952 = vmul.f32 %v904, %v904
    %v953 = vmul.f32 %v905, %v905
    %v954 = vmul.f32 %v906, %v906
    %v955 = vmul.f32 %v907, %v907
    %v956 = vmul.f32 %v908, %v908
    %v957 = vmul.f32 %v909, %v909
    %v958 = vmul.f32 %v910, %v910
    %v959 = vmul.f32 %v911, %v911
    %v960 = vmul.f32 %v912, %v912
    %v961 = vmul.f32 %v913, %v913
    %v962 = vmul.f32 %v914, %v914
    %v963 = vmul.f32 %v915, %v915
    %v964 = vmul.f32 %v916, %v916
    %v965 = vmul.f32 %v917, %v917
    %v966 = vmul.f32 %v918, %v918
    %v967 = vmul.f32 %v919, %v919
    %v968 = vmul.f32 %v920, %v920
    %v969 = vmul.f32 %v921, %v921
    %v970 = vmul.f32 %v922, %v922
    %v971 = vmul.f32 %v923, %v923
    %v972 = vmul.f32 %v924, %v924
    %v973 = vadd.f32 %v925, %v926
    %v974 = vadd.f32 %v973, %v927
    %975 = vadd.xlane.f32.xlu0 %v974
    %v976 = vpop.xlane.xlu0 %975
    %v977 = vadd.f32 %v928, %v929
    %v978 = vadd.f32 %v977, %v930
    %979 = vadd.xlane.f32.xlu0 %v978
    %v980 = vpop.xlane.xlu0 %979
    %v981 = vadd.f32 %v931, %v932
    %v982 = vadd.f32 %v981, %v933
    %983 = vadd.xlane.f32.xlu0 %v982
    %v984 = vpop.xlane.xlu0 %983
    %v985 = vadd.f32 %v934, %v935
    %v986 = vadd.f32 %v985, %v936
    %987 = vadd.xlane.f32.xlu0 %v986
    %v988 = vpop.xlane.xlu0 %987
    %v989 = vadd.f32 %v937, %v938
    %v990 = vadd.f32 %v989, %v939
    %991 = vadd.xlane.f32.xlu0 %v990
    %v992 = vpop.xlane.xlu0 %991
    %v993 = vadd.f32 %v940, %v941
    %v994 = vadd.f32 %v993, %v942
    %995 = vadd.xlane.f32.xlu0 %v994
    %v996 = vpop.xlane.xlu0 %995
    %v997 = vadd.f32 %v943, %v944
    %v998 = vadd.f32 %v997, %v945
    %999 = vadd.xlane.f32.xlu0 %v998
    %v1000 = vpop.xlane.xlu0 %999
    %v1001 = vadd.f32 %v946, %v947
    %v1002 = vadd.f32 %v1001, %v948
    %1003 = vadd.xlane.f32.xlu0 %v1002
    %v1004 = vpop.xlane.xlu0 %1003
    %v1005 = vadd.f32 %v949, %v950
    %v1006 = vadd.f32 %v1005, %v951
    %1007 = vadd.xlane.f32.xlu0 %v1006
    %v1008 = vpop.xlane.xlu0 %1007
    %v1009 = vadd.f32 %v952, %v953
    %v1010 = vadd.f32 %v1009, %v954
    %1011 = vadd.xlane.f32.xlu0 %v1010
    %v1012 = vpop.xlane.xlu0 %1011
    %v1013 = vadd.f32 %v955, %v956
    %v1014 = vadd.f32 %v1013, %v957
    %1015 = vadd.xlane.f32.xlu0 %v1014
    %v1016 = vpop.xlane.xlu0 %1015
    %v1017 = vadd.f32 %v958, %v959
    %v1018 = vadd.f32 %v1017, %v960
    %1019 = vadd.xlane.f32.xlu0 %v1018
    %v1020 = vpop.xlane.xlu0 %1019
    %v1021 = vadd.f32 %v961, %v962
    %v1022 = vadd.f32 %v1021, %v963
    %1023 = vadd.xlane.f32.xlu0 %v1022
    %v1024 = vpop.xlane.xlu0 %1023
    %v1025 = vadd.f32 %v964, %v965
    %v1026 = vadd.f32 %v1025, %v966
    %1027 = vadd.xlane.f32.xlu0 %v1026
    %v1028 = vpop.xlane.xlu0 %1027
    %v1029 = vadd.f32 %v967, %v968
    %v1030 = vadd.f32 %v1029, %v969
    %1031 = vadd.xlane.f32.xlu0 %v1030
    %v1032 = vpop.xlane.xlu0 %1031
    %v1033 = vadd.f32 %v970, %v971
    %v1034 = vadd.f32 %v1033, %v972
    %1035 = vadd.xlane.f32.xlu0 %v1034
    %v1036 = vpop.xlane.xlu0 %1035
    %v1037 = vmul.f32 %v976, 0.0029239766
    %v1038 = vmul.f32 %v980, 0.0029239766
    %v1039 = vmul.f32 %v984, 0.0029239766
    %v1040 = vmul.f32 %v988, 0.0029239766
    %v1041 = vmul.f32 %v992, 0.0029239766
    %v1042 = vmul.f32 %v996, 0.0029239766
    %v1043 = vmul.f32 %v1000, 0.0029239766
    %v1044 = vmul.f32 %v1004, 0.0029239766
    %v1045 = vmul.f32 %v1008, 0.0029239766
    %v1046 = vmul.f32 %v1012, 0.0029239766
    %v1047 = vmul.f32 %v1016, 0.0029239766
    %v1048 = vmul.f32 %v1020, 0.0029239766
    %v1049 = vmul.f32 %v1024, 0.0029239766
    %v1050 = vmul.f32 %v1028, 0.0029239766
    %v1051 = vmul.f32 %v1032, 0.0029239766
    %v1052 = vmul.f32 %v1036, 0.0029239766
    %v1053 = vadd.f32 %v1037, 1e-05
    %v1054 = vadd.f32 %v1038, 1e-05
    %v1055 = vadd.f32 %v1039, 1e-05
    %v1056 = vadd.f32 %v1040, 1e-05
    %v1057 = vadd.f32 %v1041, 1e-05
    %v1058 = vadd.f32 %v1042, 1e-05
    %v1059 = vadd.f32 %v1043, 1e-05
    %v1060 = vadd.f32 %v1044, 1e-05
    %v1061 = vadd.f32 %v1045, 1e-05
    %v1062 = vadd.f32 %v1046, 1e-05
    %v1063 = vadd.f32 %v1047, 1e-05
    %v1064 = vadd.f32 %v1048, 1e-05
    %v1065 = vadd.f32 %v1049, 1e-05
    %v1066 = vadd.f32 %v1050, 1e-05
    %v1067 = vadd.f32 %v1051, 1e-05
    %v1068 = vadd.f32 %v1052, 1e-05
    %v1069 = vrsqrt.pop %v1053
    %v1070 = vmul.f32 %v1069, %v1053
    %v1071 = vmul.f32 %v1070, %v1069
    %v1072 = vmul.f32 0.5, %v1071
    %v1073 = vsub.f32 1.5, %v1072
    %v1074 = vmul.f32 %v1069, %v1073
    %vm1075 = vweird.f32 %v1053
    %vm1076 = vweird.f32 %v1069
    %vm1077 = vmor %vm1075, %vm1076
    %v1078 = vsel %vm1077, %v1069, %v1074
    %v1079 = vrsqrt.pop %v1054
    %v1080 = vmul.f32 %v1079, %v1054
    %v1081 = vmul.f32 %v1080, %v1079
    %v1082 = vmul.f32 0.5, %v1081
    %v1083 = vsub.f32 1.5, %v1082
    %v1084 = vmul.f32 %v1079, %v1083
    %vm1085 = vweird.f32 %v1054
    %vm1086 = vweird.f32 %v1079
    %vm1087 = vmor %vm1085, %vm1086
    %v1088 = vsel %vm1087, %v1079, %v1084
    %v1089 = vrsqrt.pop %v1055
    %v1090 = vmul.f32 %v1089, %v1055
    %v1091 = vmul.f32 %v1090, %v1089
    %v1092 = vmul.f32 0.5, %v1091
    %v1093 = vsub.f32 1.5, %v1092
    %v1094 = vmul.f32 %v1089, %v1093
    %vm1095 = vweird.f32 %v1055
    %vm1096 = vweird.f32 %v1089
    %vm1097 = vmor %vm1095, %vm1096
    %v1098 = vsel %vm1097, %v1089, %v1094
    %v1099 = vrsqrt.pop %v1056
    %v1100 = vmul.f32 %v1099, %v1056
    %v1101 = vmul.f32 %v1100, %v1099
    %v1102 = vmul.f32 0.5, %v1101
    %v1103 = vsub.f32 1.5, %v1102
    %v1104 = vmul.f32 %v1099, %v1103
    %vm1105 = vweird.f32 %v1056
    %vm1106 = vweird.f32 %v1099
    %vm1107 = vmor %vm1105, %vm1106
    %v1108 = vsel %vm1107, %v1099, %v1104
    %v1109 = vrsqrt.pop %v1057
    %v1110 = vmul.f32 %v1109, %v1057
    %v1111 = vmul.f32 %v1110, %v1109
    %v1112 = vmul.f32 0.5, %v1111
    %v1113 = vsub.f32 1.5, %v1112
    %v1114 = vmul.f32 %v1109, %v1113
    %vm1115 = vweird.f32 %v1057
    %vm1116 = vweird.f32 %v1109
    %vm1117 = vmor %vm1115, %vm1116
    %v1118 = vsel %vm1117, %v1109, %v1114
    %v1119 = vrsqrt.pop %v1058
    %v1120 = vmul.f32 %v1119, %v1058
    %v1121 = vmul.f32 %v1120, %v1119
    %v1122 = vmul.f32 0.5, %v1121
    %v1123 = vsub.f32 1.5, %v1122
    %v1124 = vmul.f32 %v1119, %v1123
    %vm1125 = vweird.f32 %v1058
    %vm1126 = vweird.f32 %v1119
    %vm1127 = vmor %vm1125, %vm1126
    %v1128 = vsel %vm1127, %v1119, %v1124
    %v1129 = vrsqrt.pop %v1059
    %v1130 = vmul.f32 %v1129, %v1059
    %v1131 = vmul.f32 %v1130, %v1129
    %v1132 = vmul.f32 0.5, %v1131
    %v1133 = vsub.f32 1.5, %v1132
    %v1134 = vmul.f32 %v1129, %v1133
    %vm1135 = vweird.f32 %v1059
    %vm1136 = vweird.f32 %v1129
    %vm1137 = vmor %vm1135, %vm1136
    %v1138 = vsel %vm1137, %v1129, %v1134
    %v1139 = vrsqrt.pop %v1060
    %v1140 = vmul.f32 %v1139, %v1060
    %v1141 = vmul.f32 %v1140, %v1139
    %v1142 = vmul.f32 0.5, %v1141
    %v1143 = vsub.f32 1.5, %v1142
    %v1144 = vmul.f32 %v1139, %v1143
    %vm1145 = vweird.f32 %v1060
    %vm1146 = vweird.f32 %v1139
    %vm1147 = vmor %vm1145, %vm1146
    %v1148 = vsel %vm1147, %v1139, %v1144
    %v1149 = vrsqrt.pop %v1061
    %v1150 = vmul.f32 %v1149, %v1061
    %v1151 = vmul.f32 %v1150, %v1149
    %v1152 = vmul.f32 0.5, %v1151
    %v1153 = vsub.f32 1.5, %v1152
    %v1154 = vmul.f32 %v1149, %v1153
    %vm1155 = vweird.f32 %v1061
    %vm1156 = vweird.f32 %v1149
    %vm1157 = vmor %vm1155, %vm1156
    %v1158 = vsel %vm1157, %v1149, %v1154
    %v1159 = vrsqrt.pop %v1062
    %v1160 = vmul.f32 %v1159, %v1062
    %v1161 = vmul.f32 %v1160, %v1159
    %v1162 = vmul.f32 0.5, %v1161
    %v1163 = vsub.f32 1.5, %v1162
    %v1164 = vmul.f32 %v1159, %v1163
    %vm1165 = vweird.f32 %v1062
    %vm1166 = vweird.f32 %v1159
    %vm1167 = vmor %vm1165, %vm1166
    %v1168 = vsel %vm1167, %v1159, %v1164
    %v1169 = vrsqrt.pop %v1063
    %v1170 = vmul.f32 %v1169, %v1063
    %v1171 = vmul.f32 %v1170, %v1169
    %v1172 = vmul.f32 0.5, %v1171
    %v1173 = vsub.f32 1.5, %v1172
    %v1174 = vmul.f32 %v1169, %v1173
    %vm1175 = vweird.f32 %v1063
    %vm1176 = vweird.f32 %v1169
    %vm1177 = vmor %vm1175, %vm1176
    %v1178 = vsel %vm1177, %v1169, %v1174
    %v1179 = vrsqrt.pop %v1064
    %v1180 = vmul.f32 %v1179, %v1064
    %v1181 = vmul.f32 %v1180, %v1179
    %v1182 = vmul.f32 0.5, %v1181
    %v1183 = vsub.f32 1.5, %v1182
    %v1184 = vmul.f32 %v1179, %v1183
    %vm1185 = vweird.f32 %v1064
    %vm1186 = vweird.f32 %v1179
    %vm1187 = vmor %vm1185, %vm1186
    %v1188 = vsel %vm1187, %v1179, %v1184
    %v1189 = vrsqrt.pop %v1065
    %v1190 = vmul.f32 %v1189, %v1065
    %v1191 = vmul.f32 %v1190, %v1189
    %v1192 = vmul.f32 0.5, %v1191
    %v1193 = vsub.f32 1.5, %v1192
    %v1194 = vmul.f32 %v1189, %v1193
    %vm1195 = vweird.f32 %v1065
    %vm1196 = vweird.f32 %v1189
    %vm1197 = vmor %vm1195, %vm1196
    %v1198 = vsel %vm1197, %v1189, %v1194
    %v1199 = vrsqrt.pop %v1066
    %v1200 = vmul.f32 %v1199, %v1066
    %v1201 = vmul.f32 %v1200, %v1199
    %v1202 = vmul.f32 0.5, %v1201
    %v1203 = vsub.f32 1.5, %v1202
    %v1204 = vmul.f32 %v1199, %v1203
    %vm1205 = vweird.f32 %v1066
    %vm1206 = vweird.f32 %v1199
    %vm1207 = vmor %vm1205, %vm1206
    %v1208 = vsel %vm1207, %v1199, %v1204
    %v1209 = vrsqrt.pop %v1067
    %v1210 = vmul.f32 %v1209, %v1067
    %v1211 = vmul.f32 %v1210, %v1209
    %v1212 = vmul.f32 0.5, %v1211
    %v1213 = vsub.f32 1.5, %v1212
    %v1214 = vmul.f32 %v1209, %v1213
    %vm1215 = vweird.f32 %v1067
    %vm1216 = vweird.f32 %v1209
    %vm1217 = vmor %vm1215, %vm1216
    %v1218 = vsel %vm1217, %v1209, %v1214
    %v1219 = vrsqrt.pop %v1068
    %v1220 = vmul.f32 %v1219, %v1068
    %v1221 = vmul.f32 %v1220, %v1219
    %v1222 = vmul.f32 0.5, %v1221
    %v1223 = vsub.f32 1.5, %v1222
    %v1224 = vmul.f32 %v1219, %v1223
    %vm1225 = vweird.f32 %v1068
    %vm1226 = vweird.f32 %v1219
    %vm1227 = vmor %vm1225, %vm1226
    %v1228 = vsel %vm1227, %v1219, %v1224
    %v1229 = vmul.f32 %v829, %v1078
    %v1230 = vmul.f32 %v830, %v1078
    %v1231 = vmul.f32 %v831, %v1078
    %v1232 = vmul.f32 %v832, %v1088
    %v1233 = vmul.f32 %v833, %v1088
    %v1234 = vmul.f32 %v834, %v1088
    %v1235 = vmul.f32 %v835, %v1098
    %v1236 = vmul.f32 %v836, %v1098
    %v1237 = vmul.f32 %v837, %v1098
    %v1238 = vmul.f32 %v838, %v1108
    %v1239 = vmul.f32 %v839, %v1108
    %v1240 = vmul.f32 %v840, %v1108
    %v1241 = vmul.f32 %v841, %v1118
    %v1242 = vmul.f32 %v842, %v1118
    %v1243 = vmul.f32 %v843, %v1118
    %v1244 = vmul.f32 %v844, %v1128
    %v1245 = vmul.f32 %v845, %v1128
    %v1246 = vmul.f32 %v846, %v1128
    %v1247 = vmul.f32 %v847, %v1138
    %v1248 = vmul.f32 %v848, %v1138
    %v1249 = vmul.f32 %v849, %v1138
    %v1250 = vmul.f32 %v850, %v1148
    %v1251 = vmul.f32 %v851, %v1148
    %v1252 = vmul.f32 %v852, %v1148
    %v1253 = vmul.f32 %v853, %v1158
    %v1254 = vmul.f32 %v854, %v1158
    %v1255 = vmul.f32 %v855, %v1158
    %v1256 = vmul.f32 %v856, %v1168
    %v1257 = vmul.f32 %v857, %v1168
    %v1258 = vmul.f32 %v858, %v1168
    %v1259 = vmul.f32 %v859, %v1178
    %v1260 = vmul.f32 %v860, %v1178
    %v1261 = vmul.f32 %v861, %v1178
    %v1262 = vmul.f32 %v862, %v1188
    %v1263 = vmul.f32 %v863, %v1188
    %v1264 = vmul.f32 %v864, %v1188
    %v1265 = vmul.f32 %v865, %v1198
    %v1266 = vmul.f32 %v866, %v1198
    %v1267 = vmul.f32 %v867, %v1198
    %v1268 = vmul.f32 %v868, %v1208
    %v1269 = vmul.f32 %v869, %v1208
    %v1270 = vmul.f32 %v870, %v1208
    %v1271 = vmul.f32 %v871, %v1218
    %v1272 = vmul.f32 %v872, %v1218
    %v1273 = vmul.f32 %v873, %v1218
    %v1274 = vmul.f32 %v874, %v1228
    %v1275 = vmul.f32 %v875, %v1228
    %v1276 = vmul.f32 %v876, %v1228
    %v1278 = vperm.slane %v686, 0
    %v1279 = vperm.slane %v686, 1
    %v1280 = vperm.slane %v686, 2
    %v1284 = vmul.f32 %v1229, %v1278
    %v1285 = vmul.f32 %v1230, %v1279
    %v1286 = vmul.f32 %v1231, %v1280
    %v1287 = vmul.f32 %v1232, %v1278
    %v1288 = vmul.f32 %v1233, %v1279
    %v1289 = vmul.f32 %v1234, %v1280
    %v1290 = vmul.f32 %v1235, %v1278
    %v1291 = vmul.f32 %v1236, %v1279
    %v1292 = vmul.f32 %v1237, %v1280
    %v1293 = vmul.f32 %v1238, %v1278
    %v1294 = vmul.f32 %v1239, %v1279
    %v1295 = vmul.f32 %v1240, %v1280
    %v1296 = vmul.f32 %v1241, %v1278
    %v1297 = vmul.f32 %v1242, %v1279
    %v1298 = vmul.f32 %v1243, %v1280
    %v1299 = vmul.f32 %v1244, %v1278
    %v1300 = vmul.f32 %v1245, %v1279
    %v1301 = vmul.f32 %v1246, %v1280
    %v1302 = vmul.f32 %v1247, %v1278
    %v1303 = vmul.f32 %v1248, %v1279
    %v1304 = vmul.f32 %v1249, %v1280
    %v1305 = vmul.f32 %v1250, %v1278
    %v1306 = vmul.f32 %v1251, %v1279
    %v1307 = vmul.f32 %v1252, %v1280
    %v1308 = vmul.f32 %v1253, %v1278
    %v1309 = vmul.f32 %v1254, %v1279
    %v1310 = vmul.f32 %v1255, %v1280
    %v1311 = vmul.f32 %v1256, %v1278
    %v1312 = vmul.f32 %v1257, %v1279
    %v1313 = vmul.f32 %v1258, %v1280
    %v1314 = vmul.f32 %v1259, %v1278
    %v1315 = vmul.f32 %v1260, %v1279
    %v1316 = vmul.f32 %v1261, %v1280
    %v1317 = vmul.f32 %v1262, %v1278
    %v1318 = vmul.f32 %v1263, %v1279
    %v1319 = vmul.f32 %v1264, %v1280
    %v1320 = vmul.f32 %v1265, %v1278
    %v1321 = vmul.f32 %v1266, %v1279
    %v1322 = vmul.f32 %v1267, %v1280
    %v1323 = vmul.f32 %v1268, %v1278
    %v1324 = vmul.f32 %v1269, %v1279
    %v1325 = vmul.f32 %v1270, %v1280
    %v1326 = vmul.f32 %v1271, %v1278
    %v1327 = vmul.f32 %v1272, %v1279
    %v1328 = vmul.f32 %v1273, %v1280
    %v1329 = vmul.f32 %v1274, %v1278
    %v1330 = vmul.f32 %v1275, %v1279
    %v1331 = vmul.f32 %v1276, %v1280
    %v1333 = vperm.slane %v687, 0
    %v1334 = vperm.slane %v687, 1
    %v1335 = vperm.slane %v687, 2
    %v1339 = vadd.f32 %v1284, %v1333
    %v1340 = vadd.f32 %v1285, %v1334
    %v1341 = vadd.f32 %v1286, %v1335
    %v1342 = vadd.f32 %v1287, %v1333
    %v1343 = vadd.f32 %v1288, %v1334
    %v1344 = vadd.f32 %v1289, %v1335
    %v1345 = vadd.f32 %v1290, %v1333
    %v1346 = vadd.f32 %v1291, %v1334
    %v1347 = vadd.f32 %v1292, %v1335
    %v1348 = vadd.f32 %v1293, %v1333
    %v1349 = vadd.f32 %v1294, %v1334
    %v1350 = vadd.f32 %v1295, %v1335
    %v1351 = vadd.f32 %v1296, %v1333
    %v1352 = vadd.f32 %v1297, %v1334
    %v1353 = vadd.f32 %v1298, %v1335
    %v1354 = vadd.f32 %v1299, %v1333
    %v1355 = vadd.f32 %v1300, %v1334
    %v1356 = vadd.f32 %v1301, %v1335
    %v1357 = vadd.f32 %v1302, %v1333
    %v1358 = vadd.f32 %v1303, %v1334
    %v1359 = vadd.f32 %v1304, %v1335
    %v1360 = vadd.f32 %v1305, %v1333
    %v1361 = vadd.f32 %v1306, %v1334
    %v1362 = vadd.f32 %v1307, %v1335
    %v1363 = vadd.f32 %v1308, %v1333
    %v1364 = vadd.f32 %v1309, %v1334
    %v1365 = vadd.f32 %v1310, %v1335
    %v1366 = vadd.f32 %v1311, %v1333
    %v1367 = vadd.f32 %v1312, %v1334
    %v1368 = vadd.f32 %v1313, %v1335
    %v1369 = vadd.f32 %v1314, %v1333
    %v1370 = vadd.f32 %v1315, %v1334
    %v1371 = vadd.f32 %v1316, %v1335
    %v1372 = vadd.f32 %v1317, %v1333
    %v1373 = vadd.f32 %v1318, %v1334
    %v1374 = vadd.f32 %v1319, %v1335
    %v1375 = vadd.f32 %v1320, %v1333
    %v1376 = vadd.f32 %v1321, %v1334
    %v1377 = vadd.f32 %v1322, %v1335
    %v1378 = vadd.f32 %v1323, %v1333
    %v1379 = vadd.f32 %v1324, %v1334
    %v1380 = vadd.f32 %v1325, %v1335
    %v1381 = vadd.f32 %v1326, %v1333
    %v1382 = vadd.f32 %v1327, %v1334
    %v1383 = vadd.f32 %v1328, %v1335
    %v1384 = vadd.f32 %v1329, %v1333
    %v1385 = vadd.f32 %v1330, %v1334
    %v1386 = vadd.f32 %v1331, %v1335
    %1387 = vst [vmem:[%s6] sm:$0xff] %v1339
    %1388 = vst [vmem:[%s6 + $0x8] sm:$0xff] %v1340
    %1389 = vst [vmem:[%s6 + $0x10] sm:$0xff] %v1341
    %1390 = vst [vmem:[%s6 + $0x18] sm:$0xff] %v1342
    %1391 = vst [vmem:[%s6 + $0x20] sm:$0xff] %v1343
    %1392 = vst [vmem:[%s6 + $0x28] sm:$0xff] %v1344
    %1393 = vst [vmem:[%s6 + $0x30] sm:$0xff] %v1345
    %1394 = vst [vmem:[%s6 + $0x38] sm:$0xff] %v1346
    %1395 = vst [vmem:[%s6 + $0x40] sm:$0xff] %v1347
    %1396 = vst [vmem:[%s6 + $0x48] sm:$0xff] %v1348
    %1397 = vst [vmem:[%s6 + $0x50] sm:$0xff] %v1349
    %1398 = vst [vmem:[%s6 + $0x58] sm:$0xff] %v1350
    %1399 = vst [vmem:[%s6 + $0x60] sm:$0xff] %v1351
    %1400 = vst [vmem:[%s6 + $0x68] sm:$0xff] %v1352
    %1401 = vst [vmem:[%s6 + $0x70] sm:$0xff] %v1353
    %1402 = vst [vmem:[%s6 + $0x78] sm:$0xff] %v1354
    %1403 = vst [vmem:[%s6 + $0x80] sm:$0xff] %v1355
    %1404 = vst [vmem:[%s6 + $0x88] sm:$0xff] %v1356
    %1405 = vst [vmem:[%s6 + $0x90] sm:$0xff] %v1357
    %1406 = vst [vmem:[%s6 + $0x98] sm:$0xff] %v1358
    %1407 = vst [vmem:[%s6 + $0xa0] sm:$0xff] %v1359
    %1408 = vst [vmem:[%s6 + $0xa8] sm:$0xff] %v1360
    %1409 = vst [vmem:[%s6 + $0xb0] sm:$0xff] %v1361
    %1410 = vst [vmem:[%s6 + $0xb8] sm:$0xff] %v1362
    %1411 = vst [vmem:[%s6 + $0xc0] sm:$0xff] %v1363
    %1412 = vst [vmem:[%s6 + $0xc8] sm:$0xff] %v1364
    %1413 = vst [vmem:[%s6 + $0xd0] sm:$0xff] %v1365
    %1414 = vst [vmem:[%s6 + $0xd8] sm:$0xff] %v1366
    %1415 = vst [vmem:[%s6 + $0xe0] sm:$0xff] %v1367
    %1416 = vst [vmem:[%s6 + $0xe8] sm:$0xff] %v1368
    %1417 = vst [vmem:[%s6 + $0xf0] sm:$0xff] %v1369
    %1418 = vst [vmem:[%s6 + $0xf8] sm:$0xff] %v1370
    %1419 = vst [vmem:[%s6 + $0x100] sm:$0xff] %v1371
    %1420 = vst [vmem:[%s6 + $0x108] sm:$0xff] %v1372
    %1421 = vst [vmem:[%s6 + $0x110] sm:$0xff] %v1373
    %1422 = vst [vmem:[%s6 + $0x118] sm:$0xff] %v1374
    %1423 = vst [vmem:[%s6 + $0x120] sm:$0xff] %v1375
    %1424 = vst [vmem:[%s6 + $0x128] sm:$0xff] %v1376
    %1425 = vst [vmem:[%s6 + $0x130] sm:$0xff] %v1377
    %1426 = vst [vmem:[%s6 + $0x138] sm:$0xff] %v1378
    %1427 = vst [vmem:[%s6 + $0x140] sm:$0xff] %v1379
    %1428 = vst [vmem:[%s6 + $0x148] sm:$0xff] %v1380
    %1429 = vst [vmem:[%s6 + $0x150] sm:$0xff] %v1381
    %1430 = vst [vmem:[%s6 + $0x158] sm:$0xff] %v1382
    %1431 = vst [vmem:[%s6 + $0x160] sm:$0xff] %v1383
    %1432 = vst [vmem:[%s6 + $0x168] sm:$0xff] %v1384
    %1433 = vst [vmem:[%s6 + $0x170] sm:$0xff] %v1385
    %1434 = vst [vmem:[%s6 + $0x178] sm:$0xff] %v1386
  $region29: #{graph_sage_forward.3} parent=0 // pred_fallthru
    _
  // Predicated region
  $region30: #{graph_sage_forward.3} parent=0 // pred_check
    _
  $region31: #{graph_sage_forward.3} parent=0 // pred_check_branch
    %1436 = sbr.rel (0) target = $region33
  $region32: #{graph_sage_forward.3} parent=0 // pred_region
    _
  $region33: #{graph_sage_forward.3} parent=0 // pred_fallthru
    _
  // Predicated region
  $region34: #{graph_sage_forward.3} parent=0 // pred_check
    _
  $region35: #{graph_sage_forward.3} parent=0 // pred_check_branch
    %1438 = sbr.rel (0) target = $region37
  $region36: #{graph_sage_forward.3} parent=0 // pred_region
    _
  $region37: #{graph_sage_forward.3} parent=0 // pred_fallthru
    _

// kernel: graph_sage_forward.2
$region0: #{graph_sage_forward.2}
  #allocation0 [shape = 'u32[]', space=smem, size = 0x4, offset = 0x4, fixed_abs, tag = 'smem constant byte address 0x4 - core index']
  #allocation1 [shape = 'u32[72,128]{1,0:T(1,128)}', space=vmem, size = 0x9000, scoped, tag = 'internal scratch']
  #allocation2 [shape = 'f32[128,512]{1,0:T(8,128)}', space=vmem, size = 0x40000, scoped, tag = 'scratch operand']
  #allocation3 [shape = 's32[1]{0}', space=sflag, size = 0x4, scoped, tag = 'scoped memory for graph_sage_forward.2']
  #allocation4 [shape = 's32[1,1]{1,0:T(1,128)S(6)}', space=smem, size = 0x200, scoped, tag = 'prefetched SMEM operand 0']
  #allocation5 [shape = 's32[1]{0:T(128)S(6)}', space=smem, size = 0x200, scoped, tag = 'prefetched SMEM operand 1']
  %s0 = inlined_call_operand.<no memory space> [shape: s32[1,1], index: 0, kind: input, shape index: {}]
  %s1 = inlined_call_operand.<no memory space> [shape: s32[1], index: 1, kind: input, shape index: {}]
  %s2 = inlined_call_operand.vmem [shape: bf16[128,128], index: 2, kind: input, shape index: {}]
  %s3 = inlined_call_operand.vmem [shape: bf16[128,512], index: 3, kind: input, shape index: {}]
  %s4 = inlined_call_operand.vmem [shape: f32[1,512], index: 4, kind: input, shape index: {}]
  %s5 = inlined_call_operand.vmem [shape: f32[1,512], index: 5, kind: input, shape index: {}]
  %s6 = inlined_call_operand.vmem [shape: f32[1,512], index: 6, kind: input, shape index: {}]
  %s7 = inlined_call_operand.vmem [shape: bf16[512,384], index: 7, kind: input, shape index: {}]
  %s8 = inlined_call_operand.vmem [shape: f32[1,384], index: 8, kind: input, shape index: {}]
  %s9 = inlined_call_operand.vmem [shape: bf16[128,384], index: 9, kind: output, shape index: {}]
  %s10 = sld [smem:[#allocation0]]
  $region50: #{graph_sage_forward.2} parent=0
    _
  %s12 = ssub.s32 1, %s10
  %s13 = scalar_select 0, %s12, %s10
  %14 = sst [smem:[#allocation4]] %s0
  %15 = sst [smem:[#allocation5]] %s1
  // Predicated region
  $region2: #{graph_sage_forward.2} parent=0 // pred_check
    _
  $region3: #{graph_sage_forward.2} parent=0 // pred_check_branch
    %17 = sbr.rel (0) target = $region5
  $region4: #{graph_sage_forward.2} parent=0 // pred_region
    %s18 = sadd.s32 0, 0
    %s19 = smul.u32 %s18, 128
    %s20 = sadd.s32 %s19, 0
    %s21 = sld [smem:[#allocation4 + %s20]]
    %p22 = scmp.lt.s32.totalorder %s21, 0
    %s23 = scalar_select %p22, %s21, 0
    %s24 = smul.addr %s23, 4
    %s25 = scalar_lea.vmem %s2, %s24
    %s26 = sadd.s32 0, 0
    %s27 = smul.u32 %s26, 128
    %s28 = sadd.s32 %s27, 0
    %s29 = sld [smem:[#allocation4 + %s28]]
  $region5: #{graph_sage_forward.2} parent=0 // pred_fallthru
    _
  // Predicated region
  $region6: #{graph_sage_forward.2} parent=0 // pred_check
    _
  $region7: #{graph_sage_forward.2} parent=0 // pred_check_branch
    %31 = sbr.rel (0) target = $region9
  $region8: #{graph_sage_forward.2} parent=0 // pred_region
    _
  $region9: #{graph_sage_forward.2} parent=0 // pred_fallthru
    _
  // Predicated region
  $region10: #{graph_sage_forward.2} parent=0 // pred_check
    _
  $region11: #{graph_sage_forward.2} parent=0 // pred_check_branch
    %33 = sbr.rel (0) target = $region13
  $region12: #{graph_sage_forward.2} parent=0 // pred_region
    _
  $region13: #{graph_sage_forward.2} parent=0 // pred_fallthru
    _
  // Predicated region
  $region14: #{graph_sage_forward.2} parent=0 // pred_check
    _
  $region15: #{graph_sage_forward.2} parent=0 // pred_check_branch
    %35 = sbr.rel (0) target = $region17
  $region16: #{graph_sage_forward.2} parent=0 // pred_region
    _
  $region17: #{graph_sage_forward.2} parent=0 // pred_fallthru
    _
  // Predicated region
  $region18: #{graph_sage_forward.2} parent=0 // pred_check
    _
  $region19: #{graph_sage_forward.2} parent=0 // pred_check_branch
    %37 = sbr.rel (0) target = $region21
  $region20: #{graph_sage_forward.2} parent=0 // pred_region
    _
  $region21: #{graph_sage_forward.2} parent=0 // pred_fallthru
    _
  // Predicated region
  $region22: #{graph_sage_forward.2} parent=0 // pred_check
    _
  $region23: #{graph_sage_forward.2} parent=0 // pred_check_branch
    %39 = sbr.rel (0) target = $region25
  $region24: #{graph_sage_forward.2} parent=0 // pred_region
    _
  $region25: #{graph_sage_forward.2} parent=0 // pred_fallthru
    _
  // Predicated region
  $region26: #{graph_sage_forward.2} parent=0 // pred_check
    _
  $region27: #{graph_sage_forward.2} parent=0 // pred_check_branch
    %41 = sbr.rel (0) target = $region29
  $region28: #{graph_sage_forward.2} parent=0 // pred_region
    _
  $region29: #{graph_sage_forward.2} parent=0 // pred_fallthru
    _
  %s42 = sadd.s32 0, 0
  %s43 = smul.u32 %s42, 128
  %s44 = sadd.s32 %s43, 0
  %s45 = sld [smem:[#allocation4 + %s44]]
  %p46 = scmp.lt.s32.totalorder %s45, 0
  %s47 = scalar_select %p46, %s45, 0
  %s48 = smul.addr %s47, 4
  %s49 = scalar_lea.vmem %s2, %s48
  %s50 = sadd.s32 0, 0
  %s51 = smul.u32 %s50, 128
  %s52 = sadd.s32 %s51, 0
  %s53 = sld [smem:[#allocation4 + %s52]]
  %p54 = scmp.lt.s32.totalorder %s53, 0
  %s55 = scalar_select %p54, %s53, 0
  %s56 = smul.addr %s55, 4
  %s57 = scalar_lea.vmem %s2, %s56
  %s58 = sadd.s32 0, 0
  %s59 = smul.u32 %s58, 128
  %s60 = sadd.s32 %s59, 0
  %s61 = sld [smem:[#allocation4 + %s60]]
  %p62 = scmp.eq.s32.totalorder 0, 0
  // Predicated region
  $region30: #{graph_sage_forward.2} parent=0 // pred_check
    %p63 = pneg %p62
  $region31: #{graph_sage_forward.2} parent=0 // pred_check_branch
    %65 = sbr.rel (%p63) target = $region33
  $region32: #{graph_sage_forward.2} parent=0 // pred_region
    %66 = vst [vmem:[#allocation2] sm:$0xff] 0.0
    %67 = vst [vmem:[#allocation2 + $0x8] sm:$0xff] 0.0
    %68 = vst [vmem:[#allocation2 + $0x10] sm:$0xff] 0.0
    %69 = vst [vmem:[#allocation2 + $0x18] sm:$0xff] 0.0
    %70 = vst [vmem:[#allocation2 + $0x20] sm:$0xff] 0.0
    %71 = vst [vmem:[#allocation2 + $0x28] sm:$0xff] 0.0
    %72 = vst [vmem:[#allocation2 + $0x30] sm:$0xff] 0.0
    %73 = vst [vmem:[#allocation2 + $0x38] sm:$0xff] 0.0
    %74 = vst [vmem:[#allocation2 + $0x40] sm:$0xff] 0.0
    %75 = vst [vmem:[#allocation2 + $0x48] sm:$0xff] 0.0
    %76 = vst [vmem:[#allocation2 + $0x50] sm:$0xff] 0.0
    %77 = vst [vmem:[#allocation2 + $0x58] sm:$0xff] 0.0
    %78 = vst [vmem:[#allocation2 + $0x60] sm:$0xff] 0.0
    %79 = vst [vmem:[#allocation2 + $0x68] sm:$0xff] 0.0
    %80 = vst [vmem:[#allocation2 + $0x70] sm:$0xff] 0.0
    %81 = vst [vmem:[#allocation2 + $0x78] sm:$0xff] 0.0
    %82 = vst [vmem:[#allocation2 + $0x80] sm:$0xff] 0.0
    %83 = vst [vmem:[#allocation2 + $0x88] sm:$0xff] 0.0
    %84 = vst [vmem:[#allocation2 + $0x90] sm:$0xff] 0.0
    %85 = vst [vmem:[#allocation2 + $0x98] sm:$0xff] 0.0
    %86 = vst [vmem:[#allocation2 + $0xa0] sm:$0xff] 0.0
    %87 = vst [vmem:[#allocation2 + $0xa8] sm:$0xff] 0.0
    %88 = vst [vmem:[#allocation2 + $0xb0] sm:$0xff] 0.0
    %89 = vst [vmem:[#allocation2 + $0xb8] sm:$0xff] 0.0
    %90 = vst [vmem:[#allocation2 + $0xc0] sm:$0xff] 0.0
    %91 = vst [vmem:[#allocation2 + $0xc8] sm:$0xff] 0.0
    %92 = vst [vmem:[#allocation2 + $0xd0] sm:$0xff] 0.0
    %93 = vst [vmem:[#allocation2 + $0xd8] sm:$0xff] 0.0
    %94 = vst [vmem:[#allocation2 + $0xe0] sm:$0xff] 0.0
    %95 = vst [vmem:[#allocation2 + $0xe8] sm:$0xff] 0.0
    %96 = vst [vmem:[#allocation2 + $0xf0] sm:$0xff] 0.0
    %97 = vst [vmem:[#allocation2 + $0xf8] sm:$0xff] 0.0
    %98 = vst [vmem:[#allocation2 + $0x100] sm:$0xff] 0.0
    %99 = vst [vmem:[#allocation2 + $0x108] sm:$0xff] 0.0
    %100 = vst [vmem:[#allocation2 + $0x110] sm:$0xff] 0.0
    %101 = vst [vmem:[#allocation2 + $0x118] sm:$0xff] 0.0
    %102 = vst [vmem:[#allocation2 + $0x120] sm:$0xff] 0.0
    %103 = vst [vmem:[#allocation2 + $0x128] sm:$0xff] 0.0
    %104 = vst [vmem:[#allocation2 + $0x130] sm:$0xff] 0.0
    %105 = vst [vmem:[#allocation2 + $0x138] sm:$0xff] 0.0
    %106 = vst [vmem:[#allocation2 + $0x140] sm:$0xff] 0.0
    %107 = vst [vmem:[#allocation2 + $0x148] sm:$0xff] 0.0
    %108 = vst [vmem:[#allocation2 + $0x150] sm:$0xff] 0.0
    %109 = vst [vmem:[#allocation2 + $0x158] sm:$0xff] 0.0
    %110 = vst [vmem:[#allocation2 + $0x160] sm:$0xff] 0.0
    %111 = vst [vmem:[#allocation2 + $0x168] sm:$0xff] 0.0
    %112 = vst [vmem:[#allocation2 + $0x170] sm:$0xff] 0.0
    %113 = vst [vmem:[#allocation2 + $0x178] sm:$0xff] 0.0
    %114 = vst [vmem:[#allocation2 + $0x180] sm:$0xff] 0.0
    %115 = vst [vmem:[#allocation2 + $0x188] sm:$0xff] 0.0
    %116 = vst [vmem:[#allocation2 + $0x190] sm:$0xff] 0.0
    %117 = vst [vmem:[#allocation2 + $0x198] sm:$0xff] 0.0
    %118 = vst [vmem:[#allocation2 + $0x1a0] sm:$0xff] 0.0
    %119 = vst [vmem:[#allocation2 + $0x1a8] sm:$0xff] 0.0
    %120 = vst [vmem:[#allocation2 + $0x1b0] sm:$0xff] 0.0
    %121 = vst [vmem:[#allocation2 + $0x1b8] sm:$0xff] 0.0
    %122 = vst [vmem:[#allocation2 + $0x1c0] sm:$0xff] 0.0
    %123 = vst [vmem:[#allocation2 + $0x1c8] sm:$0xff] 0.0
    %124 = vst [vmem:[#allocation2 + $0x1d0] sm:$0xff] 0.0
    %125 = vst [vmem:[#allocation2 + $0x1d8] sm:$0xff] 0.0
    %126 = vst [vmem:[#allocation2 + $0x1e0] sm:$0xff] 0.0
    %127 = vst [vmem:[#allocation2 + $0x1e8] sm:$0xff] 0.0
    %128 = vst [vmem:[#allocation2 + $0x1f0] sm:$0xff] 0.0
    %129 = vst [vmem:[#allocation2 + $0x1f8] sm:$0xff] 0.0
  $region33: #{graph_sage_forward.2} parent=0 // pred_fallthru
    _
  %s130 = sld [smem:[#allocation5]]
  %p131 = scmp.lt.s32.totalorder 0, %s130
  // Predicated region
  $region34: #{graph_sage_forward.2} parent=0 // pred_check
    %p132 = pneg %p131
  $region35: #{graph_sage_forward.2} parent=0 // pred_check_branch
    %134 = sbr.rel (%p132) target = $region37
  $region36: #{graph_sage_forward.2} parent=0 // pred_region
    %s135 = sadd.s32 0, 0
    %s136 = smul.u32 %s135, 128
    %s137 = sadd.s32 %s136, 0
    %s138 = sld [smem:[#allocation4 + %s137]]
    %s139 = smul.u32 %s138, 128
    %s140 = sshra.s32 %s139, 3
    %s141 = sand.u32 %s139, 7
    %s142 = smul.u32 %s140, 4
    %s143 = smul.addr %s142, 4
    %s144 = scalar_lea.vmem %s3, %s143
    %v145 = vld [vmem:[%s144] sm:$0xff]
    %v146 = vld [vmem:[%s144 + $0x8] sm:$0xff]
    %v147 = vld [vmem:[%s144 + $0x10] sm:$0xff]
    %v148 = vld [vmem:[%s144 + $0x18] sm:$0xff]
    %v149 = vld [vmem:[%s144 + $0x20] sm:$0xff]
    %v150 = vld [vmem:[%s144 + $0x28] sm:$0xff]
    %v151 = vld [vmem:[%s144 + $0x30] sm:$0xff]
    %v152 = vld [vmem:[%s144 + $0x38] sm:$0xff]
    %v153 = vld [vmem:[%s144 + $0x40] sm:$0xff]
    %v154 = vld [vmem:[%s144 + $0x48] sm:$0xff]
    %v155 = vld [vmem:[%s144 + $0x50] sm:$0xff]
    %v156 = vld [vmem:[%s144 + $0x58] sm:$0xff]
    %v157 = vld [vmem:[%s144 + $0x60] sm:$0xff]
    %v158 = vld [vmem:[%s144 + $0x68] sm:$0xff]
    %v159 = vld [vmem:[%s144 + $0x70] sm:$0xff]
    %v160 = vld [vmem:[%s144 + $0x78] sm:$0xff]
    %v161 = vld [vmem:[%s144 + $0x80] sm:$0xff]
    %v162 = vld [vmem:[%s144 + $0x88] sm:$0xff]
    %v163 = vld [vmem:[%s144 + $0x90] sm:$0xff]
    %v164 = vld [vmem:[%s144 + $0x98] sm:$0xff]
    %v165 = vld [vmem:[%s144 + $0xa0] sm:$0xff]
    %v166 = vld [vmem:[%s144 + $0xa8] sm:$0xff]
    %v167 = vld [vmem:[%s144 + $0xb0] sm:$0xff]
    %v168 = vld [vmem:[%s144 + $0xb8] sm:$0xff]
    %v169 = vld [vmem:[%s144 + $0xc0] sm:$0xff]
    %v170 = vld [vmem:[%s144 + $0xc8] sm:$0xff]
    %v171 = vld [vmem:[%s144 + $0xd0] sm:$0xff]
    %v172 = vld [vmem:[%s144 + $0xd8] sm:$0xff]
    %v173 = vld [vmem:[%s144 + $0xe0] sm:$0xff]
    %v174 = vld [vmem:[%s144 + $0xe8] sm:$0xff]
    %v175 = vld [vmem:[%s144 + $0xf0] sm:$0xff]
    %v176 = vld [vmem:[%s144 + $0xf8] sm:$0xff]
    %v177 = vld [vmem:[#allocation2] sm:$0xff]
    %v178 = vld [vmem:[#allocation2 + $0x8] sm:$0xff]
    %v179 = vld [vmem:[#allocation2 + $0x10] sm:$0xff]
    %v180 = vld [vmem:[#allocation2 + $0x18] sm:$0xff]
    %v181 = vld [vmem:[#allocation2 + $0x20] sm:$0xff]
    %v182 = vld [vmem:[#allocation2 + $0x28] sm:$0xff]
    %v183 = vld [vmem:[#allocation2 + $0x30] sm:$0xff]
    %v184 = vld [vmem:[#allocation2 + $0x38] sm:$0xff]
    %v185 = vld [vmem:[#allocation2 + $0x40] sm:$0xff]
    %v186 = vld [vmem:[#allocation2 + $0x48] sm:$0xff]
    %v187 = vld [vmem:[#allocation2 + $0x50] sm:$0xff]
    %v188 = vld [vmem:[#allocation2 + $0x58] sm:$0xff]
    %v189 = vld [vmem:[#allocation2 + $0x60] sm:$0xff]
    %v190 = vld [vmem:[#allocation2 + $0x68] sm:$0xff]
    %v191 = vld [vmem:[#allocation2 + $0x70] sm:$0xff]
    %v192 = vld [vmem:[#allocation2 + $0x78] sm:$0xff]
    %v193 = vld [vmem:[#allocation2 + $0x80] sm:$0xff]
    %v194 = vld [vmem:[#allocation2 + $0x88] sm:$0xff]
    %v195 = vld [vmem:[#allocation2 + $0x90] sm:$0xff]
    %v196 = vld [vmem:[#allocation2 + $0x98] sm:$0xff]
    %v197 = vld [vmem:[#allocation2 + $0xa0] sm:$0xff]
    %v198 = vld [vmem:[#allocation2 + $0xa8] sm:$0xff]
    %v199 = vld [vmem:[#allocation2 + $0xb0] sm:$0xff]
    %v200 = vld [vmem:[#allocation2 + $0xb8] sm:$0xff]
    %v201 = vld [vmem:[#allocation2 + $0xc0] sm:$0xff]
    %v202 = vld [vmem:[#allocation2 + $0xc8] sm:$0xff]
    %v203 = vld [vmem:[#allocation2 + $0xd0] sm:$0xff]
    %v204 = vld [vmem:[#allocation2 + $0xd8] sm:$0xff]
    %v205 = vld [vmem:[#allocation2 + $0xe0] sm:$0xff]
    %v206 = vld [vmem:[#allocation2 + $0xe8] sm:$0xff]
    %v207 = vld [vmem:[#allocation2 + $0xf0] sm:$0xff]
    %v208 = vld [vmem:[#allocation2 + $0xf8] sm:$0xff]
    %v209 = vld [vmem:[#allocation2 + $0x100] sm:$0xff]
    %v210 = vld [vmem:[#allocation2 + $0x108] sm:$0xff]
    %v211 = vld [vmem:[#allocation2 + $0x110] sm:$0xff]
    %v212 = vld [vmem:[#allocation2 + $0x118] sm:$0xff]
    %v213 = vld [vmem:[#allocation2 + $0x120] sm:$0xff]
    %v214 = vld [vmem:[#allocation2 + $0x128] sm:$0xff]
    %v215 = vld [vmem:[#allocation2 + $0x130] sm:$0xff]
    %v216 = vld [vmem:[#allocation2 + $0x138] sm:$0xff]
    %v217 = vld [vmem:[#allocation2 + $0x140] sm:$0xff]
    %v218 = vld [vmem:[#allocation2 + $0x148] sm:$0xff]
    %v219 = vld [vmem:[#allocation2 + $0x150] sm:$0xff]
    %v220 = vld [vmem:[#allocation2 + $0x158] sm:$0xff]
    %v221 = vld [vmem:[#allocation2 + $0x160] sm:$0xff]
    %v222 = vld [vmem:[#allocation2 + $0x168] sm:$0xff]
    %v223 = vld [vmem:[#allocation2 + $0x170] sm:$0xff]
    %v224 = vld [vmem:[#allocation2 + $0x178] sm:$0xff]
    %v225 = vld [vmem:[#allocation2 + $0x180] sm:$0xff]
    %v226 = vld [vmem:[#allocation2 + $0x188] sm:$0xff]
    %v227 = vld [vmem:[#allocation2 + $0x190] sm:$0xff]
    %v228 = vld [vmem:[#allocation2 + $0x198] sm:$0xff]
    %v229 = vld [vmem:[#allocation2 + $0x1a0] sm:$0xff]
    %v230 = vld [vmem:[#allocation2 + $0x1a8] sm:$0xff]
    %v231 = vld [vmem:[#allocation2 + $0x1b0] sm:$0xff]
    %v232 = vld [vmem:[#allocation2 + $0x1b8] sm:$0xff]
    %v233 = vld [vmem:[#allocation2 + $0x1c0] sm:$0xff]
    %v234 = vld [vmem:[#allocation2 + $0x1c8] sm:$0xff]
    %v235 = vld [vmem:[#allocation2 + $0x1d0] sm:$0xff]
    %v236 = vld [vmem:[#allocation2 + $0x1d8] sm:$0xff]
    %v237 = vld [vmem:[#allocation2 + $0x1e0] sm:$0xff]
    %v238 = vld [vmem:[#allocation2 + $0x1e8] sm:$0xff]
    %v239 = vld [vmem:[#allocation2 + $0x1f0] sm:$0xff]
    %v240 = vld [vmem:[#allocation2 + $0x1f8] sm:$0xff]
    %v241 = vld [vmem:[%s57] sm:$0xf]
    %v242 = vld [vmem:[%s57 + $0x4] sm:$0xf]
    %v243 = vld [vmem:[%s57 + $0x8] sm:$0xf]
    %v244 = vld [vmem:[%s57 + $0xc] sm:$0xf]
    %v245 = vld [vmem:[%s57 + $0x10] sm:$0xf]
    %v246 = vld [vmem:[%s57 + $0x14] sm:$0xf]
    %v247 = vld [vmem:[%s57 + $0x18] sm:$0xf]
    %v248 = vld [vmem:[%s57 + $0x1c] sm:$0xf]
    %v249 = vld [vmem:[%s57 + $0x20] sm:$0xf]
    %v250 = vld [vmem:[%s57 + $0x24] sm:$0xf]
    %v251 = vld [vmem:[%s57 + $0x28] sm:$0xf]
    %v252 = vld [vmem:[%s57 + $0x2c] sm:$0xf]
    %v253 = vld [vmem:[%s57 + $0x30] sm:$0xf]
    %v254 = vld [vmem:[%s57 + $0x34] sm:$0xf]
    %v255 = vld [vmem:[%s57 + $0x38] sm:$0xf]
    %v256 = vld [vmem:[%s57 + $0x3c] sm:$0xf]
    %v273 = vunpack.c.l.b16 %v241
    %v274 = vunpack.c.l.b16 %v242
    %v275 = vunpack.c.l.b16 %v243
    %v276 = vunpack.c.l.b16 %v244
    %v277 = vunpack.c.l.b16 %v245
    %v278 = vunpack.c.l.b16 %v246
    %v279 = vunpack.c.l.b16 %v247
    %v280 = vunpack.c.l.b16 %v248
    %v281 = vunpack.c.l.b16 %v249
    %v282 = vunpack.c.l.b16 %v250
    %v283 = vunpack.c.l.b16 %v251
    %v284 = vunpack.c.l.b16 %v252
    %v285 = vunpack.c.l.b16 %v253
    %v286 = vunpack.c.l.b16 %v254
    %v287 = vunpack.c.l.b16 %v255
    %v288 = vunpack.c.l.b16 %v256
    %v289 = vpack.c.b16 %v274, %v273
    %v290 = vpack.c.b16 %v276, %v275
    %v291 = vpack.c.b16 %v278, %v277
    %v292 = vpack.c.b16 %v280, %v279
    %v293 = vpack.c.b16 %v282, %v281
    %v294 = vpack.c.b16 %v284, %v283
    %v295 = vpack.c.b16 %v286, %v285
    %v296 = vpack.c.b16 %v288, %v287
    %v337 = vunpack.c.l.b16 %v145
    %v338 = vunpack.c.h.b16 %v145
    %v339 = vunpack.c.l.b16 %v146
    %v340 = vunpack.c.h.b16 %v146
    %v341 = vunpack.c.l.b16 %v147
    %v342 = vunpack.c.h.b16 %v147
    %v343 = vunpack.c.l.b16 %v148
    %v344 = vunpack.c.h.b16 %v148
    %v345 = vunpack.c.l.b16 %v149
    %v346 = vunpack.c.h.b16 %v149
    %v347 = vunpack.c.l.b16 %v150
    %v348 = vunpack.c.h.b16 %v150
    %v349 = vunpack.c.l.b16 %v151
    %v350 = vunpack.c.h.b16 %v151
    %v351 = vunpack.c.l.b16 %v152
    %v352 = vunpack.c.h.b16 %v152
    %v353 = vunpack.c.l.b16 %v153
    %v354 = vunpack.c.h.b16 %v153
    %v355 = vunpack.c.l.b16 %v154
    %v356 = vunpack.c.h.b16 %v154
    %v357 = vunpack.c.l.b16 %v155
    %v358 = vunpack.c.h.b16 %v155
    %v359 = vunpack.c.l.b16 %v156
    %v360 = vunpack.c.h.b16 %v156
    %v361 = vunpack.c.l.b16 %v157
    %v362 = vunpack.c.h.b16 %v157
    %v363 = vunpack.c.l.b16 %v158
    %v364 = vunpack.c.h.b16 %v158
    %v365 = vunpack.c.l.b16 %v159
    %v366 = vunpack.c.h.b16 %v159
    %v367 = vunpack.c.l.b16 %v160
    %v368 = vunpack.c.h.b16 %v160
    %v369 = vunpack.c.l.b16 %v161
    %v370 = vunpack.c.h.b16 %v161
    %v371 = vunpack.c.l.b16 %v162
    %v372 = vunpack.c.h.b16 %v162
    %v373 = vunpack.c.l.b16 %v163
    %v374 = vunpack.c.h.b16 %v163
    %v375 = vunpack.c.l.b16 %v164
    %v376 = vunpack.c.h.b16 %v164
    %v377 = vunpack.c.l.b16 %v165
    %v378 = vunpack.c.h.b16 %v165
    %v379 = vunpack.c.l.b16 %v166
    %v380 = vunpack.c.h.b16 %v166
    %v381 = vunpack.c.l.b16 %v167
    %v382 = vunpack.c.h.b16 %v167
    %v383 = vunpack.c.l.b16 %v168
    %v384 = vunpack.c.h.b16 %v168
    %v385 = vunpack.c.l.b16 %v169
    %v386 = vunpack.c.h.b16 %v169
    %v387 = vunpack.c.l.b16 %v170
    %v388 = vunpack.c.h.b16 %v170
    %v389 = vunpack.c.l.b16 %v171
    %v390 = vunpack.c.h.b16 %v171
    %v391 = vunpack.c.l.b16 %v172
    %v392 = vunpack.c.h.b16 %v172
    %v393 = vunpack.c.l.b16 %v173
    %v394 = vunpack.c.h.b16 %v173
    %v395 = vunpack.c.l.b16 %v174
    %v396 = vunpack.c.h.b16 %v174
    %v397 = vunpack.c.l.b16 %v175
    %v398 = vunpack.c.h.b16 %v175
    %v399 = vunpack.c.l.b16 %v176
    %v400 = vunpack.c.h.b16 %v176
    %v401 = vpack.c.b16 %v341, %v337
    %v402 = vpack.c.b16 %v342, %v338
    %v403 = vpack.c.b16 %v343, %v339
    %v404 = vpack.c.b16 %v344, %v340
    %v405 = vpack.c.b16 %v349, %v345
    %v406 = vpack.c.b16 %v350, %v346
    %v407 = vpack.c.b16 %v351, %v347
    %v408 = vpack.c.b16 %v352, %v348
    %v409 = vpack.c.b16 %v357, %v353
    %v410 = vpack.c.b16 %v358, %v354
    %v411 = vpack.c.b16 %v359, %v355
    %v412 = vpack.c.b16 %v360, %v356
    %v413 = vpack.c.b16 %v365, %v361
    %v414 = vpack.c.b16 %v366, %v362
    %v415 = vpack.c.b16 %v367, %v363
    %v416 = vpack.c.b16 %v368, %v364
    %v417 = vpack.c.b16 %v373, %v369
    %v418 = vpack.c.b16 %v374, %v370
    %v419 = vpack.c.b16 %v375, %v371
    %v420 = vpack.c.b16 %v376, %v372
    %v421 = vpack.c.b16 %v381, %v377
    %v422 = vpack.c.b16 %v382, %v378
    %v423 = vpack.c.b16 %v383, %v379
    %v424 = vpack.c.b16 %v384, %v380
    %v425 = vpack.c.b16 %v389, %v385
    %v426 = vpack.c.b16 %v390, %v386
    %v427 = vpack.c.b16 %v391, %v387
    %v428 = vpack.c.b16 %v392, %v388
    %v429 = vpack.c.b16 %v397, %v393
    %v430 = vpack.c.b16 %v398, %v394
    %v431 = vpack.c.b16 %v399, %v395
    %v432 = vpack.c.b16 %v400, %v396
    %465 = vmatpush.bf16.msra.mxu0 %v429
    %466 = vmatpush.bf16.msra.mxu0 %v425
    %467 = vmatpush.bf16.msra.mxu0 %v421
    %468 = vmatpush.bf16.msra.mxu0 %v417
    %469 = vmatpush.bf16.msra.mxu0 %v413
    %470 = vmatpush.bf16.msra.mxu0 %v409
    %471 = vmatpush.bf16.msra.mxu0 %v405
    %472 = vmatpush.bf16.msra.mxu0 %v401
    %473 = vmatmul.bf16.gmra.mxu0 %v289
    %v474 = vpop.f32.mrf.mxu0
    %v475 = vadd.f32 0.0, %v474
    %v476 = vpop.f32.mrf.mxu0
    %v477 = vadd.f32 0.0, %v476
    %478 = vmatmul.bf16.gmra.mxu0 %v290
    %v479 = vpop.f32.mrf.mxu0
    %v480 = vadd.f32 0.0, %v479
    %v481 = vpop.f32.mrf.mxu0
    %v482 = vadd.f32 0.0, %v481
    %483 = vmatmul.bf16.gmra.mxu0 %v291
    %v484 = vpop.f32.mrf.mxu0
    %v485 = vadd.f32 0.0, %v484
    %v486 = vpop.f32.mrf.mxu0
    %v487 = vadd.f32 0.0, %v486
    %488 = vmatmul.bf16.gmra.mxu0 %v292
    %v489 = vpop.f32.mrf.mxu0
    %v490 = vadd.f32 0.0, %v489
    %v491 = vpop.f32.mrf.mxu0
    %v492 = vadd.f32 0.0, %v491
    %493 = vmatmul.bf16.gmra.mxu0 %v293
    %v494 = vpop.f32.mrf.mxu0
    %v495 = vadd.f32 0.0, %v494
    %v496 = vpop.f32.mrf.mxu0
    %v497 = vadd.f32 0.0, %v496
    %498 = vmatmul.bf16.gmra.mxu0 %v294
    %v499 = vpop.f32.mrf.mxu0
    %v500 = vadd.f32 0.0, %v499
    %v501 = vpop.f32.mrf.mxu0
    %v502 = vadd.f32 0.0, %v501
    %503 = vmatmul.bf16.gmra.mxu0 %v295
    %v504 = vpop.f32.mrf.mxu0
    %v505 = vadd.f32 0.0, %v504
    %v506 = vpop.f32.mrf.mxu0
    %v507 = vadd.f32 0.0, %v506
    %508 = vmatmul.bf16.gmra.mxu0 %v296
    %v509 = vpop.f32.mrf.mxu0
    %v510 = vadd.f32 0.0, %v509
    %v511 = vpop.f32.mrf.mxu0
    %v512 = vadd.f32 0.0, %v511
    %513 = vdwg.mxu0
    %514 = vmatpush.bf16.msra.mxu0 %v430
    %515 = vmatpush.bf16.msra.mxu0 %v426
    %516 = vmatpush.bf16.msra.mxu0 %v422
    %517 = vmatpush.bf16.msra.mxu0 %v418
    %518 = vmatpush.bf16.msra.mxu0 %v414
    %519 = vmatpush.bf16.msra.mxu0 %v410
    %520 = vmatpush.bf16.msra.mxu0 %v406
    %521 = vmatpush.bf16.msra.mxu0 %v402
    %522 = vmatmul.bf16.gmra.mxu0 %v289
    %v523 = vpop.f32.mrf.mxu0
    %v524 = vadd.f32 0.0, %v523
    %v525 = vpop.f32.mrf.mxu0
    %v526 = vadd.f32 0.0, %v525
    %527 = vmatmul.bf16.gmra.mxu0 %v290
    %v528 = vpop.f32.mrf.mxu0
    %v529 = vadd.f32 0.0, %v528
    %v530 = vpop.f32.mrf.mxu0
    %v531 = vadd.f32 0.0, %v530
    %532 = vmatmul.bf16.gmra.mxu0 %v291
    %v533 = vpop.f32.mrf.mxu0
    %v534 = vadd.f32 0.0, %v533
    %v535 = vpop.f32.mrf.mxu0
    %v536 = vadd.f32 0.0, %v535
    %537 = vmatmul.bf16.gmra.mxu0 %v292
    %v538 = vpop.f32.mrf.mxu0
    %v539 = vadd.f32 0.0, %v538
    %v540 = vpop.f32.mrf.mxu0
    %v541 = vadd.f32 0.0, %v540
    %542 = vmatmul.bf16.gmra.mxu0 %v293
    %v543 = vpop.f32.mrf.mxu0
    %v544 = vadd.f32 0.0, %v543
    %v545 = vpop.f32.mrf.mxu0
    %v546 = vadd.f32 0.0, %v545
    %547 = vmatmul.bf16.gmra.mxu0 %v294
    %v548 = vpop.f32.mrf.mxu0
    %v549 = vadd.f32 0.0, %v548
    %v550 = vpop.f32.mrf.mxu0
    %v551 = vadd.f32 0.0, %v550
    %552 = vmatmul.bf16.gmra.mxu0 %v295
    %v553 = vpop.f32.mrf.mxu0
    %v554 = vadd.f32 0.0, %v553
    %v555 = vpop.f32.mrf.mxu0
    %v556 = vadd.f32 0.0, %v555
    %557 = vmatmul.bf16.gmra.mxu0 %v296
    %v558 = vpop.f32.mrf.mxu0
    %v559 = vadd.f32 0.0, %v558
    %v560 = vpop.f32.mrf.mxu0
    %v561 = vadd.f32 0.0, %v560
    %562 = vdwg.mxu0
    %563 = vmatpush.bf16.msra.mxu0 %v431
    %564 = vmatpush.bf16.msra.mxu0 %v427
    %565 = vmatpush.bf16.msra.mxu0 %v423
    %566 = vmatpush.bf16.msra.mxu0 %v419
    %567 = vmatpush.bf16.msra.mxu0 %v415
    %568 = vmatpush.bf16.msra.mxu0 %v411
    %569 = vmatpush.bf16.msra.mxu0 %v407
    %570 = vmatpush.bf16.msra.mxu0 %v403
    %571 = vmatmul.bf16.gmra.mxu0 %v289
    %v572 = vpop.f32.mrf.mxu0
    %v573 = vadd.f32 0.0, %v572
    %v574 = vpop.f32.mrf.mxu0
    %v575 = vadd.f32 0.0, %v574
    %576 = vmatmul.bf16.gmra.mxu0 %v290
    %v577 = vpop.f32.mrf.mxu0
    %v578 = vadd.f32 0.0, %v577
    %v579 = vpop.f32.mrf.mxu0
    %v580 = vadd.f32 0.0, %v579
    %581 = vmatmul.bf16.gmra.mxu0 %v291
    %v582 = vpop.f32.mrf.mxu0
    %v583 = vadd.f32 0.0, %v582
    %v584 = vpop.f32.mrf.mxu0
    %v585 = vadd.f32 0.0, %v584
    %586 = vmatmul.bf16.gmra.mxu0 %v292
    %v587 = vpop.f32.mrf.mxu0
    %v588 = vadd.f32 0.0, %v587
    %v589 = vpop.f32.mrf.mxu0
    %v590 = vadd.f32 0.0, %v589
    %591 = vmatmul.bf16.gmra.mxu0 %v293
    %v592 = vpop.f32.mrf.mxu0
    %v593 = vadd.f32 0.0, %v592
    %v594 = vpop.f32.mrf.mxu0
    %v595 = vadd.f32 0.0, %v594
    %596 = vmatmul.bf16.gmra.mxu0 %v294
    %v597 = vpop.f32.mrf.mxu0
    %v598 = vadd.f32 0.0, %v597
    %v599 = vpop.f32.mrf.mxu0
    %v600 = vadd.f32 0.0, %v599
    %601 = vmatmul.bf16.gmra.mxu0 %v295
    %v602 = vpop.f32.mrf.mxu0
    %v603 = vadd.f32 0.0, %v602
    %v604 = vpop.f32.mrf.mxu0
    %v605 = vadd.f32 0.0, %v604
    %606 = vmatmul.bf16.gmra.mxu0 %v296
    %v607 = vpop.f32.mrf.mxu0
    %v608 = vadd.f32 0.0, %v607
    %v609 = vpop.f32.mrf.mxu0
    %v610 = vadd.f32 0.0, %v609
    %611 = vdwg.mxu0
    %612 = vmatpush.bf16.msra.mxu0 %v432
    %613 = vmatpush.bf16.msra.mxu0 %v428
    %614 = vmatpush.bf16.msra.mxu0 %v424
    %615 = vmatpush.bf16.msra.mxu0 %v420
    %616 = vmatpush.bf16.msra.mxu0 %v416
    %617 = vmatpush.bf16.msra.mxu0 %v412
    %618 = vmatpush.bf16.msra.mxu0 %v408
    %619 = vmatpush.bf16.msra.mxu0 %v404
    %620 = vmatmul.bf16.gmra.mxu0 %v289
    %v621 = vpop.f32.mrf.mxu0
    %v622 = vadd.f32 0.0, %v621
    %v623 = vpop.f32.mrf.mxu0
    %v624 = vadd.f32 0.0, %v623
    %625 = vmatmul.bf16.gmra.mxu0 %v290
    %v626 = vpop.f32.mrf.mxu0
    %v627 = vadd.f32 0.0, %v626
    %v628 = vpop.f32.mrf.mxu0
    %v629 = vadd.f32 0.0, %v628
    %630 = vmatmul.bf16.gmra.mxu0 %v291
    %v631 = vpop.f32.mrf.mxu0
    %v632 = vadd.f32 0.0, %v631
    %v633 = vpop.f32.mrf.mxu0
    %v634 = vadd.f32 0.0, %v633
    %635 = vmatmul.bf16.gmra.mxu0 %v292
    %v636 = vpop.f32.mrf.mxu0
    %v637 = vadd.f32 0.0, %v636
    %v638 = vpop.f32.mrf.mxu0
    %v639 = vadd.f32 0.0, %v638
    %640 = vmatmul.bf16.gmra.mxu0 %v293
    %v641 = vpop.f32.mrf.mxu0
    %v642 = vadd.f32 0.0, %v641
    %v643 = vpop.f32.mrf.mxu0
    %v644 = vadd.f32 0.0, %v643
    %645 = vmatmul.bf16.gmra.mxu0 %v294
    %v646 = vpop.f32.mrf.mxu0
    %v647 = vadd.f32 0.0, %v646
    %v648 = vpop.f32.mrf.mxu0
    %v649 = vadd.f32 0.0, %v648
    %650 = vmatmul.bf16.gmra.mxu0 %v295
    %v651 = vpop.f32.mrf.mxu0
    %v652 = vadd.f32 0.0, %v651
    %v653 = vpop.f32.mrf.mxu0
    %v654 = vadd.f32 0.0, %v653
    %655 = vmatmul.bf16.gmra.mxu0 %v296
    %v656 = vpop.f32.mrf.mxu0
    %v657 = vadd.f32 0.0, %v656
    %v658 = vpop.f32.mrf.mxu0
    %v659 = vadd.f32 0.0, %v658
    %660 = vdwg.mxu0
    %v661 = vadd.f32 %v177, %v475
    %v662 = vadd.f32 %v178, %v524
    %v663 = vadd.f32 %v179, %v573
    %v664 = vadd.f32 %v180, %v622
    %v665 = vadd.f32 %v181, %v477
    %v666 = vadd.f32 %v182, %v526
    %v667 = vadd.f32 %v183, %v575
    %v668 = vadd.f32 %v184, %v624
    %v669 = vadd.f32 %v185, %v480
    %v670 = vadd.f32 %v186, %v529
    %v671 = vadd.f32 %v187, %v578
    %v672 = vadd.f32 %v188, %v627
    %v673 = vadd.f32 %v189, %v482
    %v674 = vadd.f32 %v190, %v531
    %v675 = vadd.f32 %v191, %v580
    %v676 = vadd.f32 %v192, %v629
    %v677 = vadd.f32 %v193, %v485
    %v678 = vadd.f32 %v194, %v534
    %v679 = vadd.f32 %v195, %v583
    %v680 = vadd.f32 %v196, %v632
    %v681 = vadd.f32 %v197, %v487
    %v682 = vadd.f32 %v198, %v536
    %v683 = vadd.f32 %v199, %v585
    %v684 = vadd.f32 %v200, %v634
    %v685 = vadd.f32 %v201, %v490
    %v686 = vadd.f32 %v202, %v539
    %v687 = vadd.f32 %v203, %v588
    %v688 = vadd.f32 %v204, %v637
    %v689 = vadd.f32 %v205, %v492
    %v690 = vadd.f32 %v206, %v541
    %v691 = vadd.f32 %v207, %v590
    %v692 = vadd.f32 %v208, %v639
    %v693 = vadd.f32 %v209, %v495
    %v694 = vadd.f32 %v210, %v544
    %v695 = vadd.f32 %v211, %v593
    %v696 = vadd.f32 %v212, %v642
    %v697 = vadd.f32 %v213, %v497
    %v698 = vadd.f32 %v214, %v546
    %v699 = vadd.f32 %v215, %v595
    %v700 = vadd.f32 %v216, %v644
    %v701 = vadd.f32 %v217, %v500
    %v702 = vadd.f32 %v218, %v549
    %v703 = vadd.f32 %v219, %v598
    %v704 = vadd.f32 %v220, %v647
    %v705 = vadd.f32 %v221, %v502
    %v706 = vadd.f32 %v222, %v551
    %v707 = vadd.f32 %v223, %v600
    %v708 = vadd.f32 %v224, %v649
    %v709 = vadd.f32 %v225, %v505
    %v710 = vadd.f32 %v226, %v554
    %v711 = vadd.f32 %v227, %v603
    %v712 = vadd.f32 %v228, %v652
    %v713 = vadd.f32 %v229, %v507
    %v714 = vadd.f32 %v230, %v556
    %v715 = vadd.f32 %v231, %v605
    %v716 = vadd.f32 %v232, %v654
    %v717 = vadd.f32 %v233, %v510
    %v718 = vadd.f32 %v234, %v559
    %v719 = vadd.f32 %v235, %v608
    %v720 = vadd.f32 %v236, %v657
    %v721 = vadd.f32 %v237, %v512
    %v722 = vadd.f32 %v238, %v561
    %v723 = vadd.f32 %v239, %v610
    %v724 = vadd.f32 %v240, %v659
    %725 = vst [vmem:[#allocation2] sm:$0xff] %v661
    %726 = vst [vmem:[#allocation2 + $0x8] sm:$0xff] %v662
    %727 = vst [vmem:[#allocation2 + $0x10] sm:$0xff] %v663
    %728 = vst [vmem:[#allocation2 + $0x18] sm:$0xff] %v664
    %729 = vst [vmem:[#allocation2 + $0x20] sm:$0xff] %v665
    %730 = vst [vmem:[#allocation2 + $0x28] sm:$0xff] %v666
    %731 = vst [vmem:[#allocation2 + $0x30] sm:$0xff] %v667
    %732 = vst [vmem:[#allocation2 + $0x38] sm:$0xff] %v668
    %733 = vst [vmem:[#allocation2 + $0x40] sm:$0xff] %v669
    %734 = vst [vmem:[#allocation2 + $0x48] sm:$0xff] %v670
    %735 = vst [vmem:[#allocation2 + $0x50] sm:$0xff] %v671
    %736 = vst [vmem:[#allocation2 + $0x58] sm:$0xff] %v672
    %737 = vst [vmem:[#allocation2 + $0x60] sm:$0xff] %v673
    %738 = vst [vmem:[#allocation2 + $0x68] sm:$0xff] %v674
    %739 = vst [vmem:[#allocation2 + $0x70] sm:$0xff] %v675
    %740 = vst [vmem:[#allocation2 + $0x78] sm:$0xff] %v676
    %741 = vst [vmem:[#allocation2 + $0x80] sm:$0xff] %v677
    %742 = vst [vmem:[#allocation2 + $0x88] sm:$0xff] %v678
    %743 = vst [vmem:[#allocation2 + $0x90] sm:$0xff] %v679
    %744 = vst [vmem:[#allocation2 + $0x98] sm:$0xff] %v680
    %745 = vst [vmem:[#allocation2 + $0xa0] sm:$0xff] %v681
    %746 = vst [vmem:[#allocation2 + $0xa8] sm:$0xff] %v682
    %747 = vst [vmem:[#allocation2 + $0xb0] sm:$0xff] %v683
    %748 = vst [vmem:[#allocation2 + $0xb8] sm:$0xff] %v684
    %749 = vst [vmem:[#allocation2 + $0xc0] sm:$0xff] %v685
    %750 = vst [vmem:[#allocation2 + $0xc8] sm:$0xff] %v686
    %751 = vst [vmem:[#allocation2 + $0xd0] sm:$0xff] %v687
    %752 = vst [vmem:[#allocation2 + $0xd8] sm:$0xff] %v688
    %753 = vst [vmem:[#allocation2 + $0xe0] sm:$0xff] %v689
    %754 = vst [vmem:[#allocation2 + $0xe8] sm:$0xff] %v690
    %755 = vst [vmem:[#allocation2 + $0xf0] sm:$0xff] %v691
    %756 = vst [vmem:[#allocation2 + $0xf8] sm:$0xff] %v692
    %757 = vst [vmem:[#allocation2 + $0x100] sm:$0xff] %v693
    %758 = vst [vmem:[#allocation2 + $0x108] sm:$0xff] %v694
    %759 = vst [vmem:[#allocation2 + $0x110] sm:$0xff] %v695
    %760 = vst [vmem:[#allocation2 + $0x118] sm:$0xff] %v696
    %761 = vst [vmem:[#allocation2 + $0x120] sm:$0xff] %v697
    %762 = vst [vmem:[#allocation2 + $0x128] sm:$0xff] %v698
    %763 = vst [vmem:[#allocation2 + $0x130] sm:$0xff] %v699
    %764 = vst [vmem:[#allocation2 + $0x138] sm:$0xff] %v700
    %765 = vst [vmem:[#allocation2 + $0x140] sm:$0xff] %v701
    %766 = vst [vmem:[#allocation2 + $0x148] sm:$0xff] %v702
    %767 = vst [vmem:[#allocation2 + $0x150] sm:$0xff] %v703
    %768 = vst [vmem:[#allocation2 + $0x158] sm:$0xff] %v704
    %769 = vst [vmem:[#allocation2 + $0x160] sm:$0xff] %v705
    %770 = vst [vmem:[#allocation2 + $0x168] sm:$0xff] %v706
    %771 = vst [vmem:[#allocation2 + $0x170] sm:$0xff] %v707
    %772 = vst [vmem:[#allocation2 + $0x178] sm:$0xff] %v708
    %773 = vst [vmem:[#allocation2 + $0x180] sm:$0xff] %v709
    %774 = vst [vmem:[#allocation2 + $0x188] sm:$0xff] %v710
    %775 = vst [vmem:[#allocation2 + $0x190] sm:$0xff] %v711
    %776 = vst [vmem:[#allocation2 + $0x198] sm:$0xff] %v712
    %777 = vst [vmem:[#allocation2 + $0x1a0] sm:$0xff] %v713
    %778 = vst [vmem:[#allocation2 + $0x1a8] sm:$0xff] %v714
    %779 = vst [vmem:[#allocation2 + $0x1b0] sm:$0xff] %v715
    %780 = vst [vmem:[#allocation2 + $0x1b8] sm:$0xff] %v716
    %781 = vst [vmem:[#allocation2 + $0x1c0] sm:$0xff] %v717
    %782 = vst [vmem:[#allocation2 + $0x1c8] sm:$0xff] %v718
    %783 = vst [vmem:[#allocation2 + $0x1d0] sm:$0xff] %v719
    %784 = vst [vmem:[#allocation2 + $0x1d8] sm:$0xff] %v720
    %785 = vst [vmem:[#allocation2 + $0x1e0] sm:$0xff] %v721
    %786 = vst [vmem:[#allocation2 + $0x1e8] sm:$0xff] %v722
    %787 = vst [vmem:[#allocation2 + $0x1f0] sm:$0xff] %v723
    %788 = vst [vmem:[#allocation2 + $0x1f8] sm:$0xff] %v724
  $region37: #{graph_sage_forward.2} parent=0 // pred_fallthru
    _
  // Predicated region
  $region38: #{graph_sage_forward.2} parent=0 // pred_check
    %p789 = pneg %p62
  $region39: #{graph_sage_forward.2} parent=0 // pred_check_branch
    %791 = sbr.rel (%p789) target = $region41
  $region40: #{graph_sage_forward.2} parent=0 // pred_region
    %v792 = vld [vmem:[#allocation2] sm:$0xff]
    %v793 = vld [vmem:[#allocation2 + $0x8] sm:$0xff]
    %v794 = vld [vmem:[#allocation2 + $0x10] sm:$0xff]
    %v795 = vld [vmem:[#allocation2 + $0x18] sm:$0xff]
    %v796 = vld [vmem:[#allocation2 + $0x20] sm:$0xff]
    %v797 = vld [vmem:[#allocation2 + $0x28] sm:$0xff]
    %v798 = vld [vmem:[#allocation2 + $0x30] sm:$0xff]
    %v799 = vld [vmem:[#allocation2 + $0x38] sm:$0xff]
    %v800 = vld [vmem:[#allocation2 + $0x40] sm:$0xff]
    %v801 = vld [vmem:[#allocation2 + $0x48] sm:$0xff]
    %v802 = vld [vmem:[#allocation2 + $0x50] sm:$0xff]
    %v803 = vld [vmem:[#allocation2 + $0x58] sm:$0xff]
    %v804 = vld [vmem:[#allocation2 + $0x60] sm:$0xff]
    %v805 = vld [vmem:[#allocation2 + $0x68] sm:$0xff]
    %v806 = vld [vmem:[#allocation2 + $0x70] sm:$0xff]
    %v807 = vld [vmem:[#allocation2 + $0x78] sm:$0xff]
    %v808 = vld [vmem:[#allocation2 + $0x80] sm:$0xff]
    %v809 = vld [vmem:[#allocation2 + $0x88] sm:$0xff]
    %v810 = vld [vmem:[#allocation2 + $0x90] sm:$0xff]
    %v811 = vld [vmem:[#allocation2 + $0x98] sm:$0xff]
    %v812 = vld [vmem:[#allocation2 + $0xa0] sm:$0xff]
    %v813 = vld [vmem:[#allocation2 + $0xa8] sm:$0xff]
    %v814 = vld [vmem:[#allocation2 + $0xb0] sm:$0xff]
    %v815 = vld [vmem:[#allocation2 + $0xb8] sm:$0xff]
    %v816 = vld [vmem:[#allocation2 + $0xc0] sm:$0xff]
    %v817 = vld [vmem:[#allocation2 + $0xc8] sm:$0xff]
    %v818 = vld [vmem:[#allocation2 + $0xd0] sm:$0xff]
    %v819 = vld [vmem:[#allocation2 + $0xd8] sm:$0xff]
    %v820 = vld [vmem:[#allocation2 + $0xe0] sm:$0xff]
    %v821 = vld [vmem:[#allocation2 + $0xe8] sm:$0xff]
    %v822 = vld [vmem:[#allocation2 + $0xf0] sm:$0xff]
    %v823 = vld [vmem:[#allocation2 + $0xf8] sm:$0xff]
    %v824 = vld [vmem:[#allocation2 + $0x100] sm:$0xff]
    %v825 = vld [vmem:[#allocation2 + $0x108] sm:$0xff]
    %v826 = vld [vmem:[#allocation2 + $0x110] sm:$0xff]
    %v827 = vld [vmem:[#allocation2 + $0x118] sm:$0xff]
    %v828 = vld [vmem:[#allocation2 + $0x120] sm:$0xff]
    %v829 = vld [vmem:[#allocation2 + $0x128] sm:$0xff]
    %v830 = vld [vmem:[#allocation2 + $0x130] sm:$0xff]
    %v831 = vld [vmem:[#allocation2 + $0x138] sm:$0xff]
    %v832 = vld [vmem:[#allocation2 + $0x140] sm:$0xff]
    %v833 = vld [vmem:[#allocation2 + $0x148] sm:$0xff]
    %v834 = vld [vmem:[#allocation2 + $0x150] sm:$0xff]
    %v835 = vld [vmem:[#allocation2 + $0x158] sm:$0xff]
    %v836 = vld [vmem:[#allocation2 + $0x160] sm:$0xff]
    %v837 = vld [vmem:[#allocation2 + $0x168] sm:$0xff]
    %v838 = vld [vmem:[#allocation2 + $0x170] sm:$0xff]
    %v839 = vld [vmem:[#allocation2 + $0x178] sm:$0xff]
    %v840 = vld [vmem:[#allocation2 + $0x180] sm:$0xff]
    %v841 = vld [vmem:[#allocation2 + $0x188] sm:$0xff]
    %v842 = vld [vmem:[#allocation2 + $0x190] sm:$0xff]
    %v843 = vld [vmem:[#allocation2 + $0x198] sm:$0xff]
    %v844 = vld [vmem:[#allocation2 + $0x1a0] sm:$0xff]
    %v845 = vld [vmem:[#allocation2 + $0x1a8] sm:$0xff]
    %v846 = vld [vmem:[#allocation2 + $0x1b0] sm:$0xff]
    %v847 = vld [vmem:[#allocation2 + $0x1b8] sm:$0xff]
    %v848 = vld [vmem:[#allocation2 + $0x1c0] sm:$0xff]
    %v849 = vld [vmem:[#allocation2 + $0x1c8] sm:$0xff]
    %v850 = vld [vmem:[#allocation2 + $0x1d0] sm:$0xff]
    %v851 = vld [vmem:[#allocation2 + $0x1d8] sm:$0xff]
    %v852 = vld [vmem:[#allocation2 + $0x1e0] sm:$0xff]
    %v853 = vld [vmem:[#allocation2 + $0x1e8] sm:$0xff]
    %v854 = vld [vmem:[#allocation2 + $0x1f0] sm:$0xff]
    %v855 = vld [vmem:[#allocation2 + $0x1f8] sm:$0xff]
    %v856 = vld [vmem:[%s4] sm:$0xf]
    %v858 = vperm.slane %v856, 0
    %v859 = vperm.slane %v856, 1
    %v860 = vperm.slane %v856, 2
    %v861 = vperm.slane %v856, 3
    %v866 = vadd.f32 %v792, %v858
    %v867 = vadd.f32 %v793, %v859
    %v868 = vadd.f32 %v794, %v860
    %v869 = vadd.f32 %v795, %v861
    %v870 = vadd.f32 %v796, %v858
    %v871 = vadd.f32 %v797, %v859
    %v872 = vadd.f32 %v798, %v860
    %v873 = vadd.f32 %v799, %v861
    %v874 = vadd.f32 %v800, %v858
    %v875 = vadd.f32 %v801, %v859
    %v876 = vadd.f32 %v802, %v860
    %v877 = vadd.f32 %v803, %v861
    %v878 = vadd.f32 %v804, %v858
    %v879 = vadd.f32 %v805, %v859
    %v880 = vadd.f32 %v806, %v860
    %v881 = vadd.f32 %v807, %v861
    %v882 = vadd.f32 %v808, %v858
    %v883 = vadd.f32 %v809, %v859
    %v884 = vadd.f32 %v810, %v860
    %v885 = vadd.f32 %v811, %v861
    %v886 = vadd.f32 %v812, %v858
    %v887 = vadd.f32 %v813, %v859
    %v888 = vadd.f32 %v814, %v860
    %v889 = vadd.f32 %v815, %v861
    %v890 = vadd.f32 %v816, %v858
    %v891 = vadd.f32 %v817, %v859
    %v892 = vadd.f32 %v818, %v860
    %v893 = vadd.f32 %v819, %v861
    %v894 = vadd.f32 %v820, %v858
    %v895 = vadd.f32 %v821, %v859
    %v896 = vadd.f32 %v822, %v860
    %v897 = vadd.f32 %v823, %v861
    %v898 = vadd.f32 %v824, %v858
    %v899 = vadd.f32 %v825, %v859
    %v900 = vadd.f32 %v826, %v860
    %v901 = vadd.f32 %v827, %v861
    %v902 = vadd.f32 %v828, %v858
    %v903 = vadd.f32 %v829, %v859
    %v904 = vadd.f32 %v830, %v860
    %v905 = vadd.f32 %v831, %v861
    %v906 = vadd.f32 %v832, %v858
    %v907 = vadd.f32 %v833, %v859
    %v908 = vadd.f32 %v834, %v860
    %v909 = vadd.f32 %v835, %v861
    %v910 = vadd.f32 %v836, %v858
    %v911 = vadd.f32 %v837, %v859
    %v912 = vadd.f32 %v838, %v860
    %v913 = vadd.f32 %v839, %v861
    %v914 = vadd.f32 %v840, %v858
    %v915 = vadd.f32 %v841, %v859
    %v916 = vadd.f32 %v842, %v860
    %v917 = vadd.f32 %v843, %v861
    %v918 = vadd.f32 %v844, %v858
    %v919 = vadd.f32 %v845, %v859
    %v920 = vadd.f32 %v846, %v860
    %v921 = vadd.f32 %v847, %v861
    %v922 = vadd.f32 %v848, %v858
    %v923 = vadd.f32 %v849, %v859
    %v924 = vadd.f32 %v850, %v860
    %v925 = vadd.f32 %v851, %v861
    %v926 = vadd.f32 %v852, %v858
    %v927 = vadd.f32 %v853, %v859
    %v928 = vadd.f32 %v854, %v860
    %v929 = vadd.f32 %v855, %v861
    %v930 = vmul.f32 %v866, 0.5
    %v931 = vmul.f32 %v867, 0.5
    %v932 = vmul.f32 %v868, 0.5
    %v933 = vmul.f32 %v869, 0.5
    %v934 = vmul.f32 %v870, 0.5
    %v935 = vmul.f32 %v871, 0.5
    %v936 = vmul.f32 %v872, 0.5
    %v937 = vmul.f32 %v873, 0.5
    %v938 = vmul.f32 %v874, 0.5
    %v939 = vmul.f32 %v875, 0.5
    %v940 = vmul.f32 %v876, 0.5
    %v941 = vmul.f32 %v877, 0.5
    %v942 = vmul.f32 %v878, 0.5
    %v943 = vmul.f32 %v879, 0.5
    %v944 = vmul.f32 %v880, 0.5
    %v945 = vmul.f32 %v881, 0.5
    %v946 = vmul.f32 %v882, 0.5
    %v947 = vmul.f32 %v883, 0.5
    %v948 = vmul.f32 %v884, 0.5
    %v949 = vmul.f32 %v885, 0.5
    %v950 = vmul.f32 %v886, 0.5
    %v951 = vmul.f32 %v887, 0.5
    %v952 = vmul.f32 %v888, 0.5
    %v953 = vmul.f32 %v889, 0.5
    %v954 = vmul.f32 %v890, 0.5
    %v955 = vmul.f32 %v891, 0.5
    %v956 = vmul.f32 %v892, 0.5
    %v957 = vmul.f32 %v893, 0.5
    %v958 = vmul.f32 %v894, 0.5
    %v959 = vmul.f32 %v895, 0.5
    %v960 = vmul.f32 %v896, 0.5
    %v961 = vmul.f32 %v897, 0.5
    %v962 = vmul.f32 %v898, 0.5
    %v963 = vmul.f32 %v899, 0.5
    %v964 = vmul.f32 %v900, 0.5
    %v965 = vmul.f32 %v901, 0.5
    %v966 = vmul.f32 %v902, 0.5
    %v967 = vmul.f32 %v903, 0.5
    %v968 = vmul.f32 %v904, 0.5
    %v969 = vmul.f32 %v905, 0.5
    %v970 = vmul.f32 %v906, 0.5
    %v971 = vmul.f32 %v907, 0.5
    %v972 = vmul.f32 %v908, 0.5
    %v973 = vmul.f32 %v909, 0.5
    %v974 = vmul.f32 %v910, 0.5
    %v975 = vmul.f32 %v911, 0.5
    %v976 = vmul.f32 %v912, 0.5
    %v977 = vmul.f32 %v913, 0.5
    %v978 = vmul.f32 %v914, 0.5
    %v979 = vmul.f32 %v915, 0.5
    %v980 = vmul.f32 %v916, 0.5
    %v981 = vmul.f32 %v917, 0.5
    %v982 = vmul.f32 %v918, 0.5
    %v983 = vmul.f32 %v919, 0.5
    %v984 = vmul.f32 %v920, 0.5
    %v985 = vmul.f32 %v921, 0.5
    %v986 = vmul.f32 %v922, 0.5
    %v987 = vmul.f32 %v923, 0.5
    %v988 = vmul.f32 %v924, 0.5
    %v989 = vmul.f32 %v925, 0.5
    %v990 = vmul.f32 %v926, 0.5
    %v991 = vmul.f32 %v927, 0.5
    %v992 = vmul.f32 %v928, 0.5
    %v993 = vmul.f32 %v929, 0.5
    %v994 = vmul.f32 %v866, 0.70710677
    %v995 = vmul.f32 %v867, 0.70710677
    %v996 = vmul.f32 %v868, 0.70710677
    %v997 = vmul.f32 %v869, 0.70710677
    %v998 = vmul.f32 %v870, 0.70710677
    %v999 = vmul.f32 %v871, 0.70710677
    %v1000 = vmul.f32 %v872, 0.70710677
    %v1001 = vmul.f32 %v873, 0.70710677
    %v1002 = vmul.f32 %v874, 0.70710677
    %v1003 = vmul.f32 %v875, 0.70710677
    %v1004 = vmul.f32 %v876, 0.70710677
    %v1005 = vmul.f32 %v877, 0.70710677
    %v1006 = vmul.f32 %v878, 0.70710677
    %v1007 = vmul.f32 %v879, 0.70710677
    %v1008 = vmul.f32 %v880, 0.70710677
    %v1009 = vmul.f32 %v881, 0.70710677
    %v1010 = vmul.f32 %v882, 0.70710677
    %v1011 = vmul.f32 %v883, 0.70710677
    %v1012 = vmul.f32 %v884, 0.70710677
    %v1013 = vmul.f32 %v885, 0.70710677
    %v1014 = vmul.f32 %v886, 0.70710677
    %v1015 = vmul.f32 %v887, 0.70710677
    %v1016 = vmul.f32 %v888, 0.70710677
    %v1017 = vmul.f32 %v889, 0.70710677
    %v1018 = vmul.f32 %v890, 0.70710677
    %v1019 = vmul.f32 %v891, 0.70710677
    %v1020 = vmul.f32 %v892, 0.70710677
    %v1021 = vmul.f32 %v893, 0.70710677
    %v1022 = vmul.f32 %v894, 0.70710677
    %v1023 = vmul.f32 %v895, 0.70710677
    %v1024 = vmul.f32 %v896, 0.70710677
    %v1025 = vmul.f32 %v897, 0.70710677
    %v1026 = vmul.f32 %v898, 0.70710677
    %v1027 = vmul.f32 %v899, 0.70710677
    %v1028 = vmul.f32 %v900, 0.70710677
    %v1029 = vmul.f32 %v901, 0.70710677
    %v1030 = vmul.f32 %v902, 0.70710677
    %v1031 = vmul.f32 %v903, 0.70710677
    %v1032 = vmul.f32 %v904, 0.70710677
    %v1033 = vmul.f32 %v905, 0.70710677
    %v1034 = vmul.f32 %v906, 0.70710677
    %v1035 = vmul.f32 %v907, 0.70710677
    %v1036 = vmul.f32 %v908, 0.70710677
    %v1037 = vmul.f32 %v909, 0.70710677
    %v1038 = vmul.f32 %v910, 0.70710677
    %v1039 = vmul.f32 %v911, 0.70710677
    %v1040 = vmul.f32 %v912, 0.70710677
    %v1041 = vmul.f32 %v913, 0.70710677
    %v1042 = vmul.f32 %v914, 0.70710677
    %v1043 = vmul.f32 %v915, 0.70710677
    %v1044 = vmul.f32 %v916, 0.70710677
    %v1045 = vmul.f32 %v917, 0.70710677
    %v1046 = vmul.f32 %v918, 0.70710677
    %v1047 = vmul.f32 %v919, 0.70710677
    %v1048 = vmul.f32 %v920, 0.70710677
    %v1049 = vmul.f32 %v921, 0.70710677
    %v1050 = vmul.f32 %v922, 0.70710677
    %v1051 = vmul.f32 %v923, 0.70710677
    %v1052 = vmul.f32 %v924, 0.70710677
    %v1053 = vmul.f32 %v925, 0.70710677
    %v1054 = vmul.f32 %v926, 0.70710677
    %v1055 = vmul.f32 %v927, 0.70710677
    %v1056 = vmul.f32 %v928, 0.70710677
    %v1057 = vmul.f32 %v929, 0.70710677
    %v1058 = vmul.f32 %v994, %v994
    %v1059 = vmin.f32 16.0, %v1058
    %v1060 = vmul.f32 %v1059, 2.1237322e-06
    %v1061 = vadd.f32 %v1060, 0.00028619796
    %v1062 = vmul.f32 %v1059, %v1061
    %v1063 = vadd.f32 %v1062, 0.0036580483
    %v1064 = vmul.f32 %v1059, %v1063
    %v1065 = vadd.f32 %v1064, 0.05243302
    %v1066 = vmul.f32 %v1059, %v1065
    %v1067 = vadd.f32 %v1066, 0.18741608
    %v1068 = vmul.f32 %v1059, %v1067
    %v1069 = vadd.f32 %v1068, 1.1283791
    %v1070 = vmul.f32 %v994, %v1069
    %v1071 = vmul.f32 %v1059, 3.8918573e-05
    %v1072 = vadd.f32 %v1071, 0.001143296
    %v1073 = vmul.f32 %v1059, %v1072
    %v1074 = vadd.f32 %v1073, 0.014752088
    %v1075 = vmul.f32 %v1059, %v1074
    %v1076 = vadd.f32 %v1075, 0.112945676
    %v1077 = vmul.f32 %v1059, %v1076
    %v1078 = vadd.f32 %v1077, 0.4994258
    %v1079 = vmul.f32 %v1059, %v1078
    %v1080 = vadd.f32 %v1079, 1.0
    %v1081 = vrcp.pop %v1080
    %v1082 = vmul.f32 %v1080, %v1081
    %v1083 = vsub.f32 1.0, %v1082
    %v1084 = vmul.f32 %v1081, %v1083
    %v1085 = vadd.f32 %v1081, %v1084
    %vm1086 = vweird.f32 %v1080
    %vm1087 = vweird.f32 %v1081
    %vm1088 = vmor %vm1086, %vm1087
    %v1089 = vsel %vm1088, %v1081, %v1085
    %v1090 = vand.u32 2147483647, %v1080
    %vm1091 = vcmp.eq.f32.partialorder %v1090, 8.507059e+37
    %v1092 = vand.u32 %v1080, 2147483648
    %v1093 = vor.u32 1.1754944e-38, %v1092
    %v1094 = vsel %vm1091, %v1093, %v1089
    %v1095 = vmul.f32 %v1070, %v1094
    %v1096 = vmin.f32 %v1095, 1.0
    %v1097 = vmax.f32 %v1096, -1.0
    %v1098 = vmul.f32 %v995, %v995
    %v1099 = vmin.f32 16.0, %v1098
    %v1100 = vmul.f32 %v1099, 2.1237322e-06
    %v1101 = vadd.f32 %v1100, 0.00028619796
    %v1102 = vmul.f32 %v1099, %v1101
    %v1103 = vadd.f32 %v1102, 0.0036580483
    %v1104 = vmul.f32 %v1099, %v1103
    %v1105 = vadd.f32 %v1104, 0.05243302
    %v1106 = vmul.f32 %v1099, %v1105
    %v1107 = vadd.f32 %v1106, 0.18741608
    %v1108 = vmul.f32 %v1099, %v1107
    %v1109 = vadd.f32 %v1108, 1.1283791
    %v1110 = vmul.f32 %v995, %v1109
    %v1111 = vmul.f32 %v1099, 3.8918573e-05
    %v1112 = vadd.f32 %v1111, 0.001143296
    %v1113 = vmul.f32 %v1099, %v1112
    %v1114 = vadd.f32 %v1113, 0.014752088
    %v1115 = vmul.f32 %v1099, %v1114
    %v1116 = vadd.f32 %v1115, 0.112945676
    %v1117 = vmul.f32 %v1099, %v1116
    %v1118 = vadd.f32 %v1117, 0.4994258
    %v1119 = vmul.f32 %v1099, %v1118
    %v1120 = vadd.f32 %v1119, 1.0
    %v1121 = vrcp.pop %v1120
    %v1122 = vmul.f32 %v1120, %v1121
    %v1123 = vsub.f32 1.0, %v1122
    %v1124 = vmul.f32 %v1121, %v1123
    %v1125 = vadd.f32 %v1121, %v1124
    %vm1126 = vweird.f32 %v1120
    %vm1127 = vweird.f32 %v1121
    %vm1128 = vmor %vm1126, %vm1127
    %v1129 = vsel %vm1128, %v1121, %v1125
    %v1130 = vand.u32 2147483647, %v1120
    %vm1131 = vcmp.eq.f32.partialorder %v1130, 8.507059e+37
    %v1132 = vand.u32 %v1120, 2147483648
    %v1133 = vor.u32 1.1754944e-38, %v1132
    %v1134 = vsel %vm1131, %v1133, %v1129
    %v1135 = vmul.f32 %v1110, %v1134
    %v1136 = vmin.f32 %v1135, 1.0
    %v1137 = vmax.f32 %v1136, -1.0
    %v1138 = vmul.f32 %v996, %v996
    %v1139 = vmin.f32 16.0, %v1138
    %v1140 = vmul.f32 %v1139, 2.1237322e-06
    %v1141 = vadd.f32 %v1140, 0.00028619796
    %v1142 = vmul.f32 %v1139, %v1141
    %v1143 = vadd.f32 %v1142, 0.0036580483
    %v1144 = vmul.f32 %v1139, %v1143
    %v1145 = vadd.f32 %v1144, 0.05243302
    %v1146 = vmul.f32 %v1139, %v1145
    %v1147 = vadd.f32 %v1146, 0.18741608
    %v1148 = vmul.f32 %v1139, %v1147
    %v1149 = vadd.f32 %v1148, 1.1283791
    %v1150 = vmul.f32 %v996, %v1149
    %v1151 = vmul.f32 %v1139, 3.8918573e-05
    %v1152 = vadd.f32 %v1151, 0.001143296
    %v1153 = vmul.f32 %v1139, %v1152
    %v1154 = vadd.f32 %v1153, 0.014752088
    %v1155 = vmul.f32 %v1139, %v1154
    %v1156 = vadd.f32 %v1155, 0.112945676
    %v1157 = vmul.f32 %v1139, %v1156
    %v1158 = vadd.f32 %v1157, 0.4994258
    %v1159 = vmul.f32 %v1139, %v1158
    %v1160 = vadd.f32 %v1159, 1.0
    %v1161 = vrcp.pop %v1160
    %v1162 = vmul.f32 %v1160, %v1161
    %v1163 = vsub.f32 1.0, %v1162
    %v1164 = vmul.f32 %v1161, %v1163
    %v1165 = vadd.f32 %v1161, %v1164
    %vm1166 = vweird.f32 %v1160
    %vm1167 = vweird.f32 %v1161
    %vm1168 = vmor %vm1166, %vm1167
    %v1169 = vsel %vm1168, %v1161, %v1165
    %v1170 = vand.u32 2147483647, %v1160
    %vm1171 = vcmp.eq.f32.partialorder %v1170, 8.507059e+37
    %v1172 = vand.u32 %v1160, 2147483648
    %v1173 = vor.u32 1.1754944e-38, %v1172
    %v1174 = vsel %vm1171, %v1173, %v1169
    %v1175 = vmul.f32 %v1150, %v1174
    %v1176 = vmin.f32 %v1175, 1.0
    %v1177 = vmax.f32 %v1176, -1.0
    %v1178 = vmul.f32 %v997, %v997
    %v1179 = vmin.f32 16.0, %v1178
    %v1180 = vmul.f32 %v1179, 2.1237322e-06
    %v1181 = vadd.f32 %v1180, 0.00028619796
    %v1182 = vmul.f32 %v1179, %v1181
    %v1183 = vadd.f32 %v1182, 0.0036580483
    %v1184 = vmul.f32 %v1179, %v1183
    %v1185 = vadd.f32 %v1184, 0.05243302
    %v1186 = vmul.f32 %v1179, %v1185
    %v1187 = vadd.f32 %v1186, 0.18741608
    %v1188 = vmul.f32 %v1179, %v1187
    %v1189 = vadd.f32 %v1188, 1.1283791
    %v1190 = vmul.f32 %v997, %v1189
    %v1191 = vmul.f32 %v1179, 3.8918573e-05
    %v1192 = vadd.f32 %v1191, 0.001143296
    %v1193 = vmul.f32 %v1179, %v1192
    %v1194 = vadd.f32 %v1193, 0.014752088
    %v1195 = vmul.f32 %v1179, %v1194
    %v1196 = vadd.f32 %v1195, 0.112945676
    %v1197 = vmul.f32 %v1179, %v1196
    %v1198 = vadd.f32 %v1197, 0.4994258
    %v1199 = vmul.f32 %v1179, %v1198
    %v1200 = vadd.f32 %v1199, 1.0
    %v1201 = vrcp.pop %v1200
    %v1202 = vmul.f32 %v1200, %v1201
    %v1203 = vsub.f32 1.0, %v1202
    %v1204 = vmul.f32 %v1201, %v1203
    %v1205 = vadd.f32 %v1201, %v1204
    %vm1206 = vweird.f32 %v1200
    %vm1207 = vweird.f32 %v1201
    %vm1208 = vmor %vm1206, %vm1207
    %v1209 = vsel %vm1208, %v1201, %v1205
    %v1210 = vand.u32 2147483647, %v1200
    %vm1211 = vcmp.eq.f32.partialorder %v1210, 8.507059e+37
    %v1212 = vand.u32 %v1200, 2147483648
    %v1213 = vor.u32 1.1754944e-38, %v1212
    %v1214 = vsel %vm1211, %v1213, %v1209
    %v1215 = vmul.f32 %v1190, %v1214
    %v1216 = vmin.f32 %v1215, 1.0
    %v1217 = vmax.f32 %v1216, -1.0
    %v1218 = vmul.f32 %v998, %v998
    %v1219 = vmin.f32 16.0, %v1218
    %v1220 = vmul.f32 %v1219, 2.1237322e-06
    %v1221 = vadd.f32 %v1220, 0.00028619796
    %v1222 = vmul.f32 %v1219, %v1221
    %v1223 = vadd.f32 %v1222, 0.0036580483
    %v1224 = vmul.f32 %v1219, %v1223
    %v1225 = vadd.f32 %v1224, 0.05243302
    %v1226 = vmul.f32 %v1219, %v1225
    %v1227 = vadd.f32 %v1226, 0.18741608
    %v1228 = vmul.f32 %v1219, %v1227
    %v1229 = vadd.f32 %v1228, 1.1283791
    %v1230 = vmul.f32 %v998, %v1229
    %v1231 = vmul.f32 %v1219, 3.8918573e-05
    %v1232 = vadd.f32 %v1231, 0.001143296
    %v1233 = vmul.f32 %v1219, %v1232
    %v1234 = vadd.f32 %v1233, 0.014752088
    %v1235 = vmul.f32 %v1219, %v1234
    %v1236 = vadd.f32 %v1235, 0.112945676
    %v1237 = vmul.f32 %v1219, %v1236
    %v1238 = vadd.f32 %v1237, 0.4994258
    %v1239 = vmul.f32 %v1219, %v1238
    %v1240 = vadd.f32 %v1239, 1.0
    %v1241 = vrcp.pop %v1240
    %v1242 = vmul.f32 %v1240, %v1241
    %v1243 = vsub.f32 1.0, %v1242
    %v1244 = vmul.f32 %v1241, %v1243
    %v1245 = vadd.f32 %v1241, %v1244
    %vm1246 = vweird.f32 %v1240
    %vm1247 = vweird.f32 %v1241
    %vm1248 = vmor %vm1246, %vm1247
    %v1249 = vsel %vm1248, %v1241, %v1245
    %v1250 = vand.u32 2147483647, %v1240
    %vm1251 = vcmp.eq.f32.partialorder %v1250, 8.507059e+37
    %v1252 = vand.u32 %v1240, 2147483648
    %v1253 = vor.u32 1.1754944e-38, %v1252
    %v1254 = vsel %vm1251, %v1253, %v1249
    %v1255 = vmul.f32 %v1230, %v1254
    %v1256 = vmin.f32 %v1255, 1.0
    %v1257 = vmax.f32 %v1256, -1.0
    %v1258 = vmul.f32 %v999, %v999
    %v1259 = vmin.f32 16.0, %v1258
    %v1260 = vmul.f32 %v1259, 2.1237322e-06
    %v1261 = vadd.f32 %v1260, 0.00028619796
    %v1262 = vmul.f32 %v1259, %v1261
    %v1263 = vadd.f32 %v1262, 0.0036580483
    %v1264 = vmul.f32 %v1259, %v1263
    %v1265 = vadd.f32 %v1264, 0.05243302
    %v1266 = vmul.f32 %v1259, %v1265
    %v1267 = vadd.f32 %v1266, 0.18741608
    %v1268 = vmul.f32 %v1259, %v1267
    %v1269 = vadd.f32 %v1268, 1.1283791
    %v1270 = vmul.f32 %v999, %v1269
    %v1271 = vmul.f32 %v1259, 3.8918573e-05
    %v1272 = vadd.f32 %v1271, 0.001143296
    %v1273 = vmul.f32 %v1259, %v1272
    %v1274 = vadd.f32 %v1273, 0.014752088
    %v1275 = vmul.f32 %v1259, %v1274
    %v1276 = vadd.f32 %v1275, 0.112945676
    %v1277 = vmul.f32 %v1259, %v1276
    %v1278 = vadd.f32 %v1277, 0.4994258
    %v1279 = vmul.f32 %v1259, %v1278
    %v1280 = vadd.f32 %v1279, 1.0
    %v1281 = vrcp.pop %v1280
    %v1282 = vmul.f32 %v1280, %v1281
    %v1283 = vsub.f32 1.0, %v1282
    %v1284 = vmul.f32 %v1281, %v1283
    %v1285 = vadd.f32 %v1281, %v1284
    %vm1286 = vweird.f32 %v1280
    %vm1287 = vweird.f32 %v1281
    %vm1288 = vmor %vm1286, %vm1287
    %v1289 = vsel %vm1288, %v1281, %v1285
    %v1290 = vand.u32 2147483647, %v1280
    %vm1291 = vcmp.eq.f32.partialorder %v1290, 8.507059e+37
    %v1292 = vand.u32 %v1280, 2147483648
    %v1293 = vor.u32 1.1754944e-38, %v1292
    %v1294 = vsel %vm1291, %v1293, %v1289
    %v1295 = vmul.f32 %v1270, %v1294
    %v1296 = vmin.f32 %v1295, 1.0
    %v1297 = vmax.f32 %v1296, -1.0
    %v1298 = vmul.f32 %v1000, %v1000
    %v1299 = vmin.f32 16.0, %v1298
    %v1300 = vmul.f32 %v1299, 2.1237322e-06
    %v1301 = vadd.f32 %v1300, 0.00028619796
    %v1302 = vmul.f32 %v1299, %v1301
    %v1303 = vadd.f32 %v1302, 0.0036580483
    %v1304 = vmul.f32 %v1299, %v1303
    %v1305 = vadd.f32 %v1304, 0.05243302
    %v1306 = vmul.f32 %v1299, %v1305
    %v1307 = vadd.f32 %v1306, 0.18741608
    %v1308 = vmul.f32 %v1299, %v1307
    %v1309 = vadd.f32 %v1308, 1.1283791
    %v1310 = vmul.f32 %v1000, %v1309
    %v1311 = vmul.f32 %v1299, 3.8918573e-05
    %v1312 = vadd.f32 %v1311, 0.001143296
    %v1313 = vmul.f32 %v1299, %v1312
    %v1314 = vadd.f32 %v1313, 0.014752088
    %v1315 = vmul.f32 %v1299, %v1314
    %v1316 = vadd.f32 %v1315, 0.112945676
    %v1317 = vmul.f32 %v1299, %v1316
    %v1318 = vadd.f32 %v1317, 0.4994258
    %v1319 = vmul.f32 %v1299, %v1318
    %v1320 = vadd.f32 %v1319, 1.0
    %v1321 = vrcp.pop %v1320
    %v1322 = vmul.f32 %v1320, %v1321
    %v1323 = vsub.f32 1.0, %v1322
    %v1324 = vmul.f32 %v1321, %v1323
    %v1325 = vadd.f32 %v1321, %v1324
    %vm1326 = vweird.f32 %v1320
    %vm1327 = vweird.f32 %v1321
    %vm1328 = vmor %vm1326, %vm1327
    %v1329 = vsel %vm1328, %v1321, %v1325
    %v1330 = vand.u32 2147483647, %v1320
    %vm1331 = vcmp.eq.f32.partialorder %v1330, 8.507059e+37
    %v1332 = vand.u32 %v1320, 2147483648
    %v1333 = vor.u32 1.1754944e-38, %v1332
    %v1334 = vsel %vm1331, %v1333, %v1329
    %v1335 = vmul.f32 %v1310, %v1334
    %v1336 = vmin.f32 %v1335, 1.0
    %v1337 = vmax.f32 %v1336, -1.0
    %v1338 = vmul.f32 %v1001, %v1001
    %v1339 = vmin.f32 16.0, %v1338
    %v1340 = vmul.f32 %v1339, 2.1237322e-06
    %v1341 = vadd.f32 %v1340, 0.00028619796
    %v1342 = vmul.f32 %v1339, %v1341
    %v1343 = vadd.f32 %v1342, 0.0036580483
    %v1344 = vmul.f32 %v1339, %v1343
    %v1345 = vadd.f32 %v1344, 0.05243302
    %v1346 = vmul.f32 %v1339, %v1345
    %v1347 = vadd.f32 %v1346, 0.18741608
    %v1348 = vmul.f32 %v1339, %v1347
    %v1349 = vadd.f32 %v1348, 1.1283791
    %v1350 = vmul.f32 %v1001, %v1349
    %v1351 = vmul.f32 %v1339, 3.8918573e-05
    %v1352 = vadd.f32 %v1351, 0.001143296
    %v1353 = vmul.f32 %v1339, %v1352
    %v1354 = vadd.f32 %v1353, 0.014752088
    %v1355 = vmul.f32 %v1339, %v1354
    %v1356 = vadd.f32 %v1355, 0.112945676
    %v1357 = vmul.f32 %v1339, %v1356
    %v1358 = vadd.f32 %v1357, 0.4994258
    %v1359 = vmul.f32 %v1339, %v1358
    %v1360 = vadd.f32 %v1359, 1.0
    %v1361 = vrcp.pop %v1360
    %v1362 = vmul.f32 %v1360, %v1361
    %v1363 = vsub.f32 1.0, %v1362
    %v1364 = vmul.f32 %v1361, %v1363
    %v1365 = vadd.f32 %v1361, %v1364
    %vm1366 = vweird.f32 %v1360
    %vm1367 = vweird.f32 %v1361
    %vm1368 = vmor %vm1366, %vm1367
    %v1369 = vsel %vm1368, %v1361, %v1365
    %v1370 = vand.u32 2147483647, %v1360
    %vm1371 = vcmp.eq.f32.partialorder %v1370, 8.507059e+37
    %v1372 = vand.u32 %v1360, 2147483648
    %v1373 = vor.u32 1.1754944e-38, %v1372
    %v1374 = vsel %vm1371, %v1373, %v1369
    %v1375 = vmul.f32 %v1350, %v1374
    %v1376 = vmin.f32 %v1375, 1.0
    %v1377 = vmax.f32 %v1376, -1.0
    %v1378 = vmul.f32 %v1002, %v1002
    %v1379 = vmin.f32 16.0, %v1378
    %v1380 = vmul.f32 %v1379, 2.1237322e-06
    %v1381 = vadd.f32 %v1380, 0.00028619796
    %v1382 = vmul.f32 %v1379, %v1381
    %v1383 = vadd.f32 %v1382, 0.0036580483
    %v1384 = vmul.f32 %v1379, %v1383
    %v1385 = vadd.f32 %v1384, 0.05243302
    %v1386 = vmul.f32 %v1379, %v1385
    %v1387 = vadd.f32 %v1386, 0.18741608
    %v1388 = vmul.f32 %v1379, %v1387
    %v1389 = vadd.f32 %v1388, 1.1283791
    %v1390 = vmul.f32 %v1002, %v1389
    %v1391 = vmul.f32 %v1379, 3.8918573e-05
    %v1392 = vadd.f32 %v1391, 0.001143296
    %v1393 = vmul.f32 %v1379, %v1392
    %v1394 = vadd.f32 %v1393, 0.014752088
    %v1395 = vmul.f32 %v1379, %v1394
    %v1396 = vadd.f32 %v1395, 0.112945676
    %v1397 = vmul.f32 %v1379, %v1396
    %v1398 = vadd.f32 %v1397, 0.4994258
    %v1399 = vmul.f32 %v1379, %v1398
    %v1400 = vadd.f32 %v1399, 1.0
    %v1401 = vrcp.pop %v1400
    %v1402 = vmul.f32 %v1400, %v1401
    %v1403 = vsub.f32 1.0, %v1402
    %v1404 = vmul.f32 %v1401, %v1403
    %v1405 = vadd.f32 %v1401, %v1404
    %vm1406 = vweird.f32 %v1400
    %vm1407 = vweird.f32 %v1401
    %vm1408 = vmor %vm1406, %vm1407
    %v1409 = vsel %vm1408, %v1401, %v1405
    %v1410 = vand.u32 2147483647, %v1400
    %vm1411 = vcmp.eq.f32.partialorder %v1410, 8.507059e+37
    %v1412 = vand.u32 %v1400, 2147483648
    %v1413 = vor.u32 1.1754944e-38, %v1412
    %v1414 = vsel %vm1411, %v1413, %v1409
    %v1415 = vmul.f32 %v1390, %v1414
    %v1416 = vmin.f32 %v1415, 1.0
    %v1417 = vmax.f32 %v1416, -1.0
    %v1418 = vmul.f32 %v1003, %v1003
    %v1419 = vmin.f32 16.0, %v1418
    %v1420 = vmul.f32 %v1419, 2.1237322e-06
    %v1421 = vadd.f32 %v1420, 0.00028619796
    %v1422 = vmul.f32 %v1419, %v1421
    %v1423 = vadd.f32 %v1422, 0.0036580483
    %v1424 = vmul.f32 %v1419, %v1423
    %v1425 = vadd.f32 %v1424, 0.05243302
    %v1426 = vmul.f32 %v1419, %v1425
    %v1427 = vadd.f32 %v1426, 0.18741608
    %v1428 = vmul.f32 %v1419, %v1427
    %v1429 = vadd.f32 %v1428, 1.1283791
    %v1430 = vmul.f32 %v1003, %v1429
    %v1431 = vmul.f32 %v1419, 3.8918573e-05
    %v1432 = vadd.f32 %v1431, 0.001143296
    %v1433 = vmul.f32 %v1419, %v1432
    %v1434 = vadd.f32 %v1433, 0.014752088
    %v1435 = vmul.f32 %v1419, %v1434
    %v1436 = vadd.f32 %v1435, 0.112945676
    %v1437 = vmul.f32 %v1419, %v1436
    %v1438 = vadd.f32 %v1437, 0.4994258
    %v1439 = vmul.f32 %v1419, %v1438
    %v1440 = vadd.f32 %v1439, 1.0
    %v1441 = vrcp.pop %v1440
    %v1442 = vmul.f32 %v1440, %v1441
    %v1443 = vsub.f32 1.0, %v1442
    %v1444 = vmul.f32 %v1441, %v1443
    %v1445 = vadd.f32 %v1441, %v1444
    %vm1446 = vweird.f32 %v1440
    %vm1447 = vweird.f32 %v1441
    %vm1448 = vmor %vm1446, %vm1447
    %v1449 = vsel %vm1448, %v1441, %v1445
    %v1450 = vand.u32 2147483647, %v1440
    %vm1451 = vcmp.eq.f32.partialorder %v1450, 8.507059e+37
    %v1452 = vand.u32 %v1440, 2147483648
    %v1453 = vor.u32 1.1754944e-38, %v1452
    %v1454 = vsel %vm1451, %v1453, %v1449
    %v1455 = vmul.f32 %v1430, %v1454
    %v1456 = vmin.f32 %v1455, 1.0
    %v1457 = vmax.f32 %v1456, -1.0
    %v1458 = vmul.f32 %v1004, %v1004
    %v1459 = vmin.f32 16.0, %v1458
    %v1460 = vmul.f32 %v1459, 2.1237322e-06
    %v1461 = vadd.f32 %v1460, 0.00028619796
    %v1462 = vmul.f32 %v1459, %v1461
    %v1463 = vadd.f32 %v1462, 0.0036580483
    %v1464 = vmul.f32 %v1459, %v1463
    %v1465 = vadd.f32 %v1464, 0.05243302
    %v1466 = vmul.f32 %v1459, %v1465
    %v1467 = vadd.f32 %v1466, 0.18741608
    %v1468 = vmul.f32 %v1459, %v1467
    %v1469 = vadd.f32 %v1468, 1.1283791
    %v1470 = vmul.f32 %v1004, %v1469
    %v1471 = vmul.f32 %v1459, 3.8918573e-05
    %v1472 = vadd.f32 %v1471, 0.001143296
    %v1473 = vmul.f32 %v1459, %v1472
    %v1474 = vadd.f32 %v1473, 0.014752088
    %v1475 = vmul.f32 %v1459, %v1474
    %v1476 = vadd.f32 %v1475, 0.112945676
    %v1477 = vmul.f32 %v1459, %v1476
    %v1478 = vadd.f32 %v1477, 0.4994258
    %v1479 = vmul.f32 %v1459, %v1478
    %v1480 = vadd.f32 %v1479, 1.0
    %v1481 = vrcp.pop %v1480
    %v1482 = vmul.f32 %v1480, %v1481
    %v1483 = vsub.f32 1.0, %v1482
    %v1484 = vmul.f32 %v1481, %v1483
    %v1485 = vadd.f32 %v1481, %v1484
    %vm1486 = vweird.f32 %v1480
    %vm1487 = vweird.f32 %v1481
    %vm1488 = vmor %vm1486, %vm1487
    %v1489 = vsel %vm1488, %v1481, %v1485
    %v1490 = vand.u32 2147483647, %v1480
    %vm1491 = vcmp.eq.f32.partialorder %v1490, 8.507059e+37
    %v1492 = vand.u32 %v1480, 2147483648
    %v1493 = vor.u32 1.1754944e-38, %v1492
    %v1494 = vsel %vm1491, %v1493, %v1489
    %v1495 = vmul.f32 %v1470, %v1494
    %v1496 = vmin.f32 %v1495, 1.0
    %v1497 = vmax.f32 %v1496, -1.0
    %v1498 = vmul.f32 %v1005, %v1005
    %v1499 = vmin.f32 16.0, %v1498
    %v1500 = vmul.f32 %v1499, 2.1237322e-06
    %v1501 = vadd.f32 %v1500, 0.00028619796
    %v1502 = vmul.f32 %v1499, %v1501
    %v1503 = vadd.f32 %v1502, 0.0036580483
    %v1504 = vmul.f32 %v1499, %v1503
    %v1505 = vadd.f32 %v1504, 0.05243302
    %v1506 = vmul.f32 %v1499, %v1505
    %v1507 = vadd.f32 %v1506, 0.18741608
    %v1508 = vmul.f32 %v1499, %v1507
    %v1509 = vadd.f32 %v1508, 1.1283791
    %v1510 = vmul.f32 %v1005, %v1509
    %v1511 = vmul.f32 %v1499, 3.8918573e-05
    %v1512 = vadd.f32 %v1511, 0.001143296
    %v1513 = vmul.f32 %v1499, %v1512
    %v1514 = vadd.f32 %v1513, 0.014752088
    %v1515 = vmul.f32 %v1499, %v1514
    %v1516 = vadd.f32 %v1515, 0.112945676
    %v1517 = vmul.f32 %v1499, %v1516
    %v1518 = vadd.f32 %v1517, 0.4994258
    %v1519 = vmul.f32 %v1499, %v1518
    %v1520 = vadd.f32 %v1519, 1.0
    %v1521 = vrcp.pop %v1520
    %v1522 = vmul.f32 %v1520, %v1521
    %v1523 = vsub.f32 1.0, %v1522
    %v1524 = vmul.f32 %v1521, %v1523
    %v1525 = vadd.f32 %v1521, %v1524
    %vm1526 = vweird.f32 %v1520
    %vm1527 = vweird.f32 %v1521
    %vm1528 = vmor %vm1526, %vm1527
    %v1529 = vsel %vm1528, %v1521, %v1525
    %v1530 = vand.u32 2147483647, %v1520
    %vm1531 = vcmp.eq.f32.partialorder %v1530, 8.507059e+37
    %v1532 = vand.u32 %v1520, 2147483648
    %v1533 = vor.u32 1.1754944e-38, %v1532
    %v1534 = vsel %vm1531, %v1533, %v1529
    %v1535 = vmul.f32 %v1510, %v1534
    %v1536 = vmin.f32 %v1535, 1.0
    %v1537 = vmax.f32 %v1536, -1.0
    %v1538 = vmul.f32 %v1006, %v1006
    %v1539 = vmin.f32 16.0, %v1538
    %v1540 = vmul.f32 %v1539, 2.1237322e-06
    %v1541 = vadd.f32 %v1540, 0.00028619796
    %v1542 = vmul.f32 %v1539, %v1541
    %v1543 = vadd.f32 %v1542, 0.0036580483
    %v1544 = vmul.f32 %v1539, %v1543
    %v1545 = vadd.f32 %v1544, 0.05243302
    %v1546 = vmul.f32 %v1539, %v1545
    %v1547 = vadd.f32 %v1546, 0.18741608
    %v1548 = vmul.f32 %v1539, %v1547
    %v1549 = vadd.f32 %v1548, 1.1283791
    %v1550 = vmul.f32 %v1006, %v1549
    %v1551 = vmul.f32 %v1539, 3.8918573e-05
    %v1552 = vadd.f32 %v1551, 0.001143296
    %v1553 = vmul.f32 %v1539, %v1552
    %v1554 = vadd.f32 %v1553, 0.014752088
    %v1555 = vmul.f32 %v1539, %v1554
    %v1556 = vadd.f32 %v1555, 0.112945676
    %v1557 = vmul.f32 %v1539, %v1556
    %v1558 = vadd.f32 %v1557, 0.4994258
    %v1559 = vmul.f32 %v1539, %v1558
    %v1560 = vadd.f32 %v1559, 1.0
    %v1561 = vrcp.pop %v1560
    %v1562 = vmul.f32 %v1560, %v1561
    %v1563 = vsub.f32 1.0, %v1562
    %v1564 = vmul.f32 %v1561, %v1563
    %v1565 = vadd.f32 %v1561, %v1564
    %vm1566 = vweird.f32 %v1560
    %vm1567 = vweird.f32 %v1561
    %vm1568 = vmor %vm1566, %vm1567
    %v1569 = vsel %vm1568, %v1561, %v1565
    %v1570 = vand.u32 2147483647, %v1560
    %vm1571 = vcmp.eq.f32.partialorder %v1570, 8.507059e+37
    %v1572 = vand.u32 %v1560, 2147483648
    %v1573 = vor.u32 1.1754944e-38, %v1572
    %v1574 = vsel %vm1571, %v1573, %v1569
    %v1575 = vmul.f32 %v1550, %v1574
    %v1576 = vmin.f32 %v1575, 1.0
    %v1577 = vmax.f32 %v1576, -1.0
    %v1578 = vmul.f32 %v1007, %v1007
    %v1579 = vmin.f32 16.0, %v1578
    %v1580 = vmul.f32 %v1579, 2.1237322e-06
    %v1581 = vadd.f32 %v1580, 0.00028619796
    %v1582 = vmul.f32 %v1579, %v1581
    %v1583 = vadd.f32 %v1582, 0.0036580483
    %v1584 = vmul.f32 %v1579, %v1583
    %v1585 = vadd.f32 %v1584, 0.05243302
    %v1586 = vmul.f32 %v1579, %v1585
    %v1587 = vadd.f32 %v1586, 0.18741608
    %v1588 = vmul.f32 %v1579, %v1587
    %v1589 = vadd.f32 %v1588, 1.1283791
    %v1590 = vmul.f32 %v1007, %v1589
    %v1591 = vmul.f32 %v1579, 3.8918573e-05
    %v1592 = vadd.f32 %v1591, 0.001143296
    %v1593 = vmul.f32 %v1579, %v1592
    %v1594 = vadd.f32 %v1593, 0.014752088
    %v1595 = vmul.f32 %v1579, %v1594
    %v1596 = vadd.f32 %v1595, 0.112945676
    %v1597 = vmul.f32 %v1579, %v1596
    %v1598 = vadd.f32 %v1597, 0.4994258
    %v1599 = vmul.f32 %v1579, %v1598
    %v1600 = vadd.f32 %v1599, 1.0
    %v1601 = vrcp.pop %v1600
    %v1602 = vmul.f32 %v1600, %v1601
    %v1603 = vsub.f32 1.0, %v1602
    %v1604 = vmul.f32 %v1601, %v1603
    %v1605 = vadd.f32 %v1601, %v1604
    %vm1606 = vweird.f32 %v1600
    %vm1607 = vweird.f32 %v1601
    %vm1608 = vmor %vm1606, %vm1607
    %v1609 = vsel %vm1608, %v1601, %v1605
    %v1610 = vand.u32 2147483647, %v1600
    %vm1611 = vcmp.eq.f32.partialorder %v1610, 8.507059e+37
    %v1612 = vand.u32 %v1600, 2147483648
    %v1613 = vor.u32 1.1754944e-38, %v1612
    %v1614 = vsel %vm1611, %v1613, %v1609
    %v1615 = vmul.f32 %v1590, %v1614
    %v1616 = vmin.f32 %v1615, 1.0
    %v1617 = vmax.f32 %v1616, -1.0
    %v1618 = vmul.f32 %v1008, %v1008
    %v1619 = vmin.f32 16.0, %v1618
    %v1620 = vmul.f32 %v1619, 2.1237322e-06
    %v1621 = vadd.f32 %v1620, 0.00028619796
    %v1622 = vmul.f32 %v1619, %v1621
    %v1623 = vadd.f32 %v1622, 0.0036580483
    %v1624 = vmul.f32 %v1619, %v1623
    %v1625 = vadd.f32 %v1624, 0.05243302
    %v1626 = vmul.f32 %v1619, %v1625
    %v1627 = vadd.f32 %v1626, 0.18741608
    %v1628 = vmul.f32 %v1619, %v1627
    %v1629 = vadd.f32 %v1628, 1.1283791
    %v1630 = vmul.f32 %v1008, %v1629
    %v1631 = vmul.f32 %v1619, 3.8918573e-05
    %v1632 = vadd.f32 %v1631, 0.001143296
    %v1633 = vmul.f32 %v1619, %v1632
    %v1634 = vadd.f32 %v1633, 0.014752088
    %v1635 = vmul.f32 %v1619, %v1634
    %v1636 = vadd.f32 %v1635, 0.112945676
    %v1637 = vmul.f32 %v1619, %v1636
    %v1638 = vadd.f32 %v1637, 0.4994258
    %v1639 = vmul.f32 %v1619, %v1638
    %v1640 = vadd.f32 %v1639, 1.0
    %v1641 = vrcp.pop %v1640
    %v1642 = vmul.f32 %v1640, %v1641
    %v1643 = vsub.f32 1.0, %v1642
    %v1644 = vmul.f32 %v1641, %v1643
    %v1645 = vadd.f32 %v1641, %v1644
    %vm1646 = vweird.f32 %v1640
    %vm1647 = vweird.f32 %v1641
    %vm1648 = vmor %vm1646, %vm1647
    %v1649 = vsel %vm1648, %v1641, %v1645
    %v1650 = vand.u32 2147483647, %v1640
    %vm1651 = vcmp.eq.f32.partialorder %v1650, 8.507059e+37
    %v1652 = vand.u32 %v1640, 2147483648
    %v1653 = vor.u32 1.1754944e-38, %v1652
    %v1654 = vsel %vm1651, %v1653, %v1649
    %v1655 = vmul.f32 %v1630, %v1654
    %v1656 = vmin.f32 %v1655, 1.0
    %v1657 = vmax.f32 %v1656, -1.0
    %v1658 = vmul.f32 %v1009, %v1009
    %v1659 = vmin.f32 16.0, %v1658
    %v1660 = vmul.f32 %v1659, 2.1237322e-06
    %v1661 = vadd.f32 %v1660, 0.00028619796
    %v1662 = vmul.f32 %v1659, %v1661
    %v1663 = vadd.f32 %v1662, 0.0036580483
    %v1664 = vmul.f32 %v1659, %v1663
    %v1665 = vadd.f32 %v1664, 0.05243302
    %v1666 = vmul.f32 %v1659, %v1665
    %v1667 = vadd.f32 %v1666, 0.18741608
    %v1668 = vmul.f32 %v1659, %v1667
    %v1669 = vadd.f32 %v1668, 1.1283791
    %v1670 = vmul.f32 %v1009, %v1669
    %v1671 = vmul.f32 %v1659, 3.8918573e-05
    %v1672 = vadd.f32 %v1671, 0.001143296
    %v1673 = vmul.f32 %v1659, %v1672
    %v1674 = vadd.f32 %v1673, 0.014752088
    %v1675 = vmul.f32 %v1659, %v1674
    %v1676 = vadd.f32 %v1675, 0.112945676
    %v1677 = vmul.f32 %v1659, %v1676
    %v1678 = vadd.f32 %v1677, 0.4994258
    %v1679 = vmul.f32 %v1659, %v1678
    %v1680 = vadd.f32 %v1679, 1.0
    %v1681 = vrcp.pop %v1680
    %v1682 = vmul.f32 %v1680, %v1681
    %v1683 = vsub.f32 1.0, %v1682
    %v1684 = vmul.f32 %v1681, %v1683
    %v1685 = vadd.f32 %v1681, %v1684
    %vm1686 = vweird.f32 %v1680
    %vm1687 = vweird.f32 %v1681
    %vm1688 = vmor %vm1686, %vm1687
    %v1689 = vsel %vm1688, %v1681, %v1685
    %v1690 = vand.u32 2147483647, %v1680
    %vm1691 = vcmp.eq.f32.partialorder %v1690, 8.507059e+37
    %v1692 = vand.u32 %v1680, 2147483648
    %v1693 = vor.u32 1.1754944e-38, %v1692
    %v1694 = vsel %vm1691, %v1693, %v1689
    %v1695 = vmul.f32 %v1670, %v1694
    %v1696 = vmin.f32 %v1695, 1.0
    %v1697 = vmax.f32 %v1696, -1.0
    %v1698 = vmul.f32 %v1010, %v1010
    %v1699 = vmin.f32 16.0, %v1698
    %v1700 = vmul.f32 %v1699, 2.1237322e-06
    %v1701 = vadd.f32 %v1700, 0.00028619796
    %v1702 = vmul.f32 %v1699, %v1701
    %v1703 = vadd.f32 %v1702, 0.0036580483
    %v1704 = vmul.f32 %v1699, %v1703
    %v1705 = vadd.f32 %v1704, 0.05243302
    %v1706 = vmul.f32 %v1699, %v1705
    %v1707 = vadd.f32 %v1706, 0.18741608
    %v1708 = vmul.f32 %v1699, %v1707
    %v1709 = vadd.f32 %v1708, 1.1283791
    %v1710 = vmul.f32 %v1010, %v1709
    %v1711 = vmul.f32 %v1699, 3.8918573e-05
    %v1712 = vadd.f32 %v1711, 0.001143296
    %v1713 = vmul.f32 %v1699, %v1712
    %v1714 = vadd.f32 %v1713, 0.014752088
    %v1715 = vmul.f32 %v1699, %v1714
    %v1716 = vadd.f32 %v1715, 0.112945676
    %v1717 = vmul.f32 %v1699, %v1716
    %v1718 = vadd.f32 %v1717, 0.4994258
    %v1719 = vmul.f32 %v1699, %v1718
    %v1720 = vadd.f32 %v1719, 1.0
    %v1721 = vrcp.pop %v1720
    %v1722 = vmul.f32 %v1720, %v1721
    %v1723 = vsub.f32 1.0, %v1722
    %v1724 = vmul.f32 %v1721, %v1723
    %v1725 = vadd.f32 %v1721, %v1724
    %vm1726 = vweird.f32 %v1720
    %vm1727 = vweird.f32 %v1721
    %vm1728 = vmor %vm1726, %vm1727
    %v1729 = vsel %vm1728, %v1721, %v1725
    %v1730 = vand.u32 2147483647, %v1720
    %vm1731 = vcmp.eq.f32.partialorder %v1730, 8.507059e+37
    %v1732 = vand.u32 %v1720, 2147483648
    %v1733 = vor.u32 1.1754944e-38, %v1732
    %v1734 = vsel %vm1731, %v1733, %v1729
    %v1735 = vmul.f32 %v1710, %v1734
    %v1736 = vmin.f32 %v1735, 1.0
    %v1737 = vmax.f32 %v1736, -1.0
    %v1738 = vmul.f32 %v1011, %v1011
    %v1739 = vmin.f32 16.0, %v1738
    %v1740 = vmul.f32 %v1739, 2.1237322e-06
    %v1741 = vadd.f32 %v1740, 0.00028619796
    %v1742 = vmul.f32 %v1739, %v1741
    %v1743 = vadd.f32 %v1742, 0.0036580483
    %v1744 = vmul.f32 %v1739, %v1743
    %v1745 = vadd.f32 %v1744, 0.05243302
    %v1746 = vmul.f32 %v1739, %v1745
    %v1747 = vadd.f32 %v1746, 0.18741608
    %v1748 = vmul.f32 %v1739, %v1747
    %v1749 = vadd.f32 %v1748, 1.1283791
    %v1750 = vmul.f32 %v1011, %v1749
    %v1751 = vmul.f32 %v1739, 3.8918573e-05
    %v1752 = vadd.f32 %v1751, 0.001143296
    %v1753 = vmul.f32 %v1739, %v1752
    %v1754 = vadd.f32 %v1753, 0.014752088
    %v1755 = vmul.f32 %v1739, %v1754
    %v1756 = vadd.f32 %v1755, 0.112945676
    %v1757 = vmul.f32 %v1739, %v1756
    %v1758 = vadd.f32 %v1757, 0.4994258
    %v1759 = vmul.f32 %v1739, %v1758
    %v1760 = vadd.f32 %v1759, 1.0
    %v1761 = vrcp.pop %v1760
    %v1762 = vmul.f32 %v1760, %v1761
    %v1763 = vsub.f32 1.0, %v1762
    %v1764 = vmul.f32 %v1761, %v1763
    %v1765 = vadd.f32 %v1761, %v1764
    %vm1766 = vweird.f32 %v1760
    %vm1767 = vweird.f32 %v1761
    %vm1768 = vmor %vm1766, %vm1767
    %v1769 = vsel %vm1768, %v1761, %v1765
    %v1770 = vand.u32 2147483647, %v1760
    %vm1771 = vcmp.eq.f32.partialorder %v1770, 8.507059e+37
    %v1772 = vand.u32 %v1760, 2147483648
    %v1773 = vor.u32 1.1754944e-38, %v1772
    %v1774 = vsel %vm1771, %v1773, %v1769
    %v1775 = vmul.f32 %v1750, %v1774
    %v1776 = vmin.f32 %v1775, 1.0
    %v1777 = vmax.f32 %v1776, -1.0
    %v1778 = vmul.f32 %v1012, %v1012
    %v1779 = vmin.f32 16.0, %v1778
    %v1780 = vmul.f32 %v1779, 2.1237322e-06
    %v1781 = vadd.f32 %v1780, 0.00028619796
    %v1782 = vmul.f32 %v1779, %v1781
    %v1783 = vadd.f32 %v1782, 0.0036580483
    %v1784 = vmul.f32 %v1779, %v1783
    %v1785 = vadd.f32 %v1784, 0.05243302
    %v1786 = vmul.f32 %v1779, %v1785
    %v1787 = vadd.f32 %v1786, 0.18741608
    %v1788 = vmul.f32 %v1779, %v1787
    %v1789 = vadd.f32 %v1788, 1.1283791
    %v1790 = vmul.f32 %v1012, %v1789
    %v1791 = vmul.f32 %v1779, 3.8918573e-05
    %v1792 = vadd.f32 %v1791, 0.001143296
    %v1793 = vmul.f32 %v1779, %v1792
    %v1794 = vadd.f32 %v1793, 0.014752088
    %v1795 = vmul.f32 %v1779, %v1794
    %v1796 = vadd.f32 %v1795, 0.112945676
    %v1797 = vmul.f32 %v1779, %v1796
    %v1798 = vadd.f32 %v1797, 0.4994258
    %v1799 = vmul.f32 %v1779, %v1798
    %v1800 = vadd.f32 %v1799, 1.0
    %v1801 = vrcp.pop %v1800
    %v1802 = vmul.f32 %v1800, %v1801
    %v1803 = vsub.f32 1.0, %v1802
    %v1804 = vmul.f32 %v1801, %v1803
    %v1805 = vadd.f32 %v1801, %v1804
    %vm1806 = vweird.f32 %v1800
    %vm1807 = vweird.f32 %v1801
    %vm1808 = vmor %vm1806, %vm1807
    %v1809 = vsel %vm1808, %v1801, %v1805
    %v1810 = vand.u32 2147483647, %v1800
    %vm1811 = vcmp.eq.f32.partialorder %v1810, 8.507059e+37
    %v1812 = vand.u32 %v1800, 2147483648
    %v1813 = vor.u32 1.1754944e-38, %v1812
    %v1814 = vsel %vm1811, %v1813, %v1809
    %v1815 = vmul.f32 %v1790, %v1814
    %v1816 = vmin.f32 %v1815, 1.0
    %v1817 = vmax.f32 %v1816, -1.0
    %v1818 = vmul.f32 %v1013, %v1013
    %v1819 = vmin.f32 16.0, %v1818
    %v1820 = vmul.f32 %v1819, 2.1237322e-06
    %v1821 = vadd.f32 %v1820, 0.00028619796
    %v1822 = vmul.f32 %v1819, %v1821
    %v1823 = vadd.f32 %v1822, 0.0036580483
    %v1824 = vmul.f32 %v1819, %v1823
    %v1825 = vadd.f32 %v1824, 0.05243302
    %v1826 = vmul.f32 %v1819, %v1825
    %v1827 = vadd.f32 %v1826, 0.18741608
    %v1828 = vmul.f32 %v1819, %v1827
    %v1829 = vadd.f32 %v1828, 1.1283791
    %v1830 = vmul.f32 %v1013, %v1829
    %v1831 = vmul.f32 %v1819, 3.8918573e-05
    %v1832 = vadd.f32 %v1831, 0.001143296
    %v1833 = vmul.f32 %v1819, %v1832
    %v1834 = vadd.f32 %v1833, 0.014752088
    %v1835 = vmul.f32 %v1819, %v1834
    %v1836 = vadd.f32 %v1835, 0.112945676
    %v1837 = vmul.f32 %v1819, %v1836
    %v1838 = vadd.f32 %v1837, 0.4994258
    %v1839 = vmul.f32 %v1819, %v1838
    %v1840 = vadd.f32 %v1839, 1.0
    %v1841 = vrcp.pop %v1840
    %v1842 = vmul.f32 %v1840, %v1841
    %v1843 = vsub.f32 1.0, %v1842
    %v1844 = vmul.f32 %v1841, %v1843
    %v1845 = vadd.f32 %v1841, %v1844
    %vm1846 = vweird.f32 %v1840
    %vm1847 = vweird.f32 %v1841
    %vm1848 = vmor %vm1846, %vm1847
    %v1849 = vsel %vm1848, %v1841, %v1845
    %v1850 = vand.u32 2147483647, %v1840
    %vm1851 = vcmp.eq.f32.partialorder %v1850, 8.507059e+37
    %v1852 = vand.u32 %v1840, 2147483648
    %v1853 = vor.u32 1.1754944e-38, %v1852
    %v1854 = vsel %vm1851, %v1853, %v1849
    %v1855 = vmul.f32 %v1830, %v1854
    %v1856 = vmin.f32 %v1855, 1.0
    %v1857 = vmax.f32 %v1856, -1.0
    %v1858 = vmul.f32 %v1014, %v1014
    %v1859 = vmin.f32 16.0, %v1858
    %v1860 = vmul.f32 %v1859, 2.1237322e-06
    %v1861 = vadd.f32 %v1860, 0.00028619796
    %v1862 = vmul.f32 %v1859, %v1861
    %v1863 = vadd.f32 %v1862, 0.0036580483
    %v1864 = vmul.f32 %v1859, %v1863
    %v1865 = vadd.f32 %v1864, 0.05243302
    %v1866 = vmul.f32 %v1859, %v1865
    %v1867 = vadd.f32 %v1866, 0.18741608
    %v1868 = vmul.f32 %v1859, %v1867
    %v1869 = vadd.f32 %v1868, 1.1283791
    %v1870 = vmul.f32 %v1014, %v1869
    %v1871 = vmul.f32 %v1859, 3.8918573e-05
    %v1872 = vadd.f32 %v1871, 0.001143296
    %v1873 = vmul.f32 %v1859, %v1872
    %v1874 = vadd.f32 %v1873, 0.014752088
    %v1875 = vmul.f32 %v1859, %v1874
    %v1876 = vadd.f32 %v1875, 0.112945676
    %v1877 = vmul.f32 %v1859, %v1876
    %v1878 = vadd.f32 %v1877, 0.4994258
    %v1879 = vmul.f32 %v1859, %v1878
    %v1880 = vadd.f32 %v1879, 1.0
    %v1881 = vrcp.pop %v1880
    %v1882 = vmul.f32 %v1880, %v1881
    %v1883 = vsub.f32 1.0, %v1882
    %v1884 = vmul.f32 %v1881, %v1883
    %v1885 = vadd.f32 %v1881, %v1884
    %vm1886 = vweird.f32 %v1880
    %vm1887 = vweird.f32 %v1881
    %vm1888 = vmor %vm1886, %vm1887
    %v1889 = vsel %vm1888, %v1881, %v1885
    %v1890 = vand.u32 2147483647, %v1880
    %vm1891 = vcmp.eq.f32.partialorder %v1890, 8.507059e+37
    %v1892 = vand.u32 %v1880, 2147483648
    %v1893 = vor.u32 1.1754944e-38, %v1892
    %v1894 = vsel %vm1891, %v1893, %v1889
    %v1895 = vmul.f32 %v1870, %v1894
    %v1896 = vmin.f32 %v1895, 1.0
    %v1897 = vmax.f32 %v1896, -1.0
    %v1898 = vmul.f32 %v1015, %v1015
    %v1899 = vmin.f32 16.0, %v1898
    %v1900 = vmul.f32 %v1899, 2.1237322e-06
    %v1901 = vadd.f32 %v1900, 0.00028619796
    %v1902 = vmul.f32 %v1899, %v1901
    %v1903 = vadd.f32 %v1902, 0.0036580483
    %v1904 = vmul.f32 %v1899, %v1903
    %v1905 = vadd.f32 %v1904, 0.05243302
    %v1906 = vmul.f32 %v1899, %v1905
    %v1907 = vadd.f32 %v1906, 0.18741608
    %v1908 = vmul.f32 %v1899, %v1907
    %v1909 = vadd.f32 %v1908, 1.1283791
    %v1910 = vmul.f32 %v1015, %v1909
    %v1911 = vmul.f32 %v1899, 3.8918573e-05
    %v1912 = vadd.f32 %v1911, 0.001143296
    %v1913 = vmul.f32 %v1899, %v1912
    %v1914 = vadd.f32 %v1913, 0.014752088
    %v1915 = vmul.f32 %v1899, %v1914
    %v1916 = vadd.f32 %v1915, 0.112945676
    %v1917 = vmul.f32 %v1899, %v1916
    %v1918 = vadd.f32 %v1917, 0.4994258
    %v1919 = vmul.f32 %v1899, %v1918
    %v1920 = vadd.f32 %v1919, 1.0
    %v1921 = vrcp.pop %v1920
    %v1922 = vmul.f32 %v1920, %v1921
    %v1923 = vsub.f32 1.0, %v1922
    %v1924 = vmul.f32 %v1921, %v1923
    %v1925 = vadd.f32 %v1921, %v1924
    %vm1926 = vweird.f32 %v1920
    %vm1927 = vweird.f32 %v1921
    %vm1928 = vmor %vm1926, %vm1927
    %v1929 = vsel %vm1928, %v1921, %v1925
    %v1930 = vand.u32 2147483647, %v1920
    %vm1931 = vcmp.eq.f32.partialorder %v1930, 8.507059e+37
    %v1932 = vand.u32 %v1920, 2147483648
    %v1933 = vor.u32 1.1754944e-38, %v1932
    %v1934 = vsel %vm1931, %v1933, %v1929
    %v1935 = vmul.f32 %v1910, %v1934
    %v1936 = vmin.f32 %v1935, 1.0
    %v1937 = vmax.f32 %v1936, -1.0
    %v1938 = vmul.f32 %v1016, %v1016
    %v1939 = vmin.f32 16.0, %v1938
    %v1940 = vmul.f32 %v1939, 2.1237322e-06
    %v1941 = vadd.f32 %v1940, 0.00028619796
    %v1942 = vmul.f32 %v1939, %v1941
    %v1943 = vadd.f32 %v1942, 0.0036580483
    %v1944 = vmul.f32 %v1939, %v1943
    %v1945 = vadd.f32 %v1944, 0.05243302
    %v1946 = vmul.f32 %v1939, %v1945
    %v1947 = vadd.f32 %v1946, 0.18741608
    %v1948 = vmul.f32 %v1939, %v1947
    %v1949 = vadd.f32 %v1948, 1.1283791
    %v1950 = vmul.f32 %v1016, %v1949
    %v1951 = vmul.f32 %v1939, 3.8918573e-05
    %v1952 = vadd.f32 %v1951, 0.001143296
    %v1953 = vmul.f32 %v1939, %v1952
    %v1954 = vadd.f32 %v1953, 0.014752088
    %v1955 = vmul.f32 %v1939, %v1954
    %v1956 = vadd.f32 %v1955, 0.112945676
    %v1957 = vmul.f32 %v1939, %v1956
    %v1958 = vadd.f32 %v1957, 0.4994258
    %v1959 = vmul.f32 %v1939, %v1958
    %v1960 = vadd.f32 %v1959, 1.0
    %v1961 = vrcp.pop %v1960
    %v1962 = vmul.f32 %v1960, %v1961
    %v1963 = vsub.f32 1.0, %v1962
    %v1964 = vmul.f32 %v1961, %v1963
    %v1965 = vadd.f32 %v1961, %v1964
    %vm1966 = vweird.f32 %v1960
    %vm1967 = vweird.f32 %v1961
    %vm1968 = vmor %vm1966, %vm1967
    %v1969 = vsel %vm1968, %v1961, %v1965
    %v1970 = vand.u32 2147483647, %v1960
    %vm1971 = vcmp.eq.f32.partialorder %v1970, 8.507059e+37
    %v1972 = vand.u32 %v1960, 2147483648
    %v1973 = vor.u32 1.1754944e-38, %v1972
    %v1974 = vsel %vm1971, %v1973, %v1969
    %v1975 = vmul.f32 %v1950, %v1974
    %v1976 = vmin.f32 %v1975, 1.0
    %v1977 = vmax.f32 %v1976, -1.0
    %v1978 = vmul.f32 %v1017, %v1017
    %v1979 = vmin.f32 16.0, %v1978
    %v1980 = vmul.f32 %v1979, 2.1237322e-06
    %v1981 = vadd.f32 %v1980, 0.00028619796
    %v1982 = vmul.f32 %v1979, %v1981
    %v1983 = vadd.f32 %v1982, 0.0036580483
    %v1984 = vmul.f32 %v1979, %v1983
    %v1985 = vadd.f32 %v1984, 0.05243302
    %v1986 = vmul.f32 %v1979, %v1985
    %v1987 = vadd.f32 %v1986, 0.18741608
    %v1988 = vmul.f32 %v1979, %v1987
    %v1989 = vadd.f32 %v1988, 1.1283791
    %v1990 = vmul.f32 %v1017, %v1989
    %v1991 = vmul.f32 %v1979, 3.8918573e-05
    %v1992 = vadd.f32 %v1991, 0.001143296
    %v1993 = vmul.f32 %v1979, %v1992
    %v1994 = vadd.f32 %v1993, 0.014752088
    %v1995 = vmul.f32 %v1979, %v1994
    %v1996 = vadd.f32 %v1995, 0.112945676
    %v1997 = vmul.f32 %v1979, %v1996
    %v1998 = vadd.f32 %v1997, 0.4994258
    %v1999 = vmul.f32 %v1979, %v1998
    %v2000 = vadd.f32 %v1999, 1.0
    %v2001 = vrcp.pop %v2000
    %v2002 = vmul.f32 %v2000, %v2001
    %v2003 = vsub.f32 1.0, %v2002
    %v2004 = vmul.f32 %v2001, %v2003
    %v2005 = vadd.f32 %v2001, %v2004
    %vm2006 = vweird.f32 %v2000
    %vm2007 = vweird.f32 %v2001
    %vm2008 = vmor %vm2006, %vm2007
    %v2009 = vsel %vm2008, %v2001, %v2005
    %v2010 = vand.u32 2147483647, %v2000
    %vm2011 = vcmp.eq.f32.partialorder %v2010, 8.507059e+37
    %v2012 = vand.u32 %v2000, 2147483648
    %v2013 = vor.u32 1.1754944e-38, %v2012
    %v2014 = vsel %vm2011, %v2013, %v2009
    %v2015 = vmul.f32 %v1990, %v2014
    %v2016 = vmin.f32 %v2015, 1.0
    %v2017 = vmax.f32 %v2016, -1.0
    %v2018 = vmul.f32 %v1018, %v1018
    %v2019 = vmin.f32 16.0, %v2018
    %v2020 = vmul.f32 %v2019, 2.1237322e-06
    %v2021 = vadd.f32 %v2020, 0.00028619796
    %v2022 = vmul.f32 %v2019, %v2021
    %v2023 = vadd.f32 %v2022, 0.0036580483
    %v2024 = vmul.f32 %v2019, %v2023
    %v2025 = vadd.f32 %v2024, 0.05243302
    %v2026 = vmul.f32 %v2019, %v2025
    %v2027 = vadd.f32 %v2026, 0.18741608
    %v2028 = vmul.f32 %v2019, %v2027
    %v2029 = vadd.f32 %v2028, 1.1283791
    %v2030 = vmul.f32 %v1018, %v2029
    %v2031 = vmul.f32 %v2019, 3.8918573e-05
    %v2032 = vadd.f32 %v2031, 0.001143296
    %v2033 = vmul.f32 %v2019, %v2032
    %v2034 = vadd.f32 %v2033, 0.014752088
    %v2035 = vmul.f32 %v2019, %v2034
    %v2036 = vadd.f32 %v2035, 0.112945676
    %v2037 = vmul.f32 %v2019, %v2036
    %v2038 = vadd.f32 %v2037, 0.4994258
    %v2039 = vmul.f32 %v2019, %v2038
    %v2040 = vadd.f32 %v2039, 1.0
    %v2041 = vrcp.pop %v2040
    %v2042 = vmul.f32 %v2040, %v2041
    %v2043 = vsub.f32 1.0, %v2042
    %v2044 = vmul.f32 %v2041, %v2043
    %v2045 = vadd.f32 %v2041, %v2044
    %vm2046 = vweird.f32 %v2040
    %vm2047 = vweird.f32 %v2041
    %vm2048 = vmor %vm2046, %vm2047
    %v2049 = vsel %vm2048, %v2041, %v2045
    %v2050 = vand.u32 2147483647, %v2040
    %vm2051 = vcmp.eq.f32.partialorder %v2050, 8.507059e+37
    %v2052 = vand.u32 %v2040, 2147483648
    %v2053 = vor.u32 1.1754944e-38, %v2052
    %v2054 = vsel %vm2051, %v2053, %v2049
    %v2055 = vmul.f32 %v2030, %v2054
    %v2056 = vmin.f32 %v2055, 1.0
    %v2057 = vmax.f32 %v2056, -1.0
    %v2058 = vmul.f32 %v1019, %v1019
    %v2059 = vmin.f32 16.0, %v2058
    %v2060 = vmul.f32 %v2059, 2.1237322e-06
    %v2061 = vadd.f32 %v2060, 0.00028619796
    %v2062 = vmul.f32 %v2059, %v2061
    %v2063 = vadd.f32 %v2062, 0.0036580483
    %v2064 = vmul.f32 %v2059, %v2063
    %v2065 = vadd.f32 %v2064, 0.05243302
    %v2066 = vmul.f32 %v2059, %v2065
    %v2067 = vadd.f32 %v2066, 0.18741608
    %v2068 = vmul.f32 %v2059, %v2067
    %v2069 = vadd.f32 %v2068, 1.1283791
    %v2070 = vmul.f32 %v1019, %v2069
    %v2071 = vmul.f32 %v2059, 3.8918573e-05
    %v2072 = vadd.f32 %v2071, 0.001143296
    %v2073 = vmul.f32 %v2059, %v2072
    %v2074 = vadd.f32 %v2073, 0.014752088
    %v2075 = vmul.f32 %v2059, %v2074
    %v2076 = vadd.f32 %v2075, 0.112945676
    %v2077 = vmul.f32 %v2059, %v2076
    %v2078 = vadd.f32 %v2077, 0.4994258
    %v2079 = vmul.f32 %v2059, %v2078
    %v2080 = vadd.f32 %v2079, 1.0
    %v2081 = vrcp.pop %v2080
    %v2082 = vmul.f32 %v2080, %v2081
    %v2083 = vsub.f32 1.0, %v2082
    %v2084 = vmul.f32 %v2081, %v2083
    %v2085 = vadd.f32 %v2081, %v2084
    %vm2086 = vweird.f32 %v2080
    %vm2087 = vweird.f32 %v2081
    %vm2088 = vmor %vm2086, %vm2087
    %v2089 = vsel %vm2088, %v2081, %v2085
    %v2090 = vand.u32 2147483647, %v2080
    %vm2091 = vcmp.eq.f32.partialorder %v2090, 8.507059e+37
    %v2092 = vand.u32 %v2080, 2147483648
    %v2093 = vor.u32 1.1754944e-38, %v2092
    %v2094 = vsel %vm2091, %v2093, %v2089
    %v2095 = vmul.f32 %v2070, %v2094
    %v2096 = vmin.f32 %v2095, 1.0
    %v2097 = vmax.f32 %v2096, -1.0
    %v2098 = vmul.f32 %v1020, %v1020
    %v2099 = vmin.f32 16.0, %v2098
    %v2100 = vmul.f32 %v2099, 2.1237322e-06
    %v2101 = vadd.f32 %v2100, 0.00028619796
    %v2102 = vmul.f32 %v2099, %v2101
    %v2103 = vadd.f32 %v2102, 0.0036580483
    %v2104 = vmul.f32 %v2099, %v2103
    %v2105 = vadd.f32 %v2104, 0.05243302
    %v2106 = vmul.f32 %v2099, %v2105
    %v2107 = vadd.f32 %v2106, 0.18741608
    %v2108 = vmul.f32 %v2099, %v2107
    %v2109 = vadd.f32 %v2108, 1.1283791
    %v2110 = vmul.f32 %v1020, %v2109
    %v2111 = vmul.f32 %v2099, 3.8918573e-05
    %v2112 = vadd.f32 %v2111, 0.001143296
    %v2113 = vmul.f32 %v2099, %v2112
    %v2114 = vadd.f32 %v2113, 0.014752088
    %v2115 = vmul.f32 %v2099, %v2114
    %v2116 = vadd.f32 %v2115, 0.112945676
    %v2117 = vmul.f32 %v2099, %v2116
    %v2118 = vadd.f32 %v2117, 0.4994258
    %v2119 = vmul.f32 %v2099, %v2118
    %v2120 = vadd.f32 %v2119, 1.0
    %v2121 = vrcp.pop %v2120
    %v2122 = vmul.f32 %v2120, %v2121
    %v2123 = vsub.f32 1.0, %v2122
    %v2124 = vmul.f32 %v2121, %v2123
    %v2125 = vadd.f32 %v2121, %v2124
    %vm2126 = vweird.f32 %v2120
    %vm2127 = vweird.f32 %v2121
    %vm2128 = vmor %vm2126, %vm2127
    %v2129 = vsel %vm2128, %v2121, %v2125
    %v2130 = vand.u32 2147483647, %v2120
    %vm2131 = vcmp.eq.f32.partialorder %v2130, 8.507059e+37
    %v2132 = vand.u32 %v2120, 2147483648
    %v2133 = vor.u32 1.1754944e-38, %v2132
    %v2134 = vsel %vm2131, %v2133, %v2129
    %v2135 = vmul.f32 %v2110, %v2134
    %v2136 = vmin.f32 %v2135, 1.0
    %v2137 = vmax.f32 %v2136, -1.0
    %v2138 = vmul.f32 %v1021, %v1021
    %v2139 = vmin.f32 16.0, %v2138
    %v2140 = vmul.f32 %v2139, 2.1237322e-06
    %v2141 = vadd.f32 %v2140, 0.00028619796
    %v2142 = vmul.f32 %v2139, %v2141
    %v2143 = vadd.f32 %v2142, 0.0036580483
    %v2144 = vmul.f32 %v2139, %v2143
    %v2145 = vadd.f32 %v2144, 0.05243302
    %v2146 = vmul.f32 %v2139, %v2145
    %v2147 = vadd.f32 %v2146, 0.18741608
    %v2148 = vmul.f32 %v2139, %v2147
    %v2149 = vadd.f32 %v2148, 1.1283791
    %v2150 = vmul.f32 %v1021, %v2149
    %v2151 = vmul.f32 %v2139, 3.8918573e-05
    %v2152 = vadd.f32 %v2151, 0.001143296
    %v2153 = vmul.f32 %v2139, %v2152
    %v2154 = vadd.f32 %v2153, 0.014752088
    %v2155 = vmul.f32 %v2139, %v2154
    %v2156 = vadd.f32 %v2155, 0.112945676
    %v2157 = vmul.f32 %v2139, %v2156
    %v2158 = vadd.f32 %v2157, 0.4994258
    %v2159 = vmul.f32 %v2139, %v2158
    %v2160 = vadd.f32 %v2159, 1.0
    %v2161 = vrcp.pop %v2160
    %v2162 = vmul.f32 %v2160, %v2161
    %v2163 = vsub.f32 1.0, %v2162
    %v2164 = vmul.f32 %v2161, %v2163
    %v2165 = vadd.f32 %v2161, %v2164
    %vm2166 = vweird.f32 %v2160
    %vm2167 = vweird.f32 %v2161
    %vm2168 = vmor %vm2166, %vm2167
    %v2169 = vsel %vm2168, %v2161, %v2165
    %v2170 = vand.u32 2147483647, %v2160
    %vm2171 = vcmp.eq.f32.partialorder %v2170, 8.507059e+37
    %v2172 = vand.u32 %v2160, 2147483648
    %v2173 = vor.u32 1.1754944e-38, %v2172
    %v2174 = vsel %vm2171, %v2173, %v2169
    %v2175 = vmul.f32 %v2150, %v2174
    %v2176 = vmin.f32 %v2175, 1.0
    %v2177 = vmax.f32 %v2176, -1.0
    %v2178 = vmul.f32 %v1022, %v1022
    %v2179 = vmin.f32 16.0, %v2178
    %v2180 = vmul.f32 %v2179, 2.1237322e-06
    %v2181 = vadd.f32 %v2180, 0.00028619796
    %v2182 = vmul.f32 %v2179, %v2181
    %v2183 = vadd.f32 %v2182, 0.0036580483
    %v2184 = vmul.f32 %v2179, %v2183
    %v2185 = vadd.f32 %v2184, 0.05243302
    %v2186 = vmul.f32 %v2179, %v2185
    %v2187 = vadd.f32 %v2186, 0.18741608
    %v2188 = vmul.f32 %v2179, %v2187
    %v2189 = vadd.f32 %v2188, 1.1283791
    %v2190 = vmul.f32 %v1022, %v2189
    %v2191 = vmul.f32 %v2179, 3.8918573e-05
    %v2192 = vadd.f32 %v2191, 0.001143296
    %v2193 = vmul.f32 %v2179, %v2192
    %v2194 = vadd.f32 %v2193, 0.014752088
    %v2195 = vmul.f32 %v2179, %v2194
    %v2196 = vadd.f32 %v2195, 0.112945676
    %v2197 = vmul.f32 %v2179, %v2196
    %v2198 = vadd.f32 %v2197, 0.4994258
    %v2199 = vmul.f32 %v2179, %v2198
    %v2200 = vadd.f32 %v2199, 1.0
    %v2201 = vrcp.pop %v2200
    %v2202 = vmul.f32 %v2200, %v2201
    %v2203 = vsub.f32 1.0, %v2202
    %v2204 = vmul.f32 %v2201, %v2203
    %v2205 = vadd.f32 %v2201, %v2204
    %vm2206 = vweird.f32 %v2200
    %vm2207 = vweird.f32 %v2201
    %vm2208 = vmor %vm2206, %vm2207
    %v2209 = vsel %vm2208, %v2201, %v2205
    %v2210 = vand.u32 2147483647, %v2200
    %vm2211 = vcmp.eq.f32.partialorder %v2210, 8.507059e+37
    %v2212 = vand.u32 %v2200, 2147483648
    %v2213 = vor.u32 1.1754944e-38, %v2212
    %v2214 = vsel %vm2211, %v2213, %v2209
    %v2215 = vmul.f32 %v2190, %v2214
    %v2216 = vmin.f32 %v2215, 1.0
    %v2217 = vmax.f32 %v2216, -1.0
    %v2218 = vmul.f32 %v1023, %v1023
    %v2219 = vmin.f32 16.0, %v2218
    %v2220 = vmul.f32 %v2219, 2.1237322e-06
    %v2221 = vadd.f32 %v2220, 0.00028619796
    %v2222 = vmul.f32 %v2219, %v2221
    %v2223 = vadd.f32 %v2222, 0.0036580483
    %v2224 = vmul.f32 %v2219, %v2223
    %v2225 = vadd.f32 %v2224, 0.05243302
    %v2226 = vmul.f32 %v2219, %v2225
    %v2227 = vadd.f32 %v2226, 0.18741608
    %v2228 = vmul.f32 %v2219, %v2227
    %v2229 = vadd.f32 %v2228, 1.1283791
    %v2230 = vmul.f32 %v1023, %v2229
    %v2231 = vmul.f32 %v2219, 3.8918573e-05
    %v2232 = vadd.f32 %v2231, 0.001143296
    %v2233 = vmul.f32 %v2219, %v2232
    %v2234 = vadd.f32 %v2233, 0.014752088
    %v2235 = vmul.f32 %v2219, %v2234
    %v2236 = vadd.f32 %v2235, 0.112945676
    %v2237 = vmul.f32 %v2219, %v2236
    %v2238 = vadd.f32 %v2237, 0.4994258
    %v2239 = vmul.f32 %v2219, %v2238
    %v2240 = vadd.f32 %v2239, 1.0
    %v2241 = vrcp.pop %v2240
    %v2242 = vmul.f32 %v2240, %v2241
    %v2243 = vsub.f32 1.0, %v2242
    %v2244 = vmul.f32 %v2241, %v2243
    %v2245 = vadd.f32 %v2241, %v2244
    %vm2246 = vweird.f32 %v2240
    %vm2247 = vweird.f32 %v2241
    %vm2248 = vmor %vm2246, %vm2247
    %v2249 = vsel %vm2248, %v2241, %v2245
    %v2250 = vand.u32 2147483647, %v2240
    %vm2251 = vcmp.eq.f32.partialorder %v2250, 8.507059e+37
    %v2252 = vand.u32 %v2240, 2147483648
    %v2253 = vor.u32 1.1754944e-38, %v2252
    %v2254 = vsel %vm2251, %v2253, %v2249
    %v2255 = vmul.f32 %v2230, %v2254
    %v2256 = vmin.f32 %v2255, 1.0
    %v2257 = vmax.f32 %v2256, -1.0
    %v2258 = vmul.f32 %v1024, %v1024
    %v2259 = vmin.f32 16.0, %v2258
    %v2260 = vmul.f32 %v2259, 2.1237322e-06
    %v2261 = vadd.f32 %v2260, 0.00028619796
    %v2262 = vmul.f32 %v2259, %v2261
    %v2263 = vadd.f32 %v2262, 0.0036580483
    %v2264 = vmul.f32 %v2259, %v2263
    %v2265 = vadd.f32 %v2264, 0.05243302
    %v2266 = vmul.f32 %v2259, %v2265
    %v2267 = vadd.f32 %v2266, 0.18741608
    %v2268 = vmul.f32 %v2259, %v2267
    %v2269 = vadd.f32 %v2268, 1.1283791
    %v2270 = vmul.f32 %v1024, %v2269
    %v2271 = vmul.f32 %v2259, 3.8918573e-05
    %v2272 = vadd.f32 %v2271, 0.001143296
    %v2273 = vmul.f32 %v2259, %v2272
    %v2274 = vadd.f32 %v2273, 0.014752088
    %v2275 = vmul.f32 %v2259, %v2274
    %v2276 = vadd.f32 %v2275, 0.112945676
    %v2277 = vmul.f32 %v2259, %v2276
    %v2278 = vadd.f32 %v2277, 0.4994258
    %v2279 = vmul.f32 %v2259, %v2278
    %v2280 = vadd.f32 %v2279, 1.0
    %v2281 = vrcp.pop %v2280
    %v2282 = vmul.f32 %v2280, %v2281
    %v2283 = vsub.f32 1.0, %v2282
    %v2284 = vmul.f32 %v2281, %v2283
    %v2285 = vadd.f32 %v2281, %v2284
    %vm2286 = vweird.f32 %v2280
    %vm2287 = vweird.f32 %v2281
    %vm2288 = vmor %vm2286, %vm2287
    %v2289 = vsel %vm2288, %v2281, %v2285
    %v2290 = vand.u32 2147483647, %v2280
    %vm2291 = vcmp.eq.f32.partialorder %v2290, 8.507059e+37
    %v2292 = vand.u32 %v2280, 2147483648
    %v2293 = vor.u32 1.1754944e-38, %v2292
    %v2294 = vsel %vm2291, %v2293, %v2289
    %v2295 = vmul.f32 %v2270, %v2294
    %v2296 = vmin.f32 %v2295, 1.0
    %v2297 = vmax.f32 %v2296, -1.0
    %v2298 = vmul.f32 %v1025, %v1025
    %v2299 = vmin.f32 16.0, %v2298
    %v2300 = vmul.f32 %v2299, 2.1237322e-06
    %v2301 = vadd.f32 %v2300, 0.00028619796
    %v2302 = vmul.f32 %v2299, %v2301
    %v2303 = vadd.f32 %v2302, 0.0036580483
    %v2304 = vmul.f32 %v2299, %v2303
    %v2305 = vadd.f32 %v2304, 0.05243302
    %v2306 = vmul.f32 %v2299, %v2305
    %v2307 = vadd.f32 %v2306, 0.18741608
    %v2308 = vmul.f32 %v2299, %v2307
    %v2309 = vadd.f32 %v2308, 1.1283791
    %v2310 = vmul.f32 %v1025, %v2309
    %v2311 = vmul.f32 %v2299, 3.8918573e-05
    %v2312 = vadd.f32 %v2311, 0.001143296
    %v2313 = vmul.f32 %v2299, %v2312
    %v2314 = vadd.f32 %v2313, 0.014752088
    %v2315 = vmul.f32 %v2299, %v2314
    %v2316 = vadd.f32 %v2315, 0.112945676
    %v2317 = vmul.f32 %v2299, %v2316
    %v2318 = vadd.f32 %v2317, 0.4994258
    %v2319 = vmul.f32 %v2299, %v2318
    %v2320 = vadd.f32 %v2319, 1.0
    %v2321 = vrcp.pop %v2320
    %v2322 = vmul.f32 %v2320, %v2321
    %v2323 = vsub.f32 1.0, %v2322
    %v2324 = vmul.f32 %v2321, %v2323
    %v2325 = vadd.f32 %v2321, %v2324
    %vm2326 = vweird.f32 %v2320
    %vm2327 = vweird.f32 %v2321
    %vm2328 = vmor %vm2326, %vm2327
    %v2329 = vsel %vm2328, %v2321, %v2325
    %v2330 = vand.u32 2147483647, %v2320
    %vm2331 = vcmp.eq.f32.partialorder %v2330, 8.507059e+37
    %v2332 = vand.u32 %v2320, 2147483648
    %v2333 = vor.u32 1.1754944e-38, %v2332
    %v2334 = vsel %vm2331, %v2333, %v2329
    %v2335 = vmul.f32 %v2310, %v2334
    %v2336 = vmin.f32 %v2335, 1.0
    %v2337 = vmax.f32 %v2336, -1.0
    %v2338 = vmul.f32 %v1026, %v1026
    %v2339 = vmin.f32 16.0, %v2338
    %v2340 = vmul.f32 %v2339, 2.1237322e-06
    %v2341 = vadd.f32 %v2340, 0.00028619796
    %v2342 = vmul.f32 %v2339, %v2341
    %v2343 = vadd.f32 %v2342, 0.0036580483
    %v2344 = vmul.f32 %v2339, %v2343
    %v2345 = vadd.f32 %v2344, 0.05243302
    %v2346 = vmul.f32 %v2339, %v2345
    %v2347 = vadd.f32 %v2346, 0.18741608
    %v2348 = vmul.f32 %v2339, %v2347
    %v2349 = vadd.f32 %v2348, 1.1283791
    %v2350 = vmul.f32 %v1026, %v2349
    %v2351 = vmul.f32 %v2339, 3.8918573e-05
    %v2352 = vadd.f32 %v2351, 0.001143296
    %v2353 = vmul.f32 %v2339, %v2352
    %v2354 = vadd.f32 %v2353, 0.014752088
    %v2355 = vmul.f32 %v2339, %v2354
    %v2356 = vadd.f32 %v2355, 0.112945676
    %v2357 = vmul.f32 %v2339, %v2356
    %v2358 = vadd.f32 %v2357, 0.4994258
    %v2359 = vmul.f32 %v2339, %v2358
    %v2360 = vadd.f32 %v2359, 1.0
    %v2361 = vrcp.pop %v2360
    %v2362 = vmul.f32 %v2360, %v2361
    %v2363 = vsub.f32 1.0, %v2362
    %v2364 = vmul.f32 %v2361, %v2363
    %v2365 = vadd.f32 %v2361, %v2364
    %vm2366 = vweird.f32 %v2360
    %vm2367 = vweird.f32 %v2361
    %vm2368 = vmor %vm2366, %vm2367
    %v2369 = vsel %vm2368, %v2361, %v2365
    %v2370 = vand.u32 2147483647, %v2360
    %vm2371 = vcmp.eq.f32.partialorder %v2370, 8.507059e+37
    %v2372 = vand.u32 %v2360, 2147483648
    %v2373 = vor.u32 1.1754944e-38, %v2372
    %v2374 = vsel %vm2371, %v2373, %v2369
    %v2375 = vmul.f32 %v2350, %v2374
    %v2376 = vmin.f32 %v2375, 1.0
    %v2377 = vmax.f32 %v2376, -1.0
    %v2378 = vmul.f32 %v1027, %v1027
    %v2379 = vmin.f32 16.0, %v2378
    %v2380 = vmul.f32 %v2379, 2.1237322e-06
    %v2381 = vadd.f32 %v2380, 0.00028619796
    %v2382 = vmul.f32 %v2379, %v2381
    %v2383 = vadd.f32 %v2382, 0.0036580483
    %v2384 = vmul.f32 %v2379, %v2383
    %v2385 = vadd.f32 %v2384, 0.05243302
    %v2386 = vmul.f32 %v2379, %v2385
    %v2387 = vadd.f32 %v2386, 0.18741608
    %v2388 = vmul.f32 %v2379, %v2387
    %v2389 = vadd.f32 %v2388, 1.1283791
    %v2390 = vmul.f32 %v1027, %v2389
    %v2391 = vmul.f32 %v2379, 3.8918573e-05
    %v2392 = vadd.f32 %v2391, 0.001143296
    %v2393 = vmul.f32 %v2379, %v2392
    %v2394 = vadd.f32 %v2393, 0.014752088
    %v2395 = vmul.f32 %v2379, %v2394
    %v2396 = vadd.f32 %v2395, 0.112945676
    %v2397 = vmul.f32 %v2379, %v2396
    %v2398 = vadd.f32 %v2397, 0.4994258
    %v2399 = vmul.f32 %v2379, %v2398
    %v2400 = vadd.f32 %v2399, 1.0
    %v2401 = vrcp.pop %v2400
    %v2402 = vmul.f32 %v2400, %v2401
    %v2403 = vsub.f32 1.0, %v2402
    %v2404 = vmul.f32 %v2401, %v2403
    %v2405 = vadd.f32 %v2401, %v2404
    %vm2406 = vweird.f32 %v2400
    %vm2407 = vweird.f32 %v2401
    %vm2408 = vmor %vm2406, %vm2407
    %v2409 = vsel %vm2408, %v2401, %v2405
    %v2410 = vand.u32 2147483647, %v2400
    %vm2411 = vcmp.eq.f32.partialorder %v2410, 8.507059e+37
    %v2412 = vand.u32 %v2400, 2147483648
    %v2413 = vor.u32 1.1754944e-38, %v2412
    %v2414 = vsel %vm2411, %v2413, %v2409
    %v2415 = vmul.f32 %v2390, %v2414
    %v2416 = vmin.f32 %v2415, 1.0
    %v2417 = vmax.f32 %v2416, -1.0
    %v2418 = vmul.f32 %v1028, %v1028
    %v2419 = vmin.f32 16.0, %v2418
    %v2420 = vmul.f32 %v2419, 2.1237322e-06
    %v2421 = vadd.f32 %v2420, 0.00028619796
    %v2422 = vmul.f32 %v2419, %v2421
    %v2423 = vadd.f32 %v2422, 0.0036580483
    %v2424 = vmul.f32 %v2419, %v2423
    %v2425 = vadd.f32 %v2424, 0.05243302
    %v2426 = vmul.f32 %v2419, %v2425
    %v2427 = vadd.f32 %v2426, 0.18741608
    %v2428 = vmul.f32 %v2419, %v2427
    %v2429 = vadd.f32 %v2428, 1.1283791
    %v2430 = vmul.f32 %v1028, %v2429
    %v2431 = vmul.f32 %v2419, 3.8918573e-05
    %v2432 = vadd.f32 %v2431, 0.001143296
    %v2433 = vmul.f32 %v2419, %v2432
    %v2434 = vadd.f32 %v2433, 0.014752088
    %v2435 = vmul.f32 %v2419, %v2434
    %v2436 = vadd.f32 %v2435, 0.112945676
    %v2437 = vmul.f32 %v2419, %v2436
    %v2438 = vadd.f32 %v2437, 0.4994258
    %v2439 = vmul.f32 %v2419, %v2438
    %v2440 = vadd.f32 %v2439, 1.0
    %v2441 = vrcp.pop %v2440
    %v2442 = vmul.f32 %v2440, %v2441
    %v2443 = vsub.f32 1.0, %v2442
    %v2444 = vmul.f32 %v2441, %v2443
    %v2445 = vadd.f32 %v2441, %v2444
    %vm2446 = vweird.f32 %v2440
    %vm2447 = vweird.f32 %v2441
    %vm2448 = vmor %vm2446, %vm2447
    %v2449 = vsel %vm2448, %v2441, %v2445
    %v2450 = vand.u32 2147483647, %v2440
    %vm2451 = vcmp.eq.f32.partialorder %v2450, 8.507059e+37
    %v2452 = vand.u32 %v2440, 2147483648
    %v2453 = vor.u32 1.1754944e-38, %v2452
    %v2454 = vsel %vm2451, %v2453, %v2449
    %v2455 = vmul.f32 %v2430, %v2454
    %v2456 = vmin.f32 %v2455, 1.0
    %v2457 = vmax.f32 %v2456, -1.0
    %v2458 = vmul.f32 %v1029, %v1029
    %v2459 = vmin.f32 16.0, %v2458
    %v2460 = vmul.f32 %v2459, 2.1237322e-06
    %v2461 = vadd.f32 %v2460, 0.00028619796
    %v2462 = vmul.f32 %v2459, %v2461
    %v2463 = vadd.f32 %v2462, 0.0036580483
    %v2464 = vmul.f32 %v2459, %v2463
    %v2465 = vadd.f32 %v2464, 0.05243302
    %v2466 = vmul.f32 %v2459, %v2465
    %v2467 = vadd.f32 %v2466, 0.18741608
    %v2468 = vmul.f32 %v2459, %v2467
    %v2469 = vadd.f32 %v2468, 1.1283791
    %v2470 = vmul.f32 %v1029, %v2469
    %v2471 = vmul.f32 %v2459, 3.8918573e-05
    %v2472 = vadd.f32 %v2471, 0.001143296
    %v2473 = vmul.f32 %v2459, %v2472
    %v2474 = vadd.f32 %v2473, 0.014752088
    %v2475 = vmul.f32 %v2459, %v2474
    %v2476 = vadd.f32 %v2475, 0.112945676
    %v2477 = vmul.f32 %v2459, %v2476
    %v2478 = vadd.f32 %v2477, 0.4994258
    %v2479 = vmul.f32 %v2459, %v2478
    %v2480 = vadd.f32 %v2479, 1.0
    %v2481 = vrcp.pop %v2480
    %v2482 = vmul.f32 %v2480, %v2481
    %v2483 = vsub.f32 1.0, %v2482
    %v2484 = vmul.f32 %v2481, %v2483
    %v2485 = vadd.f32 %v2481, %v2484
    %vm2486 = vweird.f32 %v2480
    %vm2487 = vweird.f32 %v2481
    %vm2488 = vmor %vm2486, %vm2487
    %v2489 = vsel %vm2488, %v2481, %v2485
    %v2490 = vand.u32 2147483647, %v2480
    %vm2491 = vcmp.eq.f32.partialorder %v2490, 8.507059e+37
    %v2492 = vand.u32 %v2480, 2147483648
    %v2493 = vor.u32 1.1754944e-38, %v2492
    %v2494 = vsel %vm2491, %v2493, %v2489
    %v2495 = vmul.f32 %v2470, %v2494
    %v2496 = vmin.f32 %v2495, 1.0
    %v2497 = vmax.f32 %v2496, -1.0
    %v2498 = vmul.f32 %v1030, %v1030
    %v2499 = vmin.f32 16.0, %v2498
    %v2500 = vmul.f32 %v2499, 2.1237322e-06
    %v2501 = vadd.f32 %v2500, 0.00028619796
    %v2502 = vmul.f32 %v2499, %v2501
    %v2503 = vadd.f32 %v2502, 0.0036580483
    %v2504 = vmul.f32 %v2499, %v2503
    %v2505 = vadd.f32 %v2504, 0.05243302
    %v2506 = vmul.f32 %v2499, %v2505
    %v2507 = vadd.f32 %v2506, 0.18741608
    %v2508 = vmul.f32 %v2499, %v2507
    %v2509 = vadd.f32 %v2508, 1.1283791
    %v2510 = vmul.f32 %v1030, %v2509
    %v2511 = vmul.f32 %v2499, 3.8918573e-05
    %v2512 = vadd.f32 %v2511, 0.001143296
    %v2513 = vmul.f32 %v2499, %v2512
    %v2514 = vadd.f32 %v2513, 0.014752088
    %v2515 = vmul.f32 %v2499, %v2514
    %v2516 = vadd.f32 %v2515, 0.112945676
    %v2517 = vmul.f32 %v2499, %v2516
    %v2518 = vadd.f32 %v2517, 0.4994258
    %v2519 = vmul.f32 %v2499, %v2518
    %v2520 = vadd.f32 %v2519, 1.0
    %v2521 = vrcp.pop %v2520
    %v2522 = vmul.f32 %v2520, %v2521
    %v2523 = vsub.f32 1.0, %v2522
    %v2524 = vmul.f32 %v2521, %v2523
    %v2525 = vadd.f32 %v2521, %v2524
    %vm2526 = vweird.f32 %v2520
    %vm2527 = vweird.f32 %v2521
    %vm2528 = vmor %vm2526, %vm2527
    %v2529 = vsel %vm2528, %v2521, %v2525
    %v2530 = vand.u32 2147483647, %v2520
    %vm2531 = vcmp.eq.f32.partialorder %v2530, 8.507059e+37
    %v2532 = vand.u32 %v2520, 2147483648
    %v2533 = vor.u32 1.1754944e-38, %v2532
    %v2534 = vsel %vm2531, %v2533, %v2529
    %v2535 = vmul.f32 %v2510, %v2534
    %v2536 = vmin.f32 %v2535, 1.0
    %v2537 = vmax.f32 %v2536, -1.0
    %v2538 = vmul.f32 %v1031, %v1031
    %v2539 = vmin.f32 16.0, %v2538
    %v2540 = vmul.f32 %v2539, 2.1237322e-06
    %v2541 = vadd.f32 %v2540, 0.00028619796
    %v2542 = vmul.f32 %v2539, %v2541
    %v2543 = vadd.f32 %v2542, 0.0036580483
    %v2544 = vmul.f32 %v2539, %v2543
    %v2545 = vadd.f32 %v2544, 0.05243302
    %v2546 = vmul.f32 %v2539, %v2545
    %v2547 = vadd.f32 %v2546, 0.18741608
    %v2548 = vmul.f32 %v2539, %v2547
    %v2549 = vadd.f32 %v2548, 1.1283791
    %v2550 = vmul.f32 %v1031, %v2549
    %v2551 = vmul.f32 %v2539, 3.8918573e-05
    %v2552 = vadd.f32 %v2551, 0.001143296
    %v2553 = vmul.f32 %v2539, %v2552
    %v2554 = vadd.f32 %v2553, 0.014752088
    %v2555 = vmul.f32 %v2539, %v2554
    %v2556 = vadd.f32 %v2555, 0.112945676
    %v2557 = vmul.f32 %v2539, %v2556
    %v2558 = vadd.f32 %v2557, 0.4994258
    %v2559 = vmul.f32 %v2539, %v2558
    %v2560 = vadd.f32 %v2559, 1.0
    %v2561 = vrcp.pop %v2560
    %v2562 = vmul.f32 %v2560, %v2561
    %v2563 = vsub.f32 1.0, %v2562
    %v2564 = vmul.f32 %v2561, %v2563
    %v2565 = vadd.f32 %v2561, %v2564
    %vm2566 = vweird.f32 %v2560
    %vm2567 = vweird.f32 %v2561
    %vm2568 = vmor %vm2566, %vm2567
    %v2569 = vsel %vm2568, %v2561, %v2565
    %v2570 = vand.u32 2147483647, %v2560
    %vm2571 = vcmp.eq.f32.partialorder %v2570, 8.507059e+37
    %v2572 = vand.u32 %v2560, 2147483648
    %v2573 = vor.u32 1.1754944e-38, %v2572
    %v2574 = vsel %vm2571, %v2573, %v2569
    %v2575 = vmul.f32 %v2550, %v2574
    %v2576 = vmin.f32 %v2575, 1.0
    %v2577 = vmax.f32 %v2576, -1.0
    %v2578 = vmul.f32 %v1032, %v1032
    %v2579 = vmin.f32 16.0, %v2578
    %v2580 = vmul.f32 %v2579, 2.1237322e-06
    %v2581 = vadd.f32 %v2580, 0.00028619796
    %v2582 = vmul.f32 %v2579, %v2581
    %v2583 = vadd.f32 %v2582, 0.0036580483
    %v2584 = vmul.f32 %v2579, %v2583
    %v2585 = vadd.f32 %v2584, 0.05243302
    %v2586 = vmul.f32 %v2579, %v2585
    %v2587 = vadd.f32 %v2586, 0.18741608
    %v2588 = vmul.f32 %v2579, %v2587
    %v2589 = vadd.f32 %v2588, 1.1283791
    %v2590 = vmul.f32 %v1032, %v2589
    %v2591 = vmul.f32 %v2579, 3.8918573e-05
    %v2592 = vadd.f32 %v2591, 0.001143296
    %v2593 = vmul.f32 %v2579, %v2592
    %v2594 = vadd.f32 %v2593, 0.014752088
    %v2595 = vmul.f32 %v2579, %v2594
    %v2596 = vadd.f32 %v2595, 0.112945676
    %v2597 = vmul.f32 %v2579, %v2596
    %v2598 = vadd.f32 %v2597, 0.4994258
    %v2599 = vmul.f32 %v2579, %v2598
    %v2600 = vadd.f32 %v2599, 1.0
    %v2601 = vrcp.pop %v2600
    %v2602 = vmul.f32 %v2600, %v2601
    %v2603 = vsub.f32 1.0, %v2602
    %v2604 = vmul.f32 %v2601, %v2603
    %v2605 = vadd.f32 %v2601, %v2604
    %vm2606 = vweird.f32 %v2600
    %vm2607 = vweird.f32 %v2601
    %vm2608 = vmor %vm2606, %vm2607
    %v2609 = vsel %vm2608, %v2601, %v2605
    %v2610 = vand.u32 2147483647, %v2600
    %vm2611 = vcmp.eq.f32.partialorder %v2610, 8.507059e+37
    %v2612 = vand.u32 %v2600, 2147483648
    %v2613 = vor.u32 1.1754944e-38, %v2612
    %v2614 = vsel %vm2611, %v2613, %v2609
    %v2615 = vmul.f32 %v2590, %v2614
    %v2616 = vmin.f32 %v2615, 1.0
    %v2617 = vmax.f32 %v2616, -1.0
    %v2618 = vmul.f32 %v1033, %v1033
    %v2619 = vmin.f32 16.0, %v2618
    %v2620 = vmul.f32 %v2619, 2.1237322e-06
    %v2621 = vadd.f32 %v2620, 0.00028619796
    %v2622 = vmul.f32 %v2619, %v2621
    %v2623 = vadd.f32 %v2622, 0.0036580483
    %v2624 = vmul.f32 %v2619, %v2623
    %v2625 = vadd.f32 %v2624, 0.05243302
    %v2626 = vmul.f32 %v2619, %v2625
    %v2627 = vadd.f32 %v2626, 0.18741608
    %v2628 = vmul.f32 %v2619, %v2627
    %v2629 = vadd.f32 %v2628, 1.1283791
    %v2630 = vmul.f32 %v1033, %v2629
    %v2631 = vmul.f32 %v2619, 3.8918573e-05
    %v2632 = vadd.f32 %v2631, 0.001143296
    %v2633 = vmul.f32 %v2619, %v2632
    %v2634 = vadd.f32 %v2633, 0.014752088
    %v2635 = vmul.f32 %v2619, %v2634
    %v2636 = vadd.f32 %v2635, 0.112945676
    %v2637 = vmul.f32 %v2619, %v2636
    %v2638 = vadd.f32 %v2637, 0.4994258
    %v2639 = vmul.f32 %v2619, %v2638
    %v2640 = vadd.f32 %v2639, 1.0
    %v2641 = vrcp.pop %v2640
    %v2642 = vmul.f32 %v2640, %v2641
    %v2643 = vsub.f32 1.0, %v2642
    %v2644 = vmul.f32 %v2641, %v2643
    %v2645 = vadd.f32 %v2641, %v2644
    %vm2646 = vweird.f32 %v2640
    %vm2647 = vweird.f32 %v2641
    %vm2648 = vmor %vm2646, %vm2647
    %v2649 = vsel %vm2648, %v2641, %v2645
    %v2650 = vand.u32 2147483647, %v2640
    %vm2651 = vcmp.eq.f32.partialorder %v2650, 8.507059e+37
    %v2652 = vand.u32 %v2640, 2147483648
    %v2653 = vor.u32 1.1754944e-38, %v2652
    %v2654 = vsel %vm2651, %v2653, %v2649
    %v2655 = vmul.f32 %v2630, %v2654
    %v2656 = vmin.f32 %v2655, 1.0
    %v2657 = vmax.f32 %v2656, -1.0
    %v2658 = vmul.f32 %v1034, %v1034
    %v2659 = vmin.f32 16.0, %v2658
    %v2660 = vmul.f32 %v2659, 2.1237322e-06
    %v2661 = vadd.f32 %v2660, 0.00028619796
    %v2662 = vmul.f32 %v2659, %v2661
    %v2663 = vadd.f32 %v2662, 0.0036580483
    %v2664 = vmul.f32 %v2659, %v2663
    %v2665 = vadd.f32 %v2664, 0.05243302
    %v2666 = vmul.f32 %v2659, %v2665
    %v2667 = vadd.f32 %v2666, 0.18741608
    %v2668 = vmul.f32 %v2659, %v2667
    %v2669 = vadd.f32 %v2668, 1.1283791
    %v2670 = vmul.f32 %v1034, %v2669
    %v2671 = vmul.f32 %v2659, 3.8918573e-05
    %v2672 = vadd.f32 %v2671, 0.001143296
    %v2673 = vmul.f32 %v2659, %v2672
    %v2674 = vadd.f32 %v2673, 0.014752088
    %v2675 = vmul.f32 %v2659, %v2674
    %v2676 = vadd.f32 %v2675, 0.112945676
    %v2677 = vmul.f32 %v2659, %v2676
    %v2678 = vadd.f32 %v2677, 0.4994258
    %v2679 = vmul.f32 %v2659, %v2678
    %v2680 = vadd.f32 %v2679, 1.0
    %v2681 = vrcp.pop %v2680
    %v2682 = vmul.f32 %v2680, %v2681
    %v2683 = vsub.f32 1.0, %v2682
    %v2684 = vmul.f32 %v2681, %v2683
    %v2685 = vadd.f32 %v2681, %v2684
    %vm2686 = vweird.f32 %v2680
    %vm2687 = vweird.f32 %v2681
    %vm2688 = vmor %vm2686, %vm2687
    %v2689 = vsel %vm2688, %v2681, %v2685
    %v2690 = vand.u32 2147483647, %v2680
    %vm2691 = vcmp.eq.f32.partialorder %v2690, 8.507059e+37
    %v2692 = vand.u32 %v2680, 2147483648
    %v2693 = vor.u32 1.1754944e-38, %v2692
    %v2694 = vsel %vm2691, %v2693, %v2689
    %v2695 = vmul.f32 %v2670, %v2694
    %v2696 = vmin.f32 %v2695, 1.0
    %v2697 = vmax.f32 %v2696, -1.0
    %v2698 = vmul.f32 %v1035, %v1035
    %v2699 = vmin.f32 16.0, %v2698
    %v2700 = vmul.f32 %v2699, 2.1237322e-06
    %v2701 = vadd.f32 %v2700, 0.00028619796
    %v2702 = vmul.f32 %v2699, %v2701
    %v2703 = vadd.f32 %v2702, 0.0036580483
    %v2704 = vmul.f32 %v2699, %v2703
    %v2705 = vadd.f32 %v2704, 0.05243302
    %v2706 = vmul.f32 %v2699, %v2705
    %v2707 = vadd.f32 %v2706, 0.18741608
    %v2708 = vmul.f32 %v2699, %v2707
    %v2709 = vadd.f32 %v2708, 1.1283791
    %v2710 = vmul.f32 %v1035, %v2709
    %v2711 = vmul.f32 %v2699, 3.8918573e-05
    %v2712 = vadd.f32 %v2711, 0.001143296
    %v2713 = vmul.f32 %v2699, %v2712
    %v2714 = vadd.f32 %v2713, 0.014752088
    %v2715 = vmul.f32 %v2699, %v2714
    %v2716 = vadd.f32 %v2715, 0.112945676
    %v2717 = vmul.f32 %v2699, %v2716
    %v2718 = vadd.f32 %v2717, 0.4994258
    %v2719 = vmul.f32 %v2699, %v2718
    %v2720 = vadd.f32 %v2719, 1.0
    %v2721 = vrcp.pop %v2720
    %v2722 = vmul.f32 %v2720, %v2721
    %v2723 = vsub.f32 1.0, %v2722
    %v2724 = vmul.f32 %v2721, %v2723
    %v2725 = vadd.f32 %v2721, %v2724
    %vm2726 = vweird.f32 %v2720
    %vm2727 = vweird.f32 %v2721
    %vm2728 = vmor %vm2726, %vm2727
    %v2729 = vsel %vm2728, %v2721, %v2725
    %v2730 = vand.u32 2147483647, %v2720
    %vm2731 = vcmp.eq.f32.partialorder %v2730, 8.507059e+37
    %v2732 = vand.u32 %v2720, 2147483648
    %v2733 = vor.u32 1.1754944e-38, %v2732
    %v2734 = vsel %vm2731, %v2733, %v2729
    %v2735 = vmul.f32 %v2710, %v2734
    %v2736 = vmin.f32 %v2735, 1.0
    %v2737 = vmax.f32 %v2736, -1.0
    %v2738 = vmul.f32 %v1036, %v1036
    %v2739 = vmin.f32 16.0, %v2738
    %v2740 = vmul.f32 %v2739, 2.1237322e-06
    %v2741 = vadd.f32 %v2740, 0.00028619796
    %v2742 = vmul.f32 %v2739, %v2741
    %v2743 = vadd.f32 %v2742, 0.0036580483
    %v2744 = vmul.f32 %v2739, %v2743
    %v2745 = vadd.f32 %v2744, 0.05243302
    %v2746 = vmul.f32 %v2739, %v2745
    %v2747 = vadd.f32 %v2746, 0.18741608
    %v2748 = vmul.f32 %v2739, %v2747
    %v2749 = vadd.f32 %v2748, 1.1283791
    %v2750 = vmul.f32 %v1036, %v2749
    %v2751 = vmul.f32 %v2739, 3.8918573e-05
    %v2752 = vadd.f32 %v2751, 0.001143296
    %v2753 = vmul.f32 %v2739, %v2752
    %v2754 = vadd.f32 %v2753, 0.014752088
    %v2755 = vmul.f32 %v2739, %v2754
    %v2756 = vadd.f32 %v2755, 0.112945676
    %v2757 = vmul.f32 %v2739, %v2756
    %v2758 = vadd.f32 %v2757, 0.4994258
    %v2759 = vmul.f32 %v2739, %v2758
    %v2760 = vadd.f32 %v2759, 1.0
    %v2761 = vrcp.pop %v2760
    %v2762 = vmul.f32 %v2760, %v2761
    %v2763 = vsub.f32 1.0, %v2762
    %v2764 = vmul.f32 %v2761, %v2763
    %v2765 = vadd.f32 %v2761, %v2764
    %vm2766 = vweird.f32 %v2760
    %vm2767 = vweird.f32 %v2761
    %vm2768 = vmor %vm2766, %vm2767
    %v2769 = vsel %vm2768, %v2761, %v2765
    %v2770 = vand.u32 2147483647, %v2760
    %vm2771 = vcmp.eq.f32.partialorder %v2770, 8.507059e+37
    %v2772 = vand.u32 %v2760, 2147483648
    %v2773 = vor.u32 1.1754944e-38, %v2772
    %v2774 = vsel %vm2771, %v2773, %v2769
    %v2775 = vmul.f32 %v2750, %v2774
    %v2776 = vmin.f32 %v2775, 1.0
    %v2777 = vmax.f32 %v2776, -1.0
    %v2778 = vmul.f32 %v1037, %v1037
    %v2779 = vmin.f32 16.0, %v2778
    %v2780 = vmul.f32 %v2779, 2.1237322e-06
    %v2781 = vadd.f32 %v2780, 0.00028619796
    %v2782 = vmul.f32 %v2779, %v2781
    %v2783 = vadd.f32 %v2782, 0.0036580483
    %v2784 = vmul.f32 %v2779, %v2783
    %v2785 = vadd.f32 %v2784, 0.05243302
    %v2786 = vmul.f32 %v2779, %v2785
    %v2787 = vadd.f32 %v2786, 0.18741608
    %v2788 = vmul.f32 %v2779, %v2787
    %v2789 = vadd.f32 %v2788, 1.1283791
    %v2790 = vmul.f32 %v1037, %v2789
    %v2791 = vmul.f32 %v2779, 3.8918573e-05
    %v2792 = vadd.f32 %v2791, 0.001143296
    %v2793 = vmul.f32 %v2779, %v2792
    %v2794 = vadd.f32 %v2793, 0.014752088
    %v2795 = vmul.f32 %v2779, %v2794
    %v2796 = vadd.f32 %v2795, 0.112945676
    %v2797 = vmul.f32 %v2779, %v2796
    %v2798 = vadd.f32 %v2797, 0.4994258
    %v2799 = vmul.f32 %v2779, %v2798
    %v2800 = vadd.f32 %v2799, 1.0
    %v2801 = vrcp.pop %v2800
    %v2802 = vmul.f32 %v2800, %v2801
    %v2803 = vsub.f32 1.0, %v2802
    %v2804 = vmul.f32 %v2801, %v2803
    %v2805 = vadd.f32 %v2801, %v2804
    %vm2806 = vweird.f32 %v2800
    %vm2807 = vweird.f32 %v2801
    %vm2808 = vmor %vm2806, %vm2807
    %v2809 = vsel %vm2808, %v2801, %v2805
    %v2810 = vand.u32 2147483647, %v2800
    %vm2811 = vcmp.eq.f32.partialorder %v2810, 8.507059e+37
    %v2812 = vand.u32 %v2800, 2147483648
    %v2813 = vor.u32 1.1754944e-38, %v2812
    %v2814 = vsel %vm2811, %v2813, %v2809
    %v2815 = vmul.f32 %v2790, %v2814
    %v2816 = vmin.f32 %v2815, 1.0
    %v2817 = vmax.f32 %v2816, -1.0
    %v2818 = vmul.f32 %v1038, %v1038
    %v2819 = vmin.f32 16.0, %v2818
    %v2820 = vmul.f32 %v2819, 2.1237322e-06
    %v2821 = vadd.f32 %v2820, 0.00028619796
    %v2822 = vmul.f32 %v2819, %v2821
    %v2823 = vadd.f32 %v2822, 0.0036580483
    %v2824 = vmul.f32 %v2819, %v2823
    %v2825 = vadd.f32 %v2824, 0.05243302
    %v2826 = vmul.f32 %v2819, %v2825
    %v2827 = vadd.f32 %v2826, 0.18741608
    %v2828 = vmul.f32 %v2819, %v2827
    %v2829 = vadd.f32 %v2828, 1.1283791
    %v2830 = vmul.f32 %v1038, %v2829
    %v2831 = vmul.f32 %v2819, 3.8918573e-05
    %v2832 = vadd.f32 %v2831, 0.001143296
    %v2833 = vmul.f32 %v2819, %v2832
    %v2834 = vadd.f32 %v2833, 0.014752088
    %v2835 = vmul.f32 %v2819, %v2834
    %v2836 = vadd.f32 %v2835, 0.112945676
    %v2837 = vmul.f32 %v2819, %v2836
    %v2838 = vadd.f32 %v2837, 0.4994258
    %v2839 = vmul.f32 %v2819, %v2838
    %v2840 = vadd.f32 %v2839, 1.0
    %v2841 = vrcp.pop %v2840
    %v2842 = vmul.f32 %v2840, %v2841
    %v2843 = vsub.f32 1.0, %v2842
    %v2844 = vmul.f32 %v2841, %v2843
    %v2845 = vadd.f32 %v2841, %v2844
    %vm2846 = vweird.f32 %v2840
    %vm2847 = vweird.f32 %v2841
    %vm2848 = vmor %vm2846, %vm2847
    %v2849 = vsel %vm2848, %v2841, %v2845
    %v2850 = vand.u32 2147483647, %v2840
    %vm2851 = vcmp.eq.f32.partialorder %v2850, 8.507059e+37
    %v2852 = vand.u32 %v2840, 2147483648
    %v2853 = vor.u32 1.1754944e-38, %v2852
    %v2854 = vsel %vm2851, %v2853, %v2849
    %v2855 = vmul.f32 %v2830, %v2854
    %v2856 = vmin.f32 %v2855, 1.0
    %v2857 = vmax.f32 %v2856, -1.0
    %v2858 = vmul.f32 %v1039, %v1039
    %v2859 = vmin.f32 16.0, %v2858
    %v2860 = vmul.f32 %v2859, 2.1237322e-06
    %v2861 = vadd.f32 %v2860, 0.00028619796
    %v2862 = vmul.f32 %v2859, %v2861
    %v2863 = vadd.f32 %v2862, 0.0036580483
    %v2864 = vmul.f32 %v2859, %v2863
    %v2865 = vadd.f32 %v2864, 0.05243302
    %v2866 = vmul.f32 %v2859, %v2865
    %v2867 = vadd.f32 %v2866, 0.18741608
    %v2868 = vmul.f32 %v2859, %v2867
    %v2869 = vadd.f32 %v2868, 1.1283791
    %v2870 = vmul.f32 %v1039, %v2869
    %v2871 = vmul.f32 %v2859, 3.8918573e-05
    %v2872 = vadd.f32 %v2871, 0.001143296
    %v2873 = vmul.f32 %v2859, %v2872
    %v2874 = vadd.f32 %v2873, 0.014752088
    %v2875 = vmul.f32 %v2859, %v2874
    %v2876 = vadd.f32 %v2875, 0.112945676
    %v2877 = vmul.f32 %v2859, %v2876
    %v2878 = vadd.f32 %v2877, 0.4994258
    %v2879 = vmul.f32 %v2859, %v2878
    %v2880 = vadd.f32 %v2879, 1.0
    %v2881 = vrcp.pop %v2880
    %v2882 = vmul.f32 %v2880, %v2881
    %v2883 = vsub.f32 1.0, %v2882
    %v2884 = vmul.f32 %v2881, %v2883
    %v2885 = vadd.f32 %v2881, %v2884
    %vm2886 = vweird.f32 %v2880
    %vm2887 = vweird.f32 %v2881
    %vm2888 = vmor %vm2886, %vm2887
    %v2889 = vsel %vm2888, %v2881, %v2885
    %v2890 = vand.u32 2147483647, %v2880
    %vm2891 = vcmp.eq.f32.partialorder %v2890, 8.507059e+37
    %v2892 = vand.u32 %v2880, 2147483648
    %v2893 = vor.u32 1.1754944e-38, %v2892
    %v2894 = vsel %vm2891, %v2893, %v2889
    %v2895 = vmul.f32 %v2870, %v2894
    %v2896 = vmin.f32 %v2895, 1.0
    %v2897 = vmax.f32 %v2896, -1.0
    %v2898 = vmul.f32 %v1040, %v1040
    %v2899 = vmin.f32 16.0, %v2898
    %v2900 = vmul.f32 %v2899, 2.1237322e-06
    %v2901 = vadd.f32 %v2900, 0.00028619796
    %v2902 = vmul.f32 %v2899, %v2901
    %v2903 = vadd.f32 %v2902, 0.0036580483
    %v2904 = vmul.f32 %v2899, %v2903
    %v2905 = vadd.f32 %v2904, 0.05243302
    %v2906 = vmul.f32 %v2899, %v2905
    %v2907 = vadd.f32 %v2906, 0.18741608
    %v2908 = vmul.f32 %v2899, %v2907
    %v2909 = vadd.f32 %v2908, 1.1283791
    %v2910 = vmul.f32 %v1040, %v2909
    %v2911 = vmul.f32 %v2899, 3.8918573e-05
    %v2912 = vadd.f32 %v2911, 0.001143296
    %v2913 = vmul.f32 %v2899, %v2912
    %v2914 = vadd.f32 %v2913, 0.014752088
    %v2915 = vmul.f32 %v2899, %v2914
    %v2916 = vadd.f32 %v2915, 0.112945676
    %v2917 = vmul.f32 %v2899, %v2916
    %v2918 = vadd.f32 %v2917, 0.4994258
    %v2919 = vmul.f32 %v2899, %v2918
    %v2920 = vadd.f32 %v2919, 1.0
    %v2921 = vrcp.pop %v2920
    %v2922 = vmul.f32 %v2920, %v2921
    %v2923 = vsub.f32 1.0, %v2922
    %v2924 = vmul.f32 %v2921, %v2923
    %v2925 = vadd.f32 %v2921, %v2924
    %vm2926 = vweird.f32 %v2920
    %vm2927 = vweird.f32 %v2921
    %vm2928 = vmor %vm2926, %vm2927
    %v2929 = vsel %vm2928, %v2921, %v2925
    %v2930 = vand.u32 2147483647, %v2920
    %vm2931 = vcmp.eq.f32.partialorder %v2930, 8.507059e+37
    %v2932 = vand.u32 %v2920, 2147483648
    %v2933 = vor.u32 1.1754944e-38, %v2932
    %v2934 = vsel %vm2931, %v2933, %v2929
    %v2935 = vmul.f32 %v2910, %v2934
    %v2936 = vmin.f32 %v2935, 1.0
    %v2937 = vmax.f32 %v2936, -1.0
    %v2938 = vmul.f32 %v1041, %v1041
    %v2939 = vmin.f32 16.0, %v2938
    %v2940 = vmul.f32 %v2939, 2.1237322e-06
    %v2941 = vadd.f32 %v2940, 0.00028619796
    %v2942 = vmul.f32 %v2939, %v2941
    %v2943 = vadd.f32 %v2942, 0.0036580483
    %v2944 = vmul.f32 %v2939, %v2943
    %v2945 = vadd.f32 %v2944, 0.05243302
    %v2946 = vmul.f32 %v2939, %v2945
    %v2947 = vadd.f32 %v2946, 0.18741608
    %v2948 = vmul.f32 %v2939, %v2947
    %v2949 = vadd.f32 %v2948, 1.1283791
    %v2950 = vmul.f32 %v1041, %v2949
    %v2951 = vmul.f32 %v2939, 3.8918573e-05
    %v2952 = vadd.f32 %v2951, 0.001143296
    %v2953 = vmul.f32 %v2939, %v2952
    %v2954 = vadd.f32 %v2953, 0.014752088
    %v2955 = vmul.f32 %v2939, %v2954
    %v2956 = vadd.f32 %v2955, 0.112945676
    %v2957 = vmul.f32 %v2939, %v2956
    %v2958 = vadd.f32 %v2957, 0.4994258
    %v2959 = vmul.f32 %v2939, %v2958
    %v2960 = vadd.f32 %v2959, 1.0
    %v2961 = vrcp.pop %v2960
    %v2962 = vmul.f32 %v2960, %v2961
    %v2963 = vsub.f32 1.0, %v2962
    %v2964 = vmul.f32 %v2961, %v2963
    %v2965 = vadd.f32 %v2961, %v2964
    %vm2966 = vweird.f32 %v2960
    %vm2967 = vweird.f32 %v2961
    %vm2968 = vmor %vm2966, %vm2967
    %v2969 = vsel %vm2968, %v2961, %v2965
    %v2970 = vand.u32 2147483647, %v2960
    %vm2971 = vcmp.eq.f32.partialorder %v2970, 8.507059e+37
    %v2972 = vand.u32 %v2960, 2147483648
    %v2973 = vor.u32 1.1754944e-38, %v2972
    %v2974 = vsel %vm2971, %v2973, %v2969
    %v2975 = vmul.f32 %v2950, %v2974
    %v2976 = vmin.f32 %v2975, 1.0
    %v2977 = vmax.f32 %v2976, -1.0
    %v2978 = vmul.f32 %v1042, %v1042
    %v2979 = vmin.f32 16.0, %v2978
    %v2980 = vmul.f32 %v2979, 2.1237322e-06
    %v2981 = vadd.f32 %v2980, 0.00028619796
    %v2982 = vmul.f32 %v2979, %v2981
    %v2983 = vadd.f32 %v2982, 0.0036580483
    %v2984 = vmul.f32 %v2979, %v2983
    %v2985 = vadd.f32 %v2984, 0.05243302
    %v2986 = vmul.f32 %v2979, %v2985
    %v2987 = vadd.f32 %v2986, 0.18741608
    %v2988 = vmul.f32 %v2979, %v2987
    %v2989 = vadd.f32 %v2988, 1.1283791
    %v2990 = vmul.f32 %v1042, %v2989
    %v2991 = vmul.f32 %v2979, 3.8918573e-05
    %v2992 = vadd.f32 %v2991, 0.001143296
    %v2993 = vmul.f32 %v2979, %v2992
    %v2994 = vadd.f32 %v2993, 0.014752088
    %v2995 = vmul.f32 %v2979, %v2994
    %v2996 = vadd.f32 %v2995, 0.112945676
    %v2997 = vmul.f32 %v2979, %v2996
    %v2998 = vadd.f32 %v2997, 0.4994258
    %v2999 = vmul.f32 %v2979, %v2998
    %v3000 = vadd.f32 %v2999, 1.0
    %v3001 = vrcp.pop %v3000
    %v3002 = vmul.f32 %v3000, %v3001
    %v3003 = vsub.f32 1.0, %v3002
    %v3004 = vmul.f32 %v3001, %v3003
    %v3005 = vadd.f32 %v3001, %v3004
    %vm3006 = vweird.f32 %v3000
    %vm3007 = vweird.f32 %v3001
    %vm3008 = vmor %vm3006, %vm3007
    %v3009 = vsel %vm3008, %v3001, %v3005
    %v3010 = vand.u32 2147483647, %v3000
    %vm3011 = vcmp.eq.f32.partialorder %v3010, 8.507059e+37
    %v3012 = vand.u32 %v3000, 2147483648
    %v3013 = vor.u32 1.1754944e-38, %v3012
    %v3014 = vsel %vm3011, %v3013, %v3009
    %v3015 = vmul.f32 %v2990, %v3014
    %v3016 = vmin.f32 %v3015, 1.0
    %v3017 = vmax.f32 %v3016, -1.0
    %v3018 = vmul.f32 %v1043, %v1043
    %v3019 = vmin.f32 16.0, %v3018
    %v3020 = vmul.f32 %v3019, 2.1237322e-06
    %v3021 = vadd.f32 %v3020, 0.00028619796
    %v3022 = vmul.f32 %v3019, %v3021
    %v3023 = vadd.f32 %v3022, 0.0036580483
    %v3024 = vmul.f32 %v3019, %v3023
    %v3025 = vadd.f32 %v3024, 0.05243302
    %v3026 = vmul.f32 %v3019, %v3025
    %v3027 = vadd.f32 %v3026, 0.18741608
    %v3028 = vmul.f32 %v3019, %v3027
    %v3029 = vadd.f32 %v3028, 1.1283791
    %v3030 = vmul.f32 %v1043, %v3029
    %v3031 = vmul.f32 %v3019, 3.8918573e-05
    %v3032 = vadd.f32 %v3031, 0.001143296
    %v3033 = vmul.f32 %v3019, %v3032
    %v3034 = vadd.f32 %v3033, 0.014752088
    %v3035 = vmul.f32 %v3019, %v3034
    %v3036 = vadd.f32 %v3035, 0.112945676
    %v3037 = vmul.f32 %v3019, %v3036
    %v3038 = vadd.f32 %v3037, 0.4994258
    %v3039 = vmul.f32 %v3019, %v3038
    %v3040 = vadd.f32 %v3039, 1.0
    %v3041 = vrcp.pop %v3040
    %v3042 = vmul.f32 %v3040, %v3041
    %v3043 = vsub.f32 1.0, %v3042
    %v3044 = vmul.f32 %v3041, %v3043
    %v3045 = vadd.f32 %v3041, %v3044
    %vm3046 = vweird.f32 %v3040
    %vm3047 = vweird.f32 %v3041
    %vm3048 = vmor %vm3046, %vm3047
    %v3049 = vsel %vm3048, %v3041, %v3045
    %v3050 = vand.u32 2147483647, %v3040
    %vm3051 = vcmp.eq.f32.partialorder %v3050, 8.507059e+37
    %v3052 = vand.u32 %v3040, 2147483648
    %v3053 = vor.u32 1.1754944e-38, %v3052
    %v3054 = vsel %vm3051, %v3053, %v3049
    %v3055 = vmul.f32 %v3030, %v3054
    %v3056 = vmin.f32 %v3055, 1.0
    %v3057 = vmax.f32 %v3056, -1.0
    %v3058 = vmul.f32 %v1044, %v1044
    %v3059 = vmin.f32 16.0, %v3058
    %v3060 = vmul.f32 %v3059, 2.1237322e-06
    %v3061 = vadd.f32 %v3060, 0.00028619796
    %v3062 = vmul.f32 %v3059, %v3061
    %v3063 = vadd.f32 %v3062, 0.0036580483
    %v3064 = vmul.f32 %v3059, %v3063
    %v3065 = vadd.f32 %v3064, 0.05243302
    %v3066 = vmul.f32 %v3059, %v3065
    %v3067 = vadd.f32 %v3066, 0.18741608
    %v3068 = vmul.f32 %v3059, %v3067
    %v3069 = vadd.f32 %v3068, 1.1283791
    %v3070 = vmul.f32 %v1044, %v3069
    %v3071 = vmul.f32 %v3059, 3.8918573e-05
    %v3072 = vadd.f32 %v3071, 0.001143296
    %v3073 = vmul.f32 %v3059, %v3072
    %v3074 = vadd.f32 %v3073, 0.014752088
    %v3075 = vmul.f32 %v3059, %v3074
    %v3076 = vadd.f32 %v3075, 0.112945676
    %v3077 = vmul.f32 %v3059, %v3076
    %v3078 = vadd.f32 %v3077, 0.4994258
    %v3079 = vmul.f32 %v3059, %v3078
    %v3080 = vadd.f32 %v3079, 1.0
    %v3081 = vrcp.pop %v3080
    %v3082 = vmul.f32 %v3080, %v3081
    %v3083 = vsub.f32 1.0, %v3082
    %v3084 = vmul.f32 %v3081, %v3083
    %v3085 = vadd.f32 %v3081, %v3084
    %vm3086 = vweird.f32 %v3080
    %vm3087 = vweird.f32 %v3081
    %vm3088 = vmor %vm3086, %vm3087
    %v3089 = vsel %vm3088, %v3081, %v3085
    %v3090 = vand.u32 2147483647, %v3080
    %vm3091 = vcmp.eq.f32.partialorder %v3090, 8.507059e+37
    %v3092 = vand.u32 %v3080, 2147483648
    %v3093 = vor.u32 1.1754944e-38, %v3092
    %v3094 = vsel %vm3091, %v3093, %v3089
    %v3095 = vmul.f32 %v3070, %v3094
    %v3096 = vmin.f32 %v3095, 1.0
    %v3097 = vmax.f32 %v3096, -1.0
    %v3098 = vmul.f32 %v1045, %v1045
    %v3099 = vmin.f32 16.0, %v3098
    %v3100 = vmul.f32 %v3099, 2.1237322e-06
    %v3101 = vadd.f32 %v3100, 0.00028619796
    %v3102 = vmul.f32 %v3099, %v3101
    %v3103 = vadd.f32 %v3102, 0.0036580483
    %v3104 = vmul.f32 %v3099, %v3103
    %v3105 = vadd.f32 %v3104, 0.05243302
    %v3106 = vmul.f32 %v3099, %v3105
    %v3107 = vadd.f32 %v3106, 0.18741608
    %v3108 = vmul.f32 %v3099, %v3107
    %v3109 = vadd.f32 %v3108, 1.1283791
    %v3110 = vmul.f32 %v1045, %v3109
    %v3111 = vmul.f32 %v3099, 3.8918573e-05
    %v3112 = vadd.f32 %v3111, 0.001143296
    %v3113 = vmul.f32 %v3099, %v3112
    %v3114 = vadd.f32 %v3113, 0.014752088
    %v3115 = vmul.f32 %v3099, %v3114
    %v3116 = vadd.f32 %v3115, 0.112945676
    %v3117 = vmul.f32 %v3099, %v3116
    %v3118 = vadd.f32 %v3117, 0.4994258
    %v3119 = vmul.f32 %v3099, %v3118
    %v3120 = vadd.f32 %v3119, 1.0
    %v3121 = vrcp.pop %v3120
    %v3122 = vmul.f32 %v3120, %v3121
    %v3123 = vsub.f32 1.0, %v3122
    %v3124 = vmul.f32 %v3121, %v3123
    %v3125 = vadd.f32 %v3121, %v3124
    %vm3126 = vweird.f32 %v3120
    %vm3127 = vweird.f32 %v3121
    %vm3128 = vmor %vm3126, %vm3127
    %v3129 = vsel %vm3128, %v3121, %v3125
    %v3130 = vand.u32 2147483647, %v3120
    %vm3131 = vcmp.eq.f32.partialorder %v3130, 8.507059e+37
    %v3132 = vand.u32 %v3120, 2147483648
    %v3133 = vor.u32 1.1754944e-38, %v3132
    %v3134 = vsel %vm3131, %v3133, %v3129
    %v3135 = vmul.f32 %v3110, %v3134
    %v3136 = vmin.f32 %v3135, 1.0
    %v3137 = vmax.f32 %v3136, -1.0
    %v3138 = vmul.f32 %v1046, %v1046
    %v3139 = vmin.f32 16.0, %v3138
    %v3140 = vmul.f32 %v3139, 2.1237322e-06
    %v3141 = vadd.f32 %v3140, 0.00028619796
    %v3142 = vmul.f32 %v3139, %v3141
    %v3143 = vadd.f32 %v3142, 0.0036580483
    %v3144 = vmul.f32 %v3139, %v3143
    %v3145 = vadd.f32 %v3144, 0.05243302
    %v3146 = vmul.f32 %v3139, %v3145
    %v3147 = vadd.f32 %v3146, 0.18741608
    %v3148 = vmul.f32 %v3139, %v3147
    %v3149 = vadd.f32 %v3148, 1.1283791
    %v3150 = vmul.f32 %v1046, %v3149
    %v3151 = vmul.f32 %v3139, 3.8918573e-05
    %v3152 = vadd.f32 %v3151, 0.001143296
    %v3153 = vmul.f32 %v3139, %v3152
    %v3154 = vadd.f32 %v3153, 0.014752088
    %v3155 = vmul.f32 %v3139, %v3154
    %v3156 = vadd.f32 %v3155, 0.112945676
    %v3157 = vmul.f32 %v3139, %v3156
    %v3158 = vadd.f32 %v3157, 0.4994258
    %v3159 = vmul.f32 %v3139, %v3158
    %v3160 = vadd.f32 %v3159, 1.0
    %v3161 = vrcp.pop %v3160
    %v3162 = vmul.f32 %v3160, %v3161
    %v3163 = vsub.f32 1.0, %v3162
    %v3164 = vmul.f32 %v3161, %v3163
    %v3165 = vadd.f32 %v3161, %v3164
    %vm3166 = vweird.f32 %v3160
    %vm3167 = vweird.f32 %v3161
    %vm3168 = vmor %vm3166, %vm3167
    %v3169 = vsel %vm3168, %v3161, %v3165
    %v3170 = vand.u32 2147483647, %v3160
    %vm3171 = vcmp.eq.f32.partialorder %v3170, 8.507059e+37
    %v3172 = vand.u32 %v3160, 2147483648
    %v3173 = vor.u32 1.1754944e-38, %v3172
    %v3174 = vsel %vm3171, %v3173, %v3169
    %v3175 = vmul.f32 %v3150, %v3174
    %v3176 = vmin.f32 %v3175, 1.0
    %v3177 = vmax.f32 %v3176, -1.0
    %v3178 = vmul.f32 %v1047, %v1047
    %v3179 = vmin.f32 16.0, %v3178
    %v3180 = vmul.f32 %v3179, 2.1237322e-06
    %v3181 = vadd.f32 %v3180, 0.00028619796
    %v3182 = vmul.f32 %v3179, %v3181
    %v3183 = vadd.f32 %v3182, 0.0036580483
    %v3184 = vmul.f32 %v3179, %v3183
    %v3185 = vadd.f32 %v3184, 0.05243302
    %v3186 = vmul.f32 %v3179, %v3185
    %v3187 = vadd.f32 %v3186, 0.18741608
    %v3188 = vmul.f32 %v3179, %v3187
    %v3189 = vadd.f32 %v3188, 1.1283791
    %v3190 = vmul.f32 %v1047, %v3189
    %v3191 = vmul.f32 %v3179, 3.8918573e-05
    %v3192 = vadd.f32 %v3191, 0.001143296
    %v3193 = vmul.f32 %v3179, %v3192
    %v3194 = vadd.f32 %v3193, 0.014752088
    %v3195 = vmul.f32 %v3179, %v3194
    %v3196 = vadd.f32 %v3195, 0.112945676
    %v3197 = vmul.f32 %v3179, %v3196
    %v3198 = vadd.f32 %v3197, 0.4994258
    %v3199 = vmul.f32 %v3179, %v3198
    %v3200 = vadd.f32 %v3199, 1.0
    %v3201 = vrcp.pop %v3200
    %v3202 = vmul.f32 %v3200, %v3201
    %v3203 = vsub.f32 1.0, %v3202
    %v3204 = vmul.f32 %v3201, %v3203
    %v3205 = vadd.f32 %v3201, %v3204
    %vm3206 = vweird.f32 %v3200
    %vm3207 = vweird.f32 %v3201
    %vm3208 = vmor %vm3206, %vm3207
    %v3209 = vsel %vm3208, %v3201, %v3205
    %v3210 = vand.u32 2147483647, %v3200
    %vm3211 = vcmp.eq.f32.partialorder %v3210, 8.507059e+37
    %v3212 = vand.u32 %v3200, 2147483648
    %v3213 = vor.u32 1.1754944e-38, %v3212
    %v3214 = vsel %vm3211, %v3213, %v3209
    %v3215 = vmul.f32 %v3190, %v3214
    %v3216 = vmin.f32 %v3215, 1.0
    %v3217 = vmax.f32 %v3216, -1.0
    %v3218 = vmul.f32 %v1048, %v1048
    %v3219 = vmin.f32 16.0, %v3218
    %v3220 = vmul.f32 %v3219, 2.1237322e-06
    %v3221 = vadd.f32 %v3220, 0.00028619796
    %v3222 = vmul.f32 %v3219, %v3221
    %v3223 = vadd.f32 %v3222, 0.0036580483
    %v3224 = vmul.f32 %v3219, %v3223
    %v3225 = vadd.f32 %v3224, 0.05243302
    %v3226 = vmul.f32 %v3219, %v3225
    %v3227 = vadd.f32 %v3226, 0.18741608
    %v3228 = vmul.f32 %v3219, %v3227
    %v3229 = vadd.f32 %v3228, 1.1283791
    %v3230 = vmul.f32 %v1048, %v3229
    %v3231 = vmul.f32 %v3219, 3.8918573e-05
    %v3232 = vadd.f32 %v3231, 0.001143296
    %v3233 = vmul.f32 %v3219, %v3232
    %v3234 = vadd.f32 %v3233, 0.014752088
    %v3235 = vmul.f32 %v3219, %v3234
    %v3236 = vadd.f32 %v3235, 0.112945676
    %v3237 = vmul.f32 %v3219, %v3236
    %v3238 = vadd.f32 %v3237, 0.4994258
    %v3239 = vmul.f32 %v3219, %v3238
    %v3240 = vadd.f32 %v3239, 1.0
    %v3241 = vrcp.pop %v3240
    %v3242 = vmul.f32 %v3240, %v3241
    %v3243 = vsub.f32 1.0, %v3242
    %v3244 = vmul.f32 %v3241, %v3243
    %v3245 = vadd.f32 %v3241, %v3244
    %vm3246 = vweird.f32 %v3240
    %vm3247 = vweird.f32 %v3241
    %vm3248 = vmor %vm3246, %vm3247
    %v3249 = vsel %vm3248, %v3241, %v3245
    %v3250 = vand.u32 2147483647, %v3240
    %vm3251 = vcmp.eq.f32.partialorder %v3250, 8.507059e+37
    %v3252 = vand.u32 %v3240, 2147483648
    %v3253 = vor.u32 1.1754944e-38, %v3252
    %v3254 = vsel %vm3251, %v3253, %v3249
    %v3255 = vmul.f32 %v3230, %v3254
    %v3256 = vmin.f32 %v3255, 1.0
    %v3257 = vmax.f32 %v3256, -1.0
    %v3258 = vmul.f32 %v1049, %v1049
    %v3259 = vmin.f32 16.0, %v3258
    %v3260 = vmul.f32 %v3259, 2.1237322e-06
    %v3261 = vadd.f32 %v3260, 0.00028619796
    %v3262 = vmul.f32 %v3259, %v3261
    %v3263 = vadd.f32 %v3262, 0.0036580483
    %v3264 = vmul.f32 %v3259, %v3263
    %v3265 = vadd.f32 %v3264, 0.05243302
    %v3266 = vmul.f32 %v3259, %v3265
    %v3267 = vadd.f32 %v3266, 0.18741608
    %v3268 = vmul.f32 %v3259, %v3267
    %v3269 = vadd.f32 %v3268, 1.1283791
    %v3270 = vmul.f32 %v1049, %v3269
    %v3271 = vmul.f32 %v3259, 3.8918573e-05
    %v3272 = vadd.f32 %v3271, 0.001143296
    %v3273 = vmul.f32 %v3259, %v3272
    %v3274 = vadd.f32 %v3273, 0.014752088
    %v3275 = vmul.f32 %v3259, %v3274
    %v3276 = vadd.f32 %v3275, 0.112945676
    %v3277 = vmul.f32 %v3259, %v3276
    %v3278 = vadd.f32 %v3277, 0.4994258
    %v3279 = vmul.f32 %v3259, %v3278
    %v3280 = vadd.f32 %v3279, 1.0
    %v3281 = vrcp.pop %v3280
    %v3282 = vmul.f32 %v3280, %v3281
    %v3283 = vsub.f32 1.0, %v3282
    %v3284 = vmul.f32 %v3281, %v3283
    %v3285 = vadd.f32 %v3281, %v3284
    %vm3286 = vweird.f32 %v3280
    %vm3287 = vweird.f32 %v3281
    %vm3288 = vmor %vm3286, %vm3287
    %v3289 = vsel %vm3288, %v3281, %v3285
    %v3290 = vand.u32 2147483647, %v3280
    %vm3291 = vcmp.eq.f32.partialorder %v3290, 8.507059e+37
    %v3292 = vand.u32 %v3280, 2147483648
    %v3293 = vor.u32 1.1754944e-38, %v3292
    %v3294 = vsel %vm3291, %v3293, %v3289
    %v3295 = vmul.f32 %v3270, %v3294
    %v3296 = vmin.f32 %v3295, 1.0
    %v3297 = vmax.f32 %v3296, -1.0
    %v3298 = vmul.f32 %v1050, %v1050
    %v3299 = vmin.f32 16.0, %v3298
    %v3300 = vmul.f32 %v3299, 2.1237322e-06
    %v3301 = vadd.f32 %v3300, 0.00028619796
    %v3302 = vmul.f32 %v3299, %v3301
    %v3303 = vadd.f32 %v3302, 0.0036580483
    %v3304 = vmul.f32 %v3299, %v3303
    %v3305 = vadd.f32 %v3304, 0.05243302
    %v3306 = vmul.f32 %v3299, %v3305
    %v3307 = vadd.f32 %v3306, 0.18741608
    %v3308 = vmul.f32 %v3299, %v3307
    %v3309 = vadd.f32 %v3308, 1.1283791
    %v3310 = vmul.f32 %v1050, %v3309
    %v3311 = vmul.f32 %v3299, 3.8918573e-05
    %v3312 = vadd.f32 %v3311, 0.001143296
    %v3313 = vmul.f32 %v3299, %v3312
    %v3314 = vadd.f32 %v3313, 0.014752088
    %v3315 = vmul.f32 %v3299, %v3314
    %v3316 = vadd.f32 %v3315, 0.112945676
    %v3317 = vmul.f32 %v3299, %v3316
    %v3318 = vadd.f32 %v3317, 0.4994258
    %v3319 = vmul.f32 %v3299, %v3318
    %v3320 = vadd.f32 %v3319, 1.0
    %v3321 = vrcp.pop %v3320
    %v3322 = vmul.f32 %v3320, %v3321
    %v3323 = vsub.f32 1.0, %v3322
    %v3324 = vmul.f32 %v3321, %v3323
    %v3325 = vadd.f32 %v3321, %v3324
    %vm3326 = vweird.f32 %v3320
    %vm3327 = vweird.f32 %v3321
    %vm3328 = vmor %vm3326, %vm3327
    %v3329 = vsel %vm3328, %v3321, %v3325
    %v3330 = vand.u32 2147483647, %v3320
    %vm3331 = vcmp.eq.f32.partialorder %v3330, 8.507059e+37
    %v3332 = vand.u32 %v3320, 2147483648
    %v3333 = vor.u32 1.1754944e-38, %v3332
    %v3334 = vsel %vm3331, %v3333, %v3329
    %v3335 = vmul.f32 %v3310, %v3334
    %v3336 = vmin.f32 %v3335, 1.0
    %v3337 = vmax.f32 %v3336, -1.0
    %v3338 = vmul.f32 %v1051, %v1051
    %v3339 = vmin.f32 16.0, %v3338
    %v3340 = vmul.f32 %v3339, 2.1237322e-06
    %v3341 = vadd.f32 %v3340, 0.00028619796
    %v3342 = vmul.f32 %v3339, %v3341
    %v3343 = vadd.f32 %v3342, 0.0036580483
    %v3344 = vmul.f32 %v3339, %v3343
    %v3345 = vadd.f32 %v3344, 0.05243302
    %v3346 = vmul.f32 %v3339, %v3345
    %v3347 = vadd.f32 %v3346, 0.18741608
    %v3348 = vmul.f32 %v3339, %v3347
    %v3349 = vadd.f32 %v3348, 1.1283791
    %v3350 = vmul.f32 %v1051, %v3349
    %v3351 = vmul.f32 %v3339, 3.8918573e-05
    %v3352 = vadd.f32 %v3351, 0.001143296
    %v3353 = vmul.f32 %v3339, %v3352
    %v3354 = vadd.f32 %v3353, 0.014752088
    %v3355 = vmul.f32 %v3339, %v3354
    %v3356 = vadd.f32 %v3355, 0.112945676
    %v3357 = vmul.f32 %v3339, %v3356
    %v3358 = vadd.f32 %v3357, 0.4994258
    %v3359 = vmul.f32 %v3339, %v3358
    %v3360 = vadd.f32 %v3359, 1.0
    %v3361 = vrcp.pop %v3360
    %v3362 = vmul.f32 %v3360, %v3361
    %v3363 = vsub.f32 1.0, %v3362
    %v3364 = vmul.f32 %v3361, %v3363
    %v3365 = vadd.f32 %v3361, %v3364
    %vm3366 = vweird.f32 %v3360
    %vm3367 = vweird.f32 %v3361
    %vm3368 = vmor %vm3366, %vm3367
    %v3369 = vsel %vm3368, %v3361, %v3365
    %v3370 = vand.u32 2147483647, %v3360
    %vm3371 = vcmp.eq.f32.partialorder %v3370, 8.507059e+37
    %v3372 = vand.u32 %v3360, 2147483648
    %v3373 = vor.u32 1.1754944e-38, %v3372
    %v3374 = vsel %vm3371, %v3373, %v3369
    %v3375 = vmul.f32 %v3350, %v3374
    %v3376 = vmin.f32 %v3375, 1.0
    %v3377 = vmax.f32 %v3376, -1.0
    %v3378 = vmul.f32 %v1052, %v1052
    %v3379 = vmin.f32 16.0, %v3378
    %v3380 = vmul.f32 %v3379, 2.1237322e-06
    %v3381 = vadd.f32 %v3380, 0.00028619796
    %v3382 = vmul.f32 %v3379, %v3381
    %v3383 = vadd.f32 %v3382, 0.0036580483
    %v3384 = vmul.f32 %v3379, %v3383
    %v3385 = vadd.f32 %v3384, 0.05243302
    %v3386 = vmul.f32 %v3379, %v3385
    %v3387 = vadd.f32 %v3386, 0.18741608
    %v3388 = vmul.f32 %v3379, %v3387
    %v3389 = vadd.f32 %v3388, 1.1283791
    %v3390 = vmul.f32 %v1052, %v3389
    %v3391 = vmul.f32 %v3379, 3.8918573e-05
    %v3392 = vadd.f32 %v3391, 0.001143296
    %v3393 = vmul.f32 %v3379, %v3392
    %v3394 = vadd.f32 %v3393, 0.014752088
    %v3395 = vmul.f32 %v3379, %v3394
    %v3396 = vadd.f32 %v3395, 0.112945676
    %v3397 = vmul.f32 %v3379, %v3396
    %v3398 = vadd.f32 %v3397, 0.4994258
    %v3399 = vmul.f32 %v3379, %v3398
    %v3400 = vadd.f32 %v3399, 1.0
    %v3401 = vrcp.pop %v3400
    %v3402 = vmul.f32 %v3400, %v3401
    %v3403 = vsub.f32 1.0, %v3402
    %v3404 = vmul.f32 %v3401, %v3403
    %v3405 = vadd.f32 %v3401, %v3404
    %vm3406 = vweird.f32 %v3400
    %vm3407 = vweird.f32 %v3401
    %vm3408 = vmor %vm3406, %vm3407
    %v3409 = vsel %vm3408, %v3401, %v3405
    %v3410 = vand.u32 2147483647, %v3400
    %vm3411 = vcmp.eq.f32.partialorder %v3410, 8.507059e+37
    %v3412 = vand.u32 %v3400, 2147483648
    %v3413 = vor.u32 1.1754944e-38, %v3412
    %v3414 = vsel %vm3411, %v3413, %v3409
    %v3415 = vmul.f32 %v3390, %v3414
    %v3416 = vmin.f32 %v3415, 1.0
    %v3417 = vmax.f32 %v3416, -1.0
    %v3418 = vmul.f32 %v1053, %v1053
    %v3419 = vmin.f32 16.0, %v3418
    %v3420 = vmul.f32 %v3419, 2.1237322e-06
    %v3421 = vadd.f32 %v3420, 0.00028619796
    %v3422 = vmul.f32 %v3419, %v3421
    %v3423 = vadd.f32 %v3422, 0.0036580483
    %v3424 = vmul.f32 %v3419, %v3423
    %v3425 = vadd.f32 %v3424, 0.05243302
    %v3426 = vmul.f32 %v3419, %v3425
    %v3427 = vadd.f32 %v3426, 0.18741608
    %v3428 = vmul.f32 %v3419, %v3427
    %v3429 = vadd.f32 %v3428, 1.1283791
    %v3430 = vmul.f32 %v1053, %v3429
    %v3431 = vmul.f32 %v3419, 3.8918573e-05
    %v3432 = vadd.f32 %v3431, 0.001143296
    %v3433 = vmul.f32 %v3419, %v3432
    %v3434 = vadd.f32 %v3433, 0.014752088
    %v3435 = vmul.f32 %v3419, %v3434
    %v3436 = vadd.f32 %v3435, 0.112945676
    %v3437 = vmul.f32 %v3419, %v3436
    %v3438 = vadd.f32 %v3437, 0.4994258
    %v3439 = vmul.f32 %v3419, %v3438
    %v3440 = vadd.f32 %v3439, 1.0
    %v3441 = vrcp.pop %v3440
    %v3442 = vmul.f32 %v3440, %v3441
    %v3443 = vsub.f32 1.0, %v3442
    %v3444 = vmul.f32 %v3441, %v3443
    %v3445 = vadd.f32 %v3441, %v3444
    %vm3446 = vweird.f32 %v3440
    %vm3447 = vweird.f32 %v3441
    %vm3448 = vmor %vm3446, %vm3447
    %v3449 = vsel %vm3448, %v3441, %v3445
    %v3450 = vand.u32 2147483647, %v3440
    %vm3451 = vcmp.eq.f32.partialorder %v3450, 8.507059e+37
    %v3452 = vand.u32 %v3440, 2147483648
    %v3453 = vor.u32 1.1754944e-38, %v3452
    %v3454 = vsel %vm3451, %v3453, %v3449
    %v3455 = vmul.f32 %v3430, %v3454
    %v3456 = vmin.f32 %v3455, 1.0
    %v3457 = vmax.f32 %v3456, -1.0
    %v3458 = vmul.f32 %v1054, %v1054
    %v3459 = vmin.f32 16.0, %v3458
    %v3460 = vmul.f32 %v3459, 2.1237322e-06
    %v3461 = vadd.f32 %v3460, 0.00028619796
    %v3462 = vmul.f32 %v3459, %v3461
    %v3463 = vadd.f32 %v3462, 0.0036580483
    %v3464 = vmul.f32 %v3459, %v3463
    %v3465 = vadd.f32 %v3464, 0.05243302
    %v3466 = vmul.f32 %v3459, %v3465
    %v3467 = vadd.f32 %v3466, 0.18741608
    %v3468 = vmul.f32 %v3459, %v3467
    %v3469 = vadd.f32 %v3468, 1.1283791
    %v3470 = vmul.f32 %v1054, %v3469
    %v3471 = vmul.f32 %v3459, 3.8918573e-05
    %v3472 = vadd.f32 %v3471, 0.001143296
    %v3473 = vmul.f32 %v3459, %v3472
    %v3474 = vadd.f32 %v3473, 0.014752088
    %v3475 = vmul.f32 %v3459, %v3474
    %v3476 = vadd.f32 %v3475, 0.112945676
    %v3477 = vmul.f32 %v3459, %v3476
    %v3478 = vadd.f32 %v3477, 0.4994258
    %v3479 = vmul.f32 %v3459, %v3478
    %v3480 = vadd.f32 %v3479, 1.0
    %v3481 = vrcp.pop %v3480
    %v3482 = vmul.f32 %v3480, %v3481
    %v3483 = vsub.f32 1.0, %v3482
    %v3484 = vmul.f32 %v3481, %v3483
    %v3485 = vadd.f32 %v3481, %v3484
    %vm3486 = vweird.f32 %v3480
    %vm3487 = vweird.f32 %v3481
    %vm3488 = vmor %vm3486, %vm3487
    %v3489 = vsel %vm3488, %v3481, %v3485
    %v3490 = vand.u32 2147483647, %v3480
    %vm3491 = vcmp.eq.f32.partialorder %v3490, 8.507059e+37
    %v3492 = vand.u32 %v3480, 2147483648
    %v3493 = vor.u32 1.1754944e-38, %v3492
    %v3494 = vsel %vm3491, %v3493, %v3489
    %v3495 = vmul.f32 %v3470, %v3494
    %v3496 = vmin.f32 %v3495, 1.0
    %v3497 = vmax.f32 %v3496, -1.0
    %v3498 = vmul.f32 %v1055, %v1055
    %v3499 = vmin.f32 16.0, %v3498
    %v3500 = vmul.f32 %v3499, 2.1237322e-06
    %v3501 = vadd.f32 %v3500, 0.00028619796
    %v3502 = vmul.f32 %v3499, %v3501
    %v3503 = vadd.f32 %v3502, 0.0036580483
    %v3504 = vmul.f32 %v3499, %v3503
    %v3505 = vadd.f32 %v3504, 0.05243302
    %v3506 = vmul.f32 %v3499, %v3505
    %v3507 = vadd.f32 %v3506, 0.18741608
    %v3508 = vmul.f32 %v3499, %v3507
    %v3509 = vadd.f32 %v3508, 1.1283791
    %v3510 = vmul.f32 %v1055, %v3509
    %v3511 = vmul.f32 %v3499, 3.8918573e-05
    %v3512 = vadd.f32 %v3511, 0.001143296
    %v3513 = vmul.f32 %v3499, %v3512
    %v3514 = vadd.f32 %v3513, 0.014752088
    %v3515 = vmul.f32 %v3499, %v3514
    %v3516 = vadd.f32 %v3515, 0.112945676
    %v3517 = vmul.f32 %v3499, %v3516
    %v3518 = vadd.f32 %v3517, 0.4994258
    %v3519 = vmul.f32 %v3499, %v3518
    %v3520 = vadd.f32 %v3519, 1.0
    %v3521 = vrcp.pop %v3520
    %v3522 = vmul.f32 %v3520, %v3521
    %v3523 = vsub.f32 1.0, %v3522
    %v3524 = vmul.f32 %v3521, %v3523
    %v3525 = vadd.f32 %v3521, %v3524
    %vm3526 = vweird.f32 %v3520
    %vm3527 = vweird.f32 %v3521
    %vm3528 = vmor %vm3526, %vm3527
    %v3529 = vsel %vm3528, %v3521, %v3525
    %v3530 = vand.u32 2147483647, %v3520
    %vm3531 = vcmp.eq.f32.partialorder %v3530, 8.507059e+37
    %v3532 = vand.u32 %v3520, 2147483648
    %v3533 = vor.u32 1.1754944e-38, %v3532
    %v3534 = vsel %vm3531, %v3533, %v3529
    %v3535 = vmul.f32 %v3510, %v3534
    %v3536 = vmin.f32 %v3535, 1.0
    %v3537 = vmax.f32 %v3536, -1.0
    %v3538 = vmul.f32 %v1056, %v1056
    %v3539 = vmin.f32 16.0, %v3538
    %v3540 = vmul.f32 %v3539, 2.1237322e-06
    %v3541 = vadd.f32 %v3540, 0.00028619796
    %v3542 = vmul.f32 %v3539, %v3541
    %v3543 = vadd.f32 %v3542, 0.0036580483
    %v3544 = vmul.f32 %v3539, %v3543
    %v3545 = vadd.f32 %v3544, 0.05243302
    %v3546 = vmul.f32 %v3539, %v3545
    %v3547 = vadd.f32 %v3546, 0.18741608
    %v3548 = vmul.f32 %v3539, %v3547
    %v3549 = vadd.f32 %v3548, 1.1283791
    %v3550 = vmul.f32 %v1056, %v3549
    %v3551 = vmul.f32 %v3539, 3.8918573e-05
    %v3552 = vadd.f32 %v3551, 0.001143296
    %v3553 = vmul.f32 %v3539, %v3552
    %v3554 = vadd.f32 %v3553, 0.014752088
    %v3555 = vmul.f32 %v3539, %v3554
    %v3556 = vadd.f32 %v3555, 0.112945676
    %v3557 = vmul.f32 %v3539, %v3556
    %v3558 = vadd.f32 %v3557, 0.4994258
    %v3559 = vmul.f32 %v3539, %v3558
    %v3560 = vadd.f32 %v3559, 1.0
    %v3561 = vrcp.pop %v3560
    %v3562 = vmul.f32 %v3560, %v3561
    %v3563 = vsub.f32 1.0, %v3562
    %v3564 = vmul.f32 %v3561, %v3563
    %v3565 = vadd.f32 %v3561, %v3564
    %vm3566 = vweird.f32 %v3560
    %vm3567 = vweird.f32 %v3561
    %vm3568 = vmor %vm3566, %vm3567
    %v3569 = vsel %vm3568, %v3561, %v3565
    %v3570 = vand.u32 2147483647, %v3560
    %vm3571 = vcmp.eq.f32.partialorder %v3570, 8.507059e+37
    %v3572 = vand.u32 %v3560, 2147483648
    %v3573 = vor.u32 1.1754944e-38, %v3572
    %v3574 = vsel %vm3571, %v3573, %v3569
    %v3575 = vmul.f32 %v3550, %v3574
    %v3576 = vmin.f32 %v3575, 1.0
    %v3577 = vmax.f32 %v3576, -1.0
    %v3578 = vmul.f32 %v1057, %v1057
    %v3579 = vmin.f32 16.0, %v3578
    %v3580 = vmul.f32 %v3579, 2.1237322e-06
    %v3581 = vadd.f32 %v3580, 0.00028619796
    %v3582 = vmul.f32 %v3579, %v3581
    %v3583 = vadd.f32 %v3582, 0.0036580483
    %v3584 = vmul.f32 %v3579, %v3583
    %v3585 = vadd.f32 %v3584, 0.05243302
    %v3586 = vmul.f32 %v3579, %v3585
    %v3587 = vadd.f32 %v3586, 0.18741608
    %v3588 = vmul.f32 %v3579, %v3587
    %v3589 = vadd.f32 %v3588, 1.1283791
    %v3590 = vmul.f32 %v1057, %v3589
    %v3591 = vmul.f32 %v3579, 3.8918573e-05
    %v3592 = vadd.f32 %v3591, 0.001143296
    %v3593 = vmul.f32 %v3579, %v3592
    %v3594 = vadd.f32 %v3593, 0.014752088
    %v3595 = vmul.f32 %v3579, %v3594
    %v3596 = vadd.f32 %v3595, 0.112945676
    %v3597 = vmul.f32 %v3579, %v3596
    %v3598 = vadd.f32 %v3597, 0.4994258
    %v3599 = vmul.f32 %v3579, %v3598
    %v3600 = vadd.f32 %v3599, 1.0
    %v3601 = vrcp.pop %v3600
    %v3602 = vmul.f32 %v3600, %v3601
    %v3603 = vsub.f32 1.0, %v3602
    %v3604 = vmul.f32 %v3601, %v3603
    %v3605 = vadd.f32 %v3601, %v3604
    %vm3606 = vweird.f32 %v3600
    %vm3607 = vweird.f32 %v3601
    %vm3608 = vmor %vm3606, %vm3607
    %v3609 = vsel %vm3608, %v3601, %v3605
    %v3610 = vand.u32 2147483647, %v3600
    %vm3611 = vcmp.eq.f32.partialorder %v3610, 8.507059e+37
    %v3612 = vand.u32 %v3600, 2147483648
    %v3613 = vor.u32 1.1754944e-38, %v3612
    %v3614 = vsel %vm3611, %v3613, %v3609
    %v3615 = vmul.f32 %v3590, %v3614
    %v3616 = vmin.f32 %v3615, 1.0
    %v3617 = vmax.f32 %v3616, -1.0
    %v3618 = vadd.f32 %v1097, 1.0
    %v3619 = vadd.f32 %v1137, 1.0
    %v3620 = vadd.f32 %v1177, 1.0
    %v3621 = vadd.f32 %v1217, 1.0
    %v3622 = vadd.f32 %v1257, 1.0
    %v3623 = vadd.f32 %v1297, 1.0
    %v3624 = vadd.f32 %v1337, 1.0
    %v3625 = vadd.f32 %v1377, 1.0
    %v3626 = vadd.f32 %v1417, 1.0
    %v3627 = vadd.f32 %v1457, 1.0
    %v3628 = vadd.f32 %v1497, 1.0
    %v3629 = vadd.f32 %v1537, 1.0
    %v3630 = vadd.f32 %v1577, 1.0
    %v3631 = vadd.f32 %v1617, 1.0
    %v3632 = vadd.f32 %v1657, 1.0
    %v3633 = vadd.f32 %v1697, 1.0
    %v3634 = vadd.f32 %v1737, 1.0
    %v3635 = vadd.f32 %v1777, 1.0
    %v3636 = vadd.f32 %v1817, 1.0
    %v3637 = vadd.f32 %v1857, 1.0
    %v3638 = vadd.f32 %v1897, 1.0
    %v3639 = vadd.f32 %v1937, 1.0
    %v3640 = vadd.f32 %v1977, 1.0
    %v3641 = vadd.f32 %v2017, 1.0
    %v3642 = vadd.f32 %v2057, 1.0
    %v3643 = vadd.f32 %v2097, 1.0
    %v3644 = vadd.f32 %v2137, 1.0
    %v3645 = vadd.f32 %v2177, 1.0
    %v3646 = vadd.f32 %v2217, 1.0
    %v3647 = vadd.f32 %v2257, 1.0
    %v3648 = vadd.f32 %v2297, 1.0
    %v3649 = vadd.f32 %v2337, 1.0
    %v3650 = vadd.f32 %v2377, 1.0
    %v3651 = vadd.f32 %v2417, 1.0
    %v3652 = vadd.f32 %v2457, 1.0
    %v3653 = vadd.f32 %v2497, 1.0
    %v3654 = vadd.f32 %v2537, 1.0
    %v3655 = vadd.f32 %v2577, 1.0
    %v3656 = vadd.f32 %v2617, 1.0
    %v3657 = vadd.f32 %v2657, 1.0
    %v3658 = vadd.f32 %v2697, 1.0
    %v3659 = vadd.f32 %v2737, 1.0
    %v3660 = vadd.f32 %v2777, 1.0
    %v3661 = vadd.f32 %v2817, 1.0
    %v3662 = vadd.f32 %v2857, 1.0
    %v3663 = vadd.f32 %v2897, 1.0
    %v3664 = vadd.f32 %v2937, 1.0
    %v3665 = vadd.f32 %v2977, 1.0
    %v3666 = vadd.f32 %v3017, 1.0
    %v3667 = vadd.f32 %v3057, 1.0
    %v3668 = vadd.f32 %v3097, 1.0
    %v3669 = vadd.f32 %v3137, 1.0
    %v3670 = vadd.f32 %v3177, 1.0
    %v3671 = vadd.f32 %v3217, 1.0
    %v3672 = vadd.f32 %v3257, 1.0
    %v3673 = vadd.f32 %v3297, 1.0
    %v3674 = vadd.f32 %v3337, 1.0
    %v3675 = vadd.f32 %v3377, 1.0
    %v3676 = vadd.f32 %v3417, 1.0
    %v3677 = vadd.f32 %v3457, 1.0
    %v3678 = vadd.f32 %v3497, 1.0
    %v3679 = vadd.f32 %v3537, 1.0
    %v3680 = vadd.f32 %v3577, 1.0
    %v3681 = vadd.f32 %v3617, 1.0
    %v3682 = vmul.f32 %v930, %v3618
    %v3683 = vmul.f32 %v931, %v3619
    %v3684 = vmul.f32 %v932, %v3620
    %v3685 = vmul.f32 %v933, %v3621
    %v3686 = vmul.f32 %v934, %v3622
    %v3687 = vmul.f32 %v935, %v3623
    %v3688 = vmul.f32 %v936, %v3624
    %v3689 = vmul.f32 %v937, %v3625
    %v3690 = vmul.f32 %v938, %v3626
    %v3691 = vmul.f32 %v939, %v3627
    %v3692 = vmul.f32 %v940, %v3628
    %v3693 = vmul.f32 %v941, %v3629
    %v3694 = vmul.f32 %v942, %v3630
    %v3695 = vmul.f32 %v943, %v3631
    %v3696 = vmul.f32 %v944, %v3632
    %v3697 = vmul.f32 %v945, %v3633
    %v3698 = vmul.f32 %v946, %v3634
    %v3699 = vmul.f32 %v947, %v3635
    %v3700 = vmul.f32 %v948, %v3636
    %v3701 = vmul.f32 %v949, %v3637
    %v3702 = vmul.f32 %v950, %v3638
    %v3703 = vmul.f32 %v951, %v3639
    %v3704 = vmul.f32 %v952, %v3640
    %v3705 = vmul.f32 %v953, %v3641
    %v3706 = vmul.f32 %v954, %v3642
    %v3707 = vmul.f32 %v955, %v3643
    %v3708 = vmul.f32 %v956, %v3644
    %v3709 = vmul.f32 %v957, %v3645
    %v3710 = vmul.f32 %v958, %v3646
    %v3711 = vmul.f32 %v959, %v3647
    %v3712 = vmul.f32 %v960, %v3648
    %v3713 = vmul.f32 %v961, %v3649
    %v3714 = vmul.f32 %v962, %v3650
    %v3715 = vmul.f32 %v963, %v3651
    %v3716 = vmul.f32 %v964, %v3652
    %v3717 = vmul.f32 %v965, %v3653
    %v3718 = vmul.f32 %v966, %v3654
    %v3719 = vmul.f32 %v967, %v3655
    %v3720 = vmul.f32 %v968, %v3656
    %v3721 = vmul.f32 %v969, %v3657
    %v3722 = vmul.f32 %v970, %v3658
    %v3723 = vmul.f32 %v971, %v3659
    %v3724 = vmul.f32 %v972, %v3660
    %v3725 = vmul.f32 %v973, %v3661
    %v3726 = vmul.f32 %v974, %v3662
    %v3727 = vmul.f32 %v975, %v3663
    %v3728 = vmul.f32 %v976, %v3664
    %v3729 = vmul.f32 %v977, %v3665
    %v3730 = vmul.f32 %v978, %v3666
    %v3731 = vmul.f32 %v979, %v3667
    %v3732 = vmul.f32 %v980, %v3668
    %v3733 = vmul.f32 %v981, %v3669
    %v3734 = vmul.f32 %v982, %v3670
    %v3735 = vmul.f32 %v983, %v3671
    %v3736 = vmul.f32 %v984, %v3672
    %v3737 = vmul.f32 %v985, %v3673
    %v3738 = vmul.f32 %v986, %v3674
    %v3739 = vmul.f32 %v987, %v3675
    %v3740 = vmul.f32 %v988, %v3676
    %v3741 = vmul.f32 %v989, %v3677
    %v3742 = vmul.f32 %v990, %v3678
    %v3743 = vmul.f32 %v991, %v3679
    %v3744 = vmul.f32 %v992, %v3680
    %v3745 = vmul.f32 %v993, %v3681
    %v3746 = vld [vmem:[%s5] sm:$0xf]
    %v3747 = vld [vmem:[%s6] sm:$0xf]
    %v3748 = vadd.f32 %v3682, %v3683
    %v3749 = vadd.f32 %v3748, %v3684
    %v3750 = vadd.f32 %v3749, %v3685
    %3751 = vadd.xlane.f32.xlu0 %v3750
    %v3752 = vpop.xlane.xlu0 %3751
    %v3753 = vadd.f32 %v3686, %v3687
    %v3754 = vadd.f32 %v3753, %v3688
    %v3755 = vadd.f32 %v3754, %v3689
    %3756 = vadd.xlane.f32.xlu0 %v3755
    %v3757 = vpop.xlane.xlu0 %3756
    %v3758 = vadd.f32 %v3690, %v3691
    %v3759 = vadd.f32 %v3758, %v3692
    %v3760 = vadd.f32 %v3759, %v3693
    %3761 = vadd.xlane.f32.xlu0 %v3760
    %v3762 = vpop.xlane.xlu0 %3761
    %v3763 = vadd.f32 %v3694, %v3695
    %v3764 = vadd.f32 %v3763, %v3696
    %v3765 = vadd.f32 %v3764, %v3697
    %3766 = vadd.xlane.f32.xlu0 %v3765
    %v3767 = vpop.xlane.xlu0 %3766
    %v3768 = vadd.f32 %v3698, %v3699
    %v3769 = vadd.f32 %v3768, %v3700
    %v3770 = vadd.f32 %v3769, %v3701
    %3771 = vadd.xlane.f32.xlu0 %v3770
    %v3772 = vpop.xlane.xlu0 %3771
    %v3773 = vadd.f32 %v3702, %v3703
    %v3774 = vadd.f32 %v3773, %v3704
    %v3775 = vadd.f32 %v3774, %v3705
    %3776 = vadd.xlane.f32.xlu0 %v3775
    %v3777 = vpop.xlane.xlu0 %3776
    %v3778 = vadd.f32 %v3706, %v3707
    %v3779 = vadd.f32 %v3778, %v3708
    %v3780 = vadd.f32 %v3779, %v3709
    %3781 = vadd.xlane.f32.xlu0 %v3780
    %v3782 = vpop.xlane.xlu0 %3781
    %v3783 = vadd.f32 %v3710, %v3711
    %v3784 = vadd.f32 %v3783, %v3712
    %v3785 = vadd.f32 %v3784, %v3713
    %3786 = vadd.xlane.f32.xlu0 %v3785
    %v3787 = vpop.xlane.xlu0 %3786
    %v3788 = vadd.f32 %v3714, %v3715
    %v3789 = vadd.f32 %v3788, %v3716
    %v3790 = vadd.f32 %v3789, %v3717
    %3791 = vadd.xlane.f32.xlu0 %v3790
    %v3792 = vpop.xlane.xlu0 %3791
    %v3793 = vadd.f32 %v3718, %v3719
    %v3794 = vadd.f32 %v3793, %v3720
    %v3795 = vadd.f32 %v3794, %v3721
    %3796 = vadd.xlane.f32.xlu0 %v3795
    %v3797 = vpop.xlane.xlu0 %3796
    %v3798 = vadd.f32 %v3722, %v3723
    %v3799 = vadd.f32 %v3798, %v3724
    %v3800 = vadd.f32 %v3799, %v3725
    %3801 = vadd.xlane.f32.xlu0 %v3800
    %v3802 = vpop.xlane.xlu0 %3801
    %v3803 = vadd.f32 %v3726, %v3727
    %v3804 = vadd.f32 %v3803, %v3728
    %v3805 = vadd.f32 %v3804, %v3729
    %3806 = vadd.xlane.f32.xlu0 %v3805
    %v3807 = vpop.xlane.xlu0 %3806
    %v3808 = vadd.f32 %v3730, %v3731
    %v3809 = vadd.f32 %v3808, %v3732
    %v3810 = vadd.f32 %v3809, %v3733
    %3811 = vadd.xlane.f32.xlu0 %v3810
    %v3812 = vpop.xlane.xlu0 %3811
    %v3813 = vadd.f32 %v3734, %v3735
    %v3814 = vadd.f32 %v3813, %v3736
    %v3815 = vadd.f32 %v3814, %v3737
    %3816 = vadd.xlane.f32.xlu0 %v3815
    %v3817 = vpop.xlane.xlu0 %3816
    %v3818 = vadd.f32 %v3738, %v3739
    %v3819 = vadd.f32 %v3818, %v3740
    %v3820 = vadd.f32 %v3819, %v3741
    %3821 = vadd.xlane.f32.xlu0 %v3820
    %v3822 = vpop.xlane.xlu0 %3821
    %v3823 = vadd.f32 %v3742, %v3743
    %v3824 = vadd.f32 %v3823, %v3744
    %v3825 = vadd.f32 %v3824, %v3745
    %3826 = vadd.xlane.f32.xlu0 %v3825
    %v3827 = vpop.xlane.xlu0 %3826
    %v3828 = vrcp.pop 512.0
    %v3829 = vmul.f32 512.0, %v3828
    %v3830 = vsub.f32 1.0, %v3829
    %v3831 = vmul.f32 %v3828, %v3830
    %v3832 = vadd.f32 %v3828, %v3831
    %vm3833 = vweird.f32 %v3828
    %v3834 = vsel %vm3833, %v3828, %v3832
    %v3835 = vmul.f32 %v3752, %v3834
    %v3836 = vmul.f32 %v3757, %v3834
    %v3837 = vmul.f32 %v3762, %v3834
    %v3838 = vmul.f32 %v3767, %v3834
    %v3839 = vmul.f32 %v3772, %v3834
    %v3840 = vmul.f32 %v3777, %v3834
    %v3841 = vmul.f32 %v3782, %v3834
    %v3842 = vmul.f32 %v3787, %v3834
    %v3843 = vmul.f32 %v3792, %v3834
    %v3844 = vmul.f32 %v3797, %v3834
    %v3845 = vmul.f32 %v3802, %v3834
    %v3846 = vmul.f32 %v3807, %v3834
    %v3847 = vmul.f32 %v3812, %v3834
    %v3848 = vmul.f32 %v3817, %v3834
    %v3849 = vmul.f32 %v3822, %v3834
    %v3850 = vmul.f32 %v3827, %v3834
    %v3851 = vsub.f32 %v3682, %v3835
    %v3852 = vsub.f32 %v3683, %v3835
    %v3853 = vsub.f32 %v3684, %v3835
    %v3854 = vsub.f32 %v3685, %v3835
    %v3855 = vsub.f32 %v3686, %v3836
    %v3856 = vsub.f32 %v3687, %v3836
    %v3857 = vsub.f32 %v3688, %v3836
    %v3858 = vsub.f32 %v3689, %v3836
    %v3859 = vsub.f32 %v3690, %v3837
    %v3860 = vsub.f32 %v3691, %v3837
    %v3861 = vsub.f32 %v3692, %v3837
    %v3862 = vsub.f32 %v3693, %v3837
    %v3863 = vsub.f32 %v3694, %v3838
    %v3864 = vsub.f32 %v3695, %v3838
    %v3865 = vsub.f32 %v3696, %v3838
    %v3866 = vsub.f32 %v3697, %v3838
    %v3867 = vsub.f32 %v3698, %v3839
    %v3868 = vsub.f32 %v3699, %v3839
    %v3869 = vsub.f32 %v3700, %v3839
    %v3870 = vsub.f32 %v3701, %v3839
    %v3871 = vsub.f32 %v3702, %v3840
    %v3872 = vsub.f32 %v3703, %v3840
    %v3873 = vsub.f32 %v3704, %v3840
    %v3874 = vsub.f32 %v3705, %v3840
    %v3875 = vsub.f32 %v3706, %v3841
    %v3876 = vsub.f32 %v3707, %v3841
    %v3877 = vsub.f32 %v3708, %v3841
    %v3878 = vsub.f32 %v3709, %v3841
    %v3879 = vsub.f32 %v3710, %v3842
    %v3880 = vsub.f32 %v3711, %v3842
    %v3881 = vsub.f32 %v3712, %v3842
    %v3882 = vsub.f32 %v3713, %v3842
    %v3883 = vsub.f32 %v3714, %v3843
    %v3884 = vsub.f32 %v3715, %v3843
    %v3885 = vsub.f32 %v3716, %v3843
    %v3886 = vsub.f32 %v3717, %v3843
    %v3887 = vsub.f32 %v3718, %v3844
    %v3888 = vsub.f32 %v3719, %v3844
    %v3889 = vsub.f32 %v3720, %v3844
    %v3890 = vsub.f32 %v3721, %v3844
    %v3891 = vsub.f32 %v3722, %v3845
    %v3892 = vsub.f32 %v3723, %v3845
    %v3893 = vsub.f32 %v3724, %v3845
    %v3894 = vsub.f32 %v3725, %v3845
    %v3895 = vsub.f32 %v3726, %v3846
    %v3896 = vsub.f32 %v3727, %v3846
    %v3897 = vsub.f32 %v3728, %v3846
    %v3898 = vsub.f32 %v3729, %v3846
    %v3899 = vsub.f32 %v3730, %v3847
    %v3900 = vsub.f32 %v3731, %v3847
    %v3901 = vsub.f32 %v3732, %v3847
    %v3902 = vsub.f32 %v3733, %v3847
    %v3903 = vsub.f32 %v3734, %v3848
    %v3904 = vsub.f32 %v3735, %v3848
    %v3905 = vsub.f32 %v3736, %v3848
    %v3906 = vsub.f32 %v3737, %v3848
    %v3907 = vsub.f32 %v3738, %v3849
    %v3908 = vsub.f32 %v3739, %v3849
    %v3909 = vsub.f32 %v3740, %v3849
    %v3910 = vsub.f32 %v3741, %v3849
    %v3911 = vsub.f32 %v3742, %v3850
    %v3912 = vsub.f32 %v3743, %v3850
    %v3913 = vsub.f32 %v3744, %v3850
    %v3914 = vsub.f32 %v3745, %v3850
    %v3915 = vmul.f32 %v3851, %v3851
    %v3916 = vmul.f32 %v3852, %v3852
    %v3917 = vmul.f32 %v3853, %v3853
    %v3918 = vmul.f32 %v3854, %v3854
    %v3919 = vmul.f32 %v3855, %v3855
    %v3920 = vmul.f32 %v3856, %v3856
    %v3921 = vmul.f32 %v3857, %v3857
    %v3922 = vmul.f32 %v3858, %v3858
    %v3923 = vmul.f32 %v3859, %v3859
    %v3924 = vmul.f32 %v3860, %v3860
    %v3925 = vmul.f32 %v3861, %v3861
    %v3926 = vmul.f32 %v3862, %v3862
    %v3927 = vmul.f32 %v3863, %v3863
    %v3928 = vmul.f32 %v3864, %v3864
    %v3929 = vmul.f32 %v3865, %v3865
    %v3930 = vmul.f32 %v3866, %v3866
    %v3931 = vmul.f32 %v3867, %v3867
    %v3932 = vmul.f32 %v3868, %v3868
    %v3933 = vmul.f32 %v3869, %v3869
    %v3934 = vmul.f32 %v3870, %v3870
    %v3935 = vmul.f32 %v3871, %v3871
    %v3936 = vmul.f32 %v3872, %v3872
    %v3937 = vmul.f32 %v3873, %v3873
    %v3938 = vmul.f32 %v3874, %v3874
    %v3939 = vmul.f32 %v3875, %v3875
    %v3940 = vmul.f32 %v3876, %v3876
    %v3941 = vmul.f32 %v3877, %v3877
    %v3942 = vmul.f32 %v3878, %v3878
    %v3943 = vmul.f32 %v3879, %v3879
    %v3944 = vmul.f32 %v3880, %v3880
    %v3945 = vmul.f32 %v3881, %v3881
    %v3946 = vmul.f32 %v3882, %v3882
    %v3947 = vmul.f32 %v3883, %v3883
    %v3948 = vmul.f32 %v3884, %v3884
    %v3949 = vmul.f32 %v3885, %v3885
    %v3950 = vmul.f32 %v3886, %v3886
    %v3951 = vmul.f32 %v3887, %v3887
    %v3952 = vmul.f32 %v3888, %v3888
    %v3953 = vmul.f32 %v3889, %v3889
    %v3954 = vmul.f32 %v3890, %v3890
    %v3955 = vmul.f32 %v3891, %v3891
    %v3956 = vmul.f32 %v3892, %v3892
    %v3957 = vmul.f32 %v3893, %v3893
    %v3958 = vmul.f32 %v3894, %v3894
    %v3959 = vmul.f32 %v3895, %v3895
    %v3960 = vmul.f32 %v3896, %v3896
    %v3961 = vmul.f32 %v3897, %v3897
    %v3962 = vmul.f32 %v3898, %v3898
    %v3963 = vmul.f32 %v3899, %v3899
    %v3964 = vmul.f32 %v3900, %v3900
    %v3965 = vmul.f32 %v3901, %v3901
    %v3966 = vmul.f32 %v3902, %v3902
    %v3967 = vmul.f32 %v3903, %v3903
    %v3968 = vmul.f32 %v3904, %v3904
    %v3969 = vmul.f32 %v3905, %v3905
    %v3970 = vmul.f32 %v3906, %v3906
    %v3971 = vmul.f32 %v3907, %v3907
    %v3972 = vmul.f32 %v3908, %v3908
    %v3973 = vmul.f32 %v3909, %v3909
    %v3974 = vmul.f32 %v3910, %v3910
    %v3975 = vmul.f32 %v3911, %v3911
    %v3976 = vmul.f32 %v3912, %v3912
    %v3977 = vmul.f32 %v3913, %v3913
    %v3978 = vmul.f32 %v3914, %v3914
    %v3979 = vadd.f32 %v3915, %v3916
    %v3980 = vadd.f32 %v3979, %v3917
    %v3981 = vadd.f32 %v3980, %v3918
    %3982 = vadd.xlane.f32.xlu0 %v3981
    %v3983 = vpop.xlane.xlu0 %3982
    %v3984 = vadd.f32 %v3919, %v3920
    %v3985 = vadd.f32 %v3984, %v3921
    %v3986 = vadd.f32 %v3985, %v3922
    %3987 = vadd.xlane.f32.xlu0 %v3986
    %v3988 = vpop.xlane.xlu0 %3987
    %v3989 = vadd.f32 %v3923, %v3924
    %v3990 = vadd.f32 %v3989, %v3925
    %v3991 = vadd.f32 %v3990, %v3926
    %3992 = vadd.xlane.f32.xlu0 %v3991
    %v3993 = vpop.xlane.xlu0 %3992
    %v3994 = vadd.f32 %v3927, %v3928
    %v3995 = vadd.f32 %v3994, %v3929
    %v3996 = vadd.f32 %v3995, %v3930
    %3997 = vadd.xlane.f32.xlu0 %v3996
    %v3998 = vpop.xlane.xlu0 %3997
    %v3999 = vadd.f32 %v3931, %v3932
    %v4000 = vadd.f32 %v3999, %v3933
    %v4001 = vadd.f32 %v4000, %v3934
    %4002 = vadd.xlane.f32.xlu0 %v4001
    %v4003 = vpop.xlane.xlu0 %4002
    %v4004 = vadd.f32 %v3935, %v3936
    %v4005 = vadd.f32 %v4004, %v3937
    %v4006 = vadd.f32 %v4005, %v3938
    %4007 = vadd.xlane.f32.xlu0 %v4006
    %v4008 = vpop.xlane.xlu0 %4007
    %v4009 = vadd.f32 %v3939, %v3940
    %v4010 = vadd.f32 %v4009, %v3941
    %v4011 = vadd.f32 %v4010, %v3942
    %4012 = vadd.xlane.f32.xlu0 %v4011
    %v4013 = vpop.xlane.xlu0 %4012
    %v4014 = vadd.f32 %v3943, %v3944
    %v4015 = vadd.f32 %v4014, %v3945
    %v4016 = vadd.f32 %v4015, %v3946
    %4017 = vadd.xlane.f32.xlu0 %v4016
    %v4018 = vpop.xlane.xlu0 %4017
    %v4019 = vadd.f32 %v3947, %v3948
    %v4020 = vadd.f32 %v4019, %v3949
    %v4021 = vadd.f32 %v4020, %v3950
    %4022 = vadd.xlane.f32.xlu0 %v4021
    %v4023 = vpop.xlane.xlu0 %4022
    %v4024 = vadd.f32 %v3951, %v3952
    %v4025 = vadd.f32 %v4024, %v3953
    %v4026 = vadd.f32 %v4025, %v3954
    %4027 = vadd.xlane.f32.xlu0 %v4026
    %v4028 = vpop.xlane.xlu0 %4027
    %v4029 = vadd.f32 %v3955, %v3956
    %v4030 = vadd.f32 %v4029, %v3957
    %v4031 = vadd.f32 %v4030, %v3958
    %4032 = vadd.xlane.f32.xlu0 %v4031
    %v4033 = vpop.xlane.xlu0 %4032
    %v4034 = vadd.f32 %v3959, %v3960
    %v4035 = vadd.f32 %v4034, %v3961
    %v4036 = vadd.f32 %v4035, %v3962
    %4037 = vadd.xlane.f32.xlu0 %v4036
    %v4038 = vpop.xlane.xlu0 %4037
    %v4039 = vadd.f32 %v3963, %v3964
    %v4040 = vadd.f32 %v4039, %v3965
    %v4041 = vadd.f32 %v4040, %v3966
    %4042 = vadd.xlane.f32.xlu0 %v4041
    %v4043 = vpop.xlane.xlu0 %4042
    %v4044 = vadd.f32 %v3967, %v3968
    %v4045 = vadd.f32 %v4044, %v3969
    %v4046 = vadd.f32 %v4045, %v3970
    %4047 = vadd.xlane.f32.xlu0 %v4046
    %v4048 = vpop.xlane.xlu0 %4047
    %v4049 = vadd.f32 %v3971, %v3972
    %v4050 = vadd.f32 %v4049, %v3973
    %v4051 = vadd.f32 %v4050, %v3974
    %4052 = vadd.xlane.f32.xlu0 %v4051
    %v4053 = vpop.xlane.xlu0 %4052
    %v4054 = vadd.f32 %v3975, %v3976
    %v4055 = vadd.f32 %v4054, %v3977
    %v4056 = vadd.f32 %v4055, %v3978
    %4057 = vadd.xlane.f32.xlu0 %v4056
    %v4058 = vpop.xlane.xlu0 %4057
    %v4059 = vmul.f32 %v3983, %v3834
    %v4060 = vmul.f32 %v3988, %v3834
    %v4061 = vmul.f32 %v3993, %v3834
    %v4062 = vmul.f32 %v3998, %v3834
    %v4063 = vmul.f32 %v4003, %v3834
    %v4064 = vmul.f32 %v4008, %v3834
    %v4065 = vmul.f32 %v4013, %v3834
    %v4066 = vmul.f32 %v4018, %v3834
    %v4067 = vmul.f32 %v4023, %v3834
    %v4068 = vmul.f32 %v4028, %v3834
    %v4069 = vmul.f32 %v4033, %v3834
    %v4070 = vmul.f32 %v4038, %v3834
    %v4071 = vmul.f32 %v4043, %v3834
    %v4072 = vmul.f32 %v4048, %v3834
    %v4073 = vmul.f32 %v4053, %v3834
    %v4074 = vmul.f32 %v4058, %v3834
    %v4075 = vadd.f32 %v4059, 1e-05
    %v4076 = vadd.f32 %v4060, 1e-05
    %v4077 = vadd.f32 %v4061, 1e-05
    %v4078 = vadd.f32 %v4062, 1e-05
    %v4079 = vadd.f32 %v4063, 1e-05
    %v4080 = vadd.f32 %v4064, 1e-05
    %v4081 = vadd.f32 %v4065, 1e-05
    %v4082 = vadd.f32 %v4066, 1e-05
    %v4083 = vadd.f32 %v4067, 1e-05
    %v4084 = vadd.f32 %v4068, 1e-05
    %v4085 = vadd.f32 %v4069, 1e-05
    %v4086 = vadd.f32 %v4070, 1e-05
    %v4087 = vadd.f32 %v4071, 1e-05
    %v4088 = vadd.f32 %v4072, 1e-05
    %v4089 = vadd.f32 %v4073, 1e-05
    %v4090 = vadd.f32 %v4074, 1e-05
    %v4091 = vrsqrt.pop %v4075
    %v4092 = vmul.f32 %v4091, %v4075
    %v4093 = vmul.f32 %v4092, %v4091
    %v4094 = vmul.f32 0.5, %v4093
    %v4095 = vsub.f32 1.5, %v4094
    %v4096 = vmul.f32 %v4091, %v4095
    %vm4097 = vweird.f32 %v4075
    %vm4098 = vweird.f32 %v4091
    %vm4099 = vmor %vm4097, %vm4098
    %v4100 = vsel %vm4099, %v4091, %v4096
    %v4101 = vrsqrt.pop %v4076
    %v4102 = vmul.f32 %v4101, %v4076
    %v4103 = vmul.f32 %v4102, %v4101
    %v4104 = vmul.f32 0.5, %v4103
    %v4105 = vsub.f32 1.5, %v4104
    %v4106 = vmul.f32 %v4101, %v4105
    %vm4107 = vweird.f32 %v4076
    %vm4108 = vweird.f32 %v4101
    %vm4109 = vmor %vm4107, %vm4108
    %v4110 = vsel %vm4109, %v4101, %v4106
    %v4111 = vrsqrt.pop %v4077
    %v4112 = vmul.f32 %v4111, %v4077
    %v4113 = vmul.f32 %v4112, %v4111
    %v4114 = vmul.f32 0.5, %v4113
    %v4115 = vsub.f32 1.5, %v4114
    %v4116 = vmul.f32 %v4111, %v4115
    %vm4117 = vweird.f32 %v4077
    %vm4118 = vweird.f32 %v4111
    %vm4119 = vmor %vm4117, %vm4118
    %v4120 = vsel %vm4119, %v4111, %v4116
    %v4121 = vrsqrt.pop %v4078
    %v4122 = vmul.f32 %v4121, %v4078
    %v4123 = vmul.f32 %v4122, %v4121
    %v4124 = vmul.f32 0.5, %v4123
    %v4125 = vsub.f32 1.5, %v4124
    %v4126 = vmul.f32 %v4121, %v4125
    %vm4127 = vweird.f32 %v4078
    %vm4128 = vweird.f32 %v4121
    %vm4129 = vmor %vm4127, %vm4128
    %v4130 = vsel %vm4129, %v4121, %v4126
    %v4131 = vrsqrt.pop %v4079
    %v4132 = vmul.f32 %v4131, %v4079
    %v4133 = vmul.f32 %v4132, %v4131
    %v4134 = vmul.f32 0.5, %v4133
    %v4135 = vsub.f32 1.5, %v4134
    %v4136 = vmul.f32 %v4131, %v4135
    %vm4137 = vweird.f32 %v4079
    %vm4138 = vweird.f32 %v4131
    %vm4139 = vmor %vm4137, %vm4138
    %v4140 = vsel %vm4139, %v4131, %v4136
    %v4141 = vrsqrt.pop %v4080
    %v4142 = vmul.f32 %v4141, %v4080
    %v4143 = vmul.f32 %v4142, %v4141
    %v4144 = vmul.f32 0.5, %v4143
    %v4145 = vsub.f32 1.5, %v4144
    %v4146 = vmul.f32 %v4141, %v4145
    %vm4147 = vweird.f32 %v4080
    %vm4148 = vweird.f32 %v4141
    %vm4149 = vmor %vm4147, %vm4148
    %v4150 = vsel %vm4149, %v4141, %v4146
    %v4151 = vrsqrt.pop %v4081
    %v4152 = vmul.f32 %v4151, %v4081
    %v4153 = vmul.f32 %v4152, %v4151
    %v4154 = vmul.f32 0.5, %v4153
    %v4155 = vsub.f32 1.5, %v4154
    %v4156 = vmul.f32 %v4151, %v4155
    %vm4157 = vweird.f32 %v4081
    %vm4158 = vweird.f32 %v4151
    %vm4159 = vmor %vm4157, %vm4158
    %v4160 = vsel %vm4159, %v4151, %v4156
    %v4161 = vrsqrt.pop %v4082
    %v4162 = vmul.f32 %v4161, %v4082
    %v4163 = vmul.f32 %v4162, %v4161
    %v4164 = vmul.f32 0.5, %v4163
    %v4165 = vsub.f32 1.5, %v4164
    %v4166 = vmul.f32 %v4161, %v4165
    %vm4167 = vweird.f32 %v4082
    %vm4168 = vweird.f32 %v4161
    %vm4169 = vmor %vm4167, %vm4168
    %v4170 = vsel %vm4169, %v4161, %v4166
    %v4171 = vrsqrt.pop %v4083
    %v4172 = vmul.f32 %v4171, %v4083
    %v4173 = vmul.f32 %v4172, %v4171
    %v4174 = vmul.f32 0.5, %v4173
    %v4175 = vsub.f32 1.5, %v4174
    %v4176 = vmul.f32 %v4171, %v4175
    %vm4177 = vweird.f32 %v4083
    %vm4178 = vweird.f32 %v4171
    %vm4179 = vmor %vm4177, %vm4178
    %v4180 = vsel %vm4179, %v4171, %v4176
    %v4181 = vrsqrt.pop %v4084
    %v4182 = vmul.f32 %v4181, %v4084
    %v4183 = vmul.f32 %v4182, %v4181
    %v4184 = vmul.f32 0.5, %v4183
    %v4185 = vsub.f32 1.5, %v4184
    %v4186 = vmul.f32 %v4181, %v4185
    %vm4187 = vweird.f32 %v4084
    %vm4188 = vweird.f32 %v4181
    %vm4189 = vmor %vm4187, %vm4188
    %v4190 = vsel %vm4189, %v4181, %v4186
    %v4191 = vrsqrt.pop %v4085
    %v4192 = vmul.f32 %v4191, %v4085
    %v4193 = vmul.f32 %v4192, %v4191
    %v4194 = vmul.f32 0.5, %v4193
    %v4195 = vsub.f32 1.5, %v4194
    %v4196 = vmul.f32 %v4191, %v4195
    %vm4197 = vweird.f32 %v4085
    %vm4198 = vweird.f32 %v4191
    %vm4199 = vmor %vm4197, %vm4198
    %v4200 = vsel %vm4199, %v4191, %v4196
    %v4201 = vrsqrt.pop %v4086
    %v4202 = vmul.f32 %v4201, %v4086
    %v4203 = vmul.f32 %v4202, %v4201
    %v4204 = vmul.f32 0.5, %v4203
    %v4205 = vsub.f32 1.5, %v4204
    %v4206 = vmul.f32 %v4201, %v4205
    %vm4207 = vweird.f32 %v4086
    %vm4208 = vweird.f32 %v4201
    %vm4209 = vmor %vm4207, %vm4208
    %v4210 = vsel %vm4209, %v4201, %v4206
    %v4211 = vrsqrt.pop %v4087
    %v4212 = vmul.f32 %v4211, %v4087
    %v4213 = vmul.f32 %v4212, %v4211
    %v4214 = vmul.f32 0.5, %v4213
    %v4215 = vsub.f32 1.5, %v4214
    %v4216 = vmul.f32 %v4211, %v4215
    %vm4217 = vweird.f32 %v4087
    %vm4218 = vweird.f32 %v4211
    %vm4219 = vmor %vm4217, %vm4218
    %v4220 = vsel %vm4219, %v4211, %v4216
    %v4221 = vrsqrt.pop %v4088
    %v4222 = vmul.f32 %v4221, %v4088
    %v4223 = vmul.f32 %v4222, %v4221
    %v4224 = vmul.f32 0.5, %v4223
    %v4225 = vsub.f32 1.5, %v4224
    %v4226 = vmul.f32 %v4221, %v4225
    %vm4227 = vweird.f32 %v4088
    %vm4228 = vweird.f32 %v4221
    %vm4229 = vmor %vm4227, %vm4228
    %v4230 = vsel %vm4229, %v4221, %v4226
    %v4231 = vrsqrt.pop %v4089
    %v4232 = vmul.f32 %v4231, %v4089
    %v4233 = vmul.f32 %v4232, %v4231
    %v4234 = vmul.f32 0.5, %v4233
    %v4235 = vsub.f32 1.5, %v4234
    %v4236 = vmul.f32 %v4231, %v4235
    %vm4237 = vweird.f32 %v4089
    %vm4238 = vweird.f32 %v4231
    %vm4239 = vmor %vm4237, %vm4238
    %v4240 = vsel %vm4239, %v4231, %v4236
    %v4241 = vrsqrt.pop %v4090
    %v4242 = vmul.f32 %v4241, %v4090
    %v4243 = vmul.f32 %v4242, %v4241
    %v4244 = vmul.f32 0.5, %v4243
    %v4245 = vsub.f32 1.5, %v4244
    %v4246 = vmul.f32 %v4241, %v4245
    %vm4247 = vweird.f32 %v4090
    %vm4248 = vweird.f32 %v4241
    %vm4249 = vmor %vm4247, %vm4248
    %v4250 = vsel %vm4249, %v4241, %v4246
    %v4251 = vmul.f32 %v3851, %v4100
    %v4252 = vmul.f32 %v3852, %v4100
    %v4253 = vmul.f32 %v3853, %v4100
    %v4254 = vmul.f32 %v3854, %v4100
    %v4255 = vmul.f32 %v3855, %v4110
    %v4256 = vmul.f32 %v3856, %v4110
    %v4257 = vmul.f32 %v3857, %v4110
    %v4258 = vmul.f32 %v3858, %v4110
    %v4259 = vmul.f32 %v3859, %v4120
    %v4260 = vmul.f32 %v3860, %v4120
    %v4261 = vmul.f32 %v3861, %v4120
    %v4262 = vmul.f32 %v3862, %v4120
    %v4263 = vmul.f32 %v3863, %v4130
    %v4264 = vmul.f32 %v3864, %v4130
    %v4265 = vmul.f32 %v3865, %v4130
    %v4266 = vmul.f32 %v3866, %v4130
    %v4267 = vmul.f32 %v3867, %v4140
    %v4268 = vmul.f32 %v3868, %v4140
    %v4269 = vmul.f32 %v3869, %v4140
    %v4270 = vmul.f32 %v3870, %v4140
    %v4271 = vmul.f32 %v3871, %v4150
    %v4272 = vmul.f32 %v3872, %v4150
    %v4273 = vmul.f32 %v3873, %v4150
    %v4274 = vmul.f32 %v3874, %v4150
    %v4275 = vmul.f32 %v3875, %v4160
    %v4276 = vmul.f32 %v3876, %v4160
    %v4277 = vmul.f32 %v3877, %v4160
    %v4278 = vmul.f32 %v3878, %v4160
    %v4279 = vmul.f32 %v3879, %v4170
    %v4280 = vmul.f32 %v3880, %v4170
    %v4281 = vmul.f32 %v3881, %v4170
    %v4282 = vmul.f32 %v3882, %v4170
    %v4283 = vmul.f32 %v3883, %v4180
    %v4284 = vmul.f32 %v3884, %v4180
    %v4285 = vmul.f32 %v3885, %v4180
    %v4286 = vmul.f32 %v3886, %v4180
    %v4287 = vmul.f32 %v3887, %v4190
    %v4288 = vmul.f32 %v3888, %v4190
    %v4289 = vmul.f32 %v3889, %v4190
    %v4290 = vmul.f32 %v3890, %v4190
    %v4291 = vmul.f32 %v3891, %v4200
    %v4292 = vmul.f32 %v3892, %v4200
    %v4293 = vmul.f32 %v3893, %v4200
    %v4294 = vmul.f32 %v3894, %v4200
    %v4295 = vmul.f32 %v3895, %v4210
    %v4296 = vmul.f32 %v3896, %v4210
    %v4297 = vmul.f32 %v3897, %v4210
    %v4298 = vmul.f32 %v3898, %v4210
    %v4299 = vmul.f32 %v3899, %v4220
    %v4300 = vmul.f32 %v3900, %v4220
    %v4301 = vmul.f32 %v3901, %v4220
    %v4302 = vmul.f32 %v3902, %v4220
    %v4303 = vmul.f32 %v3903, %v4230
    %v4304 = vmul.f32 %v3904, %v4230
    %v4305 = vmul.f32 %v3905, %v4230
    %v4306 = vmul.f32 %v3906, %v4230
    %v4307 = vmul.f32 %v3907, %v4240
    %v4308 = vmul.f32 %v3908, %v4240
    %v4309 = vmul.f32 %v3909, %v4240
    %v4310 = vmul.f32 %v3910, %v4240
    %v4311 = vmul.f32 %v3911, %v4250
    %v4312 = vmul.f32 %v3912, %v4250
    %v4313 = vmul.f32 %v3913, %v4250
    %v4314 = vmul.f32 %v3914, %v4250
    %v4316 = vperm.slane %v3746, 0
    %v4317 = vperm.slane %v3746, 1
    %v4318 = vperm.slane %v3746, 2
    %v4319 = vperm.slane %v3746, 3
    %v4324 = vmul.f32 %v4251, %v4316
    %v4325 = vmul.f32 %v4252, %v4317
    %v4326 = vmul.f32 %v4253, %v4318
    %v4327 = vmul.f32 %v4254, %v4319
    %v4328 = vmul.f32 %v4255, %v4316
    %v4329 = vmul.f32 %v4256, %v4317
    %v4330 = vmul.f32 %v4257, %v4318
    %v4331 = vmul.f32 %v4258, %v4319
    %v4332 = vmul.f32 %v4259, %v4316
    %v4333 = vmul.f32 %v4260, %v4317
    %v4334 = vmul.f32 %v4261, %v4318
    %v4335 = vmul.f32 %v4262, %v4319
    %v4336 = vmul.f32 %v4263, %v4316
    %v4337 = vmul.f32 %v4264, %v4317
    %v4338 = vmul.f32 %v4265, %v4318
    %v4339 = vmul.f32 %v4266, %v4319
    %v4340 = vmul.f32 %v4267, %v4316
    %v4341 = vmul.f32 %v4268, %v4317
    %v4342 = vmul.f32 %v4269, %v4318
    %v4343 = vmul.f32 %v4270, %v4319
    %v4344 = vmul.f32 %v4271, %v4316
    %v4345 = vmul.f32 %v4272, %v4317
    %v4346 = vmul.f32 %v4273, %v4318
    %v4347 = vmul.f32 %v4274, %v4319
    %v4348 = vmul.f32 %v4275, %v4316
    %v4349 = vmul.f32 %v4276, %v4317
    %v4350 = vmul.f32 %v4277, %v4318
    %v4351 = vmul.f32 %v4278, %v4319
    %v4352 = vmul.f32 %v4279, %v4316
    %v4353 = vmul.f32 %v4280, %v4317
    %v4354 = vmul.f32 %v4281, %v4318
    %v4355 = vmul.f32 %v4282, %v4319
    %v4356 = vmul.f32 %v4283, %v4316
    %v4357 = vmul.f32 %v4284, %v4317
    %v4358 = vmul.f32 %v4285, %v4318
    %v4359 = vmul.f32 %v4286, %v4319
    %v4360 = vmul.f32 %v4287, %v4316
    %v4361 = vmul.f32 %v4288, %v4317
    %v4362 = vmul.f32 %v4289, %v4318
    %v4363 = vmul.f32 %v4290, %v4319
    %v4364 = vmul.f32 %v4291, %v4316
    %v4365 = vmul.f32 %v4292, %v4317
    %v4366 = vmul.f32 %v4293, %v4318
    %v4367 = vmul.f32 %v4294, %v4319
    %v4368 = vmul.f32 %v4295, %v4316
    %v4369 = vmul.f32 %v4296, %v4317
    %v4370 = vmul.f32 %v4297, %v4318
    %v4371 = vmul.f32 %v4298, %v4319
    %v4372 = vmul.f32 %v4299, %v4316
    %v4373 = vmul.f32 %v4300, %v4317
    %v4374 = vmul.f32 %v4301, %v4318
    %v4375 = vmul.f32 %v4302, %v4319
    %v4376 = vmul.f32 %v4303, %v4316
    %v4377 = vmul.f32 %v4304, %v4317
    %v4378 = vmul.f32 %v4305, %v4318
    %v4379 = vmul.f32 %v4306, %v4319
    %v4380 = vmul.f32 %v4307, %v4316
    %v4381 = vmul.f32 %v4308, %v4317
    %v4382 = vmul.f32 %v4309, %v4318
    %v4383 = vmul.f32 %v4310, %v4319
    %v4384 = vmul.f32 %v4311, %v4316
    %v4385 = vmul.f32 %v4312, %v4317
    %v4386 = vmul.f32 %v4313, %v4318
    %v4387 = vmul.f32 %v4314, %v4319
    %v4389 = vperm.slane %v3747, 0
    %v4390 = vperm.slane %v3747, 1
    %v4391 = vperm.slane %v3747, 2
    %v4392 = vperm.slane %v3747, 3
    %v4397 = vadd.f32 %v4324, %v4389
    %v4398 = vadd.f32 %v4325, %v4390
    %v4399 = vadd.f32 %v4326, %v4391
    %v4400 = vadd.f32 %v4327, %v4392
    %v4401 = vadd.f32 %v4328, %v4389
    %v4402 = vadd.f32 %v4329, %v4390
    %v4403 = vadd.f32 %v4330, %v4391
    %v4404 = vadd.f32 %v4331, %v4392
    %v4405 = vadd.f32 %v4332, %v4389
    %v4406 = vadd.f32 %v4333, %v4390
    %v4407 = vadd.f32 %v4334, %v4391
    %v4408 = vadd.f32 %v4335, %v4392
    %v4409 = vadd.f32 %v4336, %v4389
    %v4410 = vadd.f32 %v4337, %v4390
    %v4411 = vadd.f32 %v4338, %v4391
    %v4412 = vadd.f32 %v4339, %v4392
    %v4413 = vadd.f32 %v4340, %v4389
    %v4414 = vadd.f32 %v4341, %v4390
    %v4415 = vadd.f32 %v4342, %v4391
    %v4416 = vadd.f32 %v4343, %v4392
    %v4417 = vadd.f32 %v4344, %v4389
    %v4418 = vadd.f32 %v4345, %v4390
    %v4419 = vadd.f32 %v4346, %v4391
    %v4420 = vadd.f32 %v4347, %v4392
    %v4421 = vadd.f32 %v4348, %v4389
    %v4422 = vadd.f32 %v4349, %v4390
    %v4423 = vadd.f32 %v4350, %v4391
    %v4424 = vadd.f32 %v4351, %v4392
    %v4425 = vadd.f32 %v4352, %v4389
    %v4426 = vadd.f32 %v4353, %v4390
    %v4427 = vadd.f32 %v4354, %v4391
    %v4428 = vadd.f32 %v4355, %v4392
    %v4429 = vadd.f32 %v4356, %v4389
    %v4430 = vadd.f32 %v4357, %v4390
    %v4431 = vadd.f32 %v4358, %v4391
    %v4432 = vadd.f32 %v4359, %v4392
    %v4433 = vadd.f32 %v4360, %v4389
    %v4434 = vadd.f32 %v4361, %v4390
    %v4435 = vadd.f32 %v4362, %v4391
    %v4436 = vadd.f32 %v4363, %v4392
    %v4437 = vadd.f32 %v4364, %v4389
    %v4438 = vadd.f32 %v4365, %v4390
    %v4439 = vadd.f32 %v4366, %v4391
    %v4440 = vadd.f32 %v4367, %v4392
    %v4441 = vadd.f32 %v4368, %v4389
    %v4442 = vadd.f32 %v4369, %v4390
    %v4443 = vadd.f32 %v4370, %v4391
    %v4444 = vadd.f32 %v4371, %v4392
    %v4445 = vadd.f32 %v4372, %v4389
    %v4446 = vadd.f32 %v4373, %v4390
    %v4447 = vadd.f32 %v4374, %v4391
    %v4448 = vadd.f32 %v4375, %v4392
    %v4449 = vadd.f32 %v4376, %v4389
    %v4450 = vadd.f32 %v4377, %v4390
    %v4451 = vadd.f32 %v4378, %v4391
    %v4452 = vadd.f32 %v4379, %v4392
    %v4453 = vadd.f32 %v4380, %v4389
    %v4454 = vadd.f32 %v4381, %v4390
    %v4455 = vadd.f32 %v4382, %v4391
    %v4456 = vadd.f32 %v4383, %v4392
    %v4457 = vadd.f32 %v4384, %v4389
    %v4458 = vadd.f32 %v4385, %v4390
    %v4459 = vadd.f32 %v4386, %v4391
    %v4460 = vadd.f32 %v4387, %v4392
    %v4461 = vpack.c.bf16 %v4401, %v4397
    %v4462 = vpack.c.bf16 %v4402, %v4398
    %v4463 = vpack.c.bf16 %v4403, %v4399
    %v4464 = vpack.c.bf16 %v4404, %v4400
    %v4465 = vpack.c.bf16 %v4409, %v4405
    %v4466 = vpack.c.bf16 %v4410, %v4406
    %v4467 = vpack.c.bf16 %v4411, %v4407
    %v4468 = vpack.c.bf16 %v4412, %v4408
    %v4469 = vpack.c.bf16 %v4417, %v4413
    %v4470 = vpack.c.bf16 %v4418, %v4414
    %v4471 = vpack.c.bf16 %v4419, %v4415
    %v4472 = vpack.c.bf16 %v4420, %v4416
    %v4473 = vpack.c.bf16 %v4425, %v4421
    %v4474 = vpack.c.bf16 %v4426, %v4422
    %v4475 = vpack.c.bf16 %v4427, %v4423
    %v4476 = vpack.c.bf16 %v4428, %v4424
    %v4477 = vpack.c.bf16 %v4433, %v4429
    %v4478 = vpack.c.bf16 %v4434, %v4430
    %v4479 = vpack.c.bf16 %v4435, %v4431
    %v4480 = vpack.c.bf16 %v4436, %v4432
    %v4481 = vpack.c.bf16 %v4441, %v4437
    %v4482 = vpack.c.bf16 %v4442, %v4438
    %v4483 = vpack.c.bf16 %v4443, %v4439
    %v4484 = vpack.c.bf16 %v4444, %v4440
    %v4485 = vpack.c.bf16 %v4449, %v4445
    %v4486 = vpack.c.bf16 %v4450, %v4446
    %v4487 = vpack.c.bf16 %v4451, %v4447
    %v4488 = vpack.c.bf16 %v4452, %v4448
    %v4489 = vpack.c.bf16 %v4457, %v4453
    %v4490 = vpack.c.bf16 %v4458, %v4454
    %v4491 = vpack.c.bf16 %v4459, %v4455
    %v4492 = vpack.c.bf16 %v4460, %v4456
    %v4493 = vld [vmem:[%s7] sm:$0xff]
    %v4494 = vld [vmem:[%s7 + $0x8] sm:$0xf]
    %v4495 = vld [vmem:[%s7 + $0xc] sm:$0xff]
    %v4496 = vld [vmem:[%s7 + $0x14] sm:$0xf]
    %v4497 = vld [vmem:[%s7 + $0x18] sm:$0xff]
    %v4498 = vld [vmem:[%s7 + $0x20] sm:$0xf]
    %v4499 = vld [vmem:[%s7 + $0x24] sm:$0xff]
    %v4500 = vld [vmem:[%s7 + $0x2c] sm:$0xf]
    %v4501 = vld [vmem:[%s7 + $0x30] sm:$0xff]
    %v4502 = vld [vmem:[%s7 + $0x38] sm:$0xf]
    %v4503 = vld [vmem:[%s7 + $0x3c] sm:$0xff]
    %v4504 = vld [vmem:[%s7 + $0x44] sm:$0xf]
    %v4505 = vld [vmem:[%s7 + $0x48] sm:$0xff]
    %v4506 = vld [vmem:[%s7 + $0x50] sm:$0xf]
    %v4507 = vld [vmem:[%s7 + $0x54] sm:$0xff]
    %v4508 = vld [vmem:[%s7 + $0x5c] sm:$0xf]
    %v4509 = vld [vmem:[%s7 + $0x60] sm:$0xff]
    %v4510 = vld [vmem:[%s7 + $0x68] sm:$0xf]
    %v4511 = vld [vmem:[%s7 + $0x6c] sm:$0xff]
    %v4512 = vld [vmem:[%s7 + $0x74] sm:$0xf]
    %v4513 = vld [vmem:[%s7 + $0x78] sm:$0xff]
    %v4514 = vld [vmem:[%s7 + $0x80] sm:$0xf]
    %v4515 = vld [vmem:[%s7 + $0x84] sm:$0xff]
    %v4516 = vld [vmem:[%s7 + $0x8c] sm:$0xf]
    %v4517 = vld [vmem:[%s7 + $0x90] sm:$0xff]
    %v4518 = vld [vmem:[%s7 + $0x98] sm:$0xf]
    %v4519 = vld [vmem:[%s7 + $0x9c] sm:$0xff]
    %v4520 = vld [vmem:[%s7 + $0xa4] sm:$0xf]
    %v4521 = vld [vmem:[%s7 + $0xa8] sm:$0xff]
    %v4522 = vld [vmem:[%s7 + $0xb0] sm:$0xf]
    %v4523 = vld [vmem:[%s7 + $0xb4] sm:$0xff]
    %v4524 = vld [vmem:[%s7 + $0xbc] sm:$0xf]
    %v4525 = vld [vmem:[%s7 + $0xc0] sm:$0xff]
    %v4526 = vld [vmem:[%s7 + $0xc8] sm:$0xf]
    %v4527 = vld [vmem:[%s7 + $0xcc] sm:$0xff]
    %v4528 = vld [vmem:[%s7 + $0xd4] sm:$0xf]
    %v4529 = vld [vmem:[%s7 + $0xd8] sm:$0xff]
    %v4530 = vld [vmem:[%s7 + $0xe0] sm:$0xf]
    %v4531 = vld [vmem:[%s7 + $0xe4] sm:$0xff]
    %v4532 = vld [vmem:[%s7 + $0xec] sm:$0xf]
    %v4533 = vld [vmem:[%s7 + $0xf0] sm:$0xff]
    %v4534 = vld [vmem:[%s7 + $0xf8] sm:$0xf]
    %v4535 = vld [vmem:[%s7 + $0xfc] sm:$0xff]
    %v4536 = vld [vmem:[%s7 + $0x104] sm:$0xf]
    %v4537 = vld [vmem:[%s7 + $0x108] sm:$0xff]
    %v4538 = vld [vmem:[%s7 + $0x110] sm:$0xf]
    %v4539 = vld [vmem:[%s7 + $0x114] sm:$0xff]
    %v4540 = vld [vmem:[%s7 + $0x11c] sm:$0xf]
    %v4541 = vld [vmem:[%s7 + $0x120] sm:$0xff]
    %v4542 = vld [vmem:[%s7 + $0x128] sm:$0xf]
    %v4543 = vld [vmem:[%s7 + $0x12c] sm:$0xff]
    %v4544 = vld [vmem:[%s7 + $0x134] sm:$0xf]
    %v4545 = vld [vmem:[%s7 + $0x138] sm:$0xff]
    %v4546 = vld [vmem:[%s7 + $0x140] sm:$0xf]
    %v4547 = vld [vmem:[%s7 + $0x144] sm:$0xff]
    %v4548 = vld [vmem:[%s7 + $0x14c] sm:$0xf]
    %v4549 = vld [vmem:[%s7 + $0x150] sm:$0xff]
    %v4550 = vld [vmem:[%s7 + $0x158] sm:$0xf]
    %v4551 = vld [vmem:[%s7 + $0x15c] sm:$0xff]
    %v4552 = vld [vmem:[%s7 + $0x164] sm:$0xf]
    %v4553 = vld [vmem:[%s7 + $0x168] sm:$0xff]
    %v4554 = vld [vmem:[%s7 + $0x170] sm:$0xf]
    %v4555 = vld [vmem:[%s7 + $0x174] sm:$0xff]
    %v4556 = vld [vmem:[%s7 + $0x17c] sm:$0xf]
    %v4557 = vld [vmem:[%s7 + $0x180] sm:$0xff]
    %v4558 = vld [vmem:[%s7 + $0x188] sm:$0xf]
    %v4559 = vld [vmem:[%s7 + $0x18c] sm:$0xff]
    %v4560 = vld [vmem:[%s7 + $0x194] sm:$0xf]
    %v4561 = vld [vmem:[%s7 + $0x198] sm:$0xff]
    %v4562 = vld [vmem:[%s7 + $0x1a0] sm:$0xf]
    %v4563 = vld [vmem:[%s7 + $0x1a4] sm:$0xff]
    %v4564 = vld [vmem:[%s7 + $0x1ac] sm:$0xf]
    %v4565 = vld [vmem:[%s7 + $0x1b0] sm:$0xff]
    %v4566 = vld [vmem:[%s7 + $0x1b8] sm:$0xf]
    %v4567 = vld [vmem:[%s7 + $0x1bc] sm:$0xff]
    %v4568 = vld [vmem:[%s7 + $0x1c4] sm:$0xf]
    %v4569 = vld [vmem:[%s7 + $0x1c8] sm:$0xff]
    %v4570 = vld [vmem:[%s7 + $0x1d0] sm:$0xf]
    %v4571 = vld [vmem:[%s7 + $0x1d4] sm:$0xff]
    %v4572 = vld [vmem:[%s7 + $0x1dc] sm:$0xf]
    %v4573 = vld [vmem:[%s7 + $0x1e0] sm:$0xff]
    %v4574 = vld [vmem:[%s7 + $0x1e8] sm:$0xf]
    %v4575 = vld [vmem:[%s7 + $0x1ec] sm:$0xff]
    %v4576 = vld [vmem:[%s7 + $0x1f4] sm:$0xf]
    %v4577 = vld [vmem:[%s7 + $0x1f8] sm:$0xff]
    %v4578 = vld [vmem:[%s7 + $0x200] sm:$0xf]
    %v4579 = vld [vmem:[%s7 + $0x204] sm:$0xff]
    %v4580 = vld [vmem:[%s7 + $0x20c] sm:$0xf]
    %v4581 = vld [vmem:[%s7 + $0x210] sm:$0xff]
    %v4582 = vld [vmem:[%s7 + $0x218] sm:$0xf]
    %v4583 = vld [vmem:[%s7 + $0x21c] sm:$0xff]
    %v4584 = vld [vmem:[%s7 + $0x224] sm:$0xf]
    %v4585 = vld [vmem:[%s7 + $0x228] sm:$0xff]
    %v4586 = vld [vmem:[%s7 + $0x230] sm:$0xf]
    %v4587 = vld [vmem:[%s7 + $0x234] sm:$0xff]
    %v4588 = vld [vmem:[%s7 + $0x23c] sm:$0xf]
    %v4589 = vld [vmem:[%s7 + $0x240] sm:$0xff]
    %v4590 = vld [vmem:[%s7 + $0x248] sm:$0xf]
    %v4591 = vld [vmem:[%s7 + $0x24c] sm:$0xff]
    %v4592 = vld [vmem:[%s7 + $0x254] sm:$0xf]
    %v4593 = vld [vmem:[%s7 + $0x258] sm:$0xff]
    %v4594 = vld [vmem:[%s7 + $0x260] sm:$0xf]
    %v4595 = vld [vmem:[%s7 + $0x264] sm:$0xff]
    %v4596 = vld [vmem:[%s7 + $0x26c] sm:$0xf]
    %v4597 = vld [vmem:[%s7 + $0x270] sm:$0xff]
    %v4598 = vld [vmem:[%s7 + $0x278] sm:$0xf]
    %v4599 = vld [vmem:[%s7 + $0x27c] sm:$0xff]
    %v4600 = vld [vmem:[%s7 + $0x284] sm:$0xf]
    %v4601 = vld [vmem:[%s7 + $0x288] sm:$0xff]
    %v4602 = vld [vmem:[%s7 + $0x290] sm:$0xf]
    %v4603 = vld [vmem:[%s7 + $0x294] sm:$0xff]
    %v4604 = vld [vmem:[%s7 + $0x29c] sm:$0xf]
    %v4605 = vld [vmem:[%s7 + $0x2a0] sm:$0xff]
    %v4606 = vld [vmem:[%s7 + $0x2a8] sm:$0xf]
    %v4607 = vld [vmem:[%s7 + $0x2ac] sm:$0xff]
    %v4608 = vld [vmem:[%s7 + $0x2b4] sm:$0xf]
    %v4609 = vld [vmem:[%s7 + $0x2b8] sm:$0xff]
    %v4610 = vld [vmem:[%s7 + $0x2c0] sm:$0xf]
    %v4611 = vld [vmem:[%s7 + $0x2c4] sm:$0xff]
    %v4612 = vld [vmem:[%s7 + $0x2cc] sm:$0xf]
    %v4613 = vld [vmem:[%s7 + $0x2d0] sm:$0xff]
    %v4614 = vld [vmem:[%s7 + $0x2d8] sm:$0xf]
    %v4615 = vld [vmem:[%s7 + $0x2dc] sm:$0xff]
    %v4616 = vld [vmem:[%s7 + $0x2e4] sm:$0xf]
    %v4617 = vld [vmem:[%s7 + $0x2e8] sm:$0xff]
    %v4618 = vld [vmem:[%s7 + $0x2f0] sm:$0xf]
    %v4619 = vld [vmem:[%s7 + $0x2f4] sm:$0xff]
    %v4620 = vld [vmem:[%s7 + $0x2fc] sm:$0xf]
    %v4621 = vld [vmem:[%s8] sm:$0x7]
    %v4623 = vperm.slane %v4621, 0
    %v4624 = vperm.slane %v4621, 1
    %v4625 = vperm.slane %v4621, 2
    %v4757 = vunpack.c.l.b16 %v4493
    %v4758 = vunpack.c.h.b16 %v4493
    %v4759 = vunpack.c.l.b16 %v4494
    %v4760 = vunpack.c.l.b16 %v4495
    %v4761 = vunpack.c.h.b16 %v4495
    %v4762 = vunpack.c.l.b16 %v4496
    %v4763 = vunpack.c.l.b16 %v4497
    %v4764 = vunpack.c.h.b16 %v4497
    %v4765 = vunpack.c.l.b16 %v4498
    %v4766 = vunpack.c.l.b16 %v4499
    %v4767 = vunpack.c.h.b16 %v4499
    %v4768 = vunpack.c.l.b16 %v4500
    %v4769 = vunpack.c.l.b16 %v4501
    %v4770 = vunpack.c.h.b16 %v4501
    %v4771 = vunpack.c.l.b16 %v4502
    %v4772 = vunpack.c.l.b16 %v4503
    %v4773 = vunpack.c.h.b16 %v4503
    %v4774 = vunpack.c.l.b16 %v4504
    %v4775 = vunpack.c.l.b16 %v4505
    %v4776 = vunpack.c.h.b16 %v4505
    %v4777 = vunpack.c.l.b16 %v4506
    %v4778 = vunpack.c.l.b16 %v4507
    %v4779 = vunpack.c.h.b16 %v4507
    %v4780 = vunpack.c.l.b16 %v4508
    %v4781 = vunpack.c.l.b16 %v4509
    %v4782 = vunpack.c.h.b16 %v4509
    %v4783 = vunpack.c.l.b16 %v4510
    %v4784 = vunpack.c.l.b16 %v4511
    %v4785 = vunpack.c.h.b16 %v4511
    %v4786 = vunpack.c.l.b16 %v4512
    %v4787 = vunpack.c.l.b16 %v4513
    %v4788 = vunpack.c.h.b16 %v4513
    %v4789 = vunpack.c.l.b16 %v4514
    %v4790 = vunpack.c.l.b16 %v4515
    %v4791 = vunpack.c.h.b16 %v4515
    %v4792 = vunpack.c.l.b16 %v4516
    %v4793 = vunpack.c.l.b16 %v4517
    %v4794 = vunpack.c.h.b16 %v4517
    %v4795 = vunpack.c.l.b16 %v4518
    %v4796 = vunpack.c.l.b16 %v4519
    %v4797 = vunpack.c.h.b16 %v4519
    %v4798 = vunpack.c.l.b16 %v4520
    %v4799 = vunpack.c.l.b16 %v4521
    %v4800 = vunpack.c.h.b16 %v4521
    %v4801 = vunpack.c.l.b16 %v4522
    %v4802 = vunpack.c.l.b16 %v4523
    %v4803 = vunpack.c.h.b16 %v4523
    %v4804 = vunpack.c.l.b16 %v4524
    %v4805 = vunpack.c.l.b16 %v4525
    %v4806 = vunpack.c.h.b16 %v4525
    %v4807 = vunpack.c.l.b16 %v4526
    %v4808 = vunpack.c.l.b16 %v4527
    %v4809 = vunpack.c.h.b16 %v4527
    %v4810 = vunpack.c.l.b16 %v4528
    %v4811 = vunpack.c.l.b16 %v4529
    %v4812 = vunpack.c.h.b16 %v4529
    %v4813 = vunpack.c.l.b16 %v4530
    %v4814 = vunpack.c.l.b16 %v4531
    %v4815 = vunpack.c.h.b16 %v4531
    %v4816 = vunpack.c.l.b16 %v4532
    %v4817 = vunpack.c.l.b16 %v4533
    %v4818 = vunpack.c.h.b16 %v4533
    %v4819 = vunpack.c.l.b16 %v4534
    %v4820 = vunpack.c.l.b16 %v4535
    %v4821 = vunpack.c.h.b16 %v4535
    %v4822 = vunpack.c.l.b16 %v4536
    %v4823 = vunpack.c.l.b16 %v4537
    %v4824 = vunpack.c.h.b16 %v4537
    %v4825 = vunpack.c.l.b16 %v4538
    %v4826 = vunpack.c.l.b16 %v4539
    %v4827 = vunpack.c.h.b16 %v4539
    %v4828 = vunpack.c.l.b16 %v4540
    %v4829 = vunpack.c.l.b16 %v4541
    %v4830 = vunpack.c.h.b16 %v4541
    %v4831 = vunpack.c.l.b16 %v4542
    %v4832 = vunpack.c.l.b16 %v4543
    %v4833 = vunpack.c.h.b16 %v4543
    %v4834 = vunpack.c.l.b16 %v4544
    %v4835 = vunpack.c.l.b16 %v4545
    %v4836 = vunpack.c.h.b16 %v4545
    %v4837 = vunpack.c.l.b16 %v4546
    %v4838 = vunpack.c.l.b16 %v4547
    %v4839 = vunpack.c.h.b16 %v4547
    %v4840 = vunpack.c.l.b16 %v4548
    %v4841 = vunpack.c.l.b16 %v4549
    %v4842 = vunpack.c.h.b16 %v4549
    %v4843 = vunpack.c.l.b16 %v4550
    %v4844 = vunpack.c.l.b16 %v4551
    %v4845 = vunpack.c.h.b16 %v4551
    %v4846 = vunpack.c.l.b16 %v4552
    %v4847 = vunpack.c.l.b16 %v4553
    %v4848 = vunpack.c.h.b16 %v4553
    %v4849 = vunpack.c.l.b16 %v4554
    %v4850 = vunpack.c.l.b16 %v4555
    %v4851 = vunpack.c.h.b16 %v4555
    %v4852 = vunpack.c.l.b16 %v4556
    %v4853 = vunpack.c.l.b16 %v4557
    %v4854 = vunpack.c.h.b16 %v4557
    %v4855 = vunpack.c.l.b16 %v4558
    %v4856 = vunpack.c.l.b16 %v4559
    %v4857 = vunpack.c.h.b16 %v4559
    %v4858 = vunpack.c.l.b16 %v4560
    %v4859 = vunpack.c.l.b16 %v4561
    %v4860 = vunpack.c.h.b16 %v4561
    %v4861 = vunpack.c.l.b16 %v4562
    %v4862 = vunpack.c.l.b16 %v4563
    %v4863 = vunpack.c.h.b16 %v4563
    %v4864 = vunpack.c.l.b16 %v4564
    %v4865 = vunpack.c.l.b16 %v4565
    %v4866 = vunpack.c.h.b16 %v4565
    %v4867 = vunpack.c.l.b16 %v4566
    %v4868 = vunpack.c.l.b16 %v4567
    %v4869 = vunpack.c.h.b16 %v4567
    %v4870 = vunpack.c.l.b16 %v4568
    %v4871 = vunpack.c.l.b16 %v4569
    %v4872 = vunpack.c.h.b16 %v4569
    %v4873 = vunpack.c.l.b16 %v4570
    %v4874 = vunpack.c.l.b16 %v4571
    %v4875 = vunpack.c.h.b16 %v4571
    %v4876 = vunpack.c.l.b16 %v4572
    %v4877 = vunpack.c.l.b16 %v4573
    %v4878 = vunpack.c.h.b16 %v4573
    %v4879 = vunpack.c.l.b16 %v4574
    %v4880 = vunpack.c.l.b16 %v4575
    %v4881 = vunpack.c.h.b16 %v4575
    %v4882 = vunpack.c.l.b16 %v4576
    %v4883 = vunpack.c.l.b16 %v4577
    %v4884 = vunpack.c.h.b16 %v4577
    %v4885 = vunpack.c.l.b16 %v4578
    %v4886 = vunpack.c.l.b16 %v4579
    %v4887 = vunpack.c.h.b16 %v4579
    %v4888 = vunpack.c.l.b16 %v4580
    %v4889 = vunpack.c.l.b16 %v4581
    %v4890 = vunpack.c.h.b16 %v4581
    %v4891 = vunpack.c.l.b16 %v4582
    %v4892 = vunpack.c.l.b16 %v4583
    %v4893 = vunpack.c.h.b16 %v4583
    %v4894 = vunpack.c.l.b16 %v4584
    %v4895 = vunpack.c.l.b16 %v4585
    %v4896 = vunpack.c.h.b16 %v4585
    %v4897 = vunpack.c.l.b16 %v4586
    %v4898 = vunpack.c.l.b16 %v4587
    %v4899 = vunpack.c.h.b16 %v4587
    %v4900 = vunpack.c.l.b16 %v4588
    %v4901 = vunpack.c.l.b16 %v4589
    %v4902 = vunpack.c.h.b16 %v4589
    %v4903 = vunpack.c.l.b16 %v4590
    %v4904 = vunpack.c.l.b16 %v4591
    %v4905 = vunpack.c.h.b16 %v4591
    %v4906 = vunpack.c.l.b16 %v4592
    %v4907 = vunpack.c.l.b16 %v4593
    %v4908 = vunpack.c.h.b16 %v4593
    %v4909 = vunpack.c.l.b16 %v4594
    %v4910 = vunpack.c.l.b16 %v4595
    %v4911 = vunpack.c.h.b16 %v4595
    %v4912 = vunpack.c.l.b16 %v4596
    %v4913 = vunpack.c.l.b16 %v4597
    %v4914 = vunpack.c.h.b16 %v4597
    %v4915 = vunpack.c.l.b16 %v4598
    %v4916 = vunpack.c.l.b16 %v4599
    %v4917 = vunpack.c.h.b16 %v4599
    %v4918 = vunpack.c.l.b16 %v4600
    %v4919 = vunpack.c.l.b16 %v4601
    %v4920 = vunpack.c.h.b16 %v4601
    %v4921 = vunpack.c.l.b16 %v4602
    %v4922 = vunpack.c.l.b16 %v4603
    %v4923 = vunpack.c.h.b16 %v4603
    %v4924 = vunpack.c.l.b16 %v4604
    %v4925 = vunpack.c.l.b16 %v4605
    %v4926 = vunpack.c.h.b16 %v4605
    %v4927 = vunpack.c.l.b16 %v4606
    %v4928 = vunpack.c.l.b16 %v4607
    %v4929 = vunpack.c.h.b16 %v4607
    %v4930 = vunpack.c.l.b16 %v4608
    %v4931 = vunpack.c.l.b16 %v4609
    %v4932 = vunpack.c.h.b16 %v4609
    %v4933 = vunpack.c.l.b16 %v4610
    %v4934 = vunpack.c.l.b16 %v4611
    %v4935 = vunpack.c.h.b16 %v4611
    %v4936 = vunpack.c.l.b16 %v4612
    %v4937 = vunpack.c.l.b16 %v4613
    %v4938 = vunpack.c.h.b16 %v4613
    %v4939 = vunpack.c.l.b16 %v4614
    %v4940 = vunpack.c.l.b16 %v4615
    %v4941 = vunpack.c.h.b16 %v4615
    %v4942 = vunpack.c.l.b16 %v4616
    %v4943 = vunpack.c.l.b16 %v4617
    %v4944 = vunpack.c.h.b16 %v4617
    %v4945 = vunpack.c.l.b16 %v4618
    %v4946 = vunpack.c.l.b16 %v4619
    %v4947 = vunpack.c.h.b16 %v4619
    %v4948 = vunpack.c.l.b16 %v4620
    %v4949 = vpack.c.b16 %v4760, %v4757
    %v4950 = vpack.c.b16 %v4761, %v4758
    %v4951 = vpack.c.b16 %v4762, %v4759
    %v4952 = vpack.c.b16 %v4766, %v4763
    %v4953 = vpack.c.b16 %v4767, %v4764
    %v4954 = vpack.c.b16 %v4768, %v4765
    %v4955 = vpack.c.b16 %v4772, %v4769
    %v4956 = vpack.c.b16 %v4773, %v4770
    %v4957 = vpack.c.b16 %v4774, %v4771
    %v4958 = vpack.c.b16 %v4778, %v4775
    %v4959 = vpack.c.b16 %v4779, %v4776
    %v4960 = vpack.c.b16 %v4780, %v4777
    %v4961 = vpack.c.b16 %v4784, %v4781
    %v4962 = vpack.c.b16 %v4785, %v4782
    %v4963 = vpack.c.b16 %v4786, %v4783
    %v4964 = vpack.c.b16 %v4790, %v4787
    %v4965 = vpack.c.b16 %v4791, %v4788
    %v4966 = vpack.c.b16 %v4792, %v4789
    %v4967 = vpack.c.b16 %v4796, %v4793
    %v4968 = vpack.c.b16 %v4797, %v4794
    %v4969 = vpack.c.b16 %v4798, %v4795
    %v4970 = vpack.c.b16 %v4802, %v4799
    %v4971 = vpack.c.b16 %v4803, %v4800
    %v4972 = vpack.c.b16 %v4804, %v4801
    %v4973 = vpack.c.b16 %v4808, %v4805
    %v4974 = vpack.c.b16 %v4809, %v4806
    %v4975 = vpack.c.b16 %v4810, %v4807
    %v4976 = vpack.c.b16 %v4814, %v4811
    %v4977 = vpack.c.b16 %v4815, %v4812
    %v4978 = vpack.c.b16 %v4816, %v4813
    %v4979 = vpack.c.b16 %v4820, %v4817
    %v4980 = vpack.c.b16 %v4821, %v4818
    %v4981 = vpack.c.b16 %v4822, %v4819
    %v4982 = vpack.c.b16 %v4826, %v4823
    %v4983 = vpack.c.b16 %v4827, %v4824
    %v4984 = vpack.c.b16 %v4828, %v4825
    %v4985 = vpack.c.b16 %v4832, %v4829
    %v4986 = vpack.c.b16 %v4833, %v4830
    %v4987 = vpack.c.b16 %v4834, %v4831
    %v4988 = vpack.c.b16 %v4838, %v4835
    %v4989 = vpack.c.b16 %v4839, %v4836
    %v4990 = vpack.c.b16 %v4840, %v4837
    %v4991 = vpack.c.b16 %v4844, %v4841
    %v4992 = vpack.c.b16 %v4845, %v4842
    %v4993 = vpack.c.b16 %v4846, %v4843
    %v4994 = vpack.c.b16 %v4850, %v4847
    %v4995 = vpack.c.b16 %v4851, %v4848
    %v4996 = vpack.c.b16 %v4852, %v4849
    %v4997 = vpack.c.b16 %v4856, %v4853
    %v4998 = vpack.c.b16 %v4857, %v4854
    %v4999 = vpack.c.b16 %v4858, %v4855
    %v5000 = vpack.c.b16 %v4862, %v4859
    %v5001 = vpack.c.b16 %v4863, %v4860
    %v5002 = vpack.c.b16 %v4864, %v4861
    %v5003 = vpack.c.b16 %v4868, %v4865
    %v5004 = vpack.c.b16 %v4869, %v4866
    %v5005 = vpack.c.b16 %v4870, %v4867
    %v5006 = vpack.c.b16 %v4874, %v4871
    %v5007 = vpack.c.b16 %v4875, %v4872
    %v5008 = vpack.c.b16 %v4876, %v4873
    %v5009 = vpack.c.b16 %v4880, %v4877
    %v5010 = vpack.c.b16 %v4881, %v4878
    %v5011 = vpack.c.b16 %v4882, %v4879
    %v5012 = vpack.c.b16 %v4886, %v4883
    %v5013 = vpack.c.b16 %v4887, %v4884
    %v5014 = vpack.c.b16 %v4888, %v4885
    %v5015 = vpack.c.b16 %v4892, %v4889
    %v5016 = vpack.c.b16 %v4893, %v4890
    %v5017 = vpack.c.b16 %v4894, %v4891
    %v5018 = vpack.c.b16 %v4898, %v4895
    %v5019 = vpack.c.b16 %v4899, %v4896
    %v5020 = vpack.c.b16 %v4900, %v4897
    %v5021 = vpack.c.b16 %v4904, %v4901
    %v5022 = vpack.c.b16 %v4905, %v4902
    %v5023 = vpack.c.b16 %v4906, %v4903
    %v5024 = vpack.c.b16 %v4910, %v4907
    %v5025 = vpack.c.b16 %v4911, %v4908
    %v5026 = vpack.c.b16 %v4912, %v4909
    %v5027 = vpack.c.b16 %v4916, %v4913
    %v5028 = vpack.c.b16 %v4917, %v4914
    %v5029 = vpack.c.b16 %v4918, %v4915
    %v5030 = vpack.c.b16 %v4922, %v4919
    %v5031 = vpack.c.b16 %v4923, %v4920
    %v5032 = vpack.c.b16 %v4924, %v4921
    %v5033 = vpack.c.b16 %v4928, %v4925
    %v5034 = vpack.c.b16 %v4929, %v4926
    %v5035 = vpack.c.b16 %v4930, %v4927
    %v5036 = vpack.c.b16 %v4934, %v4931
    %v5037 = vpack.c.b16 %v4935, %v4932
    %v5038 = vpack.c.b16 %v4936, %v4933
    %v5039 = vpack.c.b16 %v4940, %v4937
    %v5040 = vpack.c.b16 %v4941, %v4938
    %v5041 = vpack.c.b16 %v4942, %v4939
    %v5042 = vpack.c.b16 %v4946, %v4943
    %v5043 = vpack.c.b16 %v4947, %v4944
    %v5044 = vpack.c.b16 %v4948, %v4945
    %5141 = vmatpush.bf16.msra.mxu0 %v4970
    %5142 = vmatpush.bf16.msra.mxu0 %v4967
    %5143 = vmatpush.bf16.msra.mxu0 %v4964
    %5144 = vmatpush.bf16.msra.mxu0 %v4961
    %5145 = vmatpush.bf16.msra.mxu0 %v4958
    %5146 = vmatpush.bf16.msra.mxu0 %v4955
    %5147 = vmatpush.bf16.msra.mxu0 %v4952
    %5148 = vmatpush.bf16.msra.mxu0 %v4949
    %5149 = vmatmul.bf16.gmra.mxu0 %v4461
    %v5150 = vpop.f32.mrf.mxu0
    %v5151 = vadd.f32 %v4623, %v5150
    %v5152 = vpop.f32.mrf.mxu0
    %v5153 = vadd.f32 %v4623, %v5152
    %5154 = vmatmul.bf16.gmra.mxu0 %v4465
    %v5155 = vpop.f32.mrf.mxu0
    %v5156 = vadd.f32 %v4623, %v5155
    %v5157 = vpop.f32.mrf.mxu0
    %v5158 = vadd.f32 %v4623, %v5157
    %5159 = vmatmul.bf16.gmra.mxu0 %v4469
    %v5160 = vpop.f32.mrf.mxu0
    %v5161 = vadd.f32 %v4623, %v5160
    %v5162 = vpop.f32.mrf.mxu0
    %v5163 = vadd.f32 %v4623, %v5162
    %5164 = vmatmul.bf16.gmra.mxu0 %v4473
    %v5165 = vpop.f32.mrf.mxu0
    %v5166 = vadd.f32 %v4623, %v5165
    %v5167 = vpop.f32.mrf.mxu0
    %v5168 = vadd.f32 %v4623, %v5167
    %5169 = vmatmul.bf16.gmra.mxu0 %v4477
    %v5170 = vpop.f32.mrf.mxu0
    %v5171 = vadd.f32 %v4623, %v5170
    %v5172 = vpop.f32.mrf.mxu0
    %v5173 = vadd.f32 %v4623, %v5172
    %5174 = vmatmul.bf16.gmra.mxu0 %v4481
    %v5175 = vpop.f32.mrf.mxu0
    %v5176 = vadd.f32 %v4623, %v5175
    %v5177 = vpop.f32.mrf.mxu0
    %v5178 = vadd.f32 %v4623, %v5177
    %5179 = vmatmul.bf16.gmra.mxu0 %v4485
    %v5180 = vpop.f32.mrf.mxu0
    %v5181 = vadd.f32 %v4623, %v5180
    %v5182 = vpop.f32.mrf.mxu0
    %v5183 = vadd.f32 %v4623, %v5182
    %5184 = vmatmul.bf16.gmra.mxu0 %v4489
    %v5185 = vpop.f32.mrf.mxu0
    %v5186 = vadd.f32 %v4623, %v5185
    %v5187 = vpop.f32.mrf.mxu0
    %v5188 = vadd.f32 %v4623, %v5187
    %5189 = vdwg.mxu0
    %5190 = vmatpush.bf16.msra.mxu0 %v4994
    %5191 = vmatpush.bf16.msra.mxu0 %v4991
    %5192 = vmatpush.bf16.msra.mxu0 %v4988
    %5193 = vmatpush.bf16.msra.mxu0 %v4985
    %5194 = vmatpush.bf16.msra.mxu0 %v4982
    %5195 = vmatpush.bf16.msra.mxu0 %v4979
    %5196 = vmatpush.bf16.msra.mxu0 %v4976
    %5197 = vmatpush.bf16.msra.mxu0 %v4973
    %5198 = vmatmul.bf16.gmra.mxu0 %v4462
    %v5199 = vpop.f32.mrf.mxu0
    %v5200 = vadd.f32 %v5151, %v5199
    %v5201 = vpop.f32.mrf.mxu0
    %v5202 = vadd.f32 %v5153, %v5201
    %5203 = vmatmul.bf16.gmra.mxu0 %v4466
    %v5204 = vpop.f32.mrf.mxu0
    %v5205 = vadd.f32 %v5156, %v5204
    %v5206 = vpop.f32.mrf.mxu0
    %v5207 = vadd.f32 %v5158, %v5206
    %5208 = vmatmul.bf16.gmra.mxu0 %v4470
    %v5209 = vpop.f32.mrf.mxu0
    %v5210 = vadd.f32 %v5161, %v5209
    %v5211 = vpop.f32.mrf.mxu0
    %v5212 = vadd.f32 %v5163, %v5211
    %5213 = vmatmul.bf16.gmra.mxu0 %v4474
    %v5214 = vpop.f32.mrf.mxu0
    %v5215 = vadd.f32 %v5166, %v5214
    %v5216 = vpop.f32.mrf.mxu0
    %v5217 = vadd.f32 %v5168, %v5216
    %5218 = vmatmul.bf16.gmra.mxu0 %v4478
    %v5219 = vpop.f32.mrf.mxu0
    %v5220 = vadd.f32 %v5171, %v5219
    %v5221 = vpop.f32.mrf.mxu0
    %v5222 = vadd.f32 %v5173, %v5221
    %5223 = vmatmul.bf16.gmra.mxu0 %v4482
    %v5224 = vpop.f32.mrf.mxu0
    %v5225 = vadd.f32 %v5176, %v5224
    %v5226 = vpop.f32.mrf.mxu0
    %v5227 = vadd.f32 %v5178, %v5226
    %5228 = vmatmul.bf16.gmra.mxu0 %v4486
    %v5229 = vpop.f32.mrf.mxu0
    %v5230 = vadd.f32 %v5181, %v5229
    %v5231 = vpop.f32.mrf.mxu0
    %v5232 = vadd.f32 %v5183, %v5231
    %5233 = vmatmul.bf16.gmra.mxu0 %v4490
    %v5234 = vpop.f32.mrf.mxu0
    %v5235 = vadd.f32 %v5186, %v5234
    %v5236 = vpop.f32.mrf.mxu0
    %v5237 = vadd.f32 %v5188, %v5236
    %5238 = vdwg.mxu0
    %5239 = vmatpush.bf16.msra.mxu0 %v5018
    %5240 = vmatpush.bf16.msra.mxu0 %v5015
    %5241 = vmatpush.bf16.msra.mxu0 %v5012
    %5242 = vmatpush.bf16.msra.mxu0 %v5009
    %5243 = vmatpush.bf16.msra.mxu0 %v5006
    %5244 = vmatpush.bf16.msra.mxu0 %v5003
    %5245 = vmatpush.bf16.msra.mxu0 %v5000
    %5246 = vmatpush.bf16.msra.mxu0 %v4997
    %5247 = vmatmul.bf16.gmra.mxu0 %v4463
    %v5248 = vpop.f32.mrf.mxu0
    %v5249 = vadd.f32 %v5200, %v5248
    %v5250 = vpop.f32.mrf.mxu0
    %v5251 = vadd.f32 %v5202, %v5250
    %5252 = vmatmul.bf16.gmra.mxu0 %v4467
    %v5253 = vpop.f32.mrf.mxu0
    %v5254 = vadd.f32 %v5205, %v5253
    %v5255 = vpop.f32.mrf.mxu0
    %v5256 = vadd.f32 %v5207, %v5255
    %5257 = vmatmul.bf16.gmra.mxu0 %v4471
    %v5258 = vpop.f32.mrf.mxu0
    %v5259 = vadd.f32 %v5210, %v5258
    %v5260 = vpop.f32.mrf.mxu0
    %v5261 = vadd.f32 %v5212, %v5260
    %5262 = vmatmul.bf16.gmra.mxu0 %v4475
    %v5263 = vpop.f32.mrf.mxu0
    %v5264 = vadd.f32 %v5215, %v5263
    %v5265 = vpop.f32.mrf.mxu0
    %v5266 = vadd.f32 %v5217, %v5265
    %5267 = vmatmul.bf16.gmra.mxu0 %v4479
    %v5268 = vpop.f32.mrf.mxu0
    %v5269 = vadd.f32 %v5220, %v5268
    %v5270 = vpop.f32.mrf.mxu0
    %v5271 = vadd.f32 %v5222, %v5270
    %5272 = vmatmul.bf16.gmra.mxu0 %v4483
    %v5273 = vpop.f32.mrf.mxu0
    %v5274 = vadd.f32 %v5225, %v5273
    %v5275 = vpop.f32.mrf.mxu0
    %v5276 = vadd.f32 %v5227, %v5275
    %5277 = vmatmul.bf16.gmra.mxu0 %v4487
    %v5278 = vpop.f32.mrf.mxu0
    %v5279 = vadd.f32 %v5230, %v5278
    %v5280 = vpop.f32.mrf.mxu0
    %v5281 = vadd.f32 %v5232, %v5280
    %5282 = vmatmul.bf16.gmra.mxu0 %v4491
    %v5283 = vpop.f32.mrf.mxu0
    %v5284 = vadd.f32 %v5235, %v5283
    %v5285 = vpop.f32.mrf.mxu0
    %v5286 = vadd.f32 %v5237, %v5285
    %5287 = vdwg.mxu0
    %5288 = vmatpush.bf16.msra.mxu0 %v5042
    %5289 = vmatpush.bf16.msra.mxu0 %v5039
    %5290 = vmatpush.bf16.msra.mxu0 %v5036
    %5291 = vmatpush.bf16.msra.mxu0 %v5033
    %5292 = vmatpush.bf16.msra.mxu0 %v5030
    %5293 = vmatpush.bf16.msra.mxu0 %v5027
    %5294 = vmatpush.bf16.msra.mxu0 %v5024
    %5295 = vmatpush.bf16.msra.mxu0 %v5021
    %5296 = vmatmul.bf16.gmra.mxu0 %v4464
    %v5297 = vpop.f32.mrf.mxu0
    %v5298 = vadd.f32 %v5249, %v5297
    %v5299 = vpop.f32.mrf.mxu0
    %v5300 = vadd.f32 %v5251, %v5299
    %5301 = vmatmul.bf16.gmra.mxu0 %v4468
    %v5302 = vpop.f32.mrf.mxu0
    %v5303 = vadd.f32 %v5254, %v5302
    %v5304 = vpop.f32.mrf.mxu0
    %v5305 = vadd.f32 %v5256, %v5304
    %5306 = vmatmul.bf16.gmra.mxu0 %v4472
    %v5307 = vpop.f32.mrf.mxu0
    %v5308 = vadd.f32 %v5259, %v5307
    %v5309 = vpop.f32.mrf.mxu0
    %v5310 = vadd.f32 %v5261, %v5309
    %5311 = vmatmul.bf16.gmra.mxu0 %v4476
    %v5312 = vpop.f32.mrf.mxu0
    %v5313 = vadd.f32 %v5264, %v5312
    %v5314 = vpop.f32.mrf.mxu0
    %v5315 = vadd.f32 %v5266, %v5314
    %5316 = vmatmul.bf16.gmra.mxu0 %v4480
    %v5317 = vpop.f32.mrf.mxu0
    %v5318 = vadd.f32 %v5269, %v5317
    %v5319 = vpop.f32.mrf.mxu0
    %v5320 = vadd.f32 %v5271, %v5319
    %5321 = vmatmul.bf16.gmra.mxu0 %v4484
    %v5322 = vpop.f32.mrf.mxu0
    %v5323 = vadd.f32 %v5274, %v5322
    %v5324 = vpop.f32.mrf.mxu0
    %v5325 = vadd.f32 %v5276, %v5324
    %5326 = vmatmul.bf16.gmra.mxu0 %v4488
    %v5327 = vpop.f32.mrf.mxu0
    %v5328 = vadd.f32 %v5279, %v5327
    %v5329 = vpop.f32.mrf.mxu0
    %v5330 = vadd.f32 %v5281, %v5329
    %5331 = vmatmul.bf16.gmra.mxu0 %v4492
    %v5332 = vpop.f32.mrf.mxu0
    %v5333 = vadd.f32 %v5284, %v5332
    %v5334 = vpop.f32.mrf.mxu0
    %v5335 = vadd.f32 %v5286, %v5334
    %5336 = vdwg.mxu0
    %5337 = vmatpush.bf16.msra.mxu0 %v4971
    %5338 = vmatpush.bf16.msra.mxu0 %v4968
    %5339 = vmatpush.bf16.msra.mxu0 %v4965
    %5340 = vmatpush.bf16.msra.mxu0 %v4962
    %5341 = vmatpush.bf16.msra.mxu0 %v4959
    %5342 = vmatpush.bf16.msra.mxu0 %v4956
    %5343 = vmatpush.bf16.msra.mxu0 %v4953
    %5344 = vmatpush.bf16.msra.mxu0 %v4950
    %5345 = vmatmul.bf16.gmra.mxu0 %v4461
    %v5346 = vpop.f32.mrf.mxu0
    %v5347 = vadd.f32 %v4624, %v5346
    %v5348 = vpop.f32.mrf.mxu0
    %v5349 = vadd.f32 %v4624, %v5348
    %5350 = vmatmul.bf16.gmra.mxu0 %v4465
    %v5351 = vpop.f32.mrf.mxu0
    %v5352 = vadd.f32 %v4624, %v5351
    %v5353 = vpop.f32.mrf.mxu0
    %v5354 = vadd.f32 %v4624, %v5353
    %5355 = vmatmul.bf16.gmra.mxu0 %v4469
    %v5356 = vpop.f32.mrf.mxu0
    %v5357 = vadd.f32 %v4624, %v5356
    %v5358 = vpop.f32.mrf.mxu0
    %v5359 = vadd.f32 %v4624, %v5358
    %5360 = vmatmul.bf16.gmra.mxu0 %v4473
    %v5361 = vpop.f32.mrf.mxu0
    %v5362 = vadd.f32 %v4624, %v5361
    %v5363 = vpop.f32.mrf.mxu0
    %v5364 = vadd.f32 %v4624, %v5363
    %5365 = vmatmul.bf16.gmra.mxu0 %v4477
    %v5366 = vpop.f32.mrf.mxu0
    %v5367 = vadd.f32 %v4624, %v5366
    %v5368 = vpop.f32.mrf.mxu0
    %v5369 = vadd.f32 %v4624, %v5368
    %5370 = vmatmul.bf16.gmra.mxu0 %v4481
    %v5371 = vpop.f32.mrf.mxu0
    %v5372 = vadd.f32 %v4624, %v5371
    %v5373 = vpop.f32.mrf.mxu0
    %v5374 = vadd.f32 %v4624, %v5373
    %5375 = vmatmul.bf16.gmra.mxu0 %v4485
    %v5376 = vpop.f32.mrf.mxu0
    %v5377 = vadd.f32 %v4624, %v5376
    %v5378 = vpop.f32.mrf.mxu0
    %v5379 = vadd.f32 %v4624, %v5378
    %5380 = vmatmul.bf16.gmra.mxu0 %v4489
    %v5381 = vpop.f32.mrf.mxu0
    %v5382 = vadd.f32 %v4624, %v5381
    %v5383 = vpop.f32.mrf.mxu0
    %v5384 = vadd.f32 %v4624, %v5383
    %5385 = vdwg.mxu0
    %5386 = vmatpush.bf16.msra.mxu0 %v4995
    %5387 = vmatpush.bf16.msra.mxu0 %v4992
    %5388 = vmatpush.bf16.msra.mxu0 %v4989
    %5389 = vmatpush.bf16.msra.mxu0 %v4986
    %5390 = vmatpush.bf16.msra.mxu0 %v4983
    %5391 = vmatpush.bf16.msra.mxu0 %v4980
    %5392 = vmatpush.bf16.msra.mxu0 %v4977
    %5393 = vmatpush.bf16.msra.mxu0 %v4974
    %5394 = vmatmul.bf16.gmra.mxu0 %v4462
    %v5395 = vpop.f32.mrf.mxu0
    %v5396 = vadd.f32 %v5347, %v5395
    %v5397 = vpop.f32.mrf.mxu0
    %v5398 = vadd.f32 %v5349, %v5397
    %5399 = vmatmul.bf16.gmra.mxu0 %v4466
    %v5400 = vpop.f32.mrf.mxu0
    %v5401 = vadd.f32 %v5352, %v5400
    %v5402 = vpop.f32.mrf.mxu0
    %v5403 = vadd.f32 %v5354, %v5402
    %5404 = vmatmul.bf16.gmra.mxu0 %v4470
    %v5405 = vpop.f32.mrf.mxu0
    %v5406 = vadd.f32 %v5357, %v5405
    %v5407 = vpop.f32.mrf.mxu0
    %v5408 = vadd.f32 %v5359, %v5407
    %5409 = vmatmul.bf16.gmra.mxu0 %v4474
    %v5410 = vpop.f32.mrf.mxu0
    %v5411 = vadd.f32 %v5362, %v5410
    %v5412 = vpop.f32.mrf.mxu0
    %v5413 = vadd.f32 %v5364, %v5412
    %5414 = vmatmul.bf16.gmra.mxu0 %v4478
    %v5415 = vpop.f32.mrf.mxu0
    %v5416 = vadd.f32 %v5367, %v5415
    %v5417 = vpop.f32.mrf.mxu0
    %v5418 = vadd.f32 %v5369, %v5417
    %5419 = vmatmul.bf16.gmra.mxu0 %v4482
    %v5420 = vpop.f32.mrf.mxu0
    %v5421 = vadd.f32 %v5372, %v5420
    %v5422 = vpop.f32.mrf.mxu0
    %v5423 = vadd.f32 %v5374, %v5422
    %5424 = vmatmul.bf16.gmra.mxu0 %v4486
    %v5425 = vpop.f32.mrf.mxu0
    %v5426 = vadd.f32 %v5377, %v5425
    %v5427 = vpop.f32.mrf.mxu0
    %v5428 = vadd.f32 %v5379, %v5427
    %5429 = vmatmul.bf16.gmra.mxu0 %v4490
    %v5430 = vpop.f32.mrf.mxu0
    %v5431 = vadd.f32 %v5382, %v5430
    %v5432 = vpop.f32.mrf.mxu0
    %v5433 = vadd.f32 %v5384, %v5432
    %5434 = vdwg.mxu0
    %5435 = vmatpush.bf16.msra.mxu0 %v5019
    %5436 = vmatpush.bf16.msra.mxu0 %v5016
    %5437 = vmatpush.bf16.msra.mxu0 %v5013
    %5438 = vmatpush.bf16.msra.mxu0 %v5010
    %5439 = vmatpush.bf16.msra.mxu0 %v5007
    %5440 = vmatpush.bf16.msra.mxu0 %v5004
    %5441 = vmatpush.bf16.msra.mxu0 %v5001
    %5442 = vmatpush.bf16.msra.mxu0 %v4998
    %5443 = vmatmul.bf16.gmra.mxu0 %v4463
    %v5444 = vpop.f32.mrf.mxu0
    %v5445 = vadd.f32 %v5396, %v5444
    %v5446 = vpop.f32.mrf.mxu0
    %v5447 = vadd.f32 %v5398, %v5446
    %5448 = vmatmul.bf16.gmra.mxu0 %v4467
    %v5449 = vpop.f32.mrf.mxu0
    %v5450 = vadd.f32 %v5401, %v5449
    %v5451 = vpop.f32.mrf.mxu0
    %v5452 = vadd.f32 %v5403, %v5451
    %5453 = vmatmul.bf16.gmra.mxu0 %v4471
    %v5454 = vpop.f32.mrf.mxu0
    %v5455 = vadd.f32 %v5406, %v5454
    %v5456 = vpop.f32.mrf.mxu0
    %v5457 = vadd.f32 %v5408, %v5456
    %5458 = vmatmul.bf16.gmra.mxu0 %v4475
    %v5459 = vpop.f32.mrf.mxu0
    %v5460 = vadd.f32 %v5411, %v5459
    %v5461 = vpop.f32.mrf.mxu0
    %v5462 = vadd.f32 %v5413, %v5461
    %5463 = vmatmul.bf16.gmra.mxu0 %v4479
    %v5464 = vpop.f32.mrf.mxu0
    %v5465 = vadd.f32 %v5416, %v5464
    %v5466 = vpop.f32.mrf.mxu0
    %v5467 = vadd.f32 %v5418, %v5466
    %5468 = vmatmul.bf16.gmra.mxu0 %v4483
    %v5469 = vpop.f32.mrf.mxu0
    %v5470 = vadd.f32 %v5421, %v5469
    %v5471 = vpop.f32.mrf.mxu0
    %v5472 = vadd.f32 %v5423, %v5471
    %5473 = vmatmul.bf16.gmra.mxu0 %v4487
    %v5474 = vpop.f32.mrf.mxu0
    %v5475 = vadd.f32 %v5426, %v5474
    %v5476 = vpop.f32.mrf.mxu0
    %v5477 = vadd.f32 %v5428, %v5476
    %5478 = vmatmul.bf16.gmra.mxu0 %v4491
    %v5479 = vpop.f32.mrf.mxu0
    %v5480 = vadd.f32 %v5431, %v5479
    %v5481 = vpop.f32.mrf.mxu0
    %v5482 = vadd.f32 %v5433, %v5481
    %5483 = vdwg.mxu0
    %5484 = vmatpush.bf16.msra.mxu0 %v5043
    %5485 = vmatpush.bf16.msra.mxu0 %v5040
    %5486 = vmatpush.bf16.msra.mxu0 %v5037
    %5487 = vmatpush.bf16.msra.mxu0 %v5034
    %5488 = vmatpush.bf16.msra.mxu0 %v5031
    %5489 = vmatpush.bf16.msra.mxu0 %v5028
    %5490 = vmatpush.bf16.msra.mxu0 %v5025
    %5491 = vmatpush.bf16.msra.mxu0 %v5022
    %5492 = vmatmul.bf16.gmra.mxu0 %v4464
    %v5493 = vpop.f32.mrf.mxu0
    %v5494 = vadd.f32 %v5445, %v5493
    %v5495 = vpop.f32.mrf.mxu0
    %v5496 = vadd.f32 %v5447, %v5495
    %5497 = vmatmul.bf16.gmra.mxu0 %v4468
    %v5498 = vpop.f32.mrf.mxu0
    %v5499 = vadd.f32 %v5450, %v5498
    %v5500 = vpop.f32.mrf.mxu0
    %v5501 = vadd.f32 %v5452, %v5500
    %5502 = vmatmul.bf16.gmra.mxu0 %v4472
    %v5503 = vpop.f32.mrf.mxu0
    %v5504 = vadd.f32 %v5455, %v5503
    %v5505 = vpop.f32.mrf.mxu0
    %v5506 = vadd.f32 %v5457, %v5505
    %5507 = vmatmul.bf16.gmra.mxu0 %v4476
    %v5508 = vpop.f32.mrf.mxu0
    %v5509 = vadd.f32 %v5460, %v5508
    %v5510 = vpop.f32.mrf.mxu0
    %v5511 = vadd.f32 %v5462, %v5510
    %5512 = vmatmul.bf16.gmra.mxu0 %v4480
    %v5513 = vpop.f32.mrf.mxu0
    %v5514 = vadd.f32 %v5465, %v5513
    %v5515 = vpop.f32.mrf.mxu0
    %v5516 = vadd.f32 %v5467, %v5515
    %5517 = vmatmul.bf16.gmra.mxu0 %v4484
    %v5518 = vpop.f32.mrf.mxu0
    %v5519 = vadd.f32 %v5470, %v5518
    %v5520 = vpop.f32.mrf.mxu0
    %v5521 = vadd.f32 %v5472, %v5520
    %5522 = vmatmul.bf16.gmra.mxu0 %v4488
    %v5523 = vpop.f32.mrf.mxu0
    %v5524 = vadd.f32 %v5475, %v5523
    %v5525 = vpop.f32.mrf.mxu0
    %v5526 = vadd.f32 %v5477, %v5525
    %5527 = vmatmul.bf16.gmra.mxu0 %v4492
    %v5528 = vpop.f32.mrf.mxu0
    %v5529 = vadd.f32 %v5480, %v5528
    %v5530 = vpop.f32.mrf.mxu0
    %v5531 = vadd.f32 %v5482, %v5530
    %5532 = vdwg.mxu0
    %5533 = vmatpush.bf16.msra.mxu0 %v4972
    %5534 = vmatpush.bf16.msra.mxu0 %v4969
    %5535 = vmatpush.bf16.msra.mxu0 %v4966
    %5536 = vmatpush.bf16.msra.mxu0 %v4963
    %5537 = vmatpush.bf16.msra.mxu0 %v4960
    %5538 = vmatpush.bf16.msra.mxu0 %v4957
    %5539 = vmatpush.bf16.msra.mxu0 %v4954
    %5540 = vmatpush.bf16.msra.mxu0 %v4951
    %5541 = vmatmul.bf16.gmra.mxu0 %v4461
    %v5542 = vpop.f32.mrf.mxu0
    %v5543 = vadd.f32 %v4625, %v5542
    %v5544 = vpop.f32.mrf.mxu0
    %v5545 = vadd.f32 %v4625, %v5544
    %5546 = vmatmul.bf16.gmra.mxu0 %v4465
    %v5547 = vpop.f32.mrf.mxu0
    %v5548 = vadd.f32 %v4625, %v5547
    %v5549 = vpop.f32.mrf.mxu0
    %v5550 = vadd.f32 %v4625, %v5549
    %5551 = vmatmul.bf16.gmra.mxu0 %v4469
    %v5552 = vpop.f32.mrf.mxu0
    %v5553 = vadd.f32 %v4625, %v5552
    %v5554 = vpop.f32.mrf.mxu0
    %v5555 = vadd.f32 %v4625, %v5554
    %5556 = vmatmul.bf16.gmra.mxu0 %v4473
    %v5557 = vpop.f32.mrf.mxu0
    %v5558 = vadd.f32 %v4625, %v5557
    %v5559 = vpop.f32.mrf.mxu0
    %v5560 = vadd.f32 %v4625, %v5559
    %5561 = vmatmul.bf16.gmra.mxu0 %v4477
    %v5562 = vpop.f32.mrf.mxu0
    %v5563 = vadd.f32 %v4625, %v5562
    %v5564 = vpop.f32.mrf.mxu0
    %v5565 = vadd.f32 %v4625, %v5564
    %5566 = vmatmul.bf16.gmra.mxu0 %v4481
    %v5567 = vpop.f32.mrf.mxu0
    %v5568 = vadd.f32 %v4625, %v5567
    %v5569 = vpop.f32.mrf.mxu0
    %v5570 = vadd.f32 %v4625, %v5569
    %5571 = vmatmul.bf16.gmra.mxu0 %v4485
    %v5572 = vpop.f32.mrf.mxu0
    %v5573 = vadd.f32 %v4625, %v5572
    %v5574 = vpop.f32.mrf.mxu0
    %v5575 = vadd.f32 %v4625, %v5574
    %5576 = vmatmul.bf16.gmra.mxu0 %v4489
    %v5577 = vpop.f32.mrf.mxu0
    %v5578 = vadd.f32 %v4625, %v5577
    %v5579 = vpop.f32.mrf.mxu0
    %v5580 = vadd.f32 %v4625, %v5579
    %5581 = vdwg.mxu0
    %5582 = vmatpush.bf16.msra.mxu0 %v4996
    %5583 = vmatpush.bf16.msra.mxu0 %v4993
    %5584 = vmatpush.bf16.msra.mxu0 %v4990
    %5585 = vmatpush.bf16.msra.mxu0 %v4987
    %5586 = vmatpush.bf16.msra.mxu0 %v4984
    %5587 = vmatpush.bf16.msra.mxu0 %v4981
    %5588 = vmatpush.bf16.msra.mxu0 %v4978
    %5589 = vmatpush.bf16.msra.mxu0 %v4975
    %5590 = vmatmul.bf16.gmra.mxu0 %v4462
    %v5591 = vpop.f32.mrf.mxu0
    %v5592 = vadd.f32 %v5543, %v5591
    %v5593 = vpop.f32.mrf.mxu0
    %v5594 = vadd.f32 %v5545, %v5593
    %5595 = vmatmul.bf16.gmra.mxu0 %v4466
    %v5596 = vpop.f32.mrf.mxu0
    %v5597 = vadd.f32 %v5548, %v5596
    %v5598 = vpop.f32.mrf.mxu0
    %v5599 = vadd.f32 %v5550, %v5598
    %5600 = vmatmul.bf16.gmra.mxu0 %v4470
    %v5601 = vpop.f32.mrf.mxu0
    %v5602 = vadd.f32 %v5553, %v5601
    %v5603 = vpop.f32.mrf.mxu0
    %v5604 = vadd.f32 %v5555, %v5603
    %5605 = vmatmul.bf16.gmra.mxu0 %v4474
    %v5606 = vpop.f32.mrf.mxu0
    %v5607 = vadd.f32 %v5558, %v5606
    %v5608 = vpop.f32.mrf.mxu0
    %v5609 = vadd.f32 %v5560, %v5608
    %5610 = vmatmul.bf16.gmra.mxu0 %v4478
    %v5611 = vpop.f32.mrf.mxu0
    %v5612 = vadd.f32 %v5563, %v5611
    %v5613 = vpop.f32.mrf.mxu0
    %v5614 = vadd.f32 %v5565, %v5613
    %5615 = vmatmul.bf16.gmra.mxu0 %v4482
    %v5616 = vpop.f32.mrf.mxu0
    %v5617 = vadd.f32 %v5568, %v5616
    %v5618 = vpop.f32.mrf.mxu0
    %v5619 = vadd.f32 %v5570, %v5618
    %5620 = vmatmul.bf16.gmra.mxu0 %v4486
    %v5621 = vpop.f32.mrf.mxu0
    %v5622 = vadd.f32 %v5573, %v5621
    %v5623 = vpop.f32.mrf.mxu0
    %v5624 = vadd.f32 %v5575, %v5623
    %5625 = vmatmul.bf16.gmra.mxu0 %v4490
    %v5626 = vpop.f32.mrf.mxu0
    %v5627 = vadd.f32 %v5578, %v5626
    %v5628 = vpop.f32.mrf.mxu0
    %v5629 = vadd.f32 %v5580, %v5628
    %5630 = vdwg.mxu0
    %5631 = vmatpush.bf16.msra.mxu0 %v5020
    %5632 = vmatpush.bf16.msra.mxu0 %v5017
    %5633 = vmatpush.bf16.msra.mxu0 %v5014
    %5634 = vmatpush.bf16.msra.mxu0 %v5011
    %5635 = vmatpush.bf16.msra.mxu0 %v5008
    %5636 = vmatpush.bf16.msra.mxu0 %v5005
    %5637 = vmatpush.bf16.msra.mxu0 %v5002
    %5638 = vmatpush.bf16.msra.mxu0 %v4999
    %5639 = vmatmul.bf16.gmra.mxu0 %v4463
    %v5640 = vpop.f32.mrf.mxu0
    %v5641 = vadd.f32 %v5592, %v5640
    %v5642 = vpop.f32.mrf.mxu0
    %v5643 = vadd.f32 %v5594, %v5642
    %5644 = vmatmul.bf16.gmra.mxu0 %v4467
    %v5645 = vpop.f32.mrf.mxu0
    %v5646 = vadd.f32 %v5597, %v5645
    %v5647 = vpop.f32.mrf.mxu0
    %v5648 = vadd.f32 %v5599, %v5647
    %5649 = vmatmul.bf16.gmra.mxu0 %v4471
    %v5650 = vpop.f32.mrf.mxu0
    %v5651 = vadd.f32 %v5602, %v5650
    %v5652 = vpop.f32.mrf.mxu0
    %v5653 = vadd.f32 %v5604, %v5652
    %5654 = vmatmul.bf16.gmra.mxu0 %v4475
    %v5655 = vpop.f32.mrf.mxu0
    %v5656 = vadd.f32 %v5607, %v5655
    %v5657 = vpop.f32.mrf.mxu0
    %v5658 = vadd.f32 %v5609, %v5657
    %5659 = vmatmul.bf16.gmra.mxu0 %v4479
    %v5660 = vpop.f32.mrf.mxu0
    %v5661 = vadd.f32 %v5612, %v5660
    %v5662 = vpop.f32.mrf.mxu0
    %v5663 = vadd.f32 %v5614, %v5662
    %5664 = vmatmul.bf16.gmra.mxu0 %v4483
    %v5665 = vpop.f32.mrf.mxu0
    %v5666 = vadd.f32 %v5617, %v5665
    %v5667 = vpop.f32.mrf.mxu0
    %v5668 = vadd.f32 %v5619, %v5667
    %5669 = vmatmul.bf16.gmra.mxu0 %v4487
    %v5670 = vpop.f32.mrf.mxu0
    %v5671 = vadd.f32 %v5622, %v5670
    %v5672 = vpop.f32.mrf.mxu0
    %v5673 = vadd.f32 %v5624, %v5672
    %5674 = vmatmul.bf16.gmra.mxu0 %v4491
    %v5675 = vpop.f32.mrf.mxu0
    %v5676 = vadd.f32 %v5627, %v5675
    %v5677 = vpop.f32.mrf.mxu0
    %v5678 = vadd.f32 %v5629, %v5677
    %5679 = vdwg.mxu0
    %5680 = vmatpush.bf16.msra.mxu0 %v5044
    %5681 = vmatpush.bf16.msra.mxu0 %v5041
    %5682 = vmatpush.bf16.msra.mxu0 %v5038
    %5683 = vmatpush.bf16.msra.mxu0 %v5035
    %5684 = vmatpush.bf16.msra.mxu0 %v5032
    %5685 = vmatpush.bf16.msra.mxu0 %v5029
    %5686 = vmatpush.bf16.msra.mxu0 %v5026
    %5687 = vmatpush.bf16.msra.mxu0 %v5023
    %5688 = vmatmul.bf16.gmra.mxu0 %v4464
    %v5689 = vpop.f32.mrf.mxu0
    %v5690 = vadd.f32 %v5641, %v5689
    %v5691 = vpop.f32.mrf.mxu0
    %v5692 = vadd.f32 %v5643, %v5691
    %5693 = vmatmul.bf16.gmra.mxu0 %v4468
    %v5694 = vpop.f32.mrf.mxu0
    %v5695 = vadd.f32 %v5646, %v5694
    %v5696 = vpop.f32.mrf.mxu0
    %v5697 = vadd.f32 %v5648, %v5696
    %5698 = vmatmul.bf16.gmra.mxu0 %v4472
    %v5699 = vpop.f32.mrf.mxu0
    %v5700 = vadd.f32 %v5651, %v5699
    %v5701 = vpop.f32.mrf.mxu0
    %v5702 = vadd.f32 %v5653, %v5701
    %5703 = vmatmul.bf16.gmra.mxu0 %v4476
    %v5704 = vpop.f32.mrf.mxu0
    %v5705 = vadd.f32 %v5656, %v5704
    %v5706 = vpop.f32.mrf.mxu0
    %v5707 = vadd.f32 %v5658, %v5706
    %5708 = vmatmul.bf16.gmra.mxu0 %v4480
    %v5709 = vpop.f32.mrf.mxu0
    %v5710 = vadd.f32 %v5661, %v5709
    %v5711 = vpop.f32.mrf.mxu0
    %v5712 = vadd.f32 %v5663, %v5711
    %5713 = vmatmul.bf16.gmra.mxu0 %v4484
    %v5714 = vpop.f32.mrf.mxu0
    %v5715 = vadd.f32 %v5666, %v5714
    %v5716 = vpop.f32.mrf.mxu0
    %v5717 = vadd.f32 %v5668, %v5716
    %5718 = vmatmul.bf16.gmra.mxu0 %v4488
    %v5719 = vpop.f32.mrf.mxu0
    %v5720 = vadd.f32 %v5671, %v5719
    %v5721 = vpop.f32.mrf.mxu0
    %v5722 = vadd.f32 %v5673, %v5721
    %5723 = vmatmul.bf16.gmra.mxu0 %v4492
    %v5724 = vpop.f32.mrf.mxu0
    %v5725 = vadd.f32 %v5676, %v5724
    %v5726 = vpop.f32.mrf.mxu0
    %v5727 = vadd.f32 %v5678, %v5726
    %5728 = vdwg.mxu0
    %v5729 = vpack.c.bf16 %v5494, %v5298
    %v5730 = vpack.c.bf16 %v5690, %v5690
    %v5731 = vpack.c.bf16 %v5496, %v5300
    %v5732 = vpack.c.bf16 %v5692, %v5692
    %v5733 = vpack.c.bf16 %v5499, %v5303
    %v5734 = vpack.c.bf16 %v5695, %v5695
    %v5735 = vpack.c.bf16 %v5501, %v5305
    %v5736 = vpack.c.bf16 %v5697, %v5697
    %v5737 = vpack.c.bf16 %v5504, %v5308
    %v5738 = vpack.c.bf16 %v5700, %v5700
    %v5739 = vpack.c.bf16 %v5506, %v5310
    %v5740 = vpack.c.bf16 %v5702, %v5702
    %v5741 = vpack.c.bf16 %v5509, %v5313
    %v5742 = vpack.c.bf16 %v5705, %v5705
    %v5743 = vpack.c.bf16 %v5511, %v5315
    %v5744 = vpack.c.bf16 %v5707, %v5707
    %v5745 = vpack.c.bf16 %v5514, %v5318
    %v5746 = vpack.c.bf16 %v5710, %v5710
    %v5747 = vpack.c.bf16 %v5516, %v5320
    %v5748 = vpack.c.bf16 %v5712, %v5712
    %v5749 = vpack.c.bf16 %v5519, %v5323
    %v5750 = vpack.c.bf16 %v5715, %v5715
    %v5751 = vpack.c.bf16 %v5521, %v5325
    %v5752 = vpack.c.bf16 %v5717, %v5717
    %v5753 = vpack.c.bf16 %v5524, %v5328
    %v5754 = vpack.c.bf16 %v5720, %v5720
    %v5755 = vpack.c.bf16 %v5526, %v5330
    %v5756 = vpack.c.bf16 %v5722, %v5722
    %v5757 = vpack.c.bf16 %v5529, %v5333
    %v5758 = vpack.c.bf16 %v5725, %v5725
    %v5759 = vpack.c.bf16 %v5531, %v5335
    %v5760 = vpack.c.bf16 %v5727, %v5727
    %5761 = vst [vmem:[%s9] sm:$0xff] %v5729
    %5762 = vst [vmem:[%s9 + $0x8] sm:$0xf] %v5730
    %5763 = vst [vmem:[%s9 + $0xc] sm:$0xff] %v5731
    %5764 = vst [vmem:[%s9 + $0x14] sm:$0xf] %v5732
    %5765 = vst [vmem:[%s9 + $0x18] sm:$0xff] %v5733
    %5766 = vst [vmem:[%s9 + $0x20] sm:$0xf] %v5734
    %5767 = vst [vmem:[%s9 + $0x24] sm:$0xff] %v5735
    %5768 = vst [vmem:[%s9 + $0x2c] sm:$0xf] %v5736
    %5769 = vst [vmem:[%s9 + $0x30] sm:$0xff] %v5737
    %5770 = vst [vmem:[%s9 + $0x38] sm:$0xf] %v5738
    %5771 = vst [vmem:[%s9 + $0x3c] sm:$0xff] %v5739
    %5772 = vst [vmem:[%s9 + $0x44] sm:$0xf] %v5740
    %5773 = vst [vmem:[%s9 + $0x48] sm:$0xff] %v5741
    %5774 = vst [vmem:[%s9 + $0x50] sm:$0xf] %v5742
    %5775 = vst [vmem:[%s9 + $0x54] sm:$0xff] %v5743
    %5776 = vst [vmem:[%s9 + $0x5c] sm:$0xf] %v5744
    %5777 = vst [vmem:[%s9 + $0x60] sm:$0xff] %v5745
    %5778 = vst [vmem:[%s9 + $0x68] sm:$0xf] %v5746
    %5779 = vst [vmem:[%s9 + $0x6c] sm:$0xff] %v5747
    %5780 = vst [vmem:[%s9 + $0x74] sm:$0xf] %v5748
    %5781 = vst [vmem:[%s9 + $0x78] sm:$0xff] %v5749
    %5782 = vst [vmem:[%s9 + $0x80] sm:$0xf] %v5750
    %5783 = vst [vmem:[%s9 + $0x84] sm:$0xff] %v5751
    %5784 = vst [vmem:[%s9 + $0x8c] sm:$0xf] %v5752
    %5785 = vst [vmem:[%s9 + $0x90] sm:$0xff] %v5753
    %5786 = vst [vmem:[%s9 + $0x98] sm:$0xf] %v5754
    %5787 = vst [vmem:[%s9 + $0x9c] sm:$0xff] %v5755
    %5788 = vst [vmem:[%s9 + $0xa4] sm:$0xf] %v5756
    %5789 = vst [vmem:[%s9 + $0xa8] sm:$0xff] %v5757
    %5790 = vst [vmem:[%s9 + $0xb0] sm:$0xf] %v5758
    %5791 = vst [vmem:[%s9 + $0xb4] sm:$0xff] %v5759
    %5792 = vst [vmem:[%s9 + $0xbc] sm:$0xf] %v5760
  $region41: #{graph_sage_forward.2} parent=0 // pred_fallthru
    _
  // Predicated region
  $region42: #{graph_sage_forward.2} parent=0 // pred_check
    _
  $region43: #{graph_sage_forward.2} parent=0 // pred_check_branch
    %5794 = sbr.rel (0) target = $region45
  $region44: #{graph_sage_forward.2} parent=0 // pred_region
    _
  $region45: #{graph_sage_forward.2} parent=0 // pred_fallthru
    _
  // Predicated region
  $region46: #{graph_sage_forward.2} parent=0 // pred_check
    _
  $region47: #{graph_sage_forward.2} parent=0 // pred_check_branch
    %5796 = sbr.rel (0) target = $region49
  $region48: #{graph_sage_forward.2} parent=0 // pred_region
    _
  $region49: #{graph_sage_forward.2} parent=0 // pred_fallthru
    _

</llo_original>
